<compile_context>
chip_gen: v7x
topology: tpu7x:2x2x1
jax: 0.10.0
libtpu: 0.0.40
codegen_flags: <defaults>
</compile_context>

<pallas_src>
import numpy as np
import jax
import jax.numpy as jnp
from jax import lax
from jax.experimental import pallas as pl
from jax.experimental.pallas import tpu as pltpu

# ----------------------------- model geometry -------------------------------
IMG_SIZE = 64          # search-region image (1, 3, 64, 64)
D_MODEL = 128          # transformer hidden dim
C_BACK8 = 32           # backbone channels at stride 8
C_BACK16 = 64          # backbone channels at stride 16
FFN_DIM = 256
FEAT_SZ_X8 = IMG_SIZE // 8      # 8  -> 64 search tokens at stride 8
FEAT_SZ_X16 = IMG_SIZE // 16    # 4  -> 16 search tokens at stride 16
FEAT_SZ_S = FEAT_SZ_X16         # box_head.feat_sz
FEAT_LEN_S = FEAT_SZ_S * FEAT_SZ_S
FEAT_SZ_Z8 = 4                  # template tokens (precomputed inputs)
FEAT_SZ_Z16 = 2

L_X8 = FEAT_SZ_X8 * FEAT_SZ_X8        # 64
L_X16 = FEAT_SZ_X16 * FEAT_SZ_X16     # 16
L_Z8 = FEAT_SZ_Z8 * FEAT_SZ_Z8        # 16
L_Z16 = FEAT_SZ_Z16 * FEAT_SZ_Z16     # 4
L_REAL = L_X16 + L_X8 + L_Z8 + L_Z16  # 100
L_PAD = 104                           # padded token count (multiple of 8)
N_PAD = L_PAD - L_REAL                # 4 zero rows, masked in attention
L_Z_BLK = L_Z8 + L_Z16 + N_PAD        # 24 template-token rows (incl. pad)
SCALE = 1.0 / float(D_MODEL) ** 0.5
NEG_INF = -1e30


# ------------------------------ fused kernel ---------------------------------
def _dot(a, b):
    """MXU matmul, f32 accumulation."""
    return jnp.dot(a, b, preferred_element_type=jnp.float32)


def _bf(x):
    return x.astype(jnp.bfloat16)


def _promptvt_kernel(
    # activations (runtime) ----------------------------------------------
    patch8_ref, patch16_ref, ztok_ref, pos_ref,
    # packed constants / weights ------------------------------------------
    const_ref, bias_ref, shift_ref,
    wp8_ref, wp16_ref, wbn_ref, wattn_ref, wffn2_ref, wbr_ref,
    # output ----------------------------------------------------------------
    out_ref,
    # VMEM scratch ------------------------------------------------------------
    tok_ref,
):
    # ---- unpack biases (single lane-dense (16,256) operand) -----------------
    b_qk = bias_ref[0:1, :]                               # (1, 256)
    b_ffn1 = bias_ref[1:2, :]                             # (1, 256)
    b_v = bias_ref[2:3, 0:D_MODEL]
    b_o = bias_ref[2:3, pl.ds(D_MODEL, D_MODEL)]
    b_bn8 = bias_ref[3:4, 0:D_MODEL]
    b_bn16 = bias_ref[3:4, pl.ds(D_MODEL, D_MODEL)]
    b_ffn2 = bias_ref[4:5, 0:D_MODEL]
    b_p8 = bias_ref[5:6, 0:C_BACK8]
    b_p16 = bias_ref[6:7, 0:C_BACK16]

    # ---- backbone (strided patch-embed convs as matmuls) + 1x1 bottlenecks --
    # TODO(synk): full multi-stage CNN backbone reduced to one strided
    #             patch-embed conv per output stride (8 and 16).
    f8 = jnp.maximum(_dot(patch8_ref[...], wp8_ref[...]) + b_p8, 0.0)       # (64, 32)
    x8f = _dot(_bf(f8), wbn_ref[0:C_BACK8, :]) + b_bn8                      # (64, 128)
    f16 = jnp.maximum(_dot(patch16_ref[...], wp16_ref[...]) + b_p16, 0.0)   # (16, 64)
    x16f = _dot(_bf(f16), wbn_ref[pl.ds(C_BACK8, C_BACK16), :]) + b_bn16    # (16, 128)

    # ---- assemble padded token matrix in VMEM scratch ------------------------
    # order: [x16 | x8 | z8 | z16 | pad]  (all block offsets 8-aligned)
    tok_ref[pl.ds(0, L_X16), :] = x16f
    tok_ref[pl.ds(L_X16, L_X8), :] = x8f
    tok_ref[pl.ds(L_X16 + L_X8, L_Z_BLK), :] = ztok_ref[...]

    tokens = tok_ref[...]                     # (104, 128) f32
    qk_in = _bf(tokens + pos_ref[...])        # q/k use tokens+pos, v uses tokens

    # ---- transformer: fused-QK single-head attention + FFN -------------------
    # TODO(synk): PromptVT feature-fusion transformer reduced to a single
    #             single-head attention + FFN block over concatenated tokens.
    w_qk = wattn_ref[:, pl.ds(0, 2 * D_MODEL)]
    w_ffn1 = wattn_ref[:, pl.ds(2 * D_MODEL, 2 * D_MODEL)]
    w_v = wattn_ref[:, pl.ds(4 * D_MODEL, D_MODEL)]
    w_o = wattn_ref[:, pl.ds(5 * D_MODEL, D_MODEL)]

    qk = _dot(qk_in, w_qk) + b_qk                         # (104, 256) f32 = [Q | K]
    q = _bf(qk[:, 0:D_MODEL])
    k = _bf(qk[:, D_MODEL:2 * D_MODEL])
    # contract dim-1 of both operands -> MXU transposed-RHS path (no XLU transpose)
    s = lax.dot_general(q, k, (((1,), (1,)), ((), ())),
                        preferred_element_type=jnp.float32) * SCALE
    s = s + const_ref[0:1, 0:L_PAD]                       # -1e30 mask on padded keys (f32)
    m = jnp.max(s, axis=-1, keepdims=True)
    e = jnp.exp(s - m)
    den = jnp.sum(e, axis=-1, keepdims=True)
    probs = e * pl.reciprocal(den, approx=True)           # attention softmax: approx OK
    v = _dot(_bf(tokens), w_v) + b_v                      # (104, 128) f32
    attn = _dot(_bf(probs), _bf(v))                       # (104, 128) f32
    h = tokens + _dot(_bf(attn), w_o) + b_o
    ff = jnp.maximum(_dot(_bf(h), w_ffn1) + b_ffn1, 0.0)
    memory = h + _dot(_bf(ff), wffn2_ref[...]) + b_ffn2   # (104, 128) f32

    # search stride-16 tokens (== memory[-feat_len_s:] of the original order)
    fx = memory[0:FEAT_LEN_S, :]                          # (16, 128) f32

    # ---- branch_1..4: 3x3 SAME conv + ReLU ----------------------------------
    # shift (144,16) @ fx (16,128) -> 9 shifted/zero-masked copies of fx
    # (tap-major rows: k*16 + t); each tap then hits its own (128,128) weight
    # slab wbr[b*9+k] as an accumulating bf16 matmul — no im2col scratch.
    shift = shift_ref[...]                                # (144, 16) bf16, 0/1 exact
    for b in range(4):
        shifted = _bf(_dot(shift, _bf(fx)))               # (144, 128) bf16
        acc = jnp.zeros((FEAT_LEN_S, D_MODEL), jnp.float32)
        for kk in range(9):
            acc = acc + _dot(shifted[kk * FEAT_LEN_S:(kk + 1) * FEAT_LEN_S, :],
                             wbr_ref[b * 9 + kk])
        fx = jnp.maximum(acc + bias_ref[8 + b:9 + b, 0:D_MODEL], 0.0)

    # ---- heads: cls (1x1 conv D->1) and box (D->2 corner score maps) ---------
    # const rows 8..10 = w_headT rows [cls, tl, br]; contract channel dims.
    whd = const_ref[8:11, :]                              # (3, 128)
    headT = lax.dot_general(whd, fx, (((1,), (1,)), ((), ())),
                            preferred_element_type=jnp.float32)
    headT = headT + const_ref[4:7, 0:FEAT_LEN_S]          # (3, 16) + broadcast bias

    # corner soft-argmax on the (2, 16) tl/br score maps — exact divide here.
    sc = headT[1:3, :]
    m2 = jnp.max(sc, axis=-1, keepdims=True)
    e2 = jnp.exp(sc - m2)
    den2 = jnp.sum(e2, axis=-1, keepdims=True)
    pr = e2 / den2
    ex = jnp.sum(pr * const_ref[1:2, 0:FEAT_LEN_S], axis=-1, keepdims=True)  # (2,1)
    ey = jnp.sum(pr * const_ref[2:3, 0:FEAT_LEN_S], axis=-1, keepdims=True)  # (2,1)

    # ---- single lane-dense output tile ---------------------------------------
    out_ref[...] = jnp.zeros((8, 128), jnp.float32)
    out_ref[0:1, 0:FEAT_LEN_S] = headT[0:1, :]            # cls map
    out_ref[1:3, 0:2] = jnp.concatenate([ex, ey], axis=-1)  # [[x_tl,y_tl],[x_br,y_br]]


def promptvt_fused_call(params, patch8, patch16, z_tok, pos_pack):
    return pl.pallas_call(
        _promptvt_kernel,
        out_shape=jax.ShapeDtypeStruct((8, 128), jnp.float32),
        scratch_shapes=[
            pltpu.VMEM((L_PAD, D_MODEL), jnp.float32),    # assembled tokens
        ],
    )(
        patch8, patch16, z_tok, pos_pack,
        params["const_pack"], params["bias_pack"], params["shift_mats"],
        params["w_patch8"], params["w_patch16"], params["w_bn_pack"],
        params["w_attn_pack"], params["w_ffn2"], params["w_branch"],
    )


# ------------------------------- JAX glue ------------------------------------
def patchify(img_nchw, patch):
    """(1, C, H, W) -> (num_patches, C*patch*patch), row-major over patches."""
    _, C, H, W = img_nchw.shape
    x = img_nchw[0].reshape(C, H // patch, patch, W // patch, patch)
    x = x.transpose(1, 3, 0, 2, 4)                 # (H/p, W/p, C, p, p)
    return x.reshape((H // patch) * (W // patch), C * patch * patch)


def box_xyxy_to_cxcywh(box):
    x0, y0, x1, y1 = box[..., 0], box[..., 1], box[..., 2], box[..., 3]
    return jnp.stack([(x0 + x1) / 2.0, (y0 + y1) / 2.0, x1 - x0, y1 - y0], axis=-1)


def _make_shift_mats(s):
    """0/1 matrices S_k (k = 3x3 tap index) with (S_k @ x)[t] = shifted+masked x."""
    n = s * s
    mats = np.zeros((9 * n, n), dtype=np.float32)
    for k in range(9):
        di, dj = k // 3 - 1, k % 3 - 1
        for t in range(n):
            i, j = t // s, t % s
            ii, jj = i + di, j + dj
            if 0 <= ii < s and 0 <= jj < s:
                mats[k * n + t, ii * s + jj] = 1.0
    return jnp.asarray(mats)


def init_params(key):
    ks = jax.random.split(key, 24)

    def w(i, shape, scale=0.05):
        return scale * jax.random.normal(ks[i], shape, dtype=jnp.float32)

    # ---- raw weights (f32, same structure as the PyTorch module) ------------
    w_patch8 = w(0, (3 * 8 * 8, C_BACK8));      b_patch8 = w(1, (1, C_BACK8))
    w_patch16 = w(2, (3 * 16 * 16, C_BACK16));  b_patch16 = w(3, (1, C_BACK16))
    w_bn8 = w(4, (C_BACK8, D_MODEL));   b_bn8 = w(5, (1, D_MODEL))
    w_bn16 = w(6, (C_BACK16, D_MODEL)); b_bn16 = w(7, (1, D_MODEL))
    pos_embed_8 = w(8, (L_X8, D_MODEL))
    pos_embed_16 = w(9, (L_X16, D_MODEL))
    w_qk = w(10, (D_MODEL, 2 * D_MODEL)); b_qk = w(11, (1, 2 * D_MODEL))
    w_v = w(12, (D_MODEL, D_MODEL));      b_v = w(13, (1, D_MODEL))
    w_o = w(14, (D_MODEL, D_MODEL));      b_o = w(15, (1, D_MODEL))
    w_ffn1 = w(16, (D_MODEL, FFN_DIM));   b_ffn1 = w(17, (1, FFN_DIM))
    w_ffn2 = w(18, (FFN_DIM, D_MODEL));   b_ffn2 = w(19, (1, D_MODEL))
    # branch convs: im2col rows are tap-major (k*128 + c_in)
    w_branch = w(20, (4, 9 * D_MODEL, D_MODEL))
    b_branch = w(21, (4, D_MODEL))
    w_headT = w(22, (3, D_MODEL))          # rows = [cls, box_tl, box_br]
    b_headT = jnp.zeros((3,), jnp.float32)

    p = {}
    # position embeddings of the search region (used for pos_pack assembly)
    p["pos_embed_8"] = pos_embed_8
    p["pos_embed_16"] = pos_embed_16

    # ---- bf16 MXU weights ----------------------------------------------------
    p["w_patch8"] = w_patch8.astype(jnp.bfloat16)
    p["w_patch16"] = w_patch16.astype(jnp.bfloat16)
    p["w_bn_pack"] = jnp.concatenate([w_bn8, w_bn16], axis=0).astype(jnp.bfloat16)   # (96,128)
    p["w_attn_pack"] = jnp.concatenate([w_qk, w_ffn1, w_v, w_o], axis=1).astype(jnp.bfloat16)  # (128,768)
    p["w_ffn2"] = w_ffn2.astype(jnp.bfloat16)
    p["w_branch"] = w_branch.reshape(4 * 9, D_MODEL, D_MODEL).astype(jnp.bfloat16)   # (36,128,128)
    p["shift_mats"] = _make_shift_mats(FEAT_SZ_S).astype(jnp.bfloat16)               # 0/1, exact

    # ---- packed bias tile (16, 256) f32 ---------------------------------------
    bias = jnp.zeros((16, 2 * D_MODEL), jnp.float32)
    bias = bias.at[0, :].set(b_qk[0])
    bias = bias.at[1, :].set(b_ffn1[0])
    bias = bias.at[2, 0:D_MODEL].set(b_v[0]).at[2, D_MODEL:2 * D_MODEL].set(b_o[0])
    bias = bias.at[3, 0:D_MODEL].set(b_bn8[0]).at[3, D_MODEL:2 * D_MODEL].set(b_bn16[0])
    bias = bias.at[4, 0:D_MODEL].set(b_ffn2[0])
    bias = bias.at[5, 0:C_BACK8].set(b_patch8[0])
    bias = bias.at[6, 0:C_BACK16].set(b_patch16[0])
    bias = bias.at[8:12, 0:D_MODEL].set(b_branch)
    p["bias_pack"] = bias

    # ---- packed const tile (16, 128) f32 --------------------------------------
    const = jnp.zeros((16, D_MODEL), jnp.float32)
    attn_bias_row = jnp.concatenate(
        [jnp.zeros((L_REAL,), jnp.float32), jnp.full((N_PAD,), NEG_INF, jnp.float32)])
    const = const.at[0, 0:L_PAD].set(attn_bias_row)                      # key mask
    idx = jnp.arange(FEAT_LEN_S, dtype=jnp.float32)
    const = const.at[1, 0:FEAT_LEN_S].set((idx % FEAT_SZ_S) / FEAT_SZ_S)       # coord_x
    const = const.at[2, 0:FEAT_LEN_S].set(jnp.floor(idx / FEAT_SZ_S) / FEAT_SZ_S)  # coord_y
    const = const.at[4:7, 0:FEAT_LEN_S].set(
        jnp.broadcast_to(b_headT[:, None], (3, FEAT_LEN_S)))             # head biases
    const = const.at[8:11, :].set(w_headT)                               # head weights
    p["const_pack"] = const
    return p


def promptvt_forward(params, img, feat_vec_z_8, pos_vec_z_8,
                     feat_vec_z_16, pos_vec_z_16):
    # --- input layout glue (pure data movement, done once in XLA) ---
    patch8 = patchify(img, 8).astype(jnp.bfloat16)      # (64, 192)
    patch16 = patchify(img, 16).astype(jnp.bfloat16)    # (16, 768)
    # template vectors arrive in PyTorch (L, 1, D) layout; squeeze batch
    z8, pz8 = feat_vec_z_8[:, 0, :], pos_vec_z_8[:, 0, :]
    z16, pz16 = feat_vec_z_16[:, 0, :], pos_vec_z_16[:, 0, :]
    zpad = jnp.zeros((N_PAD, D_MODEL), jnp.float32)
    # template token block [z8 | z16 | pad] (rows 80..103 of the token matrix)
    z_tok = jnp.concatenate([z8, z16, zpad], axis=0)                       # (24, 128)
    # full padded positional embedding in kernel token order [x16|x8|z8|z16|pad]
    pos_pack = jnp.concatenate(
        [params["pos_embed_16"], params["pos_embed_8"], pz8, pz16, zpad], axis=0)  # (104,128)

    # --- single fused Pallas kernel: backbone -> transformer -> heads ---
    out_tile = promptvt_fused_call(params, patch8, patch16, z_tok, pos_pack)

    # --- output formatting (matches PyTorch module) ---
    pred_logits = out_tile[0, 0:FEAT_LEN_S].reshape(1, 1, FEAT_SZ_S, FEAT_SZ_S)  # NCHW
    corners = out_tile[1:3, 0:2]                    # [[x_tl,y_tl],[x_br,y_br]]
    xyxy = corners.reshape(1, 4)                    # (x_tl, y_tl, x_br, y_br)
    outputs_coord = box_xyxy_to_cxcywh(xyxy)        # (1, 4) cx, cy, w, h
    return pred_logits, outputs_coord


# --------------------------------- main --------------------------------------
if __name__ == "__main__":
    key = jax.random.PRNGKey(0)
    pkey, k_img, k_z8, k_pz8, k_z16, k_pz16 = jax.random.split(key, 6)
    params = init_params(pkey)

    img = jax.random.normal(k_img, (1, 3, IMG_SIZE, IMG_SIZE), dtype=jnp.float32)
    feat_vec_z_8 = jax.random.normal(k_z8, (L_Z8, 1, D_MODEL), dtype=jnp.float32)
    pos_vec_z_8 = jax.random.normal(k_pz8, (L_Z8, 1, D_MODEL), dtype=jnp.float32)
    feat_vec_z_16 = jax.random.normal(k_z16, (L_Z16, 1, D_MODEL), dtype=jnp.float32)
    pos_vec_z_16 = jax.random.normal(k_pz16, (L_Z16, 1, D_MODEL), dtype=jnp.float32)

    fwd = jax.jit(promptvt_forward)
    pred_logits, outputs_coord = fwd(params, img, feat_vec_z_8, pos_vec_z_8,
                                     feat_vec_z_16, pos_vec_z_16)
    jax.block_until_ready((pred_logits, outputs_coord))

    assert pred_logits.shape == (1, 1, FEAT_SZ_S, FEAT_SZ_S)
    assert outputs_coord.shape == (1, 4)
    assert bool(jnp.all(jnp.isfinite(pred_logits)))
    assert bool(jnp.all(jnp.isfinite(outputs_coord)))
    print("KERNEL_OK")
</pallas_src>

<mosaic_0001>
module attributes {stable_mosaic.version = 11 : i64} {
  func.func @_promptvt_kernel(%arg0: memref<64x192xbf16, #tpu.memory_space<vmem>>, %arg1: memref<16x768xbf16, #tpu.memory_space<vmem>>, %arg2: memref<24x128xf32, #tpu.memory_space<vmem>>, %arg3: memref<104x128xf32, #tpu.memory_space<vmem>>, %arg4: memref<16x128xf32, #tpu.memory_space<vmem>>, %arg5: memref<16x256xf32, #tpu.memory_space<vmem>>, %arg6: memref<144x16xbf16, #tpu.memory_space<vmem>>, %arg7: memref<192x32xbf16, #tpu.memory_space<vmem>>, %arg8: memref<768x64xbf16, #tpu.memory_space<vmem>>, %arg9: memref<96x128xbf16, #tpu.memory_space<vmem>>, %arg10: memref<128x768xbf16, #tpu.memory_space<vmem>>, %arg11: memref<256x128xbf16, #tpu.memory_space<vmem>>, %arg12: memref<36x128x128xbf16, #tpu.memory_space<vmem>>, %arg13: memref<8x128xf32, #tpu.memory_space<vmem>>, %arg14: memref<104x128xf32, #tpu.memory_space<vmem>>) attributes {dimension_semantics = [], scalar_prefetch = 0 : i64, scratch_operands = 1 : i64, tpu.core_type = #tpu.core_type<tc>} {
    %c0 = arith.constant 0 : index
    %c0_0 = arith.constant 0 : index
    %0 = vector.load %arg5[%c0, %c0_0] : memref<16x256xf32, #tpu.memory_space<vmem>>, vector<1x256xf32>
    %c1 = arith.constant 1 : index
    %c0_1 = arith.constant 0 : index
    %1 = vector.load %arg5[%c1, %c0_1] : memref<16x256xf32, #tpu.memory_space<vmem>>, vector<1x256xf32>
    %c2 = arith.constant 2 : index
    %c0_2 = arith.constant 0 : index
    %2 = vector.load %arg5[%c2, %c0_2] : memref<16x256xf32, #tpu.memory_space<vmem>>, vector<1x128xf32>
    %c2_3 = arith.constant 2 : index
    %c128 = arith.constant 128 : index
    %3 = vector.load %arg5[%c2_3, %c128] : memref<16x256xf32, #tpu.memory_space<vmem>>, vector<1x128xf32>
    %c3 = arith.constant 3 : index
    %c0_4 = arith.constant 0 : index
    %4 = vector.load %arg5[%c3, %c0_4] : memref<16x256xf32, #tpu.memory_space<vmem>>, vector<1x128xf32>
    %c3_5 = arith.constant 3 : index
    %c128_6 = arith.constant 128 : index
    %5 = vector.load %arg5[%c3_5, %c128_6] : memref<16x256xf32, #tpu.memory_space<vmem>>, vector<1x128xf32>
    %c4 = arith.constant 4 : index
    %c0_7 = arith.constant 0 : index
    %6 = vector.load %arg5[%c4, %c0_7] : memref<16x256xf32, #tpu.memory_space<vmem>>, vector<1x128xf32>
    %c5 = arith.constant 5 : index
    %c0_8 = arith.constant 0 : index
    %7 = vector.load %arg5[%c5, %c0_8] : memref<16x256xf32, #tpu.memory_space<vmem>>, vector<1x32xf32>
    %c6 = arith.constant 6 : index
    %c0_9 = arith.constant 0 : index
    %8 = vector.load %arg5[%c6, %c0_9] : memref<16x256xf32, #tpu.memory_space<vmem>>, vector<1x64xf32>
    %c0_10 = arith.constant 0 : index
    %c0_11 = arith.constant 0 : index
    %9 = vector.load %arg0[%c0_10, %c0_11] : memref<64x192xbf16, #tpu.memory_space<vmem>>, vector<64x192xbf16>
    %c0_12 = arith.constant 0 : index
    %c0_13 = arith.constant 0 : index
    %10 = vector.load %arg7[%c0_12, %c0_13] : memref<192x32xbf16, #tpu.memory_space<vmem>>, vector<192x32xbf16>
    %cst = arith.constant dense<0.000000e+00> : vector<64x32xf32>
    %11 = tpu.matmul %9, %10, %cst {dimension_numbers = #tpu.dot_dimension_numbers<[1], [0], [0], [1], [0, 0, 1, 1], [], []>} : vector<64x192xbf16>, vector<192x32xbf16>, vector<64x32xf32> -> vector<64x32xf32>
    %12 = vector.broadcast %7 : vector<1x32xf32> to vector<64x32xf32>
    %13 = arith.addf %11, %12 : vector<64x32xf32>
    %cst_14 = arith.constant 0.000000e+00 : f32
    %14 = vector.broadcast %cst_14 : f32 to vector<64x32xf32>
    %15 = arith.maximumf %13, %14 : vector<64x32xf32>
    %16 = arith.truncf %15 : vector<64x32xf32> to vector<64x32xbf16>
    %c0_15 = arith.constant 0 : index
    %c0_16 = arith.constant 0 : index
    %17 = vector.load %arg9[%c0_15, %c0_16] : memref<96x128xbf16, #tpu.memory_space<vmem>>, vector<32x128xbf16>
    %cst_17 = arith.constant dense<0.000000e+00> : vector<64x128xf32>
    %18 = tpu.matmul %16, %17, %cst_17 {dimension_numbers = #tpu.dot_dimension_numbers<[1], [0], [0], [1], [0, 0, 1, 1], [], []>} : vector<64x32xbf16>, vector<32x128xbf16>, vector<64x128xf32> -> vector<64x128xf32>
    %19 = vector.broadcast %4 : vector<1x128xf32> to vector<64x128xf32>
    %20 = arith.addf %18, %19 : vector<64x128xf32>
    %c0_18 = arith.constant 0 : index
    %c0_19 = arith.constant 0 : index
    %21 = vector.load %arg1[%c0_18, %c0_19] : memref<16x768xbf16, #tpu.memory_space<vmem>>, vector<16x768xbf16>
    %c0_20 = arith.constant 0 : index
    %c0_21 = arith.constant 0 : index
    %22 = vector.load %arg8[%c0_20, %c0_21] : memref<768x64xbf16, #tpu.memory_space<vmem>>, vector<768x64xbf16>
    %cst_22 = arith.constant dense<0.000000e+00> : vector<16x64xf32>
    %23 = tpu.matmul %21, %22, %cst_22 {dimension_numbers = #tpu.dot_dimension_numbers<[1], [0], [0], [1], [0, 0, 1, 1], [], []>} : vector<16x768xbf16>, vector<768x64xbf16>, vector<16x64xf32> -> vector<16x64xf32>
    %24 = vector.broadcast %8 : vector<1x64xf32> to vector<16x64xf32>
    %25 = arith.addf %23, %24 : vector<16x64xf32>
    %cst_23 = arith.constant 0.000000e+00 : f32
    %26 = vector.broadcast %cst_23 : f32 to vector<16x64xf32>
    %27 = arith.maximumf %25, %26 : vector<16x64xf32>
    %28 = arith.truncf %27 : vector<16x64xf32> to vector<16x64xbf16>
    %c32 = arith.constant 32 : index
    %c0_24 = arith.constant 0 : index
    %29 = vector.load %arg9[%c32, %c0_24] : memref<96x128xbf16, #tpu.memory_space<vmem>>, vector<64x128xbf16>
    %cst_25 = arith.constant dense<0.000000e+00> : vector<16x128xf32>
    %30 = tpu.matmul %28, %29, %cst_25 {dimension_numbers = #tpu.dot_dimension_numbers<[1], [0], [0], [1], [0, 0, 1, 1], [], []>} : vector<16x64xbf16>, vector<64x128xbf16>, vector<16x128xf32> -> vector<16x128xf32>
    %31 = vector.broadcast %5 : vector<1x128xf32> to vector<16x128xf32>
    %32 = arith.addf %30, %31 : vector<16x128xf32>
    %c0_26 = arith.constant 0 : index
    %c0_27 = arith.constant 0 : index
    %33 = vector.load %arg14[%c0_26, %c0_27] : memref<104x128xf32, #tpu.memory_space<vmem>>, vector<16x128xf32>
    tpu.vector_store %arg14[%c0_26, %c0_27], %32 {strides = array<i32>} : memref<104x128xf32, #tpu.memory_space<vmem>>, vector<16x128xf32>,
    %c16 = arith.constant 16 : index
    %c0_28 = arith.constant 0 : index
    %34 = vector.load %arg14[%c16, %c0_28] : memref<104x128xf32, #tpu.memory_space<vmem>>, vector<64x128xf32>
    tpu.vector_store %arg14[%c16, %c0_28], %20 {strides = array<i32>} : memref<104x128xf32, #tpu.memory_space<vmem>>, vector<64x128xf32>,
    %c0_29 = arith.constant 0 : index
    %c0_30 = arith.constant 0 : index
    %35 = vector.load %arg2[%c0_29, %c0_30] : memref<24x128xf32, #tpu.memory_space<vmem>>, vector<24x128xf32>
    %c80 = arith.constant 80 : index
    %c0_31 = arith.constant 0 : index
    %36 = vector.load %arg14[%c80, %c0_31] : memref<104x128xf32, #tpu.memory_space<vmem>>, vector<24x128xf32>
    tpu.vector_store %arg14[%c80, %c0_31], %35 {strides = array<i32>} : memref<104x128xf32, #tpu.memory_space<vmem>>, vector<24x128xf32>,
    %c0_32 = arith.constant 0 : index
    %c0_33 = arith.constant 0 : index
    %37 = vector.load %arg14[%c0_32, %c0_33] : memref<104x128xf32, #tpu.memory_space<vmem>>, vector<104x128xf32>
    %c0_34 = arith.constant 0 : index
    %c0_35 = arith.constant 0 : index
    %38 = vector.load %arg3[%c0_34, %c0_35] : memref<104x128xf32, #tpu.memory_space<vmem>>, vector<104x128xf32>
    %39 = arith.addf %37, %38 : vector<104x128xf32>
    %40 = arith.truncf %39 : vector<104x128xf32> to vector<104x128xbf16>
    %c0_36 = arith.constant 0 : index
    %c0_37 = arith.constant 0 : index
    %41 = vector.load %arg10[%c0_36, %c0_37] : memref<128x768xbf16, #tpu.memory_space<vmem>>, vector<128x256xbf16>
    %c0_38 = arith.constant 0 : index
    %c256 = arith.constant 256 : index
    %42 = vector.load %arg10[%c0_38, %c256] : memref<128x768xbf16, #tpu.memory_space<vmem>>, vector<128x256xbf16>
    %c0_39 = arith.constant 0 : index
    %c512 = arith.constant 512 : index
    %43 = vector.load %arg10[%c0_39, %c512] : memref<128x768xbf16, #tpu.memory_space<vmem>>, vector<128x128xbf16>
    %c0_40 = arith.constant 0 : index
    %c640 = arith.constant 640 : index
    %44 = vector.load %arg10[%c0_40, %c640] : memref<128x768xbf16, #tpu.memory_space<vmem>>, vector<128x128xbf16>
    %cst_41 = arith.constant dense<0.000000e+00> : vector<104x256xf32>
    %45 = tpu.matmul %40, %41, %cst_41 {dimension_numbers = #tpu.dot_dimension_numbers<[1], [0], [0], [1], [0, 0, 1, 1], [], []>} : vector<104x128xbf16>, vector<128x256xbf16>, vector<104x256xf32> -> vector<104x256xf32>
    %46 = vector.broadcast %0 : vector<1x256xf32> to vector<104x256xf32>
    %47 = arith.addf %45, %46 : vector<104x256xf32>
    %48 = vector.extract_strided_slice %47 {offsets = [0, 0], sizes = [104, 128], strides = [1, 1]} : vector<104x256xf32> to vector<104x128xf32>
    %49 = arith.truncf %48 : vector<104x128xf32> to vector<104x128xbf16>
    %50 = vector.extract_strided_slice %47 {offsets = [0, 128], sizes = [104, 128], strides = [1, 1]} : vector<104x256xf32> to vector<104x128xf32>
    %51 = arith.truncf %50 : vector<104x128xf32> to vector<104x128xbf16>
    %cst_42 = arith.constant dense<0.000000e+00> : vector<104x104xf32>
    %52 = tpu.matmul %49, %51, %cst_42 {dimension_numbers = #tpu.dot_dimension_numbers<[1], [1], [0], [0], [0, 0, 1, 0], [], []>} : vector<104x128xbf16>, vector<104x128xbf16>, vector<104x104xf32> -> vector<104x104xf32>
    %cst_43 = arith.constant 0.0883883461 : f32
    %53 = vector.broadcast %cst_43 : f32 to vector<104x104xf32>
    %54 = arith.mulf %52, %53 : vector<104x104xf32>
    %c0_44 = arith.constant 0 : index
    %c0_45 = arith.constant 0 : index
    %55 = vector.load %arg4[%c0_44, %c0_45] : memref<16x128xf32, #tpu.memory_space<vmem>>, vector<1x104xf32>
    %56 = vector.broadcast %55 : vector<1x104xf32> to vector<104x104xf32>
    %57 = arith.addf %54, %56 : vector<104x104xf32>
    %cst_46 = arith.constant dense<0xFF800000> : vector<104xf32>
    %58 = vector.multi_reduction <maximumf>, %57, %cst_46 [1] : vector<104x104xf32> to vector<104xf32>
    %59 = vector.shape_cast %58 : vector<104xf32> to vector<104x1xf32>
    %60 = vector.broadcast %59 : vector<104x1xf32> to vector<104x104xf32>
    %61 = arith.subf %57, %60 : vector<104x104xf32>
    %62 = math.exp %61 : vector<104x104xf32>
    %cst_47 = arith.constant dense<0.000000e+00> : vector<104xf32>
    %63 = vector.multi_reduction <add>, %62, %cst_47 [1] : vector<104x104xf32> to vector<104xf32>
    %64 = vector.shape_cast %63 : vector<104xf32> to vector<104x1xf32>
    %65 = tpu.reciprocal %64 {approx = true} : vector<104x1xf32> -> vector<104x1xf32>
    %66 = vector.broadcast %65 : vector<104x1xf32> to vector<104x104xf32>
    %67 = arith.mulf %62, %66 : vector<104x104xf32>
    %68 = arith.truncf %37 : vector<104x128xf32> to vector<104x128xbf16>
    %cst_48 = arith.constant dense<0.000000e+00> : vector<104x128xf32>
    %69 = tpu.matmul %68, %43, %cst_48 {dimension_numbers = #tpu.dot_dimension_numbers<[1], [0], [0], [1], [0, 0, 1, 1], [], []>} : vector<104x128xbf16>, vector<128x128xbf16>, vector<104x128xf32> -> vector<104x128xf32>
    %70 = vector.broadcast %2 : vector<1x128xf32> to vector<104x128xf32>
    %71 = arith.addf %69, %70 : vector<104x128xf32>
    %72 = arith.truncf %67 : vector<104x104xf32> to vector<104x104xbf16>
    %73 = arith.truncf %71 : vector<104x128xf32> to vector<104x128xbf16>
    %cst_49 = arith.constant dense<0.000000e+00> : vector<104x128xf32>
    %74 = tpu.matmul %72, %73, %cst_49 {dimension_numbers = #tpu.dot_dimension_numbers<[1], [0], [0], [1], [0, 0, 1, 1], [], []>} : vector<104x104xbf16>, vector<104x128xbf16>, vector<104x128xf32> -> vector<104x128xf32>
    %75 = arith.truncf %74 : vector<104x128xf32> to vector<104x128xbf16>
    %cst_50 = arith.constant dense<0.000000e+00> : vector<104x128xf32>
    %76 = tpu.matmul %75, %44, %cst_50 {dimension_numbers = #tpu.dot_dimension_numbers<[1], [0], [0], [1], [0, 0, 1, 1], [], []>} : vector<104x128xbf16>, vector<128x128xbf16>, vector<104x128xf32> -> vector<104x128xf32>
    %77 = arith.addf %37, %76 : vector<104x128xf32>
    %78 = vector.broadcast %3 : vector<1x128xf32> to vector<104x128xf32>
    %79 = arith.addf %77, %78 : vector<104x128xf32>
    %80 = arith.truncf %79 : vector<104x128xf32> to vector<104x128xbf16>
    %cst_51 = arith.constant dense<0.000000e+00> : vector<104x256xf32>
    %81 = tpu.matmul %80, %42, %cst_51 {dimension_numbers = #tpu.dot_dimension_numbers<[1], [0], [0], [1], [0, 0, 1, 1], [], []>} : vector<104x128xbf16>, vector<128x256xbf16>, vector<104x256xf32> -> vector<104x256xf32>
    %82 = vector.broadcast %1 : vector<1x256xf32> to vector<104x256xf32>
    %83 = arith.addf %81, %82 : vector<104x256xf32>
    %cst_52 = arith.constant 0.000000e+00 : f32
    %84 = vector.broadcast %cst_52 : f32 to vector<104x256xf32>
    %85 = arith.maximumf %83, %84 : vector<104x256xf32>
    %86 = arith.truncf %85 : vector<104x256xf32> to vector<104x256xbf16>
    %c0_53 = arith.constant 0 : index
    %c0_54 = arith.constant 0 : index
    %87 = vector.load %arg11[%c0_53, %c0_54] : memref<256x128xbf16, #tpu.memory_space<vmem>>, vector<256x128xbf16>
    %cst_55 = arith.constant dense<0.000000e+00> : vector<104x128xf32>
    %88 = tpu.matmul %86, %87, %cst_55 {dimension_numbers = #tpu.dot_dimension_numbers<[1], [0], [0], [1], [0, 0, 1, 1], [], []>} : vector<104x256xbf16>, vector<256x128xbf16>, vector<104x128xf32> -> vector<104x128xf32>
    %89 = arith.addf %79, %88 : vector<104x128xf32>
    %90 = vector.broadcast %6 : vector<1x128xf32> to vector<104x128xf32>
    %91 = arith.addf %89, %90 : vector<104x128xf32>
    %92 = vector.extract_strided_slice %91 {offsets = [0, 0], sizes = [16, 128], strides = [1, 1]} : vector<104x128xf32> to vector<16x128xf32>
    %c0_56 = arith.constant 0 : index
    %c0_57 = arith.constant 0 : index
    %93 = vector.load %arg6[%c0_56, %c0_57] : memref<144x16xbf16, #tpu.memory_space<vmem>>, vector<144x16xbf16>
    %94 = arith.truncf %92 : vector<16x128xf32> to vector<16x128xbf16>
    %cst_58 = arith.constant dense<0.000000e+00> : vector<144x128xf32>
    %95 = tpu.matmul %93, %94, %cst_58 {dimension_numbers = #tpu.dot_dimension_numbers<[1], [0], [0], [1], [0, 0, 1, 1], [], []>} : vector<144x16xbf16>, vector<16x128xbf16>, vector<144x128xf32> -> vector<144x128xf32>
    %96 = arith.truncf %95 : vector<144x128xf32> to vector<144x128xbf16>
    %cst_59 = arith.constant 0.000000e+00 : f32
    %97 = vector.broadcast %cst_59 : f32 to vector<16x128xf32>
    %98 = vector.extract_strided_slice %96 {offsets = [0, 0], sizes = [16, 128], strides = [1, 1]} : vector<144x128xbf16> to vector<16x128xbf16>
    %c0_60 = arith.constant 0 : index
    %c0_61 = arith.constant 0 : index
    %c0_62 = arith.constant 0 : index
    %99 = vector.load %arg12[%c0_60, %c0_61, %c0_62] : memref<36x128x128xbf16, #tpu.memory_space<vmem>>, vector<1x128x128xbf16>
    %100 = vector.shape_cast %99 : vector<1x128x128xbf16> to vector<128x128xbf16>
    %cst_63 = arith.constant dense<0.000000e+00> : vector<16x128xf32>
    %101 = tpu.matmul %98, %100, %cst_63 {dimension_numbers = #tpu.dot_dimension_numbers<[1], [0], [0], [1], [0, 0, 1, 1], [], []>} : vector<16x128xbf16>, vector<128x128xbf16>, vector<16x128xf32> -> vector<16x128xf32>
    %102 = arith.addf %97, %101 : vector<16x128xf32>
    %103 = vector.extract_strided_slice %96 {offsets = [16, 0], sizes = [16, 128], strides = [1, 1]} : vector<144x128xbf16> to vector<16x128xbf16>
    %c1_64 = arith.constant 1 : index
    %c0_65 = arith.constant 0 : index
    %c0_66 = arith.constant 0 : index
    %104 = vector.load %arg12[%c1_64, %c0_65, %c0_66] : memref<36x128x128xbf16, #tpu.memory_space<vmem>>, vector<1x128x128xbf16>
    %105 = vector.shape_cast %104 : vector<1x128x128xbf16> to vector<128x128xbf16>
    %cst_67 = arith.constant dense<0.000000e+00> : vector<16x128xf32>
    %106 = tpu.matmul %103, %105, %cst_67 {dimension_numbers = #tpu.dot_dimension_numbers<[1], [0], [0], [1], [0, 0, 1, 1], [], []>} : vector<16x128xbf16>, vector<128x128xbf16>, vector<16x128xf32> -> vector<16x128xf32>
    %107 = arith.addf %102, %106 : vector<16x128xf32>
    %108 = vector.extract_strided_slice %96 {offsets = [32, 0], sizes = [16, 128], strides = [1, 1]} : vector<144x128xbf16> to vector<16x128xbf16>
    %c2_68 = arith.constant 2 : index
    %c0_69 = arith.constant 0 : index
    %c0_70 = arith.constant 0 : index
    %109 = vector.load %arg12[%c2_68, %c0_69, %c0_70] : memref<36x128x128xbf16, #tpu.memory_space<vmem>>, vector<1x128x128xbf16>
    %110 = vector.shape_cast %109 : vector<1x128x128xbf16> to vector<128x128xbf16>
    %cst_71 = arith.constant dense<0.000000e+00> : vector<16x128xf32>
    %111 = tpu.matmul %108, %110, %cst_71 {dimension_numbers = #tpu.dot_dimension_numbers<[1], [0], [0], [1], [0, 0, 1, 1], [], []>} : vector<16x128xbf16>, vector<128x128xbf16>, vector<16x128xf32> -> vector<16x128xf32>
    %112 = arith.addf %107, %111 : vector<16x128xf32>
    %113 = vector.extract_strided_slice %96 {offsets = [48, 0], sizes = [16, 128], strides = [1, 1]} : vector<144x128xbf16> to vector<16x128xbf16>
    %c3_72 = arith.constant 3 : index
    %c0_73 = arith.constant 0 : index
    %c0_74 = arith.constant 0 : index
    %114 = vector.load %arg12[%c3_72, %c0_73, %c0_74] : memref<36x128x128xbf16, #tpu.memory_space<vmem>>, vector<1x128x128xbf16>
    %115 = vector.shape_cast %114 : vector<1x128x128xbf16> to vector<128x128xbf16>
    %cst_75 = arith.constant dense<0.000000e+00> : vector<16x128xf32>
    %116 = tpu.matmul %113, %115, %cst_75 {dimension_numbers = #tpu.dot_dimension_numbers<[1], [0], [0], [1], [0, 0, 1, 1], [], []>} : vector<16x128xbf16>, vector<128x128xbf16>, vector<16x128xf32> -> vector<16x128xf32>
    %117 = arith.addf %112, %116 : vector<16x128xf32>
    %118 = vector.extract_strided_slice %96 {offsets = [64, 0], sizes = [16, 128], strides = [1, 1]} : vector<144x128xbf16> to vector<16x128xbf16>
    %c4_76 = arith.constant 4 : index
    %c0_77 = arith.constant 0 : index
    %c0_78 = arith.constant 0 : index
    %119 = vector.load %arg12[%c4_76, %c0_77, %c0_78] : memref<36x128x128xbf16, #tpu.memory_space<vmem>>, vector<1x128x128xbf16>
    %120 = vector.shape_cast %119 : vector<1x128x128xbf16> to vector<128x128xbf16>
    %cst_79 = arith.constant dense<0.000000e+00> : vector<16x128xf32>
    %121 = tpu.matmul %118, %120, %cst_79 {dimension_numbers = #tpu.dot_dimension_numbers<[1], [0], [0], [1], [0, 0, 1, 1], [], []>} : vector<16x128xbf16>, vector<128x128xbf16>, vector<16x128xf32> -> vector<16x128xf32>
    %122 = arith.addf %117, %121 : vector<16x128xf32>
    %123 = vector.extract_strided_slice %96 {offsets = [80, 0], sizes = [16, 128], strides = [1, 1]} : vector<144x128xbf16> to vector<16x128xbf16>
    %c5_80 = arith.constant 5 : index
    %c0_81 = arith.constant 0 : index
    %c0_82 = arith.constant 0 : index
    %124 = vector.load %arg12[%c5_80, %c0_81, %c0_82] : memref<36x128x128xbf16, #tpu.memory_space<vmem>>, vector<1x128x128xbf16>
    %125 = vector.shape_cast %124 : vector<1x128x128xbf16> to vector<128x128xbf16>
    %cst_83 = arith.constant dense<0.000000e+00> : vector<16x128xf32>
    %126 = tpu.matmul %123, %125, %cst_83 {dimension_numbers = #tpu.dot_dimension_numbers<[1], [0], [0], [1], [0, 0, 1, 1], [], []>} : vector<16x128xbf16>, vector<128x128xbf16>, vector<16x128xf32> -> vector<16x128xf32>
    %127 = arith.addf %122, %126 : vector<16x128xf32>
    %128 = vector.extract_strided_slice %96 {offsets = [96, 0], sizes = [16, 128], strides = [1, 1]} : vector<144x128xbf16> to vector<16x128xbf16>
    %c6_84 = arith.constant 6 : index
    %c0_85 = arith.constant 0 : index
    %c0_86 = arith.constant 0 : index
    %129 = vector.load %arg12[%c6_84, %c0_85, %c0_86] : memref<36x128x128xbf16, #tpu.memory_space<vmem>>, vector<1x128x128xbf16>
    %130 = vector.shape_cast %129 : vector<1x128x128xbf16> to vector<128x128xbf16>
    %cst_87 = arith.constant dense<0.000000e+00> : vector<16x128xf32>
    %131 = tpu.matmul %128, %130, %cst_87 {dimension_numbers = #tpu.dot_dimension_numbers<[1], [0], [0], [1], [0, 0, 1, 1], [], []>} : vector<16x128xbf16>, vector<128x128xbf16>, vector<16x128xf32> -> vector<16x128xf32>
    %132 = arith.addf %127, %131 : vector<16x128xf32>
    %133 = vector.extract_strided_slice %96 {offsets = [112, 0], sizes = [16, 128], strides = [1, 1]} : vector<144x128xbf16> to vector<16x128xbf16>
    %c7 = arith.constant 7 : index
    %c0_88 = arith.constant 0 : index
    %c0_89 = arith.constant 0 : index
    %134 = vector.load %arg12[%c7, %c0_88, %c0_89] : memref<36x128x128xbf16, #tpu.memory_space<vmem>>, vector<1x128x128xbf16>
    %135 = vector.shape_cast %134 : vector<1x128x128xbf16> to vector<128x128xbf16>
    %cst_90 = arith.constant dense<0.000000e+00> : vector<16x128xf32>
    %136 = tpu.matmul %133, %135, %cst_90 {dimension_numbers = #tpu.dot_dimension_numbers<[1], [0], [0], [1], [0, 0, 1, 1], [], []>} : vector<16x128xbf16>, vector<128x128xbf16>, vector<16x128xf32> -> vector<16x128xf32>
    %137 = arith.addf %132, %136 : vector<16x128xf32>
    %138 = vector.extract_strided_slice %96 {offsets = [128, 0], sizes = [16, 128], strides = [1, 1]} : vector<144x128xbf16> to vector<16x128xbf16>
    %c8 = arith.constant 8 : index
    %c0_91 = arith.constant 0 : index
    %c0_92 = arith.constant 0 : index
    %139 = vector.load %arg12[%c8, %c0_91, %c0_92] : memref<36x128x128xbf16, #tpu.memory_space<vmem>>, vector<1x128x128xbf16>
    %140 = vector.shape_cast %139 : vector<1x128x128xbf16> to vector<128x128xbf16>
    %cst_93 = arith.constant dense<0.000000e+00> : vector<16x128xf32>
    %141 = tpu.matmul %138, %140, %cst_93 {dimension_numbers = #tpu.dot_dimension_numbers<[1], [0], [0], [1], [0, 0, 1, 1], [], []>} : vector<16x128xbf16>, vector<128x128xbf16>, vector<16x128xf32> -> vector<16x128xf32>
    %142 = arith.addf %137, %141 : vector<16x128xf32>
    %c8_94 = arith.constant 8 : index
    %c0_95 = arith.constant 0 : index
    %143 = vector.load %arg5[%c8_94, %c0_95] : memref<16x256xf32, #tpu.memory_space<vmem>>, vector<1x128xf32>
    %144 = vector.broadcast %143 : vector<1x128xf32> to vector<16x128xf32>
    %145 = arith.addf %142, %144 : vector<16x128xf32>
    %cst_96 = arith.constant 0.000000e+00 : f32
    %146 = vector.broadcast %cst_96 : f32 to vector<16x128xf32>
    %147 = arith.maximumf %145, %146 : vector<16x128xf32>
    %148 = arith.truncf %147 : vector<16x128xf32> to vector<16x128xbf16>
    %cst_97 = arith.constant dense<0.000000e+00> : vector<144x128xf32>
    %149 = tpu.matmul %93, %148, %cst_97 {dimension_numbers = #tpu.dot_dimension_numbers<[1], [0], [0], [1], [0, 0, 1, 1], [], []>} : vector<144x16xbf16>, vector<16x128xbf16>, vector<144x128xf32> -> vector<144x128xf32>
    %150 = arith.truncf %149 : vector<144x128xf32> to vector<144x128xbf16>
    %cst_98 = arith.constant 0.000000e+00 : f32
    %151 = vector.broadcast %cst_98 : f32 to vector<16x128xf32>
    %152 = vector.extract_strided_slice %150 {offsets = [0, 0], sizes = [16, 128], strides = [1, 1]} : vector<144x128xbf16> to vector<16x128xbf16>
    %c9 = arith.constant 9 : index
    %c0_99 = arith.constant 0 : index
    %c0_100 = arith.constant 0 : index
    %153 = vector.load %arg12[%c9, %c0_99, %c0_100] : memref<36x128x128xbf16, #tpu.memory_space<vmem>>, vector<1x128x128xbf16>
    %154 = vector.shape_cast %153 : vector<1x128x128xbf16> to vector<128x128xbf16>
    %cst_101 = arith.constant dense<0.000000e+00> : vector<16x128xf32>
    %155 = tpu.matmul %152, %154, %cst_101 {dimension_numbers = #tpu.dot_dimension_numbers<[1], [0], [0], [1], [0, 0, 1, 1], [], []>} : vector<16x128xbf16>, vector<128x128xbf16>, vector<16x128xf32> -> vector<16x128xf32>
    %156 = arith.addf %151, %155 : vector<16x128xf32>
    %157 = vector.extract_strided_slice %150 {offsets = [16, 0], sizes = [16, 128], strides = [1, 1]} : vector<144x128xbf16> to vector<16x128xbf16>
    %c10 = arith.constant 10 : index
    %c0_102 = arith.constant 0 : index
    %c0_103 = arith.constant 0 : index
    %158 = vector.load %arg12[%c10, %c0_102, %c0_103] : memref<36x128x128xbf16, #tpu.memory_space<vmem>>, vector<1x128x128xbf16>
    %159 = vector.shape_cast %158 : vector<1x128x128xbf16> to vector<128x128xbf16>
    %cst_104 = arith.constant dense<0.000000e+00> : vector<16x128xf32>
    %160 = tpu.matmul %157, %159, %cst_104 {dimension_numbers = #tpu.dot_dimension_numbers<[1], [0], [0], [1], [0, 0, 1, 1], [], []>} : vector<16x128xbf16>, vector<128x128xbf16>, vector<16x128xf32> -> vector<16x128xf32>
    %161 = arith.addf %156, %160 : vector<16x128xf32>
    %162 = vector.extract_strided_slice %150 {offsets = [32, 0], sizes = [16, 128], strides = [1, 1]} : vector<144x128xbf16> to vector<16x128xbf16>
    %c11 = arith.constant 11 : index
    %c0_105 = arith.constant 0 : index
    %c0_106 = arith.constant 0 : index
    %163 = vector.load %arg12[%c11, %c0_105, %c0_106] : memref<36x128x128xbf16, #tpu.memory_space<vmem>>, vector<1x128x128xbf16>
    %164 = vector.shape_cast %163 : vector<1x128x128xbf16> to vector<128x128xbf16>
    %cst_107 = arith.constant dense<0.000000e+00> : vector<16x128xf32>
    %165 = tpu.matmul %162, %164, %cst_107 {dimension_numbers = #tpu.dot_dimension_numbers<[1], [0], [0], [1], [0, 0, 1, 1], [], []>} : vector<16x128xbf16>, vector<128x128xbf16>, vector<16x128xf32> -> vector<16x128xf32>
    %166 = arith.addf %161, %165 : vector<16x128xf32>
    %167 = vector.extract_strided_slice %150 {offsets = [48, 0], sizes = [16, 128], strides = [1, 1]} : vector<144x128xbf16> to vector<16x128xbf16>
    %c12 = arith.constant 12 : index
    %c0_108 = arith.constant 0 : index
    %c0_109 = arith.constant 0 : index
    %168 = vector.load %arg12[%c12, %c0_108, %c0_109] : memref<36x128x128xbf16, #tpu.memory_space<vmem>>, vector<1x128x128xbf16>
    %169 = vector.shape_cast %168 : vector<1x128x128xbf16> to vector<128x128xbf16>
    %cst_110 = arith.constant dense<0.000000e+00> : vector<16x128xf32>
    %170 = tpu.matmul %167, %169, %cst_110 {dimension_numbers = #tpu.dot_dimension_numbers<[1], [0], [0], [1], [0, 0, 1, 1], [], []>} : vector<16x128xbf16>, vector<128x128xbf16>, vector<16x128xf32> -> vector<16x128xf32>
    %171 = arith.addf %166, %170 : vector<16x128xf32>
    %172 = vector.extract_strided_slice %150 {offsets = [64, 0], sizes = [16, 128], strides = [1, 1]} : vector<144x128xbf16> to vector<16x128xbf16>
    %c13 = arith.constant 13 : index
    %c0_111 = arith.constant 0 : index
    %c0_112 = arith.constant 0 : index
    %173 = vector.load %arg12[%c13, %c0_111, %c0_112] : memref<36x128x128xbf16, #tpu.memory_space<vmem>>, vector<1x128x128xbf16>
    %174 = vector.shape_cast %173 : vector<1x128x128xbf16> to vector<128x128xbf16>
    %cst_113 = arith.constant dense<0.000000e+00> : vector<16x128xf32>
    %175 = tpu.matmul %172, %174, %cst_113 {dimension_numbers = #tpu.dot_dimension_numbers<[1], [0], [0], [1], [0, 0, 1, 1], [], []>} : vector<16x128xbf16>, vector<128x128xbf16>, vector<16x128xf32> -> vector<16x128xf32>
    %176 = arith.addf %171, %175 : vector<16x128xf32>
    %177 = vector.extract_strided_slice %150 {offsets = [80, 0], sizes = [16, 128], strides = [1, 1]} : vector<144x128xbf16> to vector<16x128xbf16>
    %c14 = arith.constant 14 : index
    %c0_114 = arith.constant 0 : index
    %c0_115 = arith.constant 0 : index
    %178 = vector.load %arg12[%c14, %c0_114, %c0_115] : memref<36x128x128xbf16, #tpu.memory_space<vmem>>, vector<1x128x128xbf16>
    %179 = vector.shape_cast %178 : vector<1x128x128xbf16> to vector<128x128xbf16>
    %cst_116 = arith.constant dense<0.000000e+00> : vector<16x128xf32>
    %180 = tpu.matmul %177, %179, %cst_116 {dimension_numbers = #tpu.dot_dimension_numbers<[1], [0], [0], [1], [0, 0, 1, 1], [], []>} : vector<16x128xbf16>, vector<128x128xbf16>, vector<16x128xf32> -> vector<16x128xf32>
    %181 = arith.addf %176, %180 : vector<16x128xf32>
    %182 = vector.extract_strided_slice %150 {offsets = [96, 0], sizes = [16, 128], strides = [1, 1]} : vector<144x128xbf16> to vector<16x128xbf16>
    %c15 = arith.constant 15 : index
    %c0_117 = arith.constant 0 : index
    %c0_118 = arith.constant 0 : index
    %183 = vector.load %arg12[%c15, %c0_117, %c0_118] : memref<36x128x128xbf16, #tpu.memory_space<vmem>>, vector<1x128x128xbf16>
    %184 = vector.shape_cast %183 : vector<1x128x128xbf16> to vector<128x128xbf16>
    %cst_119 = arith.constant dense<0.000000e+00> : vector<16x128xf32>
    %185 = tpu.matmul %182, %184, %cst_119 {dimension_numbers = #tpu.dot_dimension_numbers<[1], [0], [0], [1], [0, 0, 1, 1], [], []>} : vector<16x128xbf16>, vector<128x128xbf16>, vector<16x128xf32> -> vector<16x128xf32>
    %186 = arith.addf %181, %185 : vector<16x128xf32>
    %187 = vector.extract_strided_slice %150 {offsets = [112, 0], sizes = [16, 128], strides = [1, 1]} : vector<144x128xbf16> to vector<16x128xbf16>
    %c16_120 = arith.constant 16 : index
    %c0_121 = arith.constant 0 : index
    %c0_122 = arith.constant 0 : index
    %188 = vector.load %arg12[%c16_120, %c0_121, %c0_122] : memref<36x128x128xbf16, #tpu.memory_space<vmem>>, vector<1x128x128xbf16>
    %189 = vector.shape_cast %188 : vector<1x128x128xbf16> to vector<128x128xbf16>
    %cst_123 = arith.constant dense<0.000000e+00> : vector<16x128xf32>
    %190 = tpu.matmul %187, %189, %cst_123 {dimension_numbers = #tpu.dot_dimension_numbers<[1], [0], [0], [1], [0, 0, 1, 1], [], []>} : vector<16x128xbf16>, vector<128x128xbf16>, vector<16x128xf32> -> vector<16x128xf32>
    %191 = arith.addf %186, %190 : vector<16x128xf32>
    %192 = vector.extract_strided_slice %150 {offsets = [128, 0], sizes = [16, 128], strides = [1, 1]} : vector<144x128xbf16> to vector<16x128xbf16>
    %c17 = arith.constant 17 : index
    %c0_124 = arith.constant 0 : index
    %c0_125 = arith.constant 0 : index
    %193 = vector.load %arg12[%c17, %c0_124, %c0_125] : memref<36x128x128xbf16, #tpu.memory_space<vmem>>, vector<1x128x128xbf16>
    %194 = vector.shape_cast %193 : vector<1x128x128xbf16> to vector<128x128xbf16>
    %cst_126 = arith.constant dense<0.000000e+00> : vector<16x128xf32>
    %195 = tpu.matmul %192, %194, %cst_126 {dimension_numbers = #tpu.dot_dimension_numbers<[1], [0], [0], [1], [0, 0, 1, 1], [], []>} : vector<16x128xbf16>, vector<128x128xbf16>, vector<16x128xf32> -> vector<16x128xf32>
    %196 = arith.addf %191, %195 : vector<16x128xf32>
    %c9_127 = arith.constant 9 : index
    %c0_128 = arith.constant 0 : index
    %197 = vector.load %arg5[%c9_127, %c0_128] : memref<16x256xf32, #tpu.memory_space<vmem>>, vector<1x128xf32>
    %198 = vector.broadcast %197 : vector<1x128xf32> to vector<16x128xf32>
    %199 = arith.addf %196, %198 : vector<16x128xf32>
    %cst_129 = arith.constant 0.000000e+00 : f32
    %200 = vector.broadcast %cst_129 : f32 to vector<16x128xf32>
    %201 = arith.maximumf %199, %200 : vector<16x128xf32>
    %202 = arith.truncf %201 : vector<16x128xf32> to vector<16x128xbf16>
    %cst_130 = arith.constant dense<0.000000e+00> : vector<144x128xf32>
    %203 = tpu.matmul %93, %202, %cst_130 {dimension_numbers = #tpu.dot_dimension_numbers<[1], [0], [0], [1], [0, 0, 1, 1], [], []>} : vector<144x16xbf16>, vector<16x128xbf16>, vector<144x128xf32> -> vector<144x128xf32>
    %204 = arith.truncf %203 : vector<144x128xf32> to vector<144x128xbf16>
    %cst_131 = arith.constant 0.000000e+00 : f32
    %205 = vector.broadcast %cst_131 : f32 to vector<16x128xf32>
    %206 = vector.extract_strided_slice %204 {offsets = [0, 0], sizes = [16, 128], strides = [1, 1]} : vector<144x128xbf16> to vector<16x128xbf16>
    %c18 = arith.constant 18 : index
    %c0_132 = arith.constant 0 : index
    %c0_133 = arith.constant 0 : index
    %207 = vector.load %arg12[%c18, %c0_132, %c0_133] : memref<36x128x128xbf16, #tpu.memory_space<vmem>>, vector<1x128x128xbf16>
    %208 = vector.shape_cast %207 : vector<1x128x128xbf16> to vector<128x128xbf16>
    %cst_134 = arith.constant dense<0.000000e+00> : vector<16x128xf32>
    %209 = tpu.matmul %206, %208, %cst_134 {dimension_numbers = #tpu.dot_dimension_numbers<[1], [0], [0], [1], [0, 0, 1, 1], [], []>} : vector<16x128xbf16>, vector<128x128xbf16>, vector<16x128xf32> -> vector<16x128xf32>
    %210 = arith.addf %205, %209 : vector<16x128xf32>
    %211 = vector.extract_strided_slice %204 {offsets = [16, 0], sizes = [16, 128], strides = [1, 1]} : vector<144x128xbf16> to vector<16x128xbf16>
    %c19 = arith.constant 19 : index
    %c0_135 = arith.constant 0 : index
    %c0_136 = arith.constant 0 : index
    %212 = vector.load %arg12[%c19, %c0_135, %c0_136] : memref<36x128x128xbf16, #tpu.memory_space<vmem>>, vector<1x128x128xbf16>
    %213 = vector.shape_cast %212 : vector<1x128x128xbf16> to vector<128x128xbf16>
    %cst_137 = arith.constant dense<0.000000e+00> : vector<16x128xf32>
    %214 = tpu.matmul %211, %213, %cst_137 {dimension_numbers = #tpu.dot_dimension_numbers<[1], [0], [0], [1], [0, 0, 1, 1], [], []>} : vector<16x128xbf16>, vector<128x128xbf16>, vector<16x128xf32> -> vector<16x128xf32>
    %215 = arith.addf %210, %214 : vector<16x128xf32>
    %216 = vector.extract_strided_slice %204 {offsets = [32, 0], sizes = [16, 128], strides = [1, 1]} : vector<144x128xbf16> to vector<16x128xbf16>
    %c20 = arith.constant 20 : index
    %c0_138 = arith.constant 0 : index
    %c0_139 = arith.constant 0 : index
    %217 = vector.load %arg12[%c20, %c0_138, %c0_139] : memref<36x128x128xbf16, #tpu.memory_space<vmem>>, vector<1x128x128xbf16>
    %218 = vector.shape_cast %217 : vector<1x128x128xbf16> to vector<128x128xbf16>
    %cst_140 = arith.constant dense<0.000000e+00> : vector<16x128xf32>
    %219 = tpu.matmul %216, %218, %cst_140 {dimension_numbers = #tpu.dot_dimension_numbers<[1], [0], [0], [1], [0, 0, 1, 1], [], []>} : vector<16x128xbf16>, vector<128x128xbf16>, vector<16x128xf32> -> vector<16x128xf32>
    %220 = arith.addf %215, %219 : vector<16x128xf32>
    %221 = vector.extract_strided_slice %204 {offsets = [48, 0], sizes = [16, 128], strides = [1, 1]} : vector<144x128xbf16> to vector<16x128xbf16>
    %c21 = arith.constant 21 : index
    %c0_141 = arith.constant 0 : index
    %c0_142 = arith.constant 0 : index
    %222 = vector.load %arg12[%c21, %c0_141, %c0_142] : memref<36x128x128xbf16, #tpu.memory_space<vmem>>, vector<1x128x128xbf16>
    %223 = vector.shape_cast %222 : vector<1x128x128xbf16> to vector<128x128xbf16>
    %cst_143 = arith.constant dense<0.000000e+00> : vector<16x128xf32>
    %224 = tpu.matmul %221, %223, %cst_143 {dimension_numbers = #tpu.dot_dimension_numbers<[1], [0], [0], [1], [0, 0, 1, 1], [], []>} : vector<16x128xbf16>, vector<128x128xbf16>, vector<16x128xf32> -> vector<16x128xf32>
    %225 = arith.addf %220, %224 : vector<16x128xf32>
    %226 = vector.extract_strided_slice %204 {offsets = [64, 0], sizes = [16, 128], strides = [1, 1]} : vector<144x128xbf16> to vector<16x128xbf16>
    %c22 = arith.constant 22 : index
    %c0_144 = arith.constant 0 : index
    %c0_145 = arith.constant 0 : index
    %227 = vector.load %arg12[%c22, %c0_144, %c0_145] : memref<36x128x128xbf16, #tpu.memory_space<vmem>>, vector<1x128x128xbf16>
    %228 = vector.shape_cast %227 : vector<1x128x128xbf16> to vector<128x128xbf16>
    %cst_146 = arith.constant dense<0.000000e+00> : vector<16x128xf32>
    %229 = tpu.matmul %226, %228, %cst_146 {dimension_numbers = #tpu.dot_dimension_numbers<[1], [0], [0], [1], [0, 0, 1, 1], [], []>} : vector<16x128xbf16>, vector<128x128xbf16>, vector<16x128xf32> -> vector<16x128xf32>
    %230 = arith.addf %225, %229 : vector<16x128xf32>
    %231 = vector.extract_strided_slice %204 {offsets = [80, 0], sizes = [16, 128], strides = [1, 1]} : vector<144x128xbf16> to vector<16x128xbf16>
    %c23 = arith.constant 23 : index
    %c0_147 = arith.constant 0 : index
    %c0_148 = arith.constant 0 : index
    %232 = vector.load %arg12[%c23, %c0_147, %c0_148] : memref<36x128x128xbf16, #tpu.memory_space<vmem>>, vector<1x128x128xbf16>
    %233 = vector.shape_cast %232 : vector<1x128x128xbf16> to vector<128x128xbf16>
    %cst_149 = arith.constant dense<0.000000e+00> : vector<16x128xf32>
    %234 = tpu.matmul %231, %233, %cst_149 {dimension_numbers = #tpu.dot_dimension_numbers<[1], [0], [0], [1], [0, 0, 1, 1], [], []>} : vector<16x128xbf16>, vector<128x128xbf16>, vector<16x128xf32> -> vector<16x128xf32>
    %235 = arith.addf %230, %234 : vector<16x128xf32>
    %236 = vector.extract_strided_slice %204 {offsets = [96, 0], sizes = [16, 128], strides = [1, 1]} : vector<144x128xbf16> to vector<16x128xbf16>
    %c24 = arith.constant 24 : index
    %c0_150 = arith.constant 0 : index
    %c0_151 = arith.constant 0 : index
    %237 = vector.load %arg12[%c24, %c0_150, %c0_151] : memref<36x128x128xbf16, #tpu.memory_space<vmem>>, vector<1x128x128xbf16>
    %238 = vector.shape_cast %237 : vector<1x128x128xbf16> to vector<128x128xbf16>
    %cst_152 = arith.constant dense<0.000000e+00> : vector<16x128xf32>
    %239 = tpu.matmul %236, %238, %cst_152 {dimension_numbers = #tpu.dot_dimension_numbers<[1], [0], [0], [1], [0, 0, 1, 1], [], []>} : vector<16x128xbf16>, vector<128x128xbf16>, vector<16x128xf32> -> vector<16x128xf32>
    %240 = arith.addf %235, %239 : vector<16x128xf32>
    %241 = vector.extract_strided_slice %204 {offsets = [112, 0], sizes = [16, 128], strides = [1, 1]} : vector<144x128xbf16> to vector<16x128xbf16>
    %c25 = arith.constant 25 : index
    %c0_153 = arith.constant 0 : index
    %c0_154 = arith.constant 0 : index
    %242 = vector.load %arg12[%c25, %c0_153, %c0_154] : memref<36x128x128xbf16, #tpu.memory_space<vmem>>, vector<1x128x128xbf16>
    %243 = vector.shape_cast %242 : vector<1x128x128xbf16> to vector<128x128xbf16>
    %cst_155 = arith.constant dense<0.000000e+00> : vector<16x128xf32>
    %244 = tpu.matmul %241, %243, %cst_155 {dimension_numbers = #tpu.dot_dimension_numbers<[1], [0], [0], [1], [0, 0, 1, 1], [], []>} : vector<16x128xbf16>, vector<128x128xbf16>, vector<16x128xf32> -> vector<16x128xf32>
    %245 = arith.addf %240, %244 : vector<16x128xf32>
    %246 = vector.extract_strided_slice %204 {offsets = [128, 0], sizes = [16, 128], strides = [1, 1]} : vector<144x128xbf16> to vector<16x128xbf16>
    %c26 = arith.constant 26 : index
    %c0_156 = arith.constant 0 : index
    %c0_157 = arith.constant 0 : index
    %247 = vector.load %arg12[%c26, %c0_156, %c0_157] : memref<36x128x128xbf16, #tpu.memory_space<vmem>>, vector<1x128x128xbf16>
    %248 = vector.shape_cast %247 : vector<1x128x128xbf16> to vector<128x128xbf16>
    %cst_158 = arith.constant dense<0.000000e+00> : vector<16x128xf32>
    %249 = tpu.matmul %246, %248, %cst_158 {dimension_numbers = #tpu.dot_dimension_numbers<[1], [0], [0], [1], [0, 0, 1, 1], [], []>} : vector<16x128xbf16>, vector<128x128xbf16>, vector<16x128xf32> -> vector<16x128xf32>
    %250 = arith.addf %245, %249 : vector<16x128xf32>
    %c10_159 = arith.constant 10 : index
    %c0_160 = arith.constant 0 : index
    %251 = vector.load %arg5[%c10_159, %c0_160] : memref<16x256xf32, #tpu.memory_space<vmem>>, vector<1x128xf32>
    %252 = vector.broadcast %251 : vector<1x128xf32> to vector<16x128xf32>
    %253 = arith.addf %250, %252 : vector<16x128xf32>
    %cst_161 = arith.constant 0.000000e+00 : f32
    %254 = vector.broadcast %cst_161 : f32 to vector<16x128xf32>
    %255 = arith.maximumf %253, %254 : vector<16x128xf32>
    %256 = arith.truncf %255 : vector<16x128xf32> to vector<16x128xbf16>
    %cst_162 = arith.constant dense<0.000000e+00> : vector<144x128xf32>
    %257 = tpu.matmul %93, %256, %cst_162 {dimension_numbers = #tpu.dot_dimension_numbers<[1], [0], [0], [1], [0, 0, 1, 1], [], []>} : vector<144x16xbf16>, vector<16x128xbf16>, vector<144x128xf32> -> vector<144x128xf32>
    %258 = arith.truncf %257 : vector<144x128xf32> to vector<144x128xbf16>
    %cst_163 = arith.constant 0.000000e+00 : f32
    %259 = vector.broadcast %cst_163 : f32 to vector<16x128xf32>
    %260 = vector.extract_strided_slice %258 {offsets = [0, 0], sizes = [16, 128], strides = [1, 1]} : vector<144x128xbf16> to vector<16x128xbf16>
    %c27 = arith.constant 27 : index
    %c0_164 = arith.constant 0 : index
    %c0_165 = arith.constant 0 : index
    %261 = vector.load %arg12[%c27, %c0_164, %c0_165] : memref<36x128x128xbf16, #tpu.memory_space<vmem>>, vector<1x128x128xbf16>
    %262 = vector.shape_cast %261 : vector<1x128x128xbf16> to vector<128x128xbf16>
    %cst_166 = arith.constant dense<0.000000e+00> : vector<16x128xf32>
    %263 = tpu.matmul %260, %262, %cst_166 {dimension_numbers = #tpu.dot_dimension_numbers<[1], [0], [0], [1], [0, 0, 1, 1], [], []>} : vector<16x128xbf16>, vector<128x128xbf16>, vector<16x128xf32> -> vector<16x128xf32>
    %264 = arith.addf %259, %263 : vector<16x128xf32>
    %265 = vector.extract_strided_slice %258 {offsets = [16, 0], sizes = [16, 128], strides = [1, 1]} : vector<144x128xbf16> to vector<16x128xbf16>
    %c28 = arith.constant 28 : index
    %c0_167 = arith.constant 0 : index
    %c0_168 = arith.constant 0 : index
    %266 = vector.load %arg12[%c28, %c0_167, %c0_168] : memref<36x128x128xbf16, #tpu.memory_space<vmem>>, vector<1x128x128xbf16>
    %267 = vector.shape_cast %266 : vector<1x128x128xbf16> to vector<128x128xbf16>
    %cst_169 = arith.constant dense<0.000000e+00> : vector<16x128xf32>
    %268 = tpu.matmul %265, %267, %cst_169 {dimension_numbers = #tpu.dot_dimension_numbers<[1], [0], [0], [1], [0, 0, 1, 1], [], []>} : vector<16x128xbf16>, vector<128x128xbf16>, vector<16x128xf32> -> vector<16x128xf32>
    %269 = arith.addf %264, %268 : vector<16x128xf32>
    %270 = vector.extract_strided_slice %258 {offsets = [32, 0], sizes = [16, 128], strides = [1, 1]} : vector<144x128xbf16> to vector<16x128xbf16>
    %c29 = arith.constant 29 : index
    %c0_170 = arith.constant 0 : index
    %c0_171 = arith.constant 0 : index
    %271 = vector.load %arg12[%c29, %c0_170, %c0_171] : memref<36x128x128xbf16, #tpu.memory_space<vmem>>, vector<1x128x128xbf16>
    %272 = vector.shape_cast %271 : vector<1x128x128xbf16> to vector<128x128xbf16>
    %cst_172 = arith.constant dense<0.000000e+00> : vector<16x128xf32>
    %273 = tpu.matmul %270, %272, %cst_172 {dimension_numbers = #tpu.dot_dimension_numbers<[1], [0], [0], [1], [0, 0, 1, 1], [], []>} : vector<16x128xbf16>, vector<128x128xbf16>, vector<16x128xf32> -> vector<16x128xf32>
    %274 = arith.addf %269, %273 : vector<16x128xf32>
    %275 = vector.extract_strided_slice %258 {offsets = [48, 0], sizes = [16, 128], strides = [1, 1]} : vector<144x128xbf16> to vector<16x128xbf16>
    %c30 = arith.constant 30 : index
    %c0_173 = arith.constant 0 : index
    %c0_174 = arith.constant 0 : index
    %276 = vector.load %arg12[%c30, %c0_173, %c0_174] : memref<36x128x128xbf16, #tpu.memory_space<vmem>>, vector<1x128x128xbf16>
    %277 = vector.shape_cast %276 : vector<1x128x128xbf16> to vector<128x128xbf16>
    %cst_175 = arith.constant dense<0.000000e+00> : vector<16x128xf32>
    %278 = tpu.matmul %275, %277, %cst_175 {dimension_numbers = #tpu.dot_dimension_numbers<[1], [0], [0], [1], [0, 0, 1, 1], [], []>} : vector<16x128xbf16>, vector<128x128xbf16>, vector<16x128xf32> -> vector<16x128xf32>
    %279 = arith.addf %274, %278 : vector<16x128xf32>
    %280 = vector.extract_strided_slice %258 {offsets = [64, 0], sizes = [16, 128], strides = [1, 1]} : vector<144x128xbf16> to vector<16x128xbf16>
    %c31 = arith.constant 31 : index
    %c0_176 = arith.constant 0 : index
    %c0_177 = arith.constant 0 : index
    %281 = vector.load %arg12[%c31, %c0_176, %c0_177] : memref<36x128x128xbf16, #tpu.memory_space<vmem>>, vector<1x128x128xbf16>
    %282 = vector.shape_cast %281 : vector<1x128x128xbf16> to vector<128x128xbf16>
    %cst_178 = arith.constant dense<0.000000e+00> : vector<16x128xf32>
    %283 = tpu.matmul %280, %282, %cst_178 {dimension_numbers = #tpu.dot_dimension_numbers<[1], [0], [0], [1], [0, 0, 1, 1], [], []>} : vector<16x128xbf16>, vector<128x128xbf16>, vector<16x128xf32> -> vector<16x128xf32>
    %284 = arith.addf %279, %283 : vector<16x128xf32>
    %285 = vector.extract_strided_slice %258 {offsets = [80, 0], sizes = [16, 128], strides = [1, 1]} : vector<144x128xbf16> to vector<16x128xbf16>
    %c32_179 = arith.constant 32 : index
    %c0_180 = arith.constant 0 : index
    %c0_181 = arith.constant 0 : index
    %286 = vector.load %arg12[%c32_179, %c0_180, %c0_181] : memref<36x128x128xbf16, #tpu.memory_space<vmem>>, vector<1x128x128xbf16>
    %287 = vector.shape_cast %286 : vector<1x128x128xbf16> to vector<128x128xbf16>
    %cst_182 = arith.constant dense<0.000000e+00> : vector<16x128xf32>
    %288 = tpu.matmul %285, %287, %cst_182 {dimension_numbers = #tpu.dot_dimension_numbers<[1], [0], [0], [1], [0, 0, 1, 1], [], []>} : vector<16x128xbf16>, vector<128x128xbf16>, vector<16x128xf32> -> vector<16x128xf32>
    %289 = arith.addf %284, %288 : vector<16x128xf32>
    %290 = vector.extract_strided_slice %258 {offsets = [96, 0], sizes = [16, 128], strides = [1, 1]} : vector<144x128xbf16> to vector<16x128xbf16>
    %c33 = arith.constant 33 : index
    %c0_183 = arith.constant 0 : index
    %c0_184 = arith.constant 0 : index
    %291 = vector.load %arg12[%c33, %c0_183, %c0_184] : memref<36x128x128xbf16, #tpu.memory_space<vmem>>, vector<1x128x128xbf16>
    %292 = vector.shape_cast %291 : vector<1x128x128xbf16> to vector<128x128xbf16>
    %cst_185 = arith.constant dense<0.000000e+00> : vector<16x128xf32>
    %293 = tpu.matmul %290, %292, %cst_185 {dimension_numbers = #tpu.dot_dimension_numbers<[1], [0], [0], [1], [0, 0, 1, 1], [], []>} : vector<16x128xbf16>, vector<128x128xbf16>, vector<16x128xf32> -> vector<16x128xf32>
    %294 = arith.addf %289, %293 : vector<16x128xf32>
    %295 = vector.extract_strided_slice %258 {offsets = [112, 0], sizes = [16, 128], strides = [1, 1]} : vector<144x128xbf16> to vector<16x128xbf16>
    %c34 = arith.constant 34 : index
    %c0_186 = arith.constant 0 : index
    %c0_187 = arith.constant 0 : index
    %296 = vector.load %arg12[%c34, %c0_186, %c0_187] : memref<36x128x128xbf16, #tpu.memory_space<vmem>>, vector<1x128x128xbf16>
    %297 = vector.shape_cast %296 : vector<1x128x128xbf16> to vector<128x128xbf16>
    %cst_188 = arith.constant dense<0.000000e+00> : vector<16x128xf32>
    %298 = tpu.matmul %295, %297, %cst_188 {dimension_numbers = #tpu.dot_dimension_numbers<[1], [0], [0], [1], [0, 0, 1, 1], [], []>} : vector<16x128xbf16>, vector<128x128xbf16>, vector<16x128xf32> -> vector<16x128xf32>
    %299 = arith.addf %294, %298 : vector<16x128xf32>
    %300 = vector.extract_strided_slice %258 {offsets = [128, 0], sizes = [16, 128], strides = [1, 1]} : vector<144x128xbf16> to vector<16x128xbf16>
    %c35 = arith.constant 35 : index
    %c0_189 = arith.constant 0 : index
    %c0_190 = arith.constant 0 : index
    %301 = vector.load %arg12[%c35, %c0_189, %c0_190] : memref<36x128x128xbf16, #tpu.memory_space<vmem>>, vector<1x128x128xbf16>
    %302 = vector.shape_cast %301 : vector<1x128x128xbf16> to vector<128x128xbf16>
    %cst_191 = arith.constant dense<0.000000e+00> : vector<16x128xf32>
    %303 = tpu.matmul %300, %302, %cst_191 {dimension_numbers = #tpu.dot_dimension_numbers<[1], [0], [0], [1], [0, 0, 1, 1], [], []>} : vector<16x128xbf16>, vector<128x128xbf16>, vector<16x128xf32> -> vector<16x128xf32>
    %304 = arith.addf %299, %303 : vector<16x128xf32>
    %c11_192 = arith.constant 11 : index
    %c0_193 = arith.constant 0 : index
    %305 = vector.load %arg5[%c11_192, %c0_193] : memref<16x256xf32, #tpu.memory_space<vmem>>, vector<1x128xf32>
    %306 = vector.broadcast %305 : vector<1x128xf32> to vector<16x128xf32>
    %307 = arith.addf %304, %306 : vector<16x128xf32>
    %cst_194 = arith.constant 0.000000e+00 : f32
    %308 = vector.broadcast %cst_194 : f32 to vector<16x128xf32>
    %309 = arith.maximumf %307, %308 : vector<16x128xf32>
    %c8_195 = arith.constant 8 : index
    %c0_196 = arith.constant 0 : index
    %310 = vector.load %arg4[%c8_195, %c0_196] : memref<16x128xf32, #tpu.memory_space<vmem>>, vector<3x128xf32>
    %cst_197 = arith.constant dense<0.000000e+00> : vector<3x16xf32>
    %311 = tpu.matmul %310, %309, %cst_197 {dimension_numbers = #tpu.dot_dimension_numbers<[1], [1], [0], [0], [0, 0, 1, 0], [], []>} : vector<3x128xf32>, vector<16x128xf32>, vector<3x16xf32> -> vector<3x16xf32>
    %c4_198 = arith.constant 4 : index
    %c0_199 = arith.constant 0 : index
    %312 = vector.load %arg4[%c4_198, %c0_199] : memref<16x128xf32, #tpu.memory_space<vmem>>, vector<3x16xf32>
    %313 = arith.addf %311, %312 : vector<3x16xf32>
    %314 = vector.extract_strided_slice %313 {offsets = [1, 0], sizes = [2, 16], strides = [1, 1]} : vector<3x16xf32> to vector<2x16xf32>
    %cst_200 = arith.constant dense<0xFF800000> : vector<2xf32>
    %315 = vector.multi_reduction <maximumf>, %314, %cst_200 [1] : vector<2x16xf32> to vector<2xf32>
    %316 = vector.shape_cast %315 : vector<2xf32> to vector<2x1xf32>
    %317 = vector.broadcast %316 : vector<2x1xf32> to vector<2x16xf32>
    %318 = arith.subf %314, %317 : vector<2x16xf32>
    %319 = math.exp %318 : vector<2x16xf32>
    %cst_201 = arith.constant dense<0.000000e+00> : vector<2xf32>
    %320 = vector.multi_reduction <add>, %319, %cst_201 [1] : vector<2x16xf32> to vector<2xf32>
    %321 = vector.shape_cast %320 : vector<2xf32> to vector<2x1xf32>
    %322 = vector.broadcast %321 : vector<2x1xf32> to vector<2x16xf32>
    %323 = arith.divf %319, %322 : vector<2x16xf32>
    %c1_202 = arith.constant 1 : index
    %c0_203 = arith.constant 0 : index
    %324 = vector.load %arg4[%c1_202, %c0_203] : memref<16x128xf32, #tpu.memory_space<vmem>>, vector<1x16xf32>
    %325 = vector.broadcast %324 : vector<1x16xf32> to vector<2x16xf32>
    %326 = arith.mulf %323, %325 : vector<2x16xf32>
    %cst_204 = arith.constant dense<0.000000e+00> : vector<2xf32>
    %327 = vector.multi_reduction <add>, %326, %cst_204 [1] : vector<2x16xf32> to vector<2xf32>
    %328 = vector.shape_cast %327 : vector<2xf32> to vector<2x1xf32>
    %c2_205 = arith.constant 2 : index
    %c0_206 = arith.constant 0 : index
    %329 = vector.load %arg4[%c2_205, %c0_206] : memref<16x128xf32, #tpu.memory_space<vmem>>, vector<1x16xf32>
    %330 = vector.broadcast %329 : vector<1x16xf32> to vector<2x16xf32>
    %331 = arith.mulf %323, %330 : vector<2x16xf32>
    %cst_207 = arith.constant dense<0.000000e+00> : vector<2xf32>
    %332 = vector.multi_reduction <add>, %331, %cst_207 [1] : vector<2x16xf32> to vector<2xf32>
    %333 = vector.shape_cast %332 : vector<2xf32> to vector<2x1xf32>
    %cst_208 = arith.constant 0.000000e+00 : f32
    %334 = vector.broadcast %cst_208 : f32 to vector<8x128xf32>
    %c0_209 = arith.constant 0 : index
    %c0_210 = arith.constant 0 : index
    %335 = vector.load %arg13[%c0_209, %c0_210] : memref<8x128xf32, #tpu.memory_space<vmem>>, vector<8x128xf32>
    tpu.vector_store %arg13[%c0_209, %c0_210], %334 {strides = array<i32>} : memref<8x128xf32, #tpu.memory_space<vmem>>, vector<8x128xf32>,
    %336 = vector.extract_strided_slice %313 {offsets = [0, 0], sizes = [1, 16], strides = [1, 1]} : vector<3x16xf32> to vector<1x16xf32>
    %c0_211 = arith.constant 0 : index
    %c0_212 = arith.constant 0 : index
    %337 = vector.load %arg13[%c0_211, %c0_212] : memref<8x128xf32, #tpu.memory_space<vmem>>, vector<1x16xf32>
    tpu.vector_store %arg13[%c0_211, %c0_212], %336 {strides = array<i32>} : memref<8x128xf32, #tpu.memory_space<vmem>>, vector<1x16xf32>,
    %338 = tpu.concatenate %328, %333 in 1 : vector<2x1xf32>, vector<2x1xf32> -> vector<2x2xf32>
    %c1_213 = arith.constant 1 : index
    %c0_214 = arith.constant 0 : index
    %339 = vector.load %arg13[%c1_213, %c0_214] : memref<8x128xf32, #tpu.memory_space<vmem>>, vector<2x2xf32>
    tpu.vector_store %arg13[%c1_213, %c0_214], %338 {strides = array<i32>} : memref<8x128xf32, #tpu.memory_space<vmem>>, vector<2x2xf32>,
    return
  }
}

</mosaic_0001>

<llo_original>
// kernel: squeeze.17
$region0: #{squeeze.17}
  %s0 = inlined_call_operand.vmem [shape: f32[16], index: 0, kind: input, shape index: {}]
  %s1 = inlined_call_operand.hbm [shape: f32[1,1,4,4], index: 1, kind: output, shape index: {}]
  $region1: #{squeeze.17} parent=0
    #allocation0 [shape = 'u8[2048]{0}', space=vmem, size = 0x800, scoped, tag = 'operand span for operand 1']
    #allocation1 [shape = 's32[1]{0}', space=sflag, size = 0x4, scoped, tag = 'scoped memory for squeeze.17']
    #allocation2 [shape = 'u8[4096]{0}', space=vmem, size = 0x1000, scoped, tag = 'scoped mem for output reshape']
    #allocation3 [shape = 'u8[4096]{0}', space=vmem, size = 0x1000, scoped, tag = 'scoped mem for input reshape']
    %2 = vsyncpa [#allocation1], 0
    %s4 = sshllo.u32 0, 1
    %v5 = vld [vmem:[%s0] sm:%s4]
    %6 = vst [vmem:[#allocation3] sm:%s4] %v5
    %v7 = vld [vmem:[#allocation3] sm:$0x1]
    %vm8 = vcmask 31744
    %9 = vst.msk [vmem:[#allocation2] sm:$0x1] %vm8, %v7
    %v10 = vld [vmem:[#allocation3] sm:$0x1]
    %11 = vrot.lane.b32.xlu0 %v10, 124
    %v12 = vpop.permute.xlu0 %11
    %vm13 = vcmask 31744
    %s14 = scalar_lea.vmem [#allocation2], 1
    %15 = vst.msk [vmem:[%s14] sm:$0x1] %vm13, %v12
    %v16 = vld [vmem:[#allocation3] sm:$0x1]
    %17 = vrot.lane.b32.xlu0 %v16, 120
    %v18 = vpop.permute.xlu0 %17
    %vm19 = vcmask 31744
    %s20 = scalar_lea.vmem [#allocation2], 2
    %21 = vst.msk [vmem:[%s20] sm:$0x1] %vm19, %v18
    %v22 = vld [vmem:[#allocation3] sm:$0x1]
    %23 = vrot.lane.b32.xlu0 %v22, 116
    %v24 = vpop.permute.xlu0 %23
    %vm25 = vcmask 31744
    %s26 = scalar_lea.vmem [#allocation2], 3
    %27 = vst.msk [vmem:[%s26] sm:$0x1] %vm25, %v24
    %s29 = sshllo.u32 0, 4
    %v31 = vld [vmem:[#allocation2] sm:%s29]
    %s32 = sshllo.u32 0, 4
    %33 = vst [vmem:[#allocation0] sm:%s32] %v31
    %s35 = ssub.s32 64, 64
    %36 = vsyncadd [#allocation1], %s35
    %s38 = sshll.u32 [#allocation0], 4
    %s39 = int_to_ptr.vmem [resolvable:$true] %s38
    %41 = dma.vmem_to_hbm [thread:$0]  %s39, 64, %s1, [#allocation1]
    %42 = dma.done [#allocation1], 64
    %43 = vsyncpa [#allocation1], 1

// kernel: promptvt_forward.1
$region0: #{promptvt_forward.1}
  #allocation0 [shape = 'u32[]', space=smem, size = 0x4, offset = 0x4, fixed_abs, tag = 'smem constant byte address 0x4 - core index']
  #allocation1 [shape = 'u32[144,128]{1,0:T(1,128)}', space=vmem, size = 0x12000, scoped, tag = 'internal scratch']
  #allocation2 [shape = 'f32[104,128]{1,0:T(8,128)}', space=vmem, size = 0xd000, scoped, tag = 'scratch operand']
  %s0 = inlined_call_operand.vmem [shape: bf16[64,192], index: 0, kind: input, shape index: {}]
  %s1 = inlined_call_operand.vmem [shape: bf16[16,768], index: 1, kind: input, shape index: {}]
  %s2 = inlined_call_operand.vmem [shape: f32[24,128], index: 2, kind: input, shape index: {}]
  %s3 = inlined_call_operand.vmem [shape: f32[104,128], index: 3, kind: input, shape index: {}]
  %s4 = inlined_call_operand.vmem [shape: f32[16,128], index: 4, kind: input, shape index: {}]
  %s5 = inlined_call_operand.vmem [shape: f32[16,256], index: 5, kind: input, shape index: {}]
  %s6 = inlined_call_operand.vmem [shape: bf16[144,16], index: 6, kind: input, shape index: {}]
  %s7 = inlined_call_operand.vmem [shape: bf16[192,32], index: 7, kind: input, shape index: {}]
  %s8 = inlined_call_operand.vmem [shape: bf16[768,64], index: 8, kind: input, shape index: {}]
  %s9 = inlined_call_operand.vmem [shape: bf16[96,128], index: 9, kind: input, shape index: {}]
  %s10 = inlined_call_operand.vmem [shape: bf16[128,768], index: 10, kind: input, shape index: {}]
  %s11 = inlined_call_operand.vmem [shape: bf16[256,128], index: 11, kind: input, shape index: {}]
  %s12 = inlined_call_operand.vmem [shape: bf16[36,128,128], index: 12, kind: input, shape index: {}]
  %s13 = inlined_call_operand.vmem [shape: f32[8,128], index: 13, kind: output, shape index: {}]
  %s14 = sld [smem:[#allocation0]]
  $region62: #{promptvt_forward.1} parent=0
    _
  %s16 = ssub.s32 1, %s14
  %s17 = scalar_select 0, %s16, %s14
  // Predicated region
  $region2: #{promptvt_forward.1} parent=0 // pred_check
    _
  $region3: #{promptvt_forward.1} parent=0 // pred_check_branch
    %19 = sbr.rel (0) target = $region5
  $region4: #{promptvt_forward.1} parent=0 // pred_region
    _
  $region5: #{promptvt_forward.1} parent=0 // pred_fallthru
    _
  // Predicated region
  $region6: #{promptvt_forward.1} parent=0 // pred_check
    _
  $region7: #{promptvt_forward.1} parent=0 // pred_check_branch
    %21 = sbr.rel (0) target = $region9
  $region8: #{promptvt_forward.1} parent=0 // pred_region
    _
  $region9: #{promptvt_forward.1} parent=0 // pred_fallthru
    _
  // Predicated region
  $region10: #{promptvt_forward.1} parent=0 // pred_check
    _
  $region11: #{promptvt_forward.1} parent=0 // pred_check_branch
    %23 = sbr.rel (0) target = $region13
  $region12: #{promptvt_forward.1} parent=0 // pred_region
    _
  $region13: #{promptvt_forward.1} parent=0 // pred_fallthru
    _
  // Predicated region
  $region14: #{promptvt_forward.1} parent=0 // pred_check
    _
  $region15: #{promptvt_forward.1} parent=0 // pred_check_branch
    %25 = sbr.rel (0) target = $region17
  $region16: #{promptvt_forward.1} parent=0 // pred_region
    _
  $region17: #{promptvt_forward.1} parent=0 // pred_fallthru
    _
  // Predicated region
  $region18: #{promptvt_forward.1} parent=0 // pred_check
    _
  $region19: #{promptvt_forward.1} parent=0 // pred_check_branch
    %27 = sbr.rel (0) target = $region21
  $region20: #{promptvt_forward.1} parent=0 // pred_region
    _
  $region21: #{promptvt_forward.1} parent=0 // pred_fallthru
    _
  // Predicated region
  $region22: #{promptvt_forward.1} parent=0 // pred_check
    _
  $region23: #{promptvt_forward.1} parent=0 // pred_check_branch
    %29 = sbr.rel (0) target = $region25
  $region24: #{promptvt_forward.1} parent=0 // pred_region
    _
  $region25: #{promptvt_forward.1} parent=0 // pred_fallthru
    _
  // Predicated region
  $region26: #{promptvt_forward.1} parent=0 // pred_check
    _
  $region27: #{promptvt_forward.1} parent=0 // pred_check_branch
    %31 = sbr.rel (0) target = $region29
  $region28: #{promptvt_forward.1} parent=0 // pred_region
    _
  $region29: #{promptvt_forward.1} parent=0 // pred_fallthru
    _
  // Predicated region
  $region30: #{promptvt_forward.1} parent=0 // pred_check
    _
  $region31: #{promptvt_forward.1} parent=0 // pred_check_branch
    %33 = sbr.rel (0) target = $region33
  $region32: #{promptvt_forward.1} parent=0 // pred_region
    _
  $region33: #{promptvt_forward.1} parent=0 // pred_fallthru
    _
  // Predicated region
  $region34: #{promptvt_forward.1} parent=0 // pred_check
    _
  $region35: #{promptvt_forward.1} parent=0 // pred_check_branch
    %35 = sbr.rel (0) target = $region37
  $region36: #{promptvt_forward.1} parent=0 // pred_region
    _
  $region37: #{promptvt_forward.1} parent=0 // pred_fallthru
    _
  // Predicated region
  $region38: #{promptvt_forward.1} parent=0 // pred_check
    _
  $region39: #{promptvt_forward.1} parent=0 // pred_check_branch
    %37 = sbr.rel (0) target = $region41
  $region40: #{promptvt_forward.1} parent=0 // pred_region
    _
  $region41: #{promptvt_forward.1} parent=0 // pred_fallthru
    _
  // Predicated region
  $region42: #{promptvt_forward.1} parent=0 // pred_check
    _
  $region43: #{promptvt_forward.1} parent=0 // pred_check_branch
    %39 = sbr.rel (0) target = $region45
  $region44: #{promptvt_forward.1} parent=0 // pred_region
    _
  $region45: #{promptvt_forward.1} parent=0 // pred_fallthru
    _
  // Predicated region
  $region46: #{promptvt_forward.1} parent=0 // pred_check
    _
  $region47: #{promptvt_forward.1} parent=0 // pred_check_branch
    %41 = sbr.rel (0) target = $region49
  $region48: #{promptvt_forward.1} parent=0 // pred_region
    _
  $region49: #{promptvt_forward.1} parent=0 // pred_fallthru
    _
  // Predicated region
  $region50: #{promptvt_forward.1} parent=0 // pred_check
    _
  $region51: #{promptvt_forward.1} parent=0 // pred_check_branch
    %43 = sbr.rel (0) target = $region53
  $region52: #{promptvt_forward.1} parent=0 // pred_region
    _
  $region53: #{promptvt_forward.1} parent=0 // pred_fallthru
    _
  %v45 = vld [vmem:[%s5] ss:$8 sm:$0x3]
  %s46 = scalar_lea.vmem %s5, 1
  %v47 = vld [vmem:[%s46] ss:$8 sm:$0x3]
  %v48 = vld [vmem:[%s5 + $0x2] ss:$0 sm:$0xff]
  %v49 = vld [vmem:[%s5 + $0xa] ss:$0 sm:$0xff]
  %v50 = vld [vmem:[%s5 + $0x3] ss:$0 sm:$0xff]
  %v51 = vld [vmem:[%s5 + $0xb] ss:$0 sm:$0xff]
  %v52 = vld [vmem:[%s5 + $0x4] ss:$0 sm:$0xff]
  %v53 = vld [vmem:[%s5 + $0x5] ss:$0 sm:$0xff]
  %v54 = vld [vmem:[%s5 + $0x6] ss:$0 sm:$0xff]
  %v55 = vld [vmem:[%s0] sm:$0xff]
  %v56 = vld [vmem:[%s0 + $0x8] sm:$0xff]
  %v57 = vld [vmem:[%s0 + $0x10] sm:$0xff]
  %v58 = vld [vmem:[%s0 + $0x18] sm:$0xff]
  %v59 = vld [vmem:[%s0 + $0x20] sm:$0xff]
  %v60 = vld [vmem:[%s0 + $0x28] sm:$0xff]
  %v61 = vld [vmem:[%s0 + $0x30] sm:$0xff]
  %v62 = vld [vmem:[%s0 + $0x38] sm:$0xff]
  %v63 = vld [vmem:[%s7] sm:$0xf]
  %v64 = vld [vmem:[%s7 + $0x4] sm:$0xf]
  %v65 = vld [vmem:[%s7 + $0x8] sm:$0xf]
  %v66 = vld [vmem:[%s7 + $0xc] sm:$0xf]
  %v67 = vld [vmem:[%s7 + $0x10] sm:$0xf]
  %v68 = vld [vmem:[%s7 + $0x14] sm:$0xf]
  %v69 = vld [vmem:[%s7 + $0x18] sm:$0xf]
  %v70 = vld [vmem:[%s7 + $0x1c] sm:$0xf]
  %v71 = vld [vmem:[%s7 + $0x20] sm:$0xf]
  %v72 = vld [vmem:[%s7 + $0x24] sm:$0xf]
  %v73 = vld [vmem:[%s7 + $0x28] sm:$0xf]
  %v74 = vld [vmem:[%s7 + $0x2c] sm:$0xf]
  %v75 = vld [vmem:[%s7 + $0x30] sm:$0xf]
  %v76 = vld [vmem:[%s7 + $0x34] sm:$0xf]
  %v77 = vld [vmem:[%s7 + $0x38] sm:$0xf]
  %v78 = vld [vmem:[%s7 + $0x3c] sm:$0xf]
  %v79 = vld [vmem:[%s7 + $0x40] sm:$0xf]
  %v80 = vld [vmem:[%s7 + $0x44] sm:$0xf]
  %v81 = vld [vmem:[%s7 + $0x48] sm:$0xf]
  %v82 = vld [vmem:[%s7 + $0x4c] sm:$0xf]
  %v83 = vld [vmem:[%s7 + $0x50] sm:$0xf]
  %v84 = vld [vmem:[%s7 + $0x54] sm:$0xf]
  %v85 = vld [vmem:[%s7 + $0x58] sm:$0xf]
  %v86 = vld [vmem:[%s7 + $0x5c] sm:$0xf]
  %v95 = vunpack.c.l.b16 %v55
  %v96 = vunpack.c.h.b16 %v55
  %v97 = vunpack.c.l.b16 %v56
  %v98 = vunpack.c.h.b16 %v56
  %v99 = vunpack.c.l.b16 %v57
  %v100 = vunpack.c.h.b16 %v57
  %v101 = vunpack.c.l.b16 %v58
  %v102 = vunpack.c.h.b16 %v58
  %v103 = vunpack.c.l.b16 %v59
  %v104 = vunpack.c.h.b16 %v59
  %v105 = vunpack.c.l.b16 %v60
  %v106 = vunpack.c.h.b16 %v60
  %v107 = vunpack.c.l.b16 %v61
  %v108 = vunpack.c.h.b16 %v61
  %v109 = vunpack.c.l.b16 %v62
  %v110 = vunpack.c.h.b16 %v62
  %v111 = vpack.c.b16 %v97, %v95
  %v112 = vpack.c.b16 %v98, %v96
  %v113 = vpack.c.b16 %v101, %v99
  %v114 = vpack.c.b16 %v102, %v100
  %v115 = vpack.c.b16 %v105, %v103
  %v116 = vpack.c.b16 %v106, %v104
  %v117 = vpack.c.b16 %v109, %v107
  %v118 = vpack.c.b16 %v110, %v108
  %v147 = vunpack.c.l.b16 %v63
  %v148 = vunpack.c.l.b16 %v64
  %v149 = vunpack.c.l.b16 %v65
  %v150 = vunpack.c.l.b16 %v66
  %v151 = vunpack.c.l.b16 %v67
  %v152 = vunpack.c.l.b16 %v68
  %v153 = vunpack.c.l.b16 %v69
  %v154 = vunpack.c.l.b16 %v70
  %v155 = vunpack.c.l.b16 %v71
  %v156 = vunpack.c.l.b16 %v72
  %v157 = vunpack.c.l.b16 %v73
  %v158 = vunpack.c.l.b16 %v74
  %v159 = vunpack.c.l.b16 %v75
  %v160 = vunpack.c.l.b16 %v76
  %v161 = vunpack.c.l.b16 %v77
  %v162 = vunpack.c.l.b16 %v78
  %v163 = vunpack.c.l.b16 %v79
  %v164 = vunpack.c.l.b16 %v80
  %v165 = vunpack.c.l.b16 %v81
  %v166 = vunpack.c.l.b16 %v82
  %v167 = vunpack.c.l.b16 %v83
  %v168 = vunpack.c.l.b16 %v84
  %v169 = vunpack.c.l.b16 %v85
  %v170 = vunpack.c.l.b16 %v86
  %v171 = vpack.c.b16 %v148, %v147
  %v172 = vpack.c.b16 %v150, %v149
  %v173 = vpack.c.b16 %v152, %v151
  %v174 = vpack.c.b16 %v154, %v153
  %v175 = vpack.c.b16 %v156, %v155
  %v176 = vpack.c.b16 %v158, %v157
  %v177 = vpack.c.b16 %v160, %v159
  %v178 = vpack.c.b16 %v162, %v161
  %v179 = vpack.c.b16 %v164, %v163
  %v180 = vpack.c.b16 %v166, %v165
  %v181 = vpack.c.b16 %v168, %v167
  %v182 = vpack.c.b16 %v170, %v169
  %vm195 = vcmask 523264
  %v197 = vsel %vm195, %v112, 0
  %v200 = vsel %vm195, %v114, 0
  %v203 = vsel %vm195, %v116, 0
  %v206 = vsel %vm195, %v118, 0
  %208 = vmatprep.subr.bf16.mxu0 0
  %209 = vmatpush1.bf16.msra.mxu0 %v171
  %210 = vmatprep.subr.bf16.mxu0 0
  %211 = vmatpush1.bf16.msra.mxu0 %v172
  %212 = vmatprep.subr.bf16.mxu0 0
  %213 = vmatpush1.bf16.msra.mxu0 %v173
  %214 = vmatprep.subr.bf16.mxu0 0
  %215 = vmatpush1.bf16.msra.mxu0 %v174
  %216 = vmatprep.subr.bf16.mxu0 0
  %217 = vmatpush1.bf16.msra.mxu0 %v175
  %218 = vmatprep.subr.bf16.mxu0 0
  %219 = vmatpush1.bf16.msra.mxu0 %v176
  %220 = vmatprep.subr.bf16.mxu0 0
  %221 = vmatpush1.bf16.msra.mxu0 %v177
  %222 = vmatprep.subr.bf16.mxu0 0
  %223 = vmatpush1.bf16.msra.mxu0 %v178
  %224 = vmatprep.subr.bf16.mxu0 0
  %225 = vmatpush1.bf16.msra.mxu0 %v179
  %226 = vmatprep.subr.bf16.mxu0 0
  %227 = vmatpush1.bf16.msra.mxu0 %v180
  %228 = vmatprep.subr.bf16.mxu0 0
  %229 = vmatpush1.bf16.msra.mxu0 %v181
  %230 = vmatprep.subr.bf16.mxu0 0
  %231 = vmatpush1.bf16.msra.mxu0 %v182
  %232 = vmatprep.subr.bf16.mxu0 0
  %233 = vmatpush1.bf16.msra.mxu0 0
  %234 = vmatprep.subr.bf16.mxu0 0
  %235 = vmatpush1.bf16.msra.mxu0 0
  %236 = vmatprep.subr.bf16.mxu0 0
  %237 = vmatpush1.bf16.msra.mxu0 0
  %238 = vmatprep.subr.bf16.mxu0 0
  %239 = vmatpush1.bf16.msra.mxu0 0
  %240 = vmatprep.mubr.bf16.mxu0 %v197
  %241 = vmatmul.mubr.bf16.gmra.mrb[0].mxu0 %v111
  %v242 = vpop.f32.mrb[0].mxu0
  %v243 = vadd.f32 %v53, %v242
  %v244 = vpop.f32.mrb[0].mxu0
  %v245 = vpop.f32.mrb[0].mxu0
  %v246 = vadd.f32 %v53, %v245
  %v247 = vpop.f32.mrb[0].mxu0
  %248 = vmatprep.mubr.bf16.mxu0 %v200
  %249 = vmatmul.mubr.bf16.gmra.mrb[0].mxu0 %v113
  %v250 = vpop.f32.mrb[0].mxu0
  %v251 = vadd.f32 %v53, %v250
  %v252 = vpop.f32.mrb[0].mxu0
  %v253 = vpop.f32.mrb[0].mxu0
  %v254 = vadd.f32 %v53, %v253
  %v255 = vpop.f32.mrb[0].mxu0
  %256 = vmatprep.mubr.bf16.mxu0 %v203
  %257 = vmatmul.mubr.bf16.gmra.mrb[0].mxu0 %v115
  %v258 = vpop.f32.mrb[0].mxu0
  %v259 = vadd.f32 %v53, %v258
  %v260 = vpop.f32.mrb[0].mxu0
  %v261 = vpop.f32.mrb[0].mxu0
  %v262 = vadd.f32 %v53, %v261
  %v263 = vpop.f32.mrb[0].mxu0
  %264 = vmatprep.mubr.bf16.mxu0 %v206
  %265 = vmatmul.mubr.bf16.gmra.mrb[0].mxu0 %v117
  %v266 = vpop.f32.mrb[0].mxu0
  %v267 = vadd.f32 %v53, %v266
  %v268 = vpop.f32.mrb[0].mxu0
  %v269 = vpop.f32.mrb[0].mxu0
  %v270 = vadd.f32 %v53, %v269
  %v271 = vpop.f32.mrb[0].mxu0
  %272 = vdwg.mxu0
  %v273 = vmax.f32 %v243, 0.0
  %v274 = vmax.f32 %v246, 0.0
  %v275 = vmax.f32 %v251, 0.0
  %v276 = vmax.f32 %v254, 0.0
  %v277 = vmax.f32 %v259, 0.0
  %v278 = vmax.f32 %v262, 0.0
  %v279 = vmax.f32 %v267, 0.0
  %v280 = vmax.f32 %v270, 0.0
  %v281 = vpack.c.bf16 %v274, %v273
  %v282 = vpack.c.bf16 %v276, %v275
  %v283 = vpack.c.bf16 %v278, %v277
  %v284 = vpack.c.bf16 %v280, %v279
  %v285 = vld [vmem:[%s9] sm:$0xf]
  %v286 = vld [vmem:[%s9 + $0x4] sm:$0xf]
  %v287 = vld [vmem:[%s9 + $0x8] sm:$0xf]
  %v288 = vld [vmem:[%s9 + $0xc] sm:$0xf]
  %v293 = vunpack.c.l.b16 %v285
  %v294 = vunpack.c.l.b16 %v286
  %v295 = vunpack.c.l.b16 %v287
  %v296 = vunpack.c.l.b16 %v288
  %v297 = vpack.c.b16 %v294, %v293
  %v298 = vpack.c.b16 %v296, %v295
  %vm301 = vcmask 261120
  %v303 = vsel %vm301, %v281, 0
  %v306 = vsel %vm301, %v282, 0
  %v309 = vsel %vm301, %v283, 0
  %v312 = vsel %vm301, %v284, 0
  %314 = vmatprep.subr.bf16.mxu0 0
  %315 = vmatpush1.bf16.msra.mxu0 %v297
  %316 = vmatprep.subr.bf16.mxu0 0
  %317 = vmatpush1.bf16.msra.mxu0 %v298
  %318 = vmatprep.subr.bf16.mxu0 0
  %319 = vmatpush1.bf16.msra.mxu0 0
  %320 = vmatprep.subr.bf16.mxu0 0
  %321 = vmatpush1.bf16.msra.mxu0 0
  %322 = vmatprep.subr.bf16.mxu0 0
  %323 = vmatpush1.bf16.msra.mxu0 0
  %324 = vmatprep.subr.bf16.mxu0 0
  %325 = vmatpush1.bf16.msra.mxu0 0
  %326 = vmatprep.subr.bf16.mxu0 0
  %327 = vmatpush1.bf16.msra.mxu0 0
  %328 = vmatprep.subr.bf16.mxu0 0
  %329 = vmatpush1.bf16.msra.mxu0 0
  %330 = vmatprep.subr.bf16.mxu0 0
  %331 = vmatpush1.bf16.msra.mxu0 0
  %332 = vmatprep.subr.bf16.mxu0 0
  %333 = vmatpush1.bf16.msra.mxu0 0
  %334 = vmatprep.subr.bf16.mxu0 0
  %335 = vmatpush1.bf16.msra.mxu0 0
  %336 = vmatprep.subr.bf16.mxu0 0
  %337 = vmatpush1.bf16.msra.mxu0 0
  %338 = vmatprep.subr.bf16.mxu0 0
  %339 = vmatpush1.bf16.msra.mxu0 0
  %340 = vmatprep.subr.bf16.mxu0 0
  %341 = vmatpush1.bf16.msra.mxu0 0
  %342 = vmatprep.subr.bf16.mxu0 0
  %343 = vmatpush1.bf16.msra.mxu0 0
  %344 = vmatprep.subr.bf16.mxu0 0
  %345 = vmatpush1.bf16.msra.mxu0 0
  %346 = vmatprep.mubr.bf16.mxu0 0
  %347 = vmatmul.mubr.bf16.gmra.mrb[0].mxu0 %v303
  %v348 = vpop.f32.mrb[0].mxu0
  %v349 = vadd.f32 %v50, %v348
  %v350 = vpop.f32.mrb[0].mxu0
  %v351 = vpop.f32.mrb[0].mxu0
  %v352 = vadd.f32 %v50, %v351
  %v353 = vpop.f32.mrb[0].mxu0
  %354 = vmatprep.mubr.bf16.mxu0 0
  %355 = vmatmul.mubr.bf16.gmra.mrb[0].mxu0 %v306
  %v356 = vpop.f32.mrb[0].mxu0
  %v357 = vadd.f32 %v50, %v356
  %v358 = vpop.f32.mrb[0].mxu0
  %v359 = vpop.f32.mrb[0].mxu0
  %v360 = vadd.f32 %v50, %v359
  %v361 = vpop.f32.mrb[0].mxu0
  %362 = vmatprep.mubr.bf16.mxu0 0
  %363 = vmatmul.mubr.bf16.gmra.mrb[0].mxu0 %v309
  %v364 = vpop.f32.mrb[0].mxu0
  %v365 = vadd.f32 %v50, %v364
  %v366 = vpop.f32.mrb[0].mxu0
  %v367 = vpop.f32.mrb[0].mxu0
  %v368 = vadd.f32 %v50, %v367
  %v369 = vpop.f32.mrb[0].mxu0
  %370 = vmatprep.mubr.bf16.mxu0 0
  %371 = vmatmul.mubr.bf16.gmra.mrb[0].mxu0 %v312
  %v372 = vpop.f32.mrb[0].mxu0
  %v373 = vadd.f32 %v50, %v372
  %v374 = vpop.f32.mrb[0].mxu0
  %v375 = vpop.f32.mrb[0].mxu0
  %v376 = vadd.f32 %v50, %v375
  %v377 = vpop.f32.mrb[0].mxu0
  %378 = vdwg.mxu0
  %v379 = vld [vmem:[%s1] sm:$0xff]
  %v380 = vld [vmem:[%s1 + $0x8] sm:$0xff]
  %v381 = vld [vmem:[%s1 + $0x10] sm:$0xff]
  %v382 = vld [vmem:[%s1 + $0x18] sm:$0xff]
  %v383 = vld [vmem:[%s1 + $0x20] sm:$0xff]
  %v384 = vld [vmem:[%s1 + $0x28] sm:$0xff]
  %v385 = vld [vmem:[%s8] sm:$0xf]
  %v386 = vld [vmem:[%s8 + $0x4] sm:$0xf]
  %v387 = vld [vmem:[%s8 + $0x8] sm:$0xf]
  %v388 = vld [vmem:[%s8 + $0xc] sm:$0xf]
  %v389 = vld [vmem:[%s8 + $0x10] sm:$0xf]
  %v390 = vld [vmem:[%s8 + $0x14] sm:$0xf]
  %v391 = vld [vmem:[%s8 + $0x18] sm:$0xf]
  %v392 = vld [vmem:[%s8 + $0x1c] sm:$0xf]
  %v393 = vld [vmem:[%s8 + $0x20] sm:$0xf]
  %v394 = vld [vmem:[%s8 + $0x24] sm:$0xf]
  %v395 = vld [vmem:[%s8 + $0x28] sm:$0xf]
  %v396 = vld [vmem:[%s8 + $0x2c] sm:$0xf]
  %v397 = vld [vmem:[%s8 + $0x30] sm:$0xf]
  %v398 = vld [vmem:[%s8 + $0x34] sm:$0xf]
  %v399 = vld [vmem:[%s8 + $0x38] sm:$0xf]
  %v400 = vld [vmem:[%s8 + $0x3c] sm:$0xf]
  %v401 = vld [vmem:[%s8 + $0x40] sm:$0xf]
  %v402 = vld [vmem:[%s8 + $0x44] sm:$0xf]
  %v403 = vld [vmem:[%s8 + $0x48] sm:$0xf]
  %v404 = vld [vmem:[%s8 + $0x4c] sm:$0xf]
  %v405 = vld [vmem:[%s8 + $0x50] sm:$0xf]
  %v406 = vld [vmem:[%s8 + $0x54] sm:$0xf]
  %v407 = vld [vmem:[%s8 + $0x58] sm:$0xf]
  %v408 = vld [vmem:[%s8 + $0x5c] sm:$0xf]
  %v409 = vld [vmem:[%s8 + $0x60] sm:$0xf]
  %v410 = vld [vmem:[%s8 + $0x64] sm:$0xf]
  %v411 = vld [vmem:[%s8 + $0x68] sm:$0xf]
  %v412 = vld [vmem:[%s8 + $0x6c] sm:$0xf]
  %v413 = vld [vmem:[%s8 + $0x70] sm:$0xf]
  %v414 = vld [vmem:[%s8 + $0x74] sm:$0xf]
  %v415 = vld [vmem:[%s8 + $0x78] sm:$0xf]
  %v416 = vld [vmem:[%s8 + $0x7c] sm:$0xf]
  %v417 = vld [vmem:[%s8 + $0x80] sm:$0xf]
  %v418 = vld [vmem:[%s8 + $0x84] sm:$0xf]
  %v419 = vld [vmem:[%s8 + $0x88] sm:$0xf]
  %v420 = vld [vmem:[%s8 + $0x8c] sm:$0xf]
  %v421 = vld [vmem:[%s8 + $0x90] sm:$0xf]
  %v422 = vld [vmem:[%s8 + $0x94] sm:$0xf]
  %v423 = vld [vmem:[%s8 + $0x98] sm:$0xf]
  %v424 = vld [vmem:[%s8 + $0x9c] sm:$0xf]
  %v425 = vld [vmem:[%s8 + $0xa0] sm:$0xf]
  %v426 = vld [vmem:[%s8 + $0xa4] sm:$0xf]
  %v427 = vld [vmem:[%s8 + $0xa8] sm:$0xf]
  %v428 = vld [vmem:[%s8 + $0xac] sm:$0xf]
  %v429 = vld [vmem:[%s8 + $0xb0] sm:$0xf]
  %v430 = vld [vmem:[%s8 + $0xb4] sm:$0xf]
  %v431 = vld [vmem:[%s8 + $0xb8] sm:$0xf]
  %v432 = vld [vmem:[%s8 + $0xbc] sm:$0xf]
  %v433 = vld [vmem:[%s8 + $0xc0] sm:$0xf]
  %v434 = vld [vmem:[%s8 + $0xc4] sm:$0xf]
  %v435 = vld [vmem:[%s8 + $0xc8] sm:$0xf]
  %v436 = vld [vmem:[%s8 + $0xcc] sm:$0xf]
  %v437 = vld [vmem:[%s8 + $0xd0] sm:$0xf]
  %v438 = vld [vmem:[%s8 + $0xd4] sm:$0xf]
  %v439 = vld [vmem:[%s8 + $0xd8] sm:$0xf]
  %v440 = vld [vmem:[%s8 + $0xdc] sm:$0xf]
  %v441 = vld [vmem:[%s8 + $0xe0] sm:$0xf]
  %v442 = vld [vmem:[%s8 + $0xe4] sm:$0xf]
  %v443 = vld [vmem:[%s8 + $0xe8] sm:$0xf]
  %v444 = vld [vmem:[%s8 + $0xec] sm:$0xf]
  %v445 = vld [vmem:[%s8 + $0xf0] sm:$0xf]
  %v446 = vld [vmem:[%s8 + $0xf4] sm:$0xf]
  %v447 = vld [vmem:[%s8 + $0xf8] sm:$0xf]
  %v448 = vld [vmem:[%s8 + $0xfc] sm:$0xf]
  %v449 = vld [vmem:[%s8 + $0x100] sm:$0xf]
  %v450 = vld [vmem:[%s8 + $0x104] sm:$0xf]
  %v451 = vld [vmem:[%s8 + $0x108] sm:$0xf]
  %v452 = vld [vmem:[%s8 + $0x10c] sm:$0xf]
  %v453 = vld [vmem:[%s8 + $0x110] sm:$0xf]
  %v454 = vld [vmem:[%s8 + $0x114] sm:$0xf]
  %v455 = vld [vmem:[%s8 + $0x118] sm:$0xf]
  %v456 = vld [vmem:[%s8 + $0x11c] sm:$0xf]
  %v457 = vld [vmem:[%s8 + $0x120] sm:$0xf]
  %v458 = vld [vmem:[%s8 + $0x124] sm:$0xf]
  %v459 = vld [vmem:[%s8 + $0x128] sm:$0xf]
  %v460 = vld [vmem:[%s8 + $0x12c] sm:$0xf]
  %v461 = vld [vmem:[%s8 + $0x130] sm:$0xf]
  %v462 = vld [vmem:[%s8 + $0x134] sm:$0xf]
  %v463 = vld [vmem:[%s8 + $0x138] sm:$0xf]
  %v464 = vld [vmem:[%s8 + $0x13c] sm:$0xf]
  %v465 = vld [vmem:[%s8 + $0x140] sm:$0xf]
  %v466 = vld [vmem:[%s8 + $0x144] sm:$0xf]
  %v467 = vld [vmem:[%s8 + $0x148] sm:$0xf]
  %v468 = vld [vmem:[%s8 + $0x14c] sm:$0xf]
  %v469 = vld [vmem:[%s8 + $0x150] sm:$0xf]
  %v470 = vld [vmem:[%s8 + $0x154] sm:$0xf]
  %v471 = vld [vmem:[%s8 + $0x158] sm:$0xf]
  %v472 = vld [vmem:[%s8 + $0x15c] sm:$0xf]
  %v473 = vld [vmem:[%s8 + $0x160] sm:$0xf]
  %v474 = vld [vmem:[%s8 + $0x164] sm:$0xf]
  %v475 = vld [vmem:[%s8 + $0x168] sm:$0xf]
  %v476 = vld [vmem:[%s8 + $0x16c] sm:$0xf]
  %v477 = vld [vmem:[%s8 + $0x170] sm:$0xf]
  %v478 = vld [vmem:[%s8 + $0x174] sm:$0xf]
  %v479 = vld [vmem:[%s8 + $0x178] sm:$0xf]
  %v480 = vld [vmem:[%s8 + $0x17c] sm:$0xf]
  %v487 = vunpack.c.l.b16 %v379
  %v488 = vunpack.c.h.b16 %v379
  %v489 = vunpack.c.l.b16 %v380
  %v490 = vunpack.c.h.b16 %v380
  %v491 = vunpack.c.l.b16 %v381
  %v492 = vunpack.c.h.b16 %v381
  %v493 = vunpack.c.l.b16 %v382
  %v494 = vunpack.c.h.b16 %v382
  %v495 = vunpack.c.l.b16 %v383
  %v496 = vunpack.c.h.b16 %v383
  %v497 = vunpack.c.l.b16 %v384
  %v498 = vunpack.c.h.b16 %v384
  %v499 = vpack.c.b16 %v493, %v487
  %v500 = vpack.c.b16 %v494, %v488
  %v501 = vpack.c.b16 %v495, %v489
  %v502 = vpack.c.b16 %v496, %v490
  %v503 = vpack.c.b16 %v497, %v491
  %v504 = vpack.c.b16 %v498, %v492
  %v607 = vunpack.c.l.b16 %v385
  %v608 = vunpack.c.l.b16 %v386
  %v609 = vunpack.c.l.b16 %v387
  %v610 = vunpack.c.l.b16 %v388
  %v611 = vunpack.c.l.b16 %v389
  %v612 = vunpack.c.l.b16 %v390
  %v613 = vunpack.c.l.b16 %v391
  %v614 = vunpack.c.l.b16 %v392
  %v615 = vunpack.c.l.b16 %v393
  %v616 = vunpack.c.l.b16 %v394
  %v617 = vunpack.c.l.b16 %v395
  %v618 = vunpack.c.l.b16 %v396
  %v619 = vunpack.c.l.b16 %v397
  %v620 = vunpack.c.l.b16 %v398
  %v621 = vunpack.c.l.b16 %v399
  %v622 = vunpack.c.l.b16 %v400
  %v623 = vunpack.c.l.b16 %v401
  %v624 = vunpack.c.l.b16 %v402
  %v625 = vunpack.c.l.b16 %v403
  %v626 = vunpack.c.l.b16 %v404
  %v627 = vunpack.c.l.b16 %v405
  %v628 = vunpack.c.l.b16 %v406
  %v629 = vunpack.c.l.b16 %v407
  %v630 = vunpack.c.l.b16 %v408
  %v631 = vunpack.c.l.b16 %v409
  %v632 = vunpack.c.l.b16 %v410
  %v633 = vunpack.c.l.b16 %v411
  %v634 = vunpack.c.l.b16 %v412
  %v635 = vunpack.c.l.b16 %v413
  %v636 = vunpack.c.l.b16 %v414
  %v637 = vunpack.c.l.b16 %v415
  %v638 = vunpack.c.l.b16 %v416
  %v639 = vunpack.c.l.b16 %v417
  %v640 = vunpack.c.l.b16 %v418
  %v641 = vunpack.c.l.b16 %v419
  %v642 = vunpack.c.l.b16 %v420
  %v643 = vunpack.c.l.b16 %v421
  %v644 = vunpack.c.l.b16 %v422
  %v645 = vunpack.c.l.b16 %v423
  %v646 = vunpack.c.l.b16 %v424
  %v647 = vunpack.c.l.b16 %v425
  %v648 = vunpack.c.l.b16 %v426
  %v649 = vunpack.c.l.b16 %v427
  %v650 = vunpack.c.l.b16 %v428
  %v651 = vunpack.c.l.b16 %v429
  %v652 = vunpack.c.l.b16 %v430
  %v653 = vunpack.c.l.b16 %v431
  %v654 = vunpack.c.l.b16 %v432
  %v655 = vunpack.c.l.b16 %v433
  %v656 = vunpack.c.l.b16 %v434
  %v657 = vunpack.c.l.b16 %v435
  %v658 = vunpack.c.l.b16 %v436
  %v659 = vunpack.c.l.b16 %v437
  %v660 = vunpack.c.l.b16 %v438
  %v661 = vunpack.c.l.b16 %v439
  %v662 = vunpack.c.l.b16 %v440
  %v663 = vunpack.c.l.b16 %v441
  %v664 = vunpack.c.l.b16 %v442
  %v665 = vunpack.c.l.b16 %v443
  %v666 = vunpack.c.l.b16 %v444
  %v667 = vunpack.c.l.b16 %v445
  %v668 = vunpack.c.l.b16 %v446
  %v669 = vunpack.c.l.b16 %v447
  %v670 = vunpack.c.l.b16 %v448
  %v671 = vunpack.c.l.b16 %v449
  %v672 = vunpack.c.l.b16 %v450
  %v673 = vunpack.c.l.b16 %v451
  %v674 = vunpack.c.l.b16 %v452
  %v675 = vunpack.c.l.b16 %v453
  %v676 = vunpack.c.l.b16 %v454
  %v677 = vunpack.c.l.b16 %v455
  %v678 = vunpack.c.l.b16 %v456
  %v679 = vunpack.c.l.b16 %v457
  %v680 = vunpack.c.l.b16 %v458
  %v681 = vunpack.c.l.b16 %v459
  %v682 = vunpack.c.l.b16 %v460
  %v683 = vunpack.c.l.b16 %v461
  %v684 = vunpack.c.l.b16 %v462
  %v685 = vunpack.c.l.b16 %v463
  %v686 = vunpack.c.l.b16 %v464
  %v687 = vunpack.c.l.b16 %v465
  %v688 = vunpack.c.l.b16 %v466
  %v689 = vunpack.c.l.b16 %v467
  %v690 = vunpack.c.l.b16 %v468
  %v691 = vunpack.c.l.b16 %v469
  %v692 = vunpack.c.l.b16 %v470
  %v693 = vunpack.c.l.b16 %v471
  %v694 = vunpack.c.l.b16 %v472
  %v695 = vunpack.c.l.b16 %v473
  %v696 = vunpack.c.l.b16 %v474
  %v697 = vunpack.c.l.b16 %v475
  %v698 = vunpack.c.l.b16 %v476
  %v699 = vunpack.c.l.b16 %v477
  %v700 = vunpack.c.l.b16 %v478
  %v701 = vunpack.c.l.b16 %v479
  %v702 = vunpack.c.l.b16 %v480
  %v703 = vpack.c.b16 %v608, %v607
  %v704 = vpack.c.b16 %v610, %v609
  %v705 = vpack.c.b16 %v612, %v611
  %v706 = vpack.c.b16 %v614, %v613
  %v707 = vpack.c.b16 %v616, %v615
  %v708 = vpack.c.b16 %v618, %v617
  %v709 = vpack.c.b16 %v620, %v619
  %v710 = vpack.c.b16 %v622, %v621
  %v711 = vpack.c.b16 %v624, %v623
  %v712 = vpack.c.b16 %v626, %v625
  %v713 = vpack.c.b16 %v628, %v627
  %v714 = vpack.c.b16 %v630, %v629
  %v715 = vpack.c.b16 %v632, %v631
  %v716 = vpack.c.b16 %v634, %v633
  %v717 = vpack.c.b16 %v636, %v635
  %v718 = vpack.c.b16 %v638, %v637
  %v719 = vpack.c.b16 %v640, %v639
  %v720 = vpack.c.b16 %v642, %v641
  %v721 = vpack.c.b16 %v644, %v643
  %v722 = vpack.c.b16 %v646, %v645
  %v723 = vpack.c.b16 %v648, %v647
  %v724 = vpack.c.b16 %v650, %v649
  %v725 = vpack.c.b16 %v652, %v651
  %v726 = vpack.c.b16 %v654, %v653
  %v727 = vpack.c.b16 %v656, %v655
  %v728 = vpack.c.b16 %v658, %v657
  %v729 = vpack.c.b16 %v660, %v659
  %v730 = vpack.c.b16 %v662, %v661
  %v731 = vpack.c.b16 %v664, %v663
  %v732 = vpack.c.b16 %v666, %v665
  %v733 = vpack.c.b16 %v668, %v667
  %v734 = vpack.c.b16 %v670, %v669
  %v735 = vpack.c.b16 %v672, %v671
  %v736 = vpack.c.b16 %v674, %v673
  %v737 = vpack.c.b16 %v676, %v675
  %v738 = vpack.c.b16 %v678, %v677
  %v739 = vpack.c.b16 %v680, %v679
  %v740 = vpack.c.b16 %v682, %v681
  %v741 = vpack.c.b16 %v684, %v683
  %v742 = vpack.c.b16 %v686, %v685
  %v743 = vpack.c.b16 %v688, %v687
  %v744 = vpack.c.b16 %v690, %v689
  %v745 = vpack.c.b16 %v692, %v691
  %v746 = vpack.c.b16 %v694, %v693
  %v747 = vpack.c.b16 %v696, %v695
  %v748 = vpack.c.b16 %v698, %v697
  %v749 = vpack.c.b16 %v700, %v699
  %v750 = vpack.c.b16 %v702, %v701
  %799 = vmatprep.subr.bf16.mxu0 0
  %800 = vmatpush1.bf16.msra.mxu0 %v703
  %801 = vmatprep.subr.bf16.mxu0 0
  %802 = vmatpush1.bf16.msra.mxu0 %v704
  %803 = vmatprep.subr.bf16.mxu0 0
  %804 = vmatpush1.bf16.msra.mxu0 %v705
  %805 = vmatprep.subr.bf16.mxu0 0
  %806 = vmatpush1.bf16.msra.mxu0 %v706
  %807 = vmatprep.subr.bf16.mxu0 0
  %808 = vmatpush1.bf16.msra.mxu0 %v707
  %809 = vmatprep.subr.bf16.mxu0 0
  %810 = vmatpush1.bf16.msra.mxu0 %v708
  %811 = vmatprep.subr.bf16.mxu0 0
  %812 = vmatpush1.bf16.msra.mxu0 %v709
  %813 = vmatprep.subr.bf16.mxu0 0
  %814 = vmatpush1.bf16.msra.mxu0 %v710
  %815 = vmatprep.subr.bf16.mxu0 0
  %816 = vmatpush1.bf16.msra.mxu0 %v711
  %817 = vmatprep.subr.bf16.mxu0 0
  %818 = vmatpush1.bf16.msra.mxu0 %v712
  %819 = vmatprep.subr.bf16.mxu0 0
  %820 = vmatpush1.bf16.msra.mxu0 %v713
  %821 = vmatprep.subr.bf16.mxu0 0
  %822 = vmatpush1.bf16.msra.mxu0 %v714
  %823 = vmatprep.subr.bf16.mxu0 0
  %824 = vmatpush1.bf16.msra.mxu0 %v715
  %825 = vmatprep.subr.bf16.mxu0 0
  %826 = vmatpush1.bf16.msra.mxu0 %v716
  %827 = vmatprep.subr.bf16.mxu0 0
  %828 = vmatpush1.bf16.msra.mxu0 %v717
  %829 = vmatprep.subr.bf16.mxu0 0
  %830 = vmatpush1.bf16.msra.mxu0 %v718
  %831 = vmatprep.mubr.bf16.mxu0 %v500
  %832 = vmatmul.mubr.bf16.gmra.mrb[0].mxu0 %v499
  %v833 = vpop.f32.mrb[0].mxu0
  %v834 = vadd.f32 %v54, %v833
  %v835 = vpop.f32.mrb[0].mxu0
  %v836 = vpop.f32.mrb[0].mxu0
  %v837 = vadd.f32 %v54, %v836
  %v838 = vpop.f32.mrb[0].mxu0
  %839 = vdwg.mxu0
  %840 = vmatprep.subr.bf16.mxu0 0
  %841 = vmatpush1.bf16.msra.mxu0 %v719
  %842 = vmatprep.subr.bf16.mxu0 0
  %843 = vmatpush1.bf16.msra.mxu0 %v720
  %844 = vmatprep.subr.bf16.mxu0 0
  %845 = vmatpush1.bf16.msra.mxu0 %v721
  %846 = vmatprep.subr.bf16.mxu0 0
  %847 = vmatpush1.bf16.msra.mxu0 %v722
  %848 = vmatprep.subr.bf16.mxu0 0
  %849 = vmatpush1.bf16.msra.mxu0 %v723
  %850 = vmatprep.subr.bf16.mxu0 0
  %851 = vmatpush1.bf16.msra.mxu0 %v724
  %852 = vmatprep.subr.bf16.mxu0 0
  %853 = vmatpush1.bf16.msra.mxu0 %v725
  %854 = vmatprep.subr.bf16.mxu0 0
  %855 = vmatpush1.bf16.msra.mxu0 %v726
  %856 = vmatprep.subr.bf16.mxu0 0
  %857 = vmatpush1.bf16.msra.mxu0 %v727
  %858 = vmatprep.subr.bf16.mxu0 0
  %859 = vmatpush1.bf16.msra.mxu0 %v728
  %860 = vmatprep.subr.bf16.mxu0 0
  %861 = vmatpush1.bf16.msra.mxu0 %v729
  %862 = vmatprep.subr.bf16.mxu0 0
  %863 = vmatpush1.bf16.msra.mxu0 %v730
  %864 = vmatprep.subr.bf16.mxu0 0
  %865 = vmatpush1.bf16.msra.mxu0 %v731
  %866 = vmatprep.subr.bf16.mxu0 0
  %867 = vmatpush1.bf16.msra.mxu0 %v732
  %868 = vmatprep.subr.bf16.mxu0 0
  %869 = vmatpush1.bf16.msra.mxu0 %v733
  %870 = vmatprep.subr.bf16.mxu0 0
  %871 = vmatpush1.bf16.msra.mxu0 %v734
  %872 = vmatprep.mubr.bf16.mxu0 %v502
  %873 = vmatmul.mubr.bf16.gmra.mrb[0].mxu0 %v501
  %v874 = vpop.f32.mrb[0].mxu0
  %v875 = vadd.f32 %v834, %v874
  %v876 = vpop.f32.mrb[0].mxu0
  %v877 = vpop.f32.mrb[0].mxu0
  %v878 = vadd.f32 %v837, %v877
  %v879 = vpop.f32.mrb[0].mxu0
  %880 = vdwg.mxu0
  %881 = vmatprep.subr.bf16.mxu0 0
  %882 = vmatpush1.bf16.msra.mxu0 %v735
  %883 = vmatprep.subr.bf16.mxu0 0
  %884 = vmatpush1.bf16.msra.mxu0 %v736
  %885 = vmatprep.subr.bf16.mxu0 0
  %886 = vmatpush1.bf16.msra.mxu0 %v737
  %887 = vmatprep.subr.bf16.mxu0 0
  %888 = vmatpush1.bf16.msra.mxu0 %v738
  %889 = vmatprep.subr.bf16.mxu0 0
  %890 = vmatpush1.bf16.msra.mxu0 %v739
  %891 = vmatprep.subr.bf16.mxu0 0
  %892 = vmatpush1.bf16.msra.mxu0 %v740
  %893 = vmatprep.subr.bf16.mxu0 0
  %894 = vmatpush1.bf16.msra.mxu0 %v741
  %895 = vmatprep.subr.bf16.mxu0 0
  %896 = vmatpush1.bf16.msra.mxu0 %v742
  %897 = vmatprep.subr.bf16.mxu0 0
  %898 = vmatpush1.bf16.msra.mxu0 %v743
  %899 = vmatprep.subr.bf16.mxu0 0
  %900 = vmatpush1.bf16.msra.mxu0 %v744
  %901 = vmatprep.subr.bf16.mxu0 0
  %902 = vmatpush1.bf16.msra.mxu0 %v745
  %903 = vmatprep.subr.bf16.mxu0 0
  %904 = vmatpush1.bf16.msra.mxu0 %v746
  %905 = vmatprep.subr.bf16.mxu0 0
  %906 = vmatpush1.bf16.msra.mxu0 %v747
  %907 = vmatprep.subr.bf16.mxu0 0
  %908 = vmatpush1.bf16.msra.mxu0 %v748
  %909 = vmatprep.subr.bf16.mxu0 0
  %910 = vmatpush1.bf16.msra.mxu0 %v749
  %911 = vmatprep.subr.bf16.mxu0 0
  %912 = vmatpush1.bf16.msra.mxu0 %v750
  %913 = vmatprep.mubr.bf16.mxu0 %v504
  %914 = vmatmul.mubr.bf16.gmra.mrb[0].mxu0 %v503
  %v915 = vpop.f32.mrb[0].mxu0
  %v916 = vadd.f32 %v875, %v915
  %v917 = vpop.f32.mrb[0].mxu0
  %v918 = vpop.f32.mrb[0].mxu0
  %v919 = vadd.f32 %v878, %v918
  %v920 = vpop.f32.mrb[0].mxu0
  %921 = vdwg.mxu0
  %v922 = vmax.f32 %v916, 0.0
  %v923 = vmax.f32 %v919, 0.0
  %v924 = vpack.c.bf16 %v923, %v922
  %v925 = vld [vmem:[%s9 + $0x10] sm:$0xf]
  %v926 = vld [vmem:[%s9 + $0x14] sm:$0xf]
  %v927 = vld [vmem:[%s9 + $0x18] sm:$0xf]
  %v928 = vld [vmem:[%s9 + $0x1c] sm:$0xf]
  %v929 = vld [vmem:[%s9 + $0x20] sm:$0xf]
  %v930 = vld [vmem:[%s9 + $0x24] sm:$0xf]
  %v931 = vld [vmem:[%s9 + $0x28] sm:$0xf]
  %v932 = vld [vmem:[%s9 + $0x2c] sm:$0xf]
  %v941 = vunpack.c.l.b16 %v925
  %v942 = vunpack.c.l.b16 %v926
  %v943 = vunpack.c.l.b16 %v927
  %v944 = vunpack.c.l.b16 %v928
  %v945 = vunpack.c.l.b16 %v929
  %v946 = vunpack.c.l.b16 %v930
  %v947 = vunpack.c.l.b16 %v931
  %v948 = vunpack.c.l.b16 %v932
  %v949 = vpack.c.b16 %v942, %v941
  %v950 = vpack.c.b16 %v944, %v943
  %v951 = vpack.c.b16 %v946, %v945
  %v952 = vpack.c.b16 %v948, %v947
  %v958 = vsel %vm195, %v924, 0
  %960 = vmatprep.subr.bf16.mxu0 0
  %961 = vmatpush1.bf16.msra.mxu0 %v949
  %962 = vmatprep.subr.bf16.mxu0 0
  %963 = vmatpush1.bf16.msra.mxu0 %v950
  %964 = vmatprep.subr.bf16.mxu0 0
  %965 = vmatpush1.bf16.msra.mxu0 %v951
  %966 = vmatprep.subr.bf16.mxu0 0
  %967 = vmatpush1.bf16.msra.mxu0 %v952
  %968 = vmatprep.subr.bf16.mxu0 0
  %969 = vmatpush1.bf16.msra.mxu0 0
  %970 = vmatprep.subr.bf16.mxu0 0
  %971 = vmatpush1.bf16.msra.mxu0 0
  %972 = vmatprep.subr.bf16.mxu0 0
  %973 = vmatpush1.bf16.msra.mxu0 0
  %974 = vmatprep.subr.bf16.mxu0 0
  %975 = vmatpush1.bf16.msra.mxu0 0
  %976 = vmatprep.subr.bf16.mxu0 0
  %977 = vmatpush1.bf16.msra.mxu0 0
  %978 = vmatprep.subr.bf16.mxu0 0
  %979 = vmatpush1.bf16.msra.mxu0 0
  %980 = vmatprep.subr.bf16.mxu0 0
  %981 = vmatpush1.bf16.msra.mxu0 0
  %982 = vmatprep.subr.bf16.mxu0 0
  %983 = vmatpush1.bf16.msra.mxu0 0
  %984 = vmatprep.subr.bf16.mxu0 0
  %985 = vmatpush1.bf16.msra.mxu0 0
  %986 = vmatprep.subr.bf16.mxu0 0
  %987 = vmatpush1.bf16.msra.mxu0 0
  %988 = vmatprep.subr.bf16.mxu0 0
  %989 = vmatpush1.bf16.msra.mxu0 0
  %990 = vmatprep.subr.bf16.mxu0 0
  %991 = vmatpush1.bf16.msra.mxu0 0
  %992 = vmatprep.mubr.bf16.mxu0 0
  %993 = vmatmul.mubr.bf16.gmra.mrb[0].mxu0 %v958
  %v994 = vpop.f32.mrb[0].mxu0
  %v995 = vadd.f32 %v51, %v994
  %v996 = vpop.f32.mrb[0].mxu0
  %v997 = vpop.f32.mrb[0].mxu0
  %v998 = vadd.f32 %v51, %v997
  %v999 = vpop.f32.mrb[0].mxu0
  %1000 = vdwg.mxu0
  %1001 = vst [vmem:[#allocation2] sm:$0xff] %v995
  %1002 = vst [vmem:[#allocation2 + $0x8] sm:$0xff] %v998
  %1003 = vst [vmem:[#allocation2 + $0x10] sm:$0xff] %v349
  %1004 = vst [vmem:[#allocation2 + $0x18] sm:$0xff] %v352
  %1005 = vst [vmem:[#allocation2 + $0x20] sm:$0xff] %v357
  %1006 = vst [vmem:[#allocation2 + $0x28] sm:$0xff] %v360
  %1007 = vst [vmem:[#allocation2 + $0x30] sm:$0xff] %v365
  %1008 = vst [vmem:[#allocation2 + $0x38] sm:$0xff] %v368
  %1009 = vst [vmem:[#allocation2 + $0x40] sm:$0xff] %v373
  %1010 = vst [vmem:[#allocation2 + $0x48] sm:$0xff] %v376
  %v1011 = vld [vmem:[%s2] sm:$0xff]
  %v1012 = vld [vmem:[%s2 + $0x8] sm:$0xff]
  %v1013 = vld [vmem:[%s2 + $0x10] sm:$0xff]
  %1014 = vst [vmem:[#allocation2 + $0x50] sm:$0xff] %v1011
  %1015 = vst [vmem:[#allocation2 + $0x58] sm:$0xff] %v1012
  %1016 = vst [vmem:[#allocation2 + $0x60] sm:$0xff] %v1013
  %v1017 = vld [vmem:[#allocation2] sm:$0xff]
  %v1018 = vld [vmem:[#allocation2 + $0x8] sm:$0xff]
  %v1019 = vld [vmem:[#allocation2 + $0x10] sm:$0xff]
  %v1020 = vld [vmem:[#allocation2 + $0x18] sm:$0xff]
  %v1021 = vld [vmem:[#allocation2 + $0x20] sm:$0xff]
  %v1022 = vld [vmem:[#allocation2 + $0x28] sm:$0xff]
  %v1023 = vld [vmem:[#allocation2 + $0x30] sm:$0xff]
  %v1024 = vld [vmem:[#allocation2 + $0x38] sm:$0xff]
  %v1025 = vld [vmem:[#allocation2 + $0x40] sm:$0xff]
  %v1026 = vld [vmem:[#allocation2 + $0x48] sm:$0xff]
  %v1027 = vld [vmem:[#allocation2 + $0x50] sm:$0xff]
  %v1028 = vld [vmem:[#allocation2 + $0x58] sm:$0xff]
  %v1029 = vld [vmem:[#allocation2 + $0x60] sm:$0xff]
  %v1030 = vld [vmem:[%s3] sm:$0xff]
  %v1031 = vld [vmem:[%s3 + $0x8] sm:$0xff]
  %v1032 = vld [vmem:[%s3 + $0x10] sm:$0xff]
  %v1033 = vld [vmem:[%s3 + $0x18] sm:$0xff]
  %v1034 = vld [vmem:[%s3 + $0x20] sm:$0xff]
  %v1035 = vld [vmem:[%s3 + $0x28] sm:$0xff]
  %v1036 = vld [vmem:[%s3 + $0x30] sm:$0xff]
  %v1037 = vld [vmem:[%s3 + $0x38] sm:$0xff]
  %v1038 = vld [vmem:[%s3 + $0x40] sm:$0xff]
  %v1039 = vld [vmem:[%s3 + $0x48] sm:$0xff]
  %v1040 = vld [vmem:[%s3 + $0x50] sm:$0xff]
  %v1041 = vld [vmem:[%s3 + $0x58] sm:$0xff]
  %v1042 = vld [vmem:[%s3 + $0x60] sm:$0xff]
  %v1043 = vadd.f32 %v1017, %v1030
  %v1044 = vadd.f32 %v1018, %v1031
  %v1045 = vadd.f32 %v1019, %v1032
  %v1046 = vadd.f32 %v1020, %v1033
  %v1047 = vadd.f32 %v1021, %v1034
  %v1048 = vadd.f32 %v1022, %v1035
  %v1049 = vadd.f32 %v1023, %v1036
  %v1050 = vadd.f32 %v1024, %v1037
  %v1051 = vadd.f32 %v1025, %v1038
  %v1052 = vadd.f32 %v1026, %v1039
  %v1053 = vadd.f32 %v1027, %v1040
  %v1054 = vadd.f32 %v1028, %v1041
  %v1055 = vadd.f32 %v1029, %v1042
  %v1056 = vpack.c.bf16 %v1044, %v1043
  %v1057 = vpack.c.bf16 %v1046, %v1045
  %v1058 = vpack.c.bf16 %v1048, %v1047
  %v1059 = vpack.c.bf16 %v1050, %v1049
  %v1060 = vpack.c.bf16 %v1052, %v1051
  %v1061 = vpack.c.bf16 %v1054, %v1053
  %v1062 = vpack.c.bf16 %v1055, %v1055
  %v1063 = vld [vmem:[%s10] sm:$0xff]
  %v1064 = vld [vmem:[%s10 + $0x18] sm:$0xff]
  %v1065 = vld [vmem:[%s10 + $0x30] sm:$0xff]
  %v1066 = vld [vmem:[%s10 + $0x48] sm:$0xff]
  %v1067 = vld [vmem:[%s10 + $0x60] sm:$0xff]
  %v1068 = vld [vmem:[%s10 + $0x78] sm:$0xff]
  %v1069 = vld [vmem:[%s10 + $0x90] sm:$0xff]
  %v1070 = vld [vmem:[%s10 + $0xa8] sm:$0xff]
  %v1071 = vld [vmem:[%s10 + $0xc0] sm:$0xff]
  %v1072 = vld [vmem:[%s10 + $0xd8] sm:$0xff]
  %v1073 = vld [vmem:[%s10 + $0xf0] sm:$0xff]
  %v1074 = vld [vmem:[%s10 + $0x108] sm:$0xff]
  %v1075 = vld [vmem:[%s10 + $0x120] sm:$0xff]
  %v1076 = vld [vmem:[%s10 + $0x138] sm:$0xff]
  %v1077 = vld [vmem:[%s10 + $0x150] sm:$0xff]
  %v1078 = vld [vmem:[%s10 + $0x168] sm:$0xff]
  %v1079 = vld [vmem:[%s10 + $0x8] sm:$0xff]
  %v1080 = vld [vmem:[%s10 + $0x20] sm:$0xff]
  %v1081 = vld [vmem:[%s10 + $0x38] sm:$0xff]
  %v1082 = vld [vmem:[%s10 + $0x50] sm:$0xff]
  %v1083 = vld [vmem:[%s10 + $0x68] sm:$0xff]
  %v1084 = vld [vmem:[%s10 + $0x80] sm:$0xff]
  %v1085 = vld [vmem:[%s10 + $0x98] sm:$0xff]
  %v1086 = vld [vmem:[%s10 + $0xb0] sm:$0xff]
  %v1087 = vld [vmem:[%s10 + $0xc8] sm:$0xff]
  %v1088 = vld [vmem:[%s10 + $0xe0] sm:$0xff]
  %v1089 = vld [vmem:[%s10 + $0xf8] sm:$0xff]
  %v1090 = vld [vmem:[%s10 + $0x110] sm:$0xff]
  %v1091 = vld [vmem:[%s10 + $0x128] sm:$0xff]
  %v1092 = vld [vmem:[%s10 + $0x140] sm:$0xff]
  %v1093 = vld [vmem:[%s10 + $0x158] sm:$0xff]
  %v1094 = vld [vmem:[%s10 + $0x170] sm:$0xff]
  %v1095 = vld [vmem:[%s10 + $0x10] sm:$0xf]
  %v1096 = vld [vmem:[%s10 + $0x28] sm:$0xf]
  %v1097 = vld [vmem:[%s10 + $0x40] sm:$0xf]
  %v1098 = vld [vmem:[%s10 + $0x58] sm:$0xf]
  %v1099 = vld [vmem:[%s10 + $0x70] sm:$0xf]
  %v1100 = vld [vmem:[%s10 + $0x88] sm:$0xf]
  %v1101 = vld [vmem:[%s10 + $0xa0] sm:$0xf]
  %v1102 = vld [vmem:[%s10 + $0xb8] sm:$0xf]
  %v1103 = vld [vmem:[%s10 + $0xd0] sm:$0xf]
  %v1104 = vld [vmem:[%s10 + $0xe8] sm:$0xf]
  %v1105 = vld [vmem:[%s10 + $0x100] sm:$0xf]
  %v1106 = vld [vmem:[%s10 + $0x118] sm:$0xf]
  %v1107 = vld [vmem:[%s10 + $0x130] sm:$0xf]
  %v1108 = vld [vmem:[%s10 + $0x148] sm:$0xf]
  %v1109 = vld [vmem:[%s10 + $0x160] sm:$0xf]
  %v1110 = vld [vmem:[%s10 + $0x178] sm:$0xf]
  %v1111 = vld [vmem:[%s10 + $0x14] sm:$0xf]
  %v1112 = vld [vmem:[%s10 + $0x2c] sm:$0xf]
  %v1113 = vld [vmem:[%s10 + $0x44] sm:$0xf]
  %v1114 = vld [vmem:[%s10 + $0x5c] sm:$0xf]
  %v1115 = vld [vmem:[%s10 + $0x74] sm:$0xf]
  %v1116 = vld [vmem:[%s10 + $0x8c] sm:$0xf]
  %v1117 = vld [vmem:[%s10 + $0xa4] sm:$0xf]
  %v1118 = vld [vmem:[%s10 + $0xbc] sm:$0xf]
  %v1119 = vld [vmem:[%s10 + $0xd4] sm:$0xf]
  %v1120 = vld [vmem:[%s10 + $0xec] sm:$0xf]
  %v1121 = vld [vmem:[%s10 + $0x104] sm:$0xf]
  %v1122 = vld [vmem:[%s10 + $0x11c] sm:$0xf]
  %v1123 = vld [vmem:[%s10 + $0x134] sm:$0xf]
  %v1124 = vld [vmem:[%s10 + $0x14c] sm:$0xf]
  %v1125 = vld [vmem:[%s10 + $0x164] sm:$0xf]
  %v1126 = vld [vmem:[%s10 + $0x17c] sm:$0xf]
  %v1128 = vlaneseq
  %v1129 = vshrl.u32 %v1128, 7
  %v1130 = vsub.s32 0, %v1129
  %v1131 = vrot.slane %v45, %v1130
  %v1132 = vlaneseq
  %v1133 = vshrl.u32 %v1132, 7
  %v1134 = vsub.s32 1, %v1133
  %v1135 = vrot.slane %v45, %v1134
  %v1154 = vunpack.c.l.b16 %v1063
  %v1155 = vunpack.c.h.b16 %v1063
  %v1156 = vunpack.c.l.b16 %v1064
  %v1157 = vunpack.c.h.b16 %v1064
  %v1158 = vunpack.c.l.b16 %v1065
  %v1159 = vunpack.c.h.b16 %v1065
  %v1160 = vunpack.c.l.b16 %v1066
  %v1161 = vunpack.c.h.b16 %v1066
  %v1162 = vunpack.c.l.b16 %v1067
  %v1163 = vunpack.c.h.b16 %v1067
  %v1164 = vunpack.c.l.b16 %v1068
  %v1165 = vunpack.c.h.b16 %v1068
  %v1166 = vunpack.c.l.b16 %v1069
  %v1167 = vunpack.c.h.b16 %v1069
  %v1168 = vunpack.c.l.b16 %v1070
  %v1169 = vunpack.c.h.b16 %v1070
  %v1170 = vunpack.c.l.b16 %v1071
  %v1171 = vunpack.c.h.b16 %v1071
  %v1172 = vunpack.c.l.b16 %v1072
  %v1173 = vunpack.c.h.b16 %v1072
  %v1174 = vunpack.c.l.b16 %v1073
  %v1175 = vunpack.c.h.b16 %v1073
  %v1176 = vunpack.c.l.b16 %v1074
  %v1177 = vunpack.c.h.b16 %v1074
  %v1178 = vunpack.c.l.b16 %v1075
  %v1179 = vunpack.c.h.b16 %v1075
  %v1180 = vunpack.c.l.b16 %v1076
  %v1181 = vunpack.c.h.b16 %v1076
  %v1182 = vunpack.c.l.b16 %v1077
  %v1183 = vunpack.c.h.b16 %v1077
  %v1184 = vunpack.c.l.b16 %v1078
  %v1185 = vunpack.c.h.b16 %v1078
  %v1186 = vpack.c.b16 %v1156, %v1154
  %v1187 = vpack.c.b16 %v1157, %v1155
  %v1188 = vpack.c.b16 %v1160, %v1158
  %v1189 = vpack.c.b16 %v1161, %v1159
  %v1190 = vpack.c.b16 %v1164, %v1162
  %v1191 = vpack.c.b16 %v1165, %v1163
  %v1192 = vpack.c.b16 %v1168, %v1166
  %v1193 = vpack.c.b16 %v1169, %v1167
  %v1194 = vpack.c.b16 %v1172, %v1170
  %v1195 = vpack.c.b16 %v1173, %v1171
  %v1196 = vpack.c.b16 %v1176, %v1174
  %v1197 = vpack.c.b16 %v1177, %v1175
  %v1198 = vpack.c.b16 %v1180, %v1178
  %v1199 = vpack.c.b16 %v1181, %v1179
  %v1200 = vpack.c.b16 %v1184, %v1182
  %v1201 = vpack.c.b16 %v1185, %v1183
  %1218 = vmatprep.subr.bf16.mxu0 %v1187
  %1219 = vmatpush1.bf16.msra.mxu0 %v1186
  %1220 = vmatprep.subr.bf16.mxu0 %v1189
  %1221 = vmatpush1.bf16.msra.mxu0 %v1188
  %1222 = vmatprep.subr.bf16.mxu0 %v1191
  %1223 = vmatpush1.bf16.msra.mxu0 %v1190
  %1224 = vmatprep.subr.bf16.mxu0 %v1193
  %1225 = vmatpush1.bf16.msra.mxu0 %v1192
  %1226 = vmatprep.subr.bf16.mxu0 %v1195
  %1227 = vmatpush1.bf16.msra.mxu0 %v1194
  %1228 = vmatprep.subr.bf16.mxu0 %v1197
  %1229 = vmatpush1.bf16.msra.mxu0 %v1196
  %1230 = vmatprep.subr.bf16.mxu0 %v1199
  %1231 = vmatpush1.bf16.msra.mxu0 %v1198
  %1232 = vmatprep.subr.bf16.mxu0 %v1201
  %1233 = vmatpush1.bf16.msra.mxu0 %v1200
  %1234 = vmatprep.subr.bf16.mxu0 0
  %1235 = vmatpush1.bf16.msra.mxu0 0
  %1236 = vmatprep.subr.bf16.mxu0 0
  %1237 = vmatpush1.bf16.msra.mxu0 0
  %1238 = vmatprep.subr.bf16.mxu0 0
  %1239 = vmatpush1.bf16.msra.mxu0 0
  %1240 = vmatprep.subr.bf16.mxu0 0
  %1241 = vmatpush1.bf16.msra.mxu0 0
  %1242 = vmatprep.subr.bf16.mxu0 0
  %1243 = vmatpush1.bf16.msra.mxu0 0
  %1244 = vmatprep.subr.bf16.mxu0 0
  %1245 = vmatpush1.bf16.msra.mxu0 0
  %1246 = vmatprep.subr.bf16.mxu0 0
  %1247 = vmatpush1.bf16.msra.mxu0 0
  %1248 = vmatprep.subr.bf16.mxu0 0
  %1249 = vmatpush1.bf16.msra.mxu0 0
  %1250 = vmatprep.mubr.bf16.mxu0 0
  %1251 = vmatmul.mubr.bf16.gmra.mrb[0].mxu0 %v1056
  %v1252 = vpop.f32.mrb[0].mxu0
  %v1253 = vadd.f32 %v1131, %v1252
  %v1254 = vpop.f32.mrb[0].mxu0
  %v1255 = vadd.f32 %v1135, %v1254
  %v1256 = vpop.f32.mrb[0].mxu0
  %v1257 = vadd.f32 %v1131, %v1256
  %v1258 = vpop.f32.mrb[0].mxu0
  %v1259 = vadd.f32 %v1135, %v1258
  %1260 = vmatprep.mubr.bf16.mxu0 0
  %1261 = vmatmul.mubr.bf16.gmra.mrb[0].mxu0 %v1057
  %v1262 = vpop.f32.mrb[0].mxu0
  %v1263 = vadd.f32 %v1131, %v1262
  %v1264 = vpop.f32.mrb[0].mxu0
  %v1265 = vadd.f32 %v1135, %v1264
  %v1266 = vpop.f32.mrb[0].mxu0
  %v1267 = vadd.f32 %v1131, %v1266
  %v1268 = vpop.f32.mrb[0].mxu0
  %v1269 = vadd.f32 %v1135, %v1268
  %1270 = vmatprep.mubr.bf16.mxu0 0
  %1271 = vmatmul.mubr.bf16.gmra.mrb[0].mxu0 %v1058
  %v1272 = vpop.f32.mrb[0].mxu0
  %v1273 = vadd.f32 %v1131, %v1272
  %v1274 = vpop.f32.mrb[0].mxu0
  %v1275 = vadd.f32 %v1135, %v1274
  %v1276 = vpop.f32.mrb[0].mxu0
  %v1277 = vadd.f32 %v1131, %v1276
  %v1278 = vpop.f32.mrb[0].mxu0
  %v1279 = vadd.f32 %v1135, %v1278
  %1280 = vmatprep.mubr.bf16.mxu0 0
  %1281 = vmatmul.mubr.bf16.gmra.mrb[0].mxu0 %v1059
  %v1282 = vpop.f32.mrb[0].mxu0
  %v1283 = vadd.f32 %v1131, %v1282
  %v1284 = vpop.f32.mrb[0].mxu0
  %v1285 = vadd.f32 %v1135, %v1284
  %v1286 = vpop.f32.mrb[0].mxu0
  %v1287 = vadd.f32 %v1131, %v1286
  %v1288 = vpop.f32.mrb[0].mxu0
  %v1289 = vadd.f32 %v1135, %v1288
  %1290 = vmatprep.mubr.bf16.mxu0 0
  %1291 = vmatmul.mubr.bf16.gmra.mrb[0].mxu0 %v1060
  %v1292 = vpop.f32.mrb[0].mxu0
  %v1293 = vadd.f32 %v1131, %v1292
  %v1294 = vpop.f32.mrb[0].mxu0
  %v1295 = vadd.f32 %v1135, %v1294
  %v1296 = vpop.f32.mrb[0].mxu0
  %v1297 = vadd.f32 %v1131, %v1296
  %v1298 = vpop.f32.mrb[0].mxu0
  %v1299 = vadd.f32 %v1135, %v1298
  %1300 = vmatprep.mubr.bf16.mxu0 0
  %1301 = vmatmul.mubr.bf16.gmra.mrb[0].mxu0 %v1061
  %v1302 = vpop.f32.mrb[0].mxu0
  %v1303 = vadd.f32 %v1131, %v1302
  %v1304 = vpop.f32.mrb[0].mxu0
  %v1305 = vadd.f32 %v1135, %v1304
  %v1306 = vpop.f32.mrb[0].mxu0
  %v1307 = vadd.f32 %v1131, %v1306
  %v1308 = vpop.f32.mrb[0].mxu0
  %v1309 = vadd.f32 %v1135, %v1308
  %1310 = vmatprep.mubr.bf16.mxu0 0
  %1311 = vmatmul.mubr.bf16.gmra.mrb[0].mxu0 %v1062
  %v1312 = vpop.f32.mrb[0].mxu0
  %v1313 = vadd.f32 %v1131, %v1312
  %v1314 = vpop.f32.mrb[0].mxu0
  %v1315 = vadd.f32 %v1135, %v1314
  %v1316 = vpop.f32.mrb[0].mxu0
  %v1317 = vpop.f32.mrb[0].mxu0
  %1318 = vdwg.mxu0
  %v1319 = vpack.c.bf16 %v1257, %v1253
  %v1320 = vpack.c.bf16 %v1267, %v1263
  %v1321 = vpack.c.bf16 %v1277, %v1273
  %v1322 = vpack.c.bf16 %v1287, %v1283
  %v1323 = vpack.c.bf16 %v1297, %v1293
  %v1324 = vpack.c.bf16 %v1307, %v1303
  %v1325 = vpack.c.bf16 %v1313, %v1313
  %v1326 = vpack.c.bf16 %v1259, %v1255
  %v1327 = vpack.c.bf16 %v1269, %v1265
  %v1328 = vpack.c.bf16 %v1279, %v1275
  %v1329 = vpack.c.bf16 %v1289, %v1285
  %v1330 = vpack.c.bf16 %v1299, %v1295
  %v1331 = vpack.c.bf16 %v1309, %v1305
  %v1332 = vpack.c.bf16 %v1315, %v1315
  %1333 = vmatprep.subr.bf16.mxu0 0
  %1334 = vmatpush1.bf16.xpose.msra.mxu0 %v1326
  %1335 = vmatprep.subr.bf16.mxu0 0
  %1336 = vmatpush1.bf16.xpose.msra.mxu0 %v1327
  %1337 = vmatprep.subr.bf16.mxu0 0
  %1338 = vmatpush1.bf16.xpose.msra.mxu0 %v1328
  %1339 = vmatprep.subr.bf16.mxu0 0
  %1340 = vmatpush1.bf16.xpose.msra.mxu0 %v1329
  %1341 = vmatprep.subr.bf16.mxu0 0
  %1342 = vmatpush1.bf16.xpose.msra.mxu0 %v1330
  %1343 = vmatprep.subr.bf16.mxu0 0
  %1344 = vmatpush1.bf16.xpose.msra.mxu0 %v1331
  %1345 = vmatprep.subr.bf16.mxu0 0
  %1346 = vmatpush1.bf16.xpose.msra.mxu0 %v1332
  %1347 = vmatprep.subr.bf16.mxu0 0
  %1348 = vmatpush1.bf16.xpose.msra.mxu0 0
  %1349 = vmatprep.subr.bf16.mxu0 0
  %1350 = vmatpush1.bf16.xpose.msra.mxu0 0
  %1351 = vmatprep.subr.bf16.mxu0 0
  %1352 = vmatpush1.bf16.xpose.msra.mxu0 0
  %1353 = vmatprep.subr.bf16.mxu0 0
  %1354 = vmatpush1.bf16.xpose.msra.mxu0 0
  %1355 = vmatprep.subr.bf16.mxu0 0
  %1356 = vmatpush1.bf16.xpose.msra.mxu0 0
  %1357 = vmatprep.subr.bf16.mxu0 0
  %1358 = vmatpush1.bf16.xpose.msra.mxu0 0
  %1359 = vmatprep.subr.bf16.mxu0 0
  %1360 = vmatpush1.bf16.xpose.msra.mxu0 0
  %1361 = vmatprep.subr.bf16.mxu0 0
  %1362 = vmatpush1.bf16.xpose.msra.mxu0 0
  %1363 = vmatprep.subr.bf16.mxu0 0
  %1364 = vmatpush1.bf16.xpose.msra.mxu0 0
  %1365 = vmatprep.mubr.bf16.mxu0 0
  %1366 = vmatmul.mubr.bf16.gmra.mrb[0].mxu0 %v1319
  %v1367 = vpop.f32.mrb[0].mxu0
  %v1368 = vadd.f32 0.0, %v1367
  %v1369 = vpop.f32.mrb[0].mxu0
  %v1370 = vpop.f32.mrb[0].mxu0
  %v1371 = vadd.f32 0.0, %v1370
  %v1372 = vpop.f32.mrb[0].mxu0
  %1373 = vmatprep.mubr.bf16.mxu0 0
  %1374 = vmatmul.mubr.bf16.gmra.mrb[0].mxu0 %v1320
  %v1375 = vpop.f32.mrb[0].mxu0
  %v1376 = vadd.f32 0.0, %v1375
  %v1377 = vpop.f32.mrb[0].mxu0
  %v1378 = vpop.f32.mrb[0].mxu0
  %v1379 = vadd.f32 0.0, %v1378
  %v1380 = vpop.f32.mrb[0].mxu0
  %1381 = vmatprep.mubr.bf16.mxu0 0
  %1382 = vmatmul.mubr.bf16.gmra.mrb[0].mxu0 %v1321
  %v1383 = vpop.f32.mrb[0].mxu0
  %v1384 = vadd.f32 0.0, %v1383
  %v1385 = vpop.f32.mrb[0].mxu0
  %v1386 = vpop.f32.mrb[0].mxu0
  %v1387 = vadd.f32 0.0, %v1386
  %v1388 = vpop.f32.mrb[0].mxu0
  %1389 = vmatprep.mubr.bf16.mxu0 0
  %1390 = vmatmul.mubr.bf16.gmra.mrb[0].mxu0 %v1322
  %v1391 = vpop.f32.mrb[0].mxu0
  %v1392 = vadd.f32 0.0, %v1391
  %v1393 = vpop.f32.mrb[0].mxu0
  %v1394 = vpop.f32.mrb[0].mxu0
  %v1395 = vadd.f32 0.0, %v1394
  %v1396 = vpop.f32.mrb[0].mxu0
  %1397 = vmatprep.mubr.bf16.mxu0 0
  %1398 = vmatmul.mubr.bf16.gmra.mrb[0].mxu0 %v1323
  %v1399 = vpop.f32.mrb[0].mxu0
  %v1400 = vadd.f32 0.0, %v1399
  %v1401 = vpop.f32.mrb[0].mxu0
  %v1402 = vpop.f32.mrb[0].mxu0
  %v1403 = vadd.f32 0.0, %v1402
  %v1404 = vpop.f32.mrb[0].mxu0
  %1405 = vmatprep.mubr.bf16.mxu0 0
  %1406 = vmatmul.mubr.bf16.gmra.mrb[0].mxu0 %v1324
  %v1407 = vpop.f32.mrb[0].mxu0
  %v1408 = vadd.f32 0.0, %v1407
  %v1409 = vpop.f32.mrb[0].mxu0
  %v1410 = vpop.f32.mrb[0].mxu0
  %v1411 = vadd.f32 0.0, %v1410
  %v1412 = vpop.f32.mrb[0].mxu0
  %1413 = vmatprep.mubr.bf16.mxu0 0
  %1414 = vmatmul.mubr.bf16.gmra.mrb[0].mxu0 %v1325
  %v1415 = vpop.f32.mrb[0].mxu0
  %v1416 = vadd.f32 0.0, %v1415
  %v1417 = vpop.f32.mrb[0].mxu0
  %v1418 = vpop.f32.mrb[0].mxu0
  %v1419 = vpop.f32.mrb[0].mxu0
  %1420 = vdwg.mxu0
  %v1421 = vmul.f32 %v1368, 0.088388346
  %v1422 = vmul.f32 %v1371, 0.088388346
  %v1423 = vmul.f32 %v1376, 0.088388346
  %v1424 = vmul.f32 %v1379, 0.088388346
  %v1425 = vmul.f32 %v1384, 0.088388346
  %v1426 = vmul.f32 %v1387, 0.088388346
  %v1427 = vmul.f32 %v1392, 0.088388346
  %v1428 = vmul.f32 %v1395, 0.088388346
  %v1429 = vmul.f32 %v1400, 0.088388346
  %v1430 = vmul.f32 %v1403, 0.088388346
  %v1431 = vmul.f32 %v1408, 0.088388346
  %v1432 = vmul.f32 %v1411, 0.088388346
  %v1433 = vmul.f32 %v1416, 0.088388346
  %v1434 = vld [vmem:[%s4] sm:$0x1]
  %v1435 = vlaneseq
  %v1436 = vshrl.u32 %v1435, 7
  %v1437 = vsub.s32 0, %v1436
  %v1438 = vrot.slane %v1434, %v1437
  %v1439 = vadd.f32 %v1421, %v1438
  %v1440 = vadd.f32 %v1422, %v1438
  %v1441 = vadd.f32 %v1423, %v1438
  %v1442 = vadd.f32 %v1424, %v1438
  %v1443 = vadd.f32 %v1425, %v1438
  %v1444 = vadd.f32 %v1426, %v1438
  %v1445 = vadd.f32 %v1427, %v1438
  %v1446 = vadd.f32 %v1428, %v1438
  %v1447 = vadd.f32 %v1429, %v1438
  %v1448 = vadd.f32 %v1430, %v1438
  %v1449 = vadd.f32 %v1431, %v1438
  %v1450 = vadd.f32 %v1432, %v1438
  %v1451 = vadd.f32 %v1433, %v1438
  %vm1452 = vcmask 850944
  %v1453 = vsel %vm1452, %v1439, -inf
  %1454 = vmax.xlane.f32.xlu0 %v1453
  %v1455 = vpop.xlane.xlu0 %1454
  %v1456 = vsel %vm1452, %v1440, -inf
  %1457 = vmax.xlane.f32.xlu0 %v1456
  %v1458 = vpop.xlane.xlu0 %1457
  %v1459 = vsel %vm1452, %v1441, -inf
  %1460 = vmax.xlane.f32.xlu0 %v1459
  %v1461 = vpop.xlane.xlu0 %1460
  %v1462 = vsel %vm1452, %v1442, -inf
  %1463 = vmax.xlane.f32.xlu0 %v1462
  %v1464 = vpop.xlane.xlu0 %1463
  %v1465 = vsel %vm1452, %v1443, -inf
  %1466 = vmax.xlane.f32.xlu0 %v1465
  %v1467 = vpop.xlane.xlu0 %1466
  %v1468 = vsel %vm1452, %v1444, -inf
  %1469 = vmax.xlane.f32.xlu0 %v1468
  %v1470 = vpop.xlane.xlu0 %1469
  %v1471 = vsel %vm1452, %v1445, -inf
  %1472 = vmax.xlane.f32.xlu0 %v1471
  %v1473 = vpop.xlane.xlu0 %1472
  %v1474 = vsel %vm1452, %v1446, -inf
  %1475 = vmax.xlane.f32.xlu0 %v1474
  %v1476 = vpop.xlane.xlu0 %1475
  %v1477 = vsel %vm1452, %v1447, -inf
  %1478 = vmax.xlane.f32.xlu0 %v1477
  %v1479 = vpop.xlane.xlu0 %1478
  %v1480 = vsel %vm1452, %v1448, -inf
  %1481 = vmax.xlane.f32.xlu0 %v1480
  %v1482 = vpop.xlane.xlu0 %1481
  %v1483 = vsel %vm1452, %v1449, -inf
  %1484 = vmax.xlane.f32.xlu0 %v1483
  %v1485 = vpop.xlane.xlu0 %1484
  %v1486 = vsel %vm1452, %v1450, -inf
  %1487 = vmax.xlane.f32.xlu0 %v1486
  %v1488 = vpop.xlane.xlu0 %1487
  %v1489 = vsel %vm1452, %v1451, -inf
  %1490 = vmax.xlane.f32.xlu0 %v1489
  %v1491 = vpop.xlane.xlu0 %1490
  %v1492 = vsub.f32 %v1439, %v1455
  %v1493 = vsub.f32 %v1440, %v1458
  %v1494 = vsub.f32 %v1441, %v1461
  %v1495 = vsub.f32 %v1442, %v1464
  %v1496 = vsub.f32 %v1443, %v1467
  %v1497 = vsub.f32 %v1444, %v1470
  %v1498 = vsub.f32 %v1445, %v1473
  %v1499 = vsub.f32 %v1446, %v1476
  %v1500 = vsub.f32 %v1447, %v1479
  %v1501 = vsub.f32 %v1448, %v1482
  %v1502 = vsub.f32 %v1449, %v1485
  %v1503 = vsub.f32 %v1450, %v1488
  %v1504 = vsub.f32 %v1451, %v1491
  %v1505 = vmul.f32 %v1492, 1.442695
  %v1506 = vpow.pop %v1505
  %v1507 = vmul.f32 %v1493, 1.442695
  %v1508 = vpow.pop %v1507
  %v1509 = vmul.f32 %v1494, 1.442695
  %v1510 = vpow.pop %v1509
  %v1511 = vmul.f32 %v1495, 1.442695
  %v1512 = vpow.pop %v1511
  %v1513 = vmul.f32 %v1496, 1.442695
  %v1514 = vpow.pop %v1513
  %v1515 = vmul.f32 %v1497, 1.442695
  %v1516 = vpow.pop %v1515
  %v1517 = vmul.f32 %v1498, 1.442695
  %v1518 = vpow.pop %v1517
  %v1519 = vmul.f32 %v1499, 1.442695
  %v1520 = vpow.pop %v1519
  %v1521 = vmul.f32 %v1500, 1.442695
  %v1522 = vpow.pop %v1521
  %v1523 = vmul.f32 %v1501, 1.442695
  %v1524 = vpow.pop %v1523
  %v1525 = vmul.f32 %v1502, 1.442695
  %v1526 = vpow.pop %v1525
  %v1527 = vmul.f32 %v1503, 1.442695
  %v1528 = vpow.pop %v1527
  %v1529 = vmul.f32 %v1504, 1.442695
  %v1530 = vpow.pop %v1529
  %v1531 = vsel %vm1452, %v1506, 0.0
  %1532 = vadd.xlane.f32.xlu0 %v1531
  %v1533 = vpop.xlane.xlu0 %1532
  %v1534 = vsel %vm1452, %v1508, 0.0
  %1535 = vadd.xlane.f32.xlu0 %v1534
  %v1536 = vpop.xlane.xlu0 %1535
  %v1537 = vsel %vm1452, %v1510, 0.0
  %1538 = vadd.xlane.f32.xlu0 %v1537
  %v1539 = vpop.xlane.xlu0 %1538
  %v1540 = vsel %vm1452, %v1512, 0.0
  %1541 = vadd.xlane.f32.xlu0 %v1540
  %v1542 = vpop.xlane.xlu0 %1541
  %v1543 = vsel %vm1452, %v1514, 0.0
  %1544 = vadd.xlane.f32.xlu0 %v1543
  %v1545 = vpop.xlane.xlu0 %1544
  %v1546 = vsel %vm1452, %v1516, 0.0
  %1547 = vadd.xlane.f32.xlu0 %v1546
  %v1548 = vpop.xlane.xlu0 %1547
  %v1549 = vsel %vm1452, %v1518, 0.0
  %1550 = vadd.xlane.f32.xlu0 %v1549
  %v1551 = vpop.xlane.xlu0 %1550
  %v1552 = vsel %vm1452, %v1520, 0.0
  %1553 = vadd.xlane.f32.xlu0 %v1552
  %v1554 = vpop.xlane.xlu0 %1553
  %v1555 = vsel %vm1452, %v1522, 0.0
  %1556 = vadd.xlane.f32.xlu0 %v1555
  %v1557 = vpop.xlane.xlu0 %1556
  %v1558 = vsel %vm1452, %v1524, 0.0
  %1559 = vadd.xlane.f32.xlu0 %v1558
  %v1560 = vpop.xlane.xlu0 %1559
  %v1561 = vsel %vm1452, %v1526, 0.0
  %1562 = vadd.xlane.f32.xlu0 %v1561
  %v1563 = vpop.xlane.xlu0 %1562
  %v1564 = vsel %vm1452, %v1528, 0.0
  %1565 = vadd.xlane.f32.xlu0 %v1564
  %v1566 = vpop.xlane.xlu0 %1565
  %v1567 = vsel %vm1452, %v1530, 0.0
  %1568 = vadd.xlane.f32.xlu0 %v1567
  %v1569 = vpop.xlane.xlu0 %1568
  %v1570 = vrcp.pop %v1533
  %v1571 = vrcp.pop %v1536
  %v1572 = vrcp.pop %v1539
  %v1573 = vrcp.pop %v1542
  %v1574 = vrcp.pop %v1545
  %v1575 = vrcp.pop %v1548
  %v1576 = vrcp.pop %v1551
  %v1577 = vrcp.pop %v1554
  %v1578 = vrcp.pop %v1557
  %v1579 = vrcp.pop %v1560
  %v1580 = vrcp.pop %v1563
  %v1581 = vrcp.pop %v1566
  %v1582 = vrcp.pop %v1569
  %v1583 = vmul.f32 %v1506, %v1570
  %v1584 = vmul.f32 %v1508, %v1571
  %v1585 = vmul.f32 %v1510, %v1572
  %v1586 = vmul.f32 %v1512, %v1573
  %v1587 = vmul.f32 %v1514, %v1574
  %v1588 = vmul.f32 %v1516, %v1575
  %v1589 = vmul.f32 %v1518, %v1576
  %v1590 = vmul.f32 %v1520, %v1577
  %v1591 = vmul.f32 %v1522, %v1578
  %v1592 = vmul.f32 %v1524, %v1579
  %v1593 = vmul.f32 %v1526, %v1580
  %v1594 = vmul.f32 %v1528, %v1581
  %v1595 = vmul.f32 %v1530, %v1582
  %v1596 = vpack.c.bf16 %v1018, %v1017
  %v1597 = vpack.c.bf16 %v1020, %v1019
  %v1598 = vpack.c.bf16 %v1022, %v1021
  %v1599 = vpack.c.bf16 %v1024, %v1023
  %v1600 = vpack.c.bf16 %v1026, %v1025
  %v1601 = vpack.c.bf16 %v1028, %v1027
  %v1602 = vpack.c.bf16 %v1029, %v1029
  %v1619 = vunpack.c.l.b16 %v1095
  %v1620 = vunpack.c.l.b16 %v1096
  %v1621 = vunpack.c.l.b16 %v1097
  %v1622 = vunpack.c.l.b16 %v1098
  %v1623 = vunpack.c.l.b16 %v1099
  %v1624 = vunpack.c.l.b16 %v1100
  %v1625 = vunpack.c.l.b16 %v1101
  %v1626 = vunpack.c.l.b16 %v1102
  %v1627 = vunpack.c.l.b16 %v1103
  %v1628 = vunpack.c.l.b16 %v1104
  %v1629 = vunpack.c.l.b16 %v1105
  %v1630 = vunpack.c.l.b16 %v1106
  %v1631 = vunpack.c.l.b16 %v1107
  %v1632 = vunpack.c.l.b16 %v1108
  %v1633 = vunpack.c.l.b16 %v1109
  %v1634 = vunpack.c.l.b16 %v1110
  %v1635 = vpack.c.b16 %v1620, %v1619
  %v1636 = vpack.c.b16 %v1622, %v1621
  %v1637 = vpack.c.b16 %v1624, %v1623
  %v1638 = vpack.c.b16 %v1626, %v1625
  %v1639 = vpack.c.b16 %v1628, %v1627
  %v1640 = vpack.c.b16 %v1630, %v1629
  %v1641 = vpack.c.b16 %v1632, %v1631
  %v1642 = vpack.c.b16 %v1634, %v1633
  %1651 = vmatprep.subr.bf16.mxu0 0
  %1652 = vmatpush1.bf16.msra.mxu0 %v1635
  %1653 = vmatprep.subr.bf16.mxu0 0
  %1654 = vmatpush1.bf16.msra.mxu0 %v1636
  %1655 = vmatprep.subr.bf16.mxu0 0
  %1656 = vmatpush1.bf16.msra.mxu0 %v1637
  %1657 = vmatprep.subr.bf16.mxu0 0
  %1658 = vmatpush1.bf16.msra.mxu0 %v1638
  %1659 = vmatprep.subr.bf16.mxu0 0
  %1660 = vmatpush1.bf16.msra.mxu0 %v1639
  %1661 = vmatprep.subr.bf16.mxu0 0
  %1662 = vmatpush1.bf16.msra.mxu0 %v1640
  %1663 = vmatprep.subr.bf16.mxu0 0
  %1664 = vmatpush1.bf16.msra.mxu0 %v1641
  %1665 = vmatprep.subr.bf16.mxu0 0
  %1666 = vmatpush1.bf16.msra.mxu0 %v1642
  %1667 = vmatprep.subr.bf16.mxu0 0
  %1668 = vmatpush1.bf16.msra.mxu0 0
  %1669 = vmatprep.subr.bf16.mxu0 0
  %1670 = vmatpush1.bf16.msra.mxu0 0
  %1671 = vmatprep.subr.bf16.mxu0 0
  %1672 = vmatpush1.bf16.msra.mxu0 0
  %1673 = vmatprep.subr.bf16.mxu0 0
  %1674 = vmatpush1.bf16.msra.mxu0 0
  %1675 = vmatprep.subr.bf16.mxu0 0
  %1676 = vmatpush1.bf16.msra.mxu0 0
  %1677 = vmatprep.subr.bf16.mxu0 0
  %1678 = vmatpush1.bf16.msra.mxu0 0
  %1679 = vmatprep.subr.bf16.mxu0 0
  %1680 = vmatpush1.bf16.msra.mxu0 0
  %1681 = vmatprep.subr.bf16.mxu0 0
  %1682 = vmatpush1.bf16.msra.mxu0 0
  %1683 = vmatprep.mubr.bf16.mxu0 0
  %1684 = vmatmul.mubr.bf16.gmra.mrb[0].mxu0 %v1596
  %v1685 = vpop.f32.mrb[0].mxu0
  %v1686 = vadd.f32 %v48, %v1685
  %v1687 = vpop.f32.mrb[0].mxu0
  %v1688 = vpop.f32.mrb[0].mxu0
  %v1689 = vadd.f32 %v48, %v1688
  %v1690 = vpop.f32.mrb[0].mxu0
  %1691 = vmatprep.mubr.bf16.mxu0 0
  %1692 = vmatmul.mubr.bf16.gmra.mrb[0].mxu0 %v1597
  %v1693 = vpop.f32.mrb[0].mxu0
  %v1694 = vadd.f32 %v48, %v1693
  %v1695 = vpop.f32.mrb[0].mxu0
  %v1696 = vpop.f32.mrb[0].mxu0
  %v1697 = vadd.f32 %v48, %v1696
  %v1698 = vpop.f32.mrb[0].mxu0
  %1699 = vmatprep.mubr.bf16.mxu0 0
  %1700 = vmatmul.mubr.bf16.gmra.mrb[0].mxu0 %v1598
  %v1701 = vpop.f32.mrb[0].mxu0
  %v1702 = vadd.f32 %v48, %v1701
  %v1703 = vpop.f32.mrb[0].mxu0
  %v1704 = vpop.f32.mrb[0].mxu0
  %v1705 = vadd.f32 %v48, %v1704
  %v1706 = vpop.f32.mrb[0].mxu0
  %1707 = vmatprep.mubr.bf16.mxu0 0
  %1708 = vmatmul.mubr.bf16.gmra.mrb[0].mxu0 %v1599
  %v1709 = vpop.f32.mrb[0].mxu0
  %v1710 = vadd.f32 %v48, %v1709
  %v1711 = vpop.f32.mrb[0].mxu0
  %v1712 = vpop.f32.mrb[0].mxu0
  %v1713 = vadd.f32 %v48, %v1712
  %v1714 = vpop.f32.mrb[0].mxu0
  %1715 = vmatprep.mubr.bf16.mxu0 0
  %1716 = vmatmul.mubr.bf16.gmra.mrb[0].mxu0 %v1600
  %v1717 = vpop.f32.mrb[0].mxu0
  %v1718 = vadd.f32 %v48, %v1717
  %v1719 = vpop.f32.mrb[0].mxu0
  %v1720 = vpop.f32.mrb[0].mxu0
  %v1721 = vadd.f32 %v48, %v1720
  %v1722 = vpop.f32.mrb[0].mxu0
  %1723 = vmatprep.mubr.bf16.mxu0 0
  %1724 = vmatmul.mubr.bf16.gmra.mrb[0].mxu0 %v1601
  %v1725 = vpop.f32.mrb[0].mxu0
  %v1726 = vadd.f32 %v48, %v1725
  %v1727 = vpop.f32.mrb[0].mxu0
  %v1728 = vpop.f32.mrb[0].mxu0
  %v1729 = vadd.f32 %v48, %v1728
  %v1730 = vpop.f32.mrb[0].mxu0
  %1731 = vmatprep.mubr.bf16.mxu0 0
  %1732 = vmatmul.mubr.bf16.gmra.mrb[0].mxu0 %v1602
  %v1733 = vpop.f32.mrb[0].mxu0
  %v1734 = vadd.f32 %v48, %v1733
  %v1735 = vpop.f32.mrb[0].mxu0
  %v1736 = vpop.f32.mrb[0].mxu0
  %v1737 = vpop.f32.mrb[0].mxu0
  %1738 = vdwg.mxu0
  %v1739 = vpack.c.bf16 %v1584, %v1583
  %v1740 = vpack.c.bf16 %v1586, %v1585
  %v1741 = vpack.c.bf16 %v1588, %v1587
  %v1742 = vpack.c.bf16 %v1590, %v1589
  %v1743 = vpack.c.bf16 %v1592, %v1591
  %v1744 = vpack.c.bf16 %v1594, %v1593
  %v1745 = vpack.c.bf16 %v1595, %v1595
  %v1746 = vpack.c.bf16 %v1689, %v1686
  %v1747 = vpack.c.bf16 %v1697, %v1694
  %v1748 = vpack.c.bf16 %v1705, %v1702
  %v1749 = vpack.c.bf16 %v1713, %v1710
  %v1750 = vpack.c.bf16 %v1721, %v1718
  %v1751 = vpack.c.bf16 %v1729, %v1726
  %v1752 = vpack.c.bf16 %v1734, %v1734
  %v1754 = vsel %vm1452, %v1739, 0
  %v1757 = vsel %vm1452, %v1740, 0
  %v1760 = vsel %vm1452, %v1741, 0
  %v1763 = vsel %vm1452, %v1742, 0
  %v1766 = vsel %vm1452, %v1743, 0
  %v1769 = vsel %vm1452, %v1744, 0
  %v1772 = vsel %vm1452, %v1745, 0
  %vm1774 = vcmask 1043456
  %v1776 = vsel %vm1774, %v1752, 0
  %1778 = vmatprep.subr.bf16.mxu0 0
  %1779 = vmatpush1.bf16.msra.mxu0 %v1746
  %1780 = vmatprep.subr.bf16.mxu0 0
  %1781 = vmatpush1.bf16.msra.mxu0 %v1747
  %1782 = vmatprep.subr.bf16.mxu0 0
  %1783 = vmatpush1.bf16.msra.mxu0 %v1748
  %1784 = vmatprep.subr.bf16.mxu0 0
  %1785 = vmatpush1.bf16.msra.mxu0 %v1749
  %1786 = vmatprep.subr.bf16.mxu0 0
  %1787 = vmatpush1.bf16.msra.mxu0 %v1750
  %1788 = vmatprep.subr.bf16.mxu0 0
  %1789 = vmatpush1.bf16.msra.mxu0 %v1751
  %1790 = vmatprep.subr.bf16.mxu0 0
  %1791 = vmatpush1.bf16.msra.mxu0 %v1776
  %1792 = vmatprep.subr.bf16.mxu0 0
  %1793 = vmatpush1.bf16.msra.mxu0 0
  %1794 = vmatprep.subr.bf16.mxu0 0
  %1795 = vmatpush1.bf16.msra.mxu0 0
  %1796 = vmatprep.subr.bf16.mxu0 0
  %1797 = vmatpush1.bf16.msra.mxu0 0
  %1798 = vmatprep.subr.bf16.mxu0 0
  %1799 = vmatpush1.bf16.msra.mxu0 0
  %1800 = vmatprep.subr.bf16.mxu0 0
  %1801 = vmatpush1.bf16.msra.mxu0 0
  %1802 = vmatprep.subr.bf16.mxu0 0
  %1803 = vmatpush1.bf16.msra.mxu0 0
  %1804 = vmatprep.subr.bf16.mxu0 0
  %1805 = vmatpush1.bf16.msra.mxu0 0
  %1806 = vmatprep.subr.bf16.mxu0 0
  %1807 = vmatpush1.bf16.msra.mxu0 0
  %1808 = vmatprep.subr.bf16.mxu0 0
  %1809 = vmatpush1.bf16.msra.mxu0 0
  %1810 = vmatprep.mubr.bf16.mxu0 0
  %1811 = vmatmul.mubr.bf16.gmra.mrb[0].mxu0 %v1754
  %v1812 = vpop.f32.mrb[0].mxu0
  %v1813 = vadd.f32 0.0, %v1812
  %v1814 = vpop.f32.mrb[0].mxu0
  %v1815 = vpop.f32.mrb[0].mxu0
  %v1816 = vadd.f32 0.0, %v1815
  %v1817 = vpop.f32.mrb[0].mxu0
  %1818 = vmatprep.mubr.bf16.mxu0 0
  %1819 = vmatmul.mubr.bf16.gmra.mrb[0].mxu0 %v1757
  %v1820 = vpop.f32.mrb[0].mxu0
  %v1821 = vadd.f32 0.0, %v1820
  %v1822 = vpop.f32.mrb[0].mxu0
  %v1823 = vpop.f32.mrb[0].mxu0
  %v1824 = vadd.f32 0.0, %v1823
  %v1825 = vpop.f32.mrb[0].mxu0
  %1826 = vmatprep.mubr.bf16.mxu0 0
  %1827 = vmatmul.mubr.bf16.gmra.mrb[0].mxu0 %v1760
  %v1828 = vpop.f32.mrb[0].mxu0
  %v1829 = vadd.f32 0.0, %v1828
  %v1830 = vpop.f32.mrb[0].mxu0
  %v1831 = vpop.f32.mrb[0].mxu0
  %v1832 = vadd.f32 0.0, %v1831
  %v1833 = vpop.f32.mrb[0].mxu0
  %1834 = vmatprep.mubr.bf16.mxu0 0
  %1835 = vmatmul.mubr.bf16.gmra.mrb[0].mxu0 %v1763
  %v1836 = vpop.f32.mrb[0].mxu0
  %v1837 = vadd.f32 0.0, %v1836
  %v1838 = vpop.f32.mrb[0].mxu0
  %v1839 = vpop.f32.mrb[0].mxu0
  %v1840 = vadd.f32 0.0, %v1839
  %v1841 = vpop.f32.mrb[0].mxu0
  %1842 = vmatprep.mubr.bf16.mxu0 0
  %1843 = vmatmul.mubr.bf16.gmra.mrb[0].mxu0 %v1766
  %v1844 = vpop.f32.mrb[0].mxu0
  %v1845 = vadd.f32 0.0, %v1844
  %v1846 = vpop.f32.mrb[0].mxu0
  %v1847 = vpop.f32.mrb[0].mxu0
  %v1848 = vadd.f32 0.0, %v1847
  %v1849 = vpop.f32.mrb[0].mxu0
  %1850 = vmatprep.mubr.bf16.mxu0 0
  %1851 = vmatmul.mubr.bf16.gmra.mrb[0].mxu0 %v1769
  %v1852 = vpop.f32.mrb[0].mxu0
  %v1853 = vadd.f32 0.0, %v1852
  %v1854 = vpop.f32.mrb[0].mxu0
  %v1855 = vpop.f32.mrb[0].mxu0
  %v1856 = vadd.f32 0.0, %v1855
  %v1857 = vpop.f32.mrb[0].mxu0
  %1858 = vmatprep.mubr.bf16.mxu0 0
  %1859 = vmatmul.mubr.bf16.gmra.mrb[0].mxu0 %v1772
  %v1860 = vpop.f32.mrb[0].mxu0
  %v1861 = vadd.f32 0.0, %v1860
  %v1862 = vpop.f32.mrb[0].mxu0
  %v1863 = vpop.f32.mrb[0].mxu0
  %v1864 = vpop.f32.mrb[0].mxu0
  %1865 = vdwg.mxu0
  %v1866 = vpack.c.bf16 %v1816, %v1813
  %v1867 = vpack.c.bf16 %v1824, %v1821
  %v1868 = vpack.c.bf16 %v1832, %v1829
  %v1869 = vpack.c.bf16 %v1840, %v1837
  %v1870 = vpack.c.bf16 %v1848, %v1845
  %v1871 = vpack.c.bf16 %v1856, %v1853
  %v1872 = vpack.c.bf16 %v1861, %v1861
  %v1889 = vunpack.c.l.b16 %v1111
  %v1890 = vunpack.c.l.b16 %v1112
  %v1891 = vunpack.c.l.b16 %v1113
  %v1892 = vunpack.c.l.b16 %v1114
  %v1893 = vunpack.c.l.b16 %v1115
  %v1894 = vunpack.c.l.b16 %v1116
  %v1895 = vunpack.c.l.b16 %v1117
  %v1896 = vunpack.c.l.b16 %v1118
  %v1897 = vunpack.c.l.b16 %v1119
  %v1898 = vunpack.c.l.b16 %v1120
  %v1899 = vunpack.c.l.b16 %v1121
  %v1900 = vunpack.c.l.b16 %v1122
  %v1901 = vunpack.c.l.b16 %v1123
  %v1902 = vunpack.c.l.b16 %v1124
  %v1903 = vunpack.c.l.b16 %v1125
  %v1904 = vunpack.c.l.b16 %v1126
  %v1905 = vpack.c.b16 %v1890, %v1889
  %v1906 = vpack.c.b16 %v1892, %v1891
  %v1907 = vpack.c.b16 %v1894, %v1893
  %v1908 = vpack.c.b16 %v1896, %v1895
  %v1909 = vpack.c.b16 %v1898, %v1897
  %v1910 = vpack.c.b16 %v1900, %v1899
  %v1911 = vpack.c.b16 %v1902, %v1901
  %v1912 = vpack.c.b16 %v1904, %v1903
  %1921 = vmatprep.subr.bf16.mxu0 0
  %1922 = vmatpush1.bf16.msra.mxu0 %v1905
  %1923 = vmatprep.subr.bf16.mxu0 0
  %1924 = vmatpush1.bf16.msra.mxu0 %v1906
  %1925 = vmatprep.subr.bf16.mxu0 0
  %1926 = vmatpush1.bf16.msra.mxu0 %v1907
  %1927 = vmatprep.subr.bf16.mxu0 0
  %1928 = vmatpush1.bf16.msra.mxu0 %v1908
  %1929 = vmatprep.subr.bf16.mxu0 0
  %1930 = vmatpush1.bf16.msra.mxu0 %v1909
  %1931 = vmatprep.subr.bf16.mxu0 0
  %1932 = vmatpush1.bf16.msra.mxu0 %v1910
  %1933 = vmatprep.subr.bf16.mxu0 0
  %1934 = vmatpush1.bf16.msra.mxu0 %v1911
  %1935 = vmatprep.subr.bf16.mxu0 0
  %1936 = vmatpush1.bf16.msra.mxu0 %v1912
  %1937 = vmatprep.subr.bf16.mxu0 0
  %1938 = vmatpush1.bf16.msra.mxu0 0
  %1939 = vmatprep.subr.bf16.mxu0 0
  %1940 = vmatpush1.bf16.msra.mxu0 0
  %1941 = vmatprep.subr.bf16.mxu0 0
  %1942 = vmatpush1.bf16.msra.mxu0 0
  %1943 = vmatprep.subr.bf16.mxu0 0
  %1944 = vmatpush1.bf16.msra.mxu0 0
  %1945 = vmatprep.subr.bf16.mxu0 0
  %1946 = vmatpush1.bf16.msra.mxu0 0
  %1947 = vmatprep.subr.bf16.mxu0 0
  %1948 = vmatpush1.bf16.msra.mxu0 0
  %1949 = vmatprep.subr.bf16.mxu0 0
  %1950 = vmatpush1.bf16.msra.mxu0 0
  %1951 = vmatprep.subr.bf16.mxu0 0
  %1952 = vmatpush1.bf16.msra.mxu0 0
  %1953 = vmatprep.mubr.bf16.mxu0 0
  %1954 = vmatmul.mubr.bf16.gmra.mrb[0].mxu0 %v1866
  %v1955 = vpop.f32.mrb[0].mxu0
  %v1956 = vadd.f32 0.0, %v1955
  %v1957 = vpop.f32.mrb[0].mxu0
  %v1958 = vpop.f32.mrb[0].mxu0
  %v1959 = vadd.f32 0.0, %v1958
  %v1960 = vpop.f32.mrb[0].mxu0
  %1961 = vmatprep.mubr.bf16.mxu0 0
  %1962 = vmatmul.mubr.bf16.gmra.mrb[0].mxu0 %v1867
  %v1963 = vpop.f32.mrb[0].mxu0
  %v1964 = vadd.f32 0.0, %v1963
  %v1965 = vpop.f32.mrb[0].mxu0
  %v1966 = vpop.f32.mrb[0].mxu0
  %v1967 = vadd.f32 0.0, %v1966
  %v1968 = vpop.f32.mrb[0].mxu0
  %1969 = vmatprep.mubr.bf16.mxu0 0
  %1970 = vmatmul.mubr.bf16.gmra.mrb[0].mxu0 %v1868
  %v1971 = vpop.f32.mrb[0].mxu0
  %v1972 = vadd.f32 0.0, %v1971
  %v1973 = vpop.f32.mrb[0].mxu0
  %v1974 = vpop.f32.mrb[0].mxu0
  %v1975 = vadd.f32 0.0, %v1974
  %v1976 = vpop.f32.mrb[0].mxu0
  %1977 = vmatprep.mubr.bf16.mxu0 0
  %1978 = vmatmul.mubr.bf16.gmra.mrb[0].mxu0 %v1869
  %v1979 = vpop.f32.mrb[0].mxu0
  %v1980 = vadd.f32 0.0, %v1979
  %v1981 = vpop.f32.mrb[0].mxu0
  %v1982 = vpop.f32.mrb[0].mxu0
  %v1983 = vadd.f32 0.0, %v1982
  %v1984 = vpop.f32.mrb[0].mxu0
  %1985 = vmatprep.mubr.bf16.mxu0 0
  %1986 = vmatmul.mubr.bf16.gmra.mrb[0].mxu0 %v1870
  %v1987 = vpop.f32.mrb[0].mxu0
  %v1988 = vadd.f32 0.0, %v1987
  %v1989 = vpop.f32.mrb[0].mxu0
  %v1990 = vpop.f32.mrb[0].mxu0
  %v1991 = vadd.f32 0.0, %v1990
  %v1992 = vpop.f32.mrb[0].mxu0
  %1993 = vmatprep.mubr.bf16.mxu0 0
  %1994 = vmatmul.mubr.bf16.gmra.mrb[0].mxu0 %v1871
  %v1995 = vpop.f32.mrb[0].mxu0
  %v1996 = vadd.f32 0.0, %v1995
  %v1997 = vpop.f32.mrb[0].mxu0
  %v1998 = vpop.f32.mrb[0].mxu0
  %v1999 = vadd.f32 0.0, %v1998
  %v2000 = vpop.f32.mrb[0].mxu0
  %2001 = vmatprep.mubr.bf16.mxu0 0
  %2002 = vmatmul.mubr.bf16.gmra.mrb[0].mxu0 %v1872
  %v2003 = vpop.f32.mrb[0].mxu0
  %v2004 = vadd.f32 0.0, %v2003
  %v2005 = vpop.f32.mrb[0].mxu0
  %v2006 = vpop.f32.mrb[0].mxu0
  %v2007 = vpop.f32.mrb[0].mxu0
  %2008 = vdwg.mxu0
  %v2009 = vadd.f32 %v1017, %v1956
  %v2010 = vadd.f32 %v1018, %v1959
  %v2011 = vadd.f32 %v1019, %v1964
  %v2012 = vadd.f32 %v1020, %v1967
  %v2013 = vadd.f32 %v1021, %v1972
  %v2014 = vadd.f32 %v1022, %v1975
  %v2015 = vadd.f32 %v1023, %v1980
  %v2016 = vadd.f32 %v1024, %v1983
  %v2017 = vadd.f32 %v1025, %v1988
  %v2018 = vadd.f32 %v1026, %v1991
  %v2019 = vadd.f32 %v1027, %v1996
  %v2020 = vadd.f32 %v1028, %v1999
  %v2021 = vadd.f32 %v1029, %v2004
  %v2022 = vadd.f32 %v2009, %v49
  %v2023 = vadd.f32 %v2010, %v49
  %v2024 = vadd.f32 %v2011, %v49
  %v2025 = vadd.f32 %v2012, %v49
  %v2026 = vadd.f32 %v2013, %v49
  %v2027 = vadd.f32 %v2014, %v49
  %v2028 = vadd.f32 %v2015, %v49
  %v2029 = vadd.f32 %v2016, %v49
  %v2030 = vadd.f32 %v2017, %v49
  %v2031 = vadd.f32 %v2018, %v49
  %v2032 = vadd.f32 %v2019, %v49
  %v2033 = vadd.f32 %v2020, %v49
  %v2034 = vadd.f32 %v2021, %v49
  %v2035 = vpack.c.bf16 %v2023, %v2022
  %v2036 = vpack.c.bf16 %v2025, %v2024
  %v2037 = vpack.c.bf16 %v2027, %v2026
  %v2038 = vpack.c.bf16 %v2029, %v2028
  %v2039 = vpack.c.bf16 %v2031, %v2030
  %v2040 = vpack.c.bf16 %v2033, %v2032
  %v2041 = vpack.c.bf16 %v2034, %v2034
  %v2043 = vlaneseq
  %v2044 = vshrl.u32 %v2043, 7
  %v2045 = vsub.s32 0, %v2044
  %v2046 = vrot.slane %v47, %v2045
  %v2047 = vlaneseq
  %v2048 = vshrl.u32 %v2047, 7
  %v2049 = vsub.s32 1, %v2048
  %v2050 = vrot.slane %v47, %v2049
  %v2069 = vunpack.c.l.b16 %v1079
  %v2070 = vunpack.c.h.b16 %v1079
  %v2071 = vunpack.c.l.b16 %v1080
  %v2072 = vunpack.c.h.b16 %v1080
  %v2073 = vunpack.c.l.b16 %v1081
  %v2074 = vunpack.c.h.b16 %v1081
  %v2075 = vunpack.c.l.b16 %v1082
  %v2076 = vunpack.c.h.b16 %v1082
  %v2077 = vunpack.c.l.b16 %v1083
  %v2078 = vunpack.c.h.b16 %v1083
  %v2079 = vunpack.c.l.b16 %v1084
  %v2080 = vunpack.c.h.b16 %v1084
  %v2081 = vunpack.c.l.b16 %v1085
  %v2082 = vunpack.c.h.b16 %v1085
  %v2083 = vunpack.c.l.b16 %v1086
  %v2084 = vunpack.c.h.b16 %v1086
  %v2085 = vunpack.c.l.b16 %v1087
  %v2086 = vunpack.c.h.b16 %v1087
  %v2087 = vunpack.c.l.b16 %v1088
  %v2088 = vunpack.c.h.b16 %v1088
  %v2089 = vunpack.c.l.b16 %v1089
  %v2090 = vunpack.c.h.b16 %v1089
  %v2091 = vunpack.c.l.b16 %v1090
  %v2092 = vunpack.c.h.b16 %v1090
  %v2093 = vunpack.c.l.b16 %v1091
  %v2094 = vunpack.c.h.b16 %v1091
  %v2095 = vunpack.c.l.b16 %v1092
  %v2096 = vunpack.c.h.b16 %v1092
  %v2097 = vunpack.c.l.b16 %v1093
  %v2098 = vunpack.c.h.b16 %v1093
  %v2099 = vunpack.c.l.b16 %v1094
  %v2100 = vunpack.c.h.b16 %v1094
  %v2101 = vpack.c.b16 %v2071, %v2069
  %v2102 = vpack.c.b16 %v2072, %v2070
  %v2103 = vpack.c.b16 %v2075, %v2073
  %v2104 = vpack.c.b16 %v2076, %v2074
  %v2105 = vpack.c.b16 %v2079, %v2077
  %v2106 = vpack.c.b16 %v2080, %v2078
  %v2107 = vpack.c.b16 %v2083, %v2081
  %v2108 = vpack.c.b16 %v2084, %v2082
  %v2109 = vpack.c.b16 %v2087, %v2085
  %v2110 = vpack.c.b16 %v2088, %v2086
  %v2111 = vpack.c.b16 %v2091, %v2089
  %v2112 = vpack.c.b16 %v2092, %v2090
  %v2113 = vpack.c.b16 %v2095, %v2093
  %v2114 = vpack.c.b16 %v2096, %v2094
  %v2115 = vpack.c.b16 %v2099, %v2097
  %v2116 = vpack.c.b16 %v2100, %v2098
  %2133 = vmatprep.subr.bf16.mxu0 %v2102
  %2134 = vmatpush1.bf16.msra.mxu0 %v2101
  %2135 = vmatprep.subr.bf16.mxu0 %v2104
  %2136 = vmatpush1.bf16.msra.mxu0 %v2103
  %2137 = vmatprep.subr.bf16.mxu0 %v2106
  %2138 = vmatpush1.bf16.msra.mxu0 %v2105
  %2139 = vmatprep.subr.bf16.mxu0 %v2108
  %2140 = vmatpush1.bf16.msra.mxu0 %v2107
  %2141 = vmatprep.subr.bf16.mxu0 %v2110
  %2142 = vmatpush1.bf16.msra.mxu0 %v2109
  %2143 = vmatprep.subr.bf16.mxu0 %v2112
  %2144 = vmatpush1.bf16.msra.mxu0 %v2111
  %2145 = vmatprep.subr.bf16.mxu0 %v2114
  %2146 = vmatpush1.bf16.msra.mxu0 %v2113
  %2147 = vmatprep.subr.bf16.mxu0 %v2116
  %2148 = vmatpush1.bf16.msra.mxu0 %v2115
  %2149 = vmatprep.subr.bf16.mxu0 0
  %2150 = vmatpush1.bf16.msra.mxu0 0
  %2151 = vmatprep.subr.bf16.mxu0 0
  %2152 = vmatpush1.bf16.msra.mxu0 0
  %2153 = vmatprep.subr.bf16.mxu0 0
  %2154 = vmatpush1.bf16.msra.mxu0 0
  %2155 = vmatprep.subr.bf16.mxu0 0
  %2156 = vmatpush1.bf16.msra.mxu0 0
  %2157 = vmatprep.subr.bf16.mxu0 0
  %2158 = vmatpush1.bf16.msra.mxu0 0
  %2159 = vmatprep.subr.bf16.mxu0 0
  %2160 = vmatpush1.bf16.msra.mxu0 0
  %2161 = vmatprep.subr.bf16.mxu0 0
  %2162 = vmatpush1.bf16.msra.mxu0 0
  %2163 = vmatprep.subr.bf16.mxu0 0
  %2164 = vmatpush1.bf16.msra.mxu0 0
  %2165 = vmatprep.mubr.bf16.mxu0 0
  %2166 = vmatmul.mubr.bf16.gmra.mrb[0].mxu0 %v2035
  %v2167 = vpop.f32.mrb[0].mxu0
  %v2168 = vadd.f32 %v2046, %v2167
  %v2169 = vpop.f32.mrb[0].mxu0
  %v2170 = vadd.f32 %v2050, %v2169
  %v2171 = vpop.f32.mrb[0].mxu0
  %v2172 = vadd.f32 %v2046, %v2171
  %v2173 = vpop.f32.mrb[0].mxu0
  %v2174 = vadd.f32 %v2050, %v2173
  %2175 = vmatprep.mubr.bf16.mxu0 0
  %2176 = vmatmul.mubr.bf16.gmra.mrb[0].mxu0 %v2036
  %v2177 = vpop.f32.mrb[0].mxu0
  %v2178 = vadd.f32 %v2046, %v2177
  %v2179 = vpop.f32.mrb[0].mxu0
  %v2180 = vadd.f32 %v2050, %v2179
  %v2181 = vpop.f32.mrb[0].mxu0
  %v2182 = vadd.f32 %v2046, %v2181
  %v2183 = vpop.f32.mrb[0].mxu0
  %v2184 = vadd.f32 %v2050, %v2183
  %2185 = vmatprep.mubr.bf16.mxu0 0
  %2186 = vmatmul.mubr.bf16.gmra.mrb[0].mxu0 %v2037
  %v2187 = vpop.f32.mrb[0].mxu0
  %v2188 = vadd.f32 %v2046, %v2187
  %v2189 = vpop.f32.mrb[0].mxu0
  %v2190 = vadd.f32 %v2050, %v2189
  %v2191 = vpop.f32.mrb[0].mxu0
  %v2192 = vadd.f32 %v2046, %v2191
  %v2193 = vpop.f32.mrb[0].mxu0
  %v2194 = vadd.f32 %v2050, %v2193
  %2195 = vmatprep.mubr.bf16.mxu0 0
  %2196 = vmatmul.mubr.bf16.gmra.mrb[0].mxu0 %v2038
  %v2197 = vpop.f32.mrb[0].mxu0
  %v2198 = vadd.f32 %v2046, %v2197
  %v2199 = vpop.f32.mrb[0].mxu0
  %v2200 = vadd.f32 %v2050, %v2199
  %v2201 = vpop.f32.mrb[0].mxu0
  %v2202 = vadd.f32 %v2046, %v2201
  %v2203 = vpop.f32.mrb[0].mxu0
  %v2204 = vadd.f32 %v2050, %v2203
  %2205 = vmatprep.mubr.bf16.mxu0 0
  %2206 = vmatmul.mubr.bf16.gmra.mrb[0].mxu0 %v2039
  %v2207 = vpop.f32.mrb[0].mxu0
  %v2208 = vadd.f32 %v2046, %v2207
  %v2209 = vpop.f32.mrb[0].mxu0
  %v2210 = vadd.f32 %v2050, %v2209
  %v2211 = vpop.f32.mrb[0].mxu0
  %v2212 = vadd.f32 %v2046, %v2211
  %v2213 = vpop.f32.mrb[0].mxu0
  %v2214 = vadd.f32 %v2050, %v2213
  %2215 = vmatprep.mubr.bf16.mxu0 0
  %2216 = vmatmul.mubr.bf16.gmra.mrb[0].mxu0 %v2040
  %v2217 = vpop.f32.mrb[0].mxu0
  %v2218 = vadd.f32 %v2046, %v2217
  %v2219 = vpop.f32.mrb[0].mxu0
  %v2220 = vadd.f32 %v2050, %v2219
  %v2221 = vpop.f32.mrb[0].mxu0
  %v2222 = vadd.f32 %v2046, %v2221
  %v2223 = vpop.f32.mrb[0].mxu0
  %v2224 = vadd.f32 %v2050, %v2223
  %2225 = vmatprep.mubr.bf16.mxu0 0
  %2226 = vmatmul.mubr.bf16.gmra.mrb[0].mxu0 %v2041
  %v2227 = vpop.f32.mrb[0].mxu0
  %v2228 = vadd.f32 %v2046, %v2227
  %v2229 = vpop.f32.mrb[0].mxu0
  %v2230 = vadd.f32 %v2050, %v2229
  %v2231 = vpop.f32.mrb[0].mxu0
  %v2232 = vpop.f32.mrb[0].mxu0
  %2233 = vdwg.mxu0
  %v2234 = vmax.f32 %v2168, 0.0
  %v2235 = vmax.f32 %v2170, 0.0
  %v2236 = vmax.f32 %v2172, 0.0
  %v2237 = vmax.f32 %v2174, 0.0
  %v2238 = vmax.f32 %v2178, 0.0
  %v2239 = vmax.f32 %v2180, 0.0
  %v2240 = vmax.f32 %v2182, 0.0
  %v2241 = vmax.f32 %v2184, 0.0
  %v2242 = vmax.f32 %v2188, 0.0
  %v2243 = vmax.f32 %v2190, 0.0
  %v2244 = vmax.f32 %v2192, 0.0
  %v2245 = vmax.f32 %v2194, 0.0
  %v2246 = vmax.f32 %v2198, 0.0
  %v2247 = vmax.f32 %v2200, 0.0
  %v2248 = vmax.f32 %v2202, 0.0
  %v2249 = vmax.f32 %v2204, 0.0
  %v2250 = vmax.f32 %v2208, 0.0
  %v2251 = vmax.f32 %v2210, 0.0
  %v2252 = vmax.f32 %v2212, 0.0
  %v2253 = vmax.f32 %v2214, 0.0
  %v2254 = vmax.f32 %v2218, 0.0
  %v2255 = vmax.f32 %v2220, 0.0
  %v2256 = vmax.f32 %v2222, 0.0
  %v2257 = vmax.f32 %v2224, 0.0
  %v2258 = vmax.f32 %v2228, 0.0
  %v2259 = vmax.f32 %v2230, 0.0
  %v2260 = vpack.c.bf16 %v2236, %v2234
  %v2261 = vpack.c.bf16 %v2237, %v2235
  %v2262 = vpack.c.bf16 %v2240, %v2238
  %v2263 = vpack.c.bf16 %v2241, %v2239
  %v2264 = vpack.c.bf16 %v2244, %v2242
  %v2265 = vpack.c.bf16 %v2245, %v2243
  %v2266 = vpack.c.bf16 %v2248, %v2246
  %v2267 = vpack.c.bf16 %v2249, %v2247
  %v2268 = vpack.c.bf16 %v2252, %v2250
  %v2269 = vpack.c.bf16 %v2253, %v2251
  %v2270 = vpack.c.bf16 %v2256, %v2254
  %v2271 = vpack.c.bf16 %v2257, %v2255
  %v2272 = vpack.c.bf16 %v2258, %v2258
  %v2273 = vpack.c.bf16 %v2259, %v2259
  %v2274 = vld [vmem:[%s11] sm:$0xf]
  %v2275 = vld [vmem:[%s11 + $0x4] sm:$0xf]
  %v2276 = vld [vmem:[%s11 + $0x8] sm:$0xf]
  %v2277 = vld [vmem:[%s11 + $0xc] sm:$0xf]
  %v2278 = vld [vmem:[%s11 + $0x10] sm:$0xf]
  %v2279 = vld [vmem:[%s11 + $0x14] sm:$0xf]
  %v2280 = vld [vmem:[%s11 + $0x18] sm:$0xf]
  %v2281 = vld [vmem:[%s11 + $0x1c] sm:$0xf]
  %v2282 = vld [vmem:[%s11 + $0x20] sm:$0xf]
  %v2283 = vld [vmem:[%s11 + $0x24] sm:$0xf]
  %v2284 = vld [vmem:[%s11 + $0x28] sm:$0xf]
  %v2285 = vld [vmem:[%s11 + $0x2c] sm:$0xf]
  %v2286 = vld [vmem:[%s11 + $0x30] sm:$0xf]
  %v2287 = vld [vmem:[%s11 + $0x34] sm:$0xf]
  %v2288 = vld [vmem:[%s11 + $0x38] sm:$0xf]
  %v2289 = vld [vmem:[%s11 + $0x3c] sm:$0xf]
  %v2290 = vld [vmem:[%s11 + $0x40] sm:$0xf]
  %v2291 = vld [vmem:[%s11 + $0x44] sm:$0xf]
  %v2292 = vld [vmem:[%s11 + $0x48] sm:$0xf]
  %v2293 = vld [vmem:[%s11 + $0x4c] sm:$0xf]
  %v2294 = vld [vmem:[%s11 + $0x50] sm:$0xf]
  %v2295 = vld [vmem:[%s11 + $0x54] sm:$0xf]
  %v2296 = vld [vmem:[%s11 + $0x58] sm:$0xf]
  %v2297 = vld [vmem:[%s11 + $0x5c] sm:$0xf]
  %v2298 = vld [vmem:[%s11 + $0x60] sm:$0xf]
  %v2299 = vld [vmem:[%s11 + $0x64] sm:$0xf]
  %v2300 = vld [vmem:[%s11 + $0x68] sm:$0xf]
  %v2301 = vld [vmem:[%s11 + $0x6c] sm:$0xf]
  %v2302 = vld [vmem:[%s11 + $0x70] sm:$0xf]
  %v2303 = vld [vmem:[%s11 + $0x74] sm:$0xf]
  %v2304 = vld [vmem:[%s11 + $0x78] sm:$0xf]
  %v2305 = vld [vmem:[%s11 + $0x7c] sm:$0xf]
  %v2338 = vunpack.c.l.b16 %v2274
  %v2339 = vunpack.c.l.b16 %v2275
  %v2340 = vunpack.c.l.b16 %v2276
  %v2341 = vunpack.c.l.b16 %v2277
  %v2342 = vunpack.c.l.b16 %v2278
  %v2343 = vunpack.c.l.b16 %v2279
  %v2344 = vunpack.c.l.b16 %v2280
  %v2345 = vunpack.c.l.b16 %v2281
  %v2346 = vunpack.c.l.b16 %v2282
  %v2347 = vunpack.c.l.b16 %v2283
  %v2348 = vunpack.c.l.b16 %v2284
  %v2349 = vunpack.c.l.b16 %v2285
  %v2350 = vunpack.c.l.b16 %v2286
  %v2351 = vunpack.c.l.b16 %v2287
  %v2352 = vunpack.c.l.b16 %v2288
  %v2353 = vunpack.c.l.b16 %v2289
  %v2354 = vunpack.c.l.b16 %v2290
  %v2355 = vunpack.c.l.b16 %v2291
  %v2356 = vunpack.c.l.b16 %v2292
  %v2357 = vunpack.c.l.b16 %v2293
  %v2358 = vunpack.c.l.b16 %v2294
  %v2359 = vunpack.c.l.b16 %v2295
  %v2360 = vunpack.c.l.b16 %v2296
  %v2361 = vunpack.c.l.b16 %v2297
  %v2362 = vunpack.c.l.b16 %v2298
  %v2363 = vunpack.c.l.b16 %v2299
  %v2364 = vunpack.c.l.b16 %v2300
  %v2365 = vunpack.c.l.b16 %v2301
  %v2366 = vunpack.c.l.b16 %v2302
  %v2367 = vunpack.c.l.b16 %v2303
  %v2368 = vunpack.c.l.b16 %v2304
  %v2369 = vunpack.c.l.b16 %v2305
  %v2370 = vpack.c.b16 %v2339, %v2338
  %v2371 = vpack.c.b16 %v2341, %v2340
  %v2372 = vpack.c.b16 %v2343, %v2342
  %v2373 = vpack.c.b16 %v2345, %v2344
  %v2374 = vpack.c.b16 %v2347, %v2346
  %v2375 = vpack.c.b16 %v2349, %v2348
  %v2376 = vpack.c.b16 %v2351, %v2350
  %v2377 = vpack.c.b16 %v2353, %v2352
  %v2378 = vpack.c.b16 %v2355, %v2354
  %v2379 = vpack.c.b16 %v2357, %v2356
  %v2380 = vpack.c.b16 %v2359, %v2358
  %v2381 = vpack.c.b16 %v2361, %v2360
  %v2382 = vpack.c.b16 %v2363, %v2362
  %v2383 = vpack.c.b16 %v2365, %v2364
  %v2384 = vpack.c.b16 %v2367, %v2366
  %v2385 = vpack.c.b16 %v2369, %v2368
  %2402 = vmatprep.subr.bf16.mxu0 0
  %2403 = vmatpush1.bf16.msra.mxu0 %v2370
  %2404 = vmatprep.subr.bf16.mxu0 0
  %2405 = vmatpush1.bf16.msra.mxu0 %v2371
  %2406 = vmatprep.subr.bf16.mxu0 0
  %2407 = vmatpush1.bf16.msra.mxu0 %v2372
  %2408 = vmatprep.subr.bf16.mxu0 0
  %2409 = vmatpush1.bf16.msra.mxu0 %v2373
  %2410 = vmatprep.subr.bf16.mxu0 0
  %2411 = vmatpush1.bf16.msra.mxu0 %v2374
  %2412 = vmatprep.subr.bf16.mxu0 0
  %2413 = vmatpush1.bf16.msra.mxu0 %v2375
  %2414 = vmatprep.subr.bf16.mxu0 0
  %2415 = vmatpush1.bf16.msra.mxu0 %v2376
  %2416 = vmatprep.subr.bf16.mxu0 0
  %2417 = vmatpush1.bf16.msra.mxu0 %v2377
  %2418 = vmatprep.subr.bf16.mxu0 0
  %2419 = vmatpush1.bf16.msra.mxu0 %v2378
  %2420 = vmatprep.subr.bf16.mxu0 0
  %2421 = vmatpush1.bf16.msra.mxu0 %v2379
  %2422 = vmatprep.subr.bf16.mxu0 0
  %2423 = vmatpush1.bf16.msra.mxu0 %v2380
  %2424 = vmatprep.subr.bf16.mxu0 0
  %2425 = vmatpush1.bf16.msra.mxu0 %v2381
  %2426 = vmatprep.subr.bf16.mxu0 0
  %2427 = vmatpush1.bf16.msra.mxu0 %v2382
  %2428 = vmatprep.subr.bf16.mxu0 0
  %2429 = vmatpush1.bf16.msra.mxu0 %v2383
  %2430 = vmatprep.subr.bf16.mxu0 0
  %2431 = vmatpush1.bf16.msra.mxu0 %v2384
  %2432 = vmatprep.subr.bf16.mxu0 0
  %2433 = vmatpush1.bf16.msra.mxu0 %v2385
  %2434 = vmatprep.mubr.bf16.mxu0 %v2261
  %2435 = vmatmul.mubr.bf16.gmra.mrb[0].mxu0 %v2260
  %v2436 = vpop.f32.mrb[0].mxu0
  %v2437 = vadd.f32 0.0, %v2436
  %v2438 = vpop.f32.mrb[0].mxu0
  %v2439 = vpop.f32.mrb[0].mxu0
  %v2440 = vadd.f32 0.0, %v2439
  %v2441 = vpop.f32.mrb[0].mxu0
  %2442 = vmatprep.mubr.bf16.mxu0 %v2263
  %2443 = vmatmul.mubr.bf16.gmra.mrb[0].mxu0 %v2262
  %v2444 = vpop.f32.mrb[0].mxu0
  %v2445 = vpop.f32.mrb[0].mxu0
  %v2446 = vpop.f32.mrb[0].mxu0
  %v2447 = vpop.f32.mrb[0].mxu0
  %2448 = vmatprep.mubr.bf16.mxu0 %v2265
  %2449 = vmatmul.mubr.bf16.gmra.mrb[0].mxu0 %v2264
  %v2450 = vpop.f32.mrb[0].mxu0
  %v2451 = vpop.f32.mrb[0].mxu0
  %v2452 = vpop.f32.mrb[0].mxu0
  %v2453 = vpop.f32.mrb[0].mxu0
  %2454 = vmatprep.mubr.bf16.mxu0 %v2267
  %2455 = vmatmul.mubr.bf16.gmra.mrb[0].mxu0 %v2266
  %v2456 = vpop.f32.mrb[0].mxu0
  %v2457 = vpop.f32.mrb[0].mxu0
  %v2458 = vpop.f32.mrb[0].mxu0
  %v2459 = vpop.f32.mrb[0].mxu0
  %2460 = vmatprep.mubr.bf16.mxu0 %v2269
  %2461 = vmatmul.mubr.bf16.gmra.mrb[0].mxu0 %v2268
  %v2462 = vpop.f32.mrb[0].mxu0
  %v2463 = vpop.f32.mrb[0].mxu0
  %v2464 = vpop.f32.mrb[0].mxu0
  %v2465 = vpop.f32.mrb[0].mxu0
  %2466 = vmatprep.mubr.bf16.mxu0 %v2271
  %2467 = vmatmul.mubr.bf16.gmra.mrb[0].mxu0 %v2270
  %v2468 = vpop.f32.mrb[0].mxu0
  %v2469 = vpop.f32.mrb[0].mxu0
  %v2470 = vpop.f32.mrb[0].mxu0
  %v2471 = vpop.f32.mrb[0].mxu0
  %2472 = vmatprep.mubr.bf16.mxu0 %v2273
  %2473 = vmatmul.mubr.bf16.gmra.mrb[0].mxu0 %v2272
  %v2474 = vpop.f32.mrb[0].mxu0
  %v2475 = vpop.f32.mrb[0].mxu0
  %v2476 = vpop.f32.mrb[0].mxu0
  %v2477 = vpop.f32.mrb[0].mxu0
  %2478 = vdwg.mxu0
  %v2479 = vadd.f32 %v2022, %v2437
  %v2480 = vadd.f32 %v2023, %v2440
  %v2481 = vadd.f32 %v2479, %v52
  %v2482 = vadd.f32 %v2480, %v52
  %v2483 = vld [vmem:[%s6] sm:$0xf]
  %v2484 = vld [vmem:[%s6 + $0x4] sm:$0xf]
  %v2485 = vld [vmem:[%s6 + $0x8] sm:$0xf]
  %v2486 = vld [vmem:[%s6 + $0xc] sm:$0xf]
  %v2487 = vld [vmem:[%s6 + $0x10] sm:$0xf]
  %v2488 = vld [vmem:[%s6 + $0x14] sm:$0xf]
  %v2489 = vld [vmem:[%s6 + $0x18] sm:$0xf]
  %v2490 = vld [vmem:[%s6 + $0x1c] sm:$0xf]
  %v2491 = vld [vmem:[%s6 + $0x20] sm:$0xf]
  %v2492 = vld [vmem:[%s6 + $0x24] sm:$0xf]
  %v2493 = vld [vmem:[%s6 + $0x28] sm:$0xf]
  %v2494 = vld [vmem:[%s6 + $0x2c] sm:$0xf]
  %v2495 = vld [vmem:[%s6 + $0x30] sm:$0xf]
  %v2496 = vld [vmem:[%s6 + $0x34] sm:$0xf]
  %v2497 = vld [vmem:[%s6 + $0x38] sm:$0xf]
  %v2498 = vld [vmem:[%s6 + $0x3c] sm:$0xf]
  %v2499 = vld [vmem:[%s6 + $0x40] sm:$0xf]
  %v2500 = vld [vmem:[%s6 + $0x44] sm:$0xf]
  %v2501 = vpack.c.bf16 %v2482, %v2481
  %v2520 = vunpack.c.l.b16 %v2483
  %v2521 = vunpack.c.l.b16 %v2484
  %v2522 = vunpack.c.l.b16 %v2485
  %v2523 = vunpack.c.l.b16 %v2486
  %v2524 = vunpack.c.l.b16 %v2487
  %v2525 = vunpack.c.l.b16 %v2488
  %v2526 = vunpack.c.l.b16 %v2489
  %v2527 = vunpack.c.l.b16 %v2490
  %v2528 = vunpack.c.l.b16 %v2491
  %v2529 = vunpack.c.l.b16 %v2492
  %v2530 = vunpack.c.l.b16 %v2493
  %v2531 = vunpack.c.l.b16 %v2494
  %v2532 = vunpack.c.l.b16 %v2495
  %v2533 = vunpack.c.l.b16 %v2496
  %v2534 = vunpack.c.l.b16 %v2497
  %v2535 = vunpack.c.l.b16 %v2498
  %v2536 = vunpack.c.l.b16 %v2499
  %v2537 = vunpack.c.l.b16 %v2500
  %v2538 = vpack.c.b16 %v2521, %v2520
  %v2539 = vpack.c.b16 %v2523, %v2522
  %v2540 = vpack.c.b16 %v2525, %v2524
  %v2541 = vpack.c.b16 %v2527, %v2526
  %v2542 = vpack.c.b16 %v2529, %v2528
  %v2543 = vpack.c.b16 %v2531, %v2530
  %v2544 = vpack.c.b16 %v2533, %v2532
  %v2545 = vpack.c.b16 %v2535, %v2534
  %v2546 = vpack.c.b16 %v2537, %v2536
  %vm2547 = vcmask 130048
  %v2549 = vsel %vm2547, %v2538, 0
  %v2552 = vsel %vm2547, %v2539, 0
  %v2555 = vsel %vm2547, %v2540, 0
  %v2558 = vsel %vm2547, %v2541, 0
  %v2561 = vsel %vm2547, %v2542, 0
  %v2564 = vsel %vm2547, %v2543, 0
  %v2567 = vsel %vm2547, %v2544, 0
  %v2570 = vsel %vm2547, %v2545, 0
  %v2573 = vsel %vm2547, %v2546, 0
  %2575 = vmatprep.subr.bf16.mxu0 0
  %2576 = vmatpush1.bf16.msra.mxu0 %v2501
  %2577 = vmatprep.subr.bf16.mxu0 0
  %2578 = vmatpush1.bf16.msra.mxu0 0
  %2579 = vmatprep.subr.bf16.mxu0 0
  %2580 = vmatpush1.bf16.msra.mxu0 0
  %2581 = vmatprep.subr.bf16.mxu0 0
  %2582 = vmatpush1.bf16.msra.mxu0 0
  %2583 = vmatprep.subr.bf16.mxu0 0
  %2584 = vmatpush1.bf16.msra.mxu0 0
  %2585 = vmatprep.subr.bf16.mxu0 0
  %2586 = vmatpush1.bf16.msra.mxu0 0
  %2587 = vmatprep.subr.bf16.mxu0 0
  %2588 = vmatpush1.bf16.msra.mxu0 0
  %2589 = vmatprep.subr.bf16.mxu0 0
  %2590 = vmatpush1.bf16.msra.mxu0 0
  %2591 = vmatprep.subr.bf16.mxu0 0
  %2592 = vmatpush1.bf16.msra.mxu0 0
  %2593 = vmatprep.subr.bf16.mxu0 0
  %2594 = vmatpush1.bf16.msra.mxu0 0
  %2595 = vmatprep.subr.bf16.mxu0 0
  %2596 = vmatpush1.bf16.msra.mxu0 0
  %2597 = vmatprep.subr.bf16.mxu0 0
  %2598 = vmatpush1.bf16.msra.mxu0 0
  %2599 = vmatprep.subr.bf16.mxu0 0
  %2600 = vmatpush1.bf16.msra.mxu0 0
  %2601 = vmatprep.subr.bf16.mxu0 0
  %2602 = vmatpush1.bf16.msra.mxu0 0
  %2603 = vmatprep.subr.bf16.mxu0 0
  %2604 = vmatpush1.bf16.msra.mxu0 0
  %2605 = vmatprep.subr.bf16.mxu0 0
  %2606 = vmatpush1.bf16.msra.mxu0 0
  %2607 = vmatprep.mubr.bf16.mxu0 0
  %2608 = vmatmul.mubr.bf16.gmra.mrb[0].mxu0 %v2549
  %v2609 = vpop.f32.mrb[0].mxu0
  %v2610 = vadd.f32 0.0, %v2609
  %v2611 = vpop.f32.mrb[0].mxu0
  %v2612 = vpop.f32.mrb[0].mxu0
  %v2613 = vadd.f32 0.0, %v2612
  %v2614 = vpop.f32.mrb[0].mxu0
  %2615 = vmatprep.mubr.bf16.mxu0 0
  %2616 = vmatmul.mubr.bf16.gmra.mrb[0].mxu0 %v2552
  %v2617 = vpop.f32.mrb[0].mxu0
  %v2618 = vadd.f32 0.0, %v2617
  %v2619 = vpop.f32.mrb[0].mxu0
  %v2620 = vpop.f32.mrb[0].mxu0
  %v2621 = vadd.f32 0.0, %v2620
  %v2622 = vpop.f32.mrb[0].mxu0
  %2623 = vmatprep.mubr.bf16.mxu0 0
  %2624 = vmatmul.mubr.bf16.gmra.mrb[0].mxu0 %v2555
  %v2625 = vpop.f32.mrb[0].mxu0
  %v2626 = vadd.f32 0.0, %v2625
  %v2627 = vpop.f32.mrb[0].mxu0
  %v2628 = vpop.f32.mrb[0].mxu0
  %v2629 = vadd.f32 0.0, %v2628
  %v2630 = vpop.f32.mrb[0].mxu0
  %2631 = vmatprep.mubr.bf16.mxu0 0
  %2632 = vmatmul.mubr.bf16.gmra.mrb[0].mxu0 %v2558
  %v2633 = vpop.f32.mrb[0].mxu0
  %v2634 = vadd.f32 0.0, %v2633
  %v2635 = vpop.f32.mrb[0].mxu0
  %v2636 = vpop.f32.mrb[0].mxu0
  %v2637 = vadd.f32 0.0, %v2636
  %v2638 = vpop.f32.mrb[0].mxu0
  %2639 = vmatprep.mubr.bf16.mxu0 0
  %2640 = vmatmul.mubr.bf16.gmra.mrb[0].mxu0 %v2561
  %v2641 = vpop.f32.mrb[0].mxu0
  %v2642 = vadd.f32 0.0, %v2641
  %v2643 = vpop.f32.mrb[0].mxu0
  %v2644 = vpop.f32.mrb[0].mxu0
  %v2645 = vadd.f32 0.0, %v2644
  %v2646 = vpop.f32.mrb[0].mxu0
  %2647 = vmatprep.mubr.bf16.mxu0 0
  %2648 = vmatmul.mubr.bf16.gmra.mrb[0].mxu0 %v2564
  %v2649 = vpop.f32.mrb[0].mxu0
  %v2650 = vadd.f32 0.0, %v2649
  %v2651 = vpop.f32.mrb[0].mxu0
  %v2652 = vpop.f32.mrb[0].mxu0
  %v2653 = vadd.f32 0.0, %v2652
  %v2654 = vpop.f32.mrb[0].mxu0
  %2655 = vmatprep.mubr.bf16.mxu0 0
  %2656 = vmatmul.mubr.bf16.gmra.mrb[0].mxu0 %v2567
  %v2657 = vpop.f32.mrb[0].mxu0
  %v2658 = vadd.f32 0.0, %v2657
  %v2659 = vpop.f32.mrb[0].mxu0
  %v2660 = vpop.f32.mrb[0].mxu0
  %v2661 = vadd.f32 0.0, %v2660
  %v2662 = vpop.f32.mrb[0].mxu0
  %2663 = vmatprep.mubr.bf16.mxu0 0
  %2664 = vmatmul.mubr.bf16.gmra.mrb[0].mxu0 %v2570
  %v2665 = vpop.f32.mrb[0].mxu0
  %v2666 = vadd.f32 0.0, %v2665
  %v2667 = vpop.f32.mrb[0].mxu0
  %v2668 = vpop.f32.mrb[0].mxu0
  %v2669 = vadd.f32 0.0, %v2668
  %v2670 = vpop.f32.mrb[0].mxu0
  %2671 = vmatprep.mubr.bf16.mxu0 0
  %2672 = vmatmul.mubr.bf16.gmra.mrb[0].mxu0 %v2573
  %v2673 = vpop.f32.mrb[0].mxu0
  %v2674 = vadd.f32 0.0, %v2673
  %v2675 = vpop.f32.mrb[0].mxu0
  %v2676 = vpop.f32.mrb[0].mxu0
  %v2677 = vadd.f32 0.0, %v2676
  %v2678 = vpop.f32.mrb[0].mxu0
  %2679 = vdwg.mxu0
  %v2680 = vpack.c.bf16 %v2613, %v2610
  %v2681 = vpack.c.bf16 %v2621, %v2618
  %v2682 = vpack.c.bf16 %v2629, %v2626
  %v2683 = vpack.c.bf16 %v2637, %v2634
  %v2684 = vpack.c.bf16 %v2645, %v2642
  %v2685 = vpack.c.bf16 %v2653, %v2650
  %v2686 = vpack.c.bf16 %v2661, %v2658
  %v2687 = vpack.c.bf16 %v2669, %v2666
  %v2688 = vpack.c.bf16 %v2677, %v2674
  %v2689 = vld [vmem:[%s12] sm:$0xf]
  %v2690 = vld [vmem:[%s12 + $0x4] sm:$0xf]
  %v2691 = vld [vmem:[%s12 + $0x8] sm:$0xf]
  %v2692 = vld [vmem:[%s12 + $0xc] sm:$0xf]
  %v2693 = vld [vmem:[%s12 + $0x10] sm:$0xf]
  %v2694 = vld [vmem:[%s12 + $0x14] sm:$0xf]
  %v2695 = vld [vmem:[%s12 + $0x18] sm:$0xf]
  %v2696 = vld [vmem:[%s12 + $0x1c] sm:$0xf]
  %v2697 = vld [vmem:[%s12 + $0x20] sm:$0xf]
  %v2698 = vld [vmem:[%s12 + $0x24] sm:$0xf]
  %v2699 = vld [vmem:[%s12 + $0x28] sm:$0xf]
  %v2700 = vld [vmem:[%s12 + $0x2c] sm:$0xf]
  %v2701 = vld [vmem:[%s12 + $0x30] sm:$0xf]
  %v2702 = vld [vmem:[%s12 + $0x34] sm:$0xf]
  %v2703 = vld [vmem:[%s12 + $0x38] sm:$0xf]
  %v2704 = vld [vmem:[%s12 + $0x3c] sm:$0xf]
  %s2705 = scalar_lea.vmem %s12, 64
  %v2706 = vld [vmem:[%s2705] sm:$0xf]
  %v2707 = vld [vmem:[%s2705 + $0x4] sm:$0xf]
  %v2708 = vld [vmem:[%s2705 + $0x8] sm:$0xf]
  %v2709 = vld [vmem:[%s2705 + $0xc] sm:$0xf]
  %v2710 = vld [vmem:[%s2705 + $0x10] sm:$0xf]
  %v2711 = vld [vmem:[%s2705 + $0x14] sm:$0xf]
  %v2712 = vld [vmem:[%s2705 + $0x18] sm:$0xf]
  %v2713 = vld [vmem:[%s2705 + $0x1c] sm:$0xf]
  %v2714 = vld [vmem:[%s2705 + $0x20] sm:$0xf]
  %v2715 = vld [vmem:[%s2705 + $0x24] sm:$0xf]
  %v2716 = vld [vmem:[%s2705 + $0x28] sm:$0xf]
  %v2717 = vld [vmem:[%s2705 + $0x2c] sm:$0xf]
  %v2718 = vld [vmem:[%s2705 + $0x30] sm:$0xf]
  %v2719 = vld [vmem:[%s2705 + $0x34] sm:$0xf]
  %v2720 = vld [vmem:[%s2705 + $0x38] sm:$0xf]
  %v2721 = vld [vmem:[%s2705 + $0x3c] sm:$0xf]
  %v2738 = vunpack.c.l.b16 %v2706
  %v2739 = vunpack.c.l.b16 %v2707
  %v2740 = vunpack.c.l.b16 %v2708
  %v2741 = vunpack.c.l.b16 %v2709
  %v2742 = vunpack.c.l.b16 %v2710
  %v2743 = vunpack.c.l.b16 %v2711
  %v2744 = vunpack.c.l.b16 %v2712
  %v2745 = vunpack.c.l.b16 %v2713
  %v2746 = vunpack.c.l.b16 %v2714
  %v2747 = vunpack.c.l.b16 %v2715
  %v2748 = vunpack.c.l.b16 %v2716
  %v2749 = vunpack.c.l.b16 %v2717
  %v2750 = vunpack.c.l.b16 %v2718
  %v2751 = vunpack.c.l.b16 %v2719
  %v2752 = vunpack.c.l.b16 %v2720
  %v2753 = vunpack.c.l.b16 %v2721
  %v2754 = vpack.c.b16 %v2739, %v2738
  %v2755 = vpack.c.b16 %v2741, %v2740
  %v2756 = vpack.c.b16 %v2743, %v2742
  %v2757 = vpack.c.b16 %v2745, %v2744
  %v2758 = vpack.c.b16 %v2747, %v2746
  %v2759 = vpack.c.b16 %v2749, %v2748
  %v2760 = vpack.c.b16 %v2751, %v2750
  %v2761 = vpack.c.b16 %v2753, %v2752
  %2770 = vmatprep.subr.bf16.mxu0 0
  %2771 = vmatpush1.bf16.msra.mxu0 %v2754
  %2772 = vmatprep.subr.bf16.mxu0 0
  %2773 = vmatpush1.bf16.msra.mxu0 %v2755
  %2774 = vmatprep.subr.bf16.mxu0 0
  %2775 = vmatpush1.bf16.msra.mxu0 %v2756
  %2776 = vmatprep.subr.bf16.mxu0 0
  %2777 = vmatpush1.bf16.msra.mxu0 %v2757
  %2778 = vmatprep.subr.bf16.mxu0 0
  %2779 = vmatpush1.bf16.msra.mxu0 %v2758
  %2780 = vmatprep.subr.bf16.mxu0 0
  %2781 = vmatpush1.bf16.msra.mxu0 %v2759
  %2782 = vmatprep.subr.bf16.mxu0 0
  %2783 = vmatpush1.bf16.msra.mxu0 %v2760
  %2784 = vmatprep.subr.bf16.mxu0 0
  %2785 = vmatpush1.bf16.msra.mxu0 %v2761
  %2786 = vmatprep.subr.bf16.mxu0 0
  %2787 = vmatpush1.bf16.msra.mxu0 0
  %2788 = vmatprep.subr.bf16.mxu0 0
  %2789 = vmatpush1.bf16.msra.mxu0 0
  %2790 = vmatprep.subr.bf16.mxu0 0
  %2791 = vmatpush1.bf16.msra.mxu0 0
  %2792 = vmatprep.subr.bf16.mxu0 0
  %2793 = vmatpush1.bf16.msra.mxu0 0
  %2794 = vmatprep.subr.bf16.mxu0 0
  %2795 = vmatpush1.bf16.msra.mxu0 0
  %2796 = vmatprep.subr.bf16.mxu0 0
  %2797 = vmatpush1.bf16.msra.mxu0 0
  %2798 = vmatprep.subr.bf16.mxu0 0
  %2799 = vmatpush1.bf16.msra.mxu0 0
  %2800 = vmatprep.subr.bf16.mxu0 0
  %2801 = vmatpush1.bf16.msra.mxu0 0
  %2802 = vmatprep.mubr.bf16.mxu0 0
  %2803 = vmatmul.mubr.bf16.gmra.mrb[0].mxu0 %v2681
  %v2804 = vpop.f32.mrb[0].mxu0
  %v2805 = vadd.f32 0.0, %v2804
  %v2806 = vpop.f32.mrb[0].mxu0
  %v2807 = vpop.f32.mrb[0].mxu0
  %v2808 = vadd.f32 0.0, %v2807
  %v2809 = vpop.f32.mrb[0].mxu0
  %2810 = vdwg.mxu0
  %v2827 = vunpack.c.l.b16 %v2689
  %v2828 = vunpack.c.l.b16 %v2690
  %v2829 = vunpack.c.l.b16 %v2691
  %v2830 = vunpack.c.l.b16 %v2692
  %v2831 = vunpack.c.l.b16 %v2693
  %v2832 = vunpack.c.l.b16 %v2694
  %v2833 = vunpack.c.l.b16 %v2695
  %v2834 = vunpack.c.l.b16 %v2696
  %v2835 = vunpack.c.l.b16 %v2697
  %v2836 = vunpack.c.l.b16 %v2698
  %v2837 = vunpack.c.l.b16 %v2699
  %v2838 = vunpack.c.l.b16 %v2700
  %v2839 = vunpack.c.l.b16 %v2701
  %v2840 = vunpack.c.l.b16 %v2702
  %v2841 = vunpack.c.l.b16 %v2703
  %v2842 = vunpack.c.l.b16 %v2704
  %v2843 = vpack.c.b16 %v2828, %v2827
  %v2844 = vpack.c.b16 %v2830, %v2829
  %v2845 = vpack.c.b16 %v2832, %v2831
  %v2846 = vpack.c.b16 %v2834, %v2833
  %v2847 = vpack.c.b16 %v2836, %v2835
  %v2848 = vpack.c.b16 %v2838, %v2837
  %v2849 = vpack.c.b16 %v2840, %v2839
  %v2850 = vpack.c.b16 %v2842, %v2841
  %2859 = vmatprep.subr.bf16.mxu0 0
  %2860 = vmatpush1.bf16.msra.mxu0 %v2843
  %2861 = vmatprep.subr.bf16.mxu0 0
  %2862 = vmatpush1.bf16.msra.mxu0 %v2844
  %2863 = vmatprep.subr.bf16.mxu0 0
  %2864 = vmatpush1.bf16.msra.mxu0 %v2845
  %2865 = vmatprep.subr.bf16.mxu0 0
  %2866 = vmatpush1.bf16.msra.mxu0 %v2846
  %2867 = vmatprep.subr.bf16.mxu0 0
  %2868 = vmatpush1.bf16.msra.mxu0 %v2847
  %2869 = vmatprep.subr.bf16.mxu0 0
  %2870 = vmatpush1.bf16.msra.mxu0 %v2848
  %2871 = vmatprep.subr.bf16.mxu0 0
  %2872 = vmatpush1.bf16.msra.mxu0 %v2849
  %2873 = vmatprep.subr.bf16.mxu0 0
  %2874 = vmatpush1.bf16.msra.mxu0 %v2850
  %2875 = vmatprep.subr.bf16.mxu0 0
  %2876 = vmatpush1.bf16.msra.mxu0 0
  %2877 = vmatprep.subr.bf16.mxu0 0
  %2878 = vmatpush1.bf16.msra.mxu0 0
  %2879 = vmatprep.subr.bf16.mxu0 0
  %2880 = vmatpush1.bf16.msra.mxu0 0
  %2881 = vmatprep.subr.bf16.mxu0 0
  %2882 = vmatpush1.bf16.msra.mxu0 0
  %2883 = vmatprep.subr.bf16.mxu0 0
  %2884 = vmatpush1.bf16.msra.mxu0 0
  %2885 = vmatprep.subr.bf16.mxu0 0
  %2886 = vmatpush1.bf16.msra.mxu0 0
  %2887 = vmatprep.subr.bf16.mxu0 0
  %2888 = vmatpush1.bf16.msra.mxu0 0
  %2889 = vmatprep.subr.bf16.mxu0 0
  %2890 = vmatpush1.bf16.msra.mxu0 0
  %2891 = vmatprep.mubr.bf16.mxu0 0
  %2892 = vmatmul.mubr.bf16.gmra.mrb[0].mxu0 %v2680
  %v2893 = vpop.f32.mrb[0].mxu0
  %v2894 = vadd.f32 %v2805, %v2893
  %v2895 = vpop.f32.mrb[0].mxu0
  %v2896 = vpop.f32.mrb[0].mxu0
  %v2897 = vadd.f32 %v2808, %v2896
  %v2898 = vpop.f32.mrb[0].mxu0
  %2899 = vdwg.mxu0
  %s2900 = scalar_lea.vmem %s12, 128
  %v2901 = vld [vmem:[%s2900] sm:$0xf]
  %v2902 = vld [vmem:[%s2900 + $0x4] sm:$0xf]
  %v2903 = vld [vmem:[%s2900 + $0x8] sm:$0xf]
  %v2904 = vld [vmem:[%s2900 + $0xc] sm:$0xf]
  %v2905 = vld [vmem:[%s2900 + $0x10] sm:$0xf]
  %v2906 = vld [vmem:[%s2900 + $0x14] sm:$0xf]
  %v2907 = vld [vmem:[%s2900 + $0x18] sm:$0xf]
  %v2908 = vld [vmem:[%s2900 + $0x1c] sm:$0xf]
  %v2909 = vld [vmem:[%s2900 + $0x20] sm:$0xf]
  %v2910 = vld [vmem:[%s2900 + $0x24] sm:$0xf]
  %v2911 = vld [vmem:[%s2900 + $0x28] sm:$0xf]
  %v2912 = vld [vmem:[%s2900 + $0x2c] sm:$0xf]
  %v2913 = vld [vmem:[%s2900 + $0x30] sm:$0xf]
  %v2914 = vld [vmem:[%s2900 + $0x34] sm:$0xf]
  %v2915 = vld [vmem:[%s2900 + $0x38] sm:$0xf]
  %v2916 = vld [vmem:[%s2900 + $0x3c] sm:$0xf]
  %v2933 = vunpack.c.l.b16 %v2901
  %v2934 = vunpack.c.l.b16 %v2902
  %v2935 = vunpack.c.l.b16 %v2903
  %v2936 = vunpack.c.l.b16 %v2904
  %v2937 = vunpack.c.l.b16 %v2905
  %v2938 = vunpack.c.l.b16 %v2906
  %v2939 = vunpack.c.l.b16 %v2907
  %v2940 = vunpack.c.l.b16 %v2908
  %v2941 = vunpack.c.l.b16 %v2909
  %v2942 = vunpack.c.l.b16 %v2910
  %v2943 = vunpack.c.l.b16 %v2911
  %v2944 = vunpack.c.l.b16 %v2912
  %v2945 = vunpack.c.l.b16 %v2913
  %v2946 = vunpack.c.l.b16 %v2914
  %v2947 = vunpack.c.l.b16 %v2915
  %v2948 = vunpack.c.l.b16 %v2916
  %v2949 = vpack.c.b16 %v2934, %v2933
  %v2950 = vpack.c.b16 %v2936, %v2935
  %v2951 = vpack.c.b16 %v2938, %v2937
  %v2952 = vpack.c.b16 %v2940, %v2939
  %v2953 = vpack.c.b16 %v2942, %v2941
  %v2954 = vpack.c.b16 %v2944, %v2943
  %v2955 = vpack.c.b16 %v2946, %v2945
  %v2956 = vpack.c.b16 %v2948, %v2947
  %2965 = vmatprep.subr.bf16.mxu0 0
  %2966 = vmatpush1.bf16.msra.mxu0 %v2949
  %2967 = vmatprep.subr.bf16.mxu0 0
  %2968 = vmatpush1.bf16.msra.mxu0 %v2950
  %2969 = vmatprep.subr.bf16.mxu0 0
  %2970 = vmatpush1.bf16.msra.mxu0 %v2951
  %2971 = vmatprep.subr.bf16.mxu0 0
  %2972 = vmatpush1.bf16.msra.mxu0 %v2952
  %2973 = vmatprep.subr.bf16.mxu0 0
  %2974 = vmatpush1.bf16.msra.mxu0 %v2953
  %2975 = vmatprep.subr.bf16.mxu0 0
  %2976 = vmatpush1.bf16.msra.mxu0 %v2954
  %2977 = vmatprep.subr.bf16.mxu0 0
  %2978 = vmatpush1.bf16.msra.mxu0 %v2955
  %2979 = vmatprep.subr.bf16.mxu0 0
  %2980 = vmatpush1.bf16.msra.mxu0 %v2956
  %2981 = vmatprep.subr.bf16.mxu0 0
  %2982 = vmatpush1.bf16.msra.mxu0 0
  %2983 = vmatprep.subr.bf16.mxu0 0
  %2984 = vmatpush1.bf16.msra.mxu0 0
  %2985 = vmatprep.subr.bf16.mxu0 0
  %2986 = vmatpush1.bf16.msra.mxu0 0
  %2987 = vmatprep.subr.bf16.mxu0 0
  %2988 = vmatpush1.bf16.msra.mxu0 0
  %2989 = vmatprep.subr.bf16.mxu0 0
  %2990 = vmatpush1.bf16.msra.mxu0 0
  %2991 = vmatprep.subr.bf16.mxu0 0
  %2992 = vmatpush1.bf16.msra.mxu0 0
  %2993 = vmatprep.subr.bf16.mxu0 0
  %2994 = vmatpush1.bf16.msra.mxu0 0
  %2995 = vmatprep.subr.bf16.mxu0 0
  %2996 = vmatpush1.bf16.msra.mxu0 0
  %2997 = vmatprep.mubr.bf16.mxu0 0
  %2998 = vmatmul.mubr.bf16.gmra.mrb[0].mxu0 %v2682
  %v2999 = vpop.f32.mrb[0].mxu0
  %v3000 = vadd.f32 0.0, %v2999
  %v3001 = vpop.f32.mrb[0].mxu0
  %v3002 = vpop.f32.mrb[0].mxu0
  %v3003 = vadd.f32 0.0, %v3002
  %v3004 = vpop.f32.mrb[0].mxu0
  %3005 = vdwg.mxu0
  %v3006 = vadd.f32 %v2894, %v3000
  %v3007 = vadd.f32 %v2897, %v3003
  %s3008 = scalar_lea.vmem %s12, 192
  %v3009 = vld [vmem:[%s3008] sm:$0xf]
  %v3010 = vld [vmem:[%s3008 + $0x4] sm:$0xf]
  %v3011 = vld [vmem:[%s3008 + $0x8] sm:$0xf]
  %v3012 = vld [vmem:[%s3008 + $0xc] sm:$0xf]
  %v3013 = vld [vmem:[%s3008 + $0x10] sm:$0xf]
  %v3014 = vld [vmem:[%s3008 + $0x14] sm:$0xf]
  %v3015 = vld [vmem:[%s3008 + $0x18] sm:$0xf]
  %v3016 = vld [vmem:[%s3008 + $0x1c] sm:$0xf]
  %v3017 = vld [vmem:[%s3008 + $0x20] sm:$0xf]
  %v3018 = vld [vmem:[%s3008 + $0x24] sm:$0xf]
  %v3019 = vld [vmem:[%s3008 + $0x28] sm:$0xf]
  %v3020 = vld [vmem:[%s3008 + $0x2c] sm:$0xf]
  %v3021 = vld [vmem:[%s3008 + $0x30] sm:$0xf]
  %v3022 = vld [vmem:[%s3008 + $0x34] sm:$0xf]
  %v3023 = vld [vmem:[%s3008 + $0x38] sm:$0xf]
  %v3024 = vld [vmem:[%s3008 + $0x3c] sm:$0xf]
  %v3041 = vunpack.c.l.b16 %v3009
  %v3042 = vunpack.c.l.b16 %v3010
  %v3043 = vunpack.c.l.b16 %v3011
  %v3044 = vunpack.c.l.b16 %v3012
  %v3045 = vunpack.c.l.b16 %v3013
  %v3046 = vunpack.c.l.b16 %v3014
  %v3047 = vunpack.c.l.b16 %v3015
  %v3048 = vunpack.c.l.b16 %v3016
  %v3049 = vunpack.c.l.b16 %v3017
  %v3050 = vunpack.c.l.b16 %v3018
  %v3051 = vunpack.c.l.b16 %v3019
  %v3052 = vunpack.c.l.b16 %v3020
  %v3053 = vunpack.c.l.b16 %v3021
  %v3054 = vunpack.c.l.b16 %v3022
  %v3055 = vunpack.c.l.b16 %v3023
  %v3056 = vunpack.c.l.b16 %v3024
  %v3057 = vpack.c.b16 %v3042, %v3041
  %v3058 = vpack.c.b16 %v3044, %v3043
  %v3059 = vpack.c.b16 %v3046, %v3045
  %v3060 = vpack.c.b16 %v3048, %v3047
  %v3061 = vpack.c.b16 %v3050, %v3049
  %v3062 = vpack.c.b16 %v3052, %v3051
  %v3063 = vpack.c.b16 %v3054, %v3053
  %v3064 = vpack.c.b16 %v3056, %v3055
  %3073 = vmatprep.subr.bf16.mxu0 0
  %3074 = vmatpush1.bf16.msra.mxu0 %v3057
  %3075 = vmatprep.subr.bf16.mxu0 0
  %3076 = vmatpush1.bf16.msra.mxu0 %v3058
  %3077 = vmatprep.subr.bf16.mxu0 0
  %3078 = vmatpush1.bf16.msra.mxu0 %v3059
  %3079 = vmatprep.subr.bf16.mxu0 0
  %3080 = vmatpush1.bf16.msra.mxu0 %v3060
  %3081 = vmatprep.subr.bf16.mxu0 0
  %3082 = vmatpush1.bf16.msra.mxu0 %v3061
  %3083 = vmatprep.subr.bf16.mxu0 0
  %3084 = vmatpush1.bf16.msra.mxu0 %v3062
  %3085 = vmatprep.subr.bf16.mxu0 0
  %3086 = vmatpush1.bf16.msra.mxu0 %v3063
  %3087 = vmatprep.subr.bf16.mxu0 0
  %3088 = vmatpush1.bf16.msra.mxu0 %v3064
  %3089 = vmatprep.subr.bf16.mxu0 0
  %3090 = vmatpush1.bf16.msra.mxu0 0
  %3091 = vmatprep.subr.bf16.mxu0 0
  %3092 = vmatpush1.bf16.msra.mxu0 0
  %3093 = vmatprep.subr.bf16.mxu0 0
  %3094 = vmatpush1.bf16.msra.mxu0 0
  %3095 = vmatprep.subr.bf16.mxu0 0
  %3096 = vmatpush1.bf16.msra.mxu0 0
  %3097 = vmatprep.subr.bf16.mxu0 0
  %3098 = vmatpush1.bf16.msra.mxu0 0
  %3099 = vmatprep.subr.bf16.mxu0 0
  %3100 = vmatpush1.bf16.msra.mxu0 0
  %3101 = vmatprep.subr.bf16.mxu0 0
  %3102 = vmatpush1.bf16.msra.mxu0 0
  %3103 = vmatprep.subr.bf16.mxu0 0
  %3104 = vmatpush1.bf16.msra.mxu0 0
  %3105 = vmatprep.mubr.bf16.mxu0 0
  %3106 = vmatmul.mubr.bf16.gmra.mrb[0].mxu0 %v2683
  %v3107 = vpop.f32.mrb[0].mxu0
  %v3108 = vadd.f32 0.0, %v3107
  %v3109 = vpop.f32.mrb[0].mxu0
  %v3110 = vpop.f32.mrb[0].mxu0
  %v3111 = vadd.f32 0.0, %v3110
  %v3112 = vpop.f32.mrb[0].mxu0
  %3113 = vdwg.mxu0
  %v3114 = vadd.f32 %v3006, %v3108
  %v3115 = vadd.f32 %v3007, %v3111
  %s3116 = scalar_lea.vmem %s12, 256
  %v3117 = vld [vmem:[%s3116] sm:$0xf]
  %v3118 = vld [vmem:[%s3116 + $0x4] sm:$0xf]
  %v3119 = vld [vmem:[%s3116 + $0x8] sm:$0xf]
  %v3120 = vld [vmem:[%s3116 + $0xc] sm:$0xf]
  %v3121 = vld [vmem:[%s3116 + $0x10] sm:$0xf]
  %v3122 = vld [vmem:[%s3116 + $0x14] sm:$0xf]
  %v3123 = vld [vmem:[%s3116 + $0x18] sm:$0xf]
  %v3124 = vld [vmem:[%s3116 + $0x1c] sm:$0xf]
  %v3125 = vld [vmem:[%s3116 + $0x20] sm:$0xf]
  %v3126 = vld [vmem:[%s3116 + $0x24] sm:$0xf]
  %v3127 = vld [vmem:[%s3116 + $0x28] sm:$0xf]
  %v3128 = vld [vmem:[%s3116 + $0x2c] sm:$0xf]
  %v3129 = vld [vmem:[%s3116 + $0x30] sm:$0xf]
  %v3130 = vld [vmem:[%s3116 + $0x34] sm:$0xf]
  %v3131 = vld [vmem:[%s3116 + $0x38] sm:$0xf]
  %v3132 = vld [vmem:[%s3116 + $0x3c] sm:$0xf]
  %v3149 = vunpack.c.l.b16 %v3117
  %v3150 = vunpack.c.l.b16 %v3118
  %v3151 = vunpack.c.l.b16 %v3119
  %v3152 = vunpack.c.l.b16 %v3120
  %v3153 = vunpack.c.l.b16 %v3121
  %v3154 = vunpack.c.l.b16 %v3122
  %v3155 = vunpack.c.l.b16 %v3123
  %v3156 = vunpack.c.l.b16 %v3124
  %v3157 = vunpack.c.l.b16 %v3125
  %v3158 = vunpack.c.l.b16 %v3126
  %v3159 = vunpack.c.l.b16 %v3127
  %v3160 = vunpack.c.l.b16 %v3128
  %v3161 = vunpack.c.l.b16 %v3129
  %v3162 = vunpack.c.l.b16 %v3130
  %v3163 = vunpack.c.l.b16 %v3131
  %v3164 = vunpack.c.l.b16 %v3132
  %v3165 = vpack.c.b16 %v3150, %v3149
  %v3166 = vpack.c.b16 %v3152, %v3151
  %v3167 = vpack.c.b16 %v3154, %v3153
  %v3168 = vpack.c.b16 %v3156, %v3155
  %v3169 = vpack.c.b16 %v3158, %v3157
  %v3170 = vpack.c.b16 %v3160, %v3159
  %v3171 = vpack.c.b16 %v3162, %v3161
  %v3172 = vpack.c.b16 %v3164, %v3163
  %3181 = vmatprep.subr.bf16.mxu0 0
  %3182 = vmatpush1.bf16.msra.mxu0 %v3165
  %3183 = vmatprep.subr.bf16.mxu0 0
  %3184 = vmatpush1.bf16.msra.mxu0 %v3166
  %3185 = vmatprep.subr.bf16.mxu0 0
  %3186 = vmatpush1.bf16.msra.mxu0 %v3167
  %3187 = vmatprep.subr.bf16.mxu0 0
  %3188 = vmatpush1.bf16.msra.mxu0 %v3168
  %3189 = vmatprep.subr.bf16.mxu0 0
  %3190 = vmatpush1.bf16.msra.mxu0 %v3169
  %3191 = vmatprep.subr.bf16.mxu0 0
  %3192 = vmatpush1.bf16.msra.mxu0 %v3170
  %3193 = vmatprep.subr.bf16.mxu0 0
  %3194 = vmatpush1.bf16.msra.mxu0 %v3171
  %3195 = vmatprep.subr.bf16.mxu0 0
  %3196 = vmatpush1.bf16.msra.mxu0 %v3172
  %3197 = vmatprep.subr.bf16.mxu0 0
  %3198 = vmatpush1.bf16.msra.mxu0 0
  %3199 = vmatprep.subr.bf16.mxu0 0
  %3200 = vmatpush1.bf16.msra.mxu0 0
  %3201 = vmatprep.subr.bf16.mxu0 0
  %3202 = vmatpush1.bf16.msra.mxu0 0
  %3203 = vmatprep.subr.bf16.mxu0 0
  %3204 = vmatpush1.bf16.msra.mxu0 0
  %3205 = vmatprep.subr.bf16.mxu0 0
  %3206 = vmatpush1.bf16.msra.mxu0 0
  %3207 = vmatprep.subr.bf16.mxu0 0
  %3208 = vmatpush1.bf16.msra.mxu0 0
  %3209 = vmatprep.subr.bf16.mxu0 0
  %3210 = vmatpush1.bf16.msra.mxu0 0
  %3211 = vmatprep.subr.bf16.mxu0 0
  %3212 = vmatpush1.bf16.msra.mxu0 0
  %3213 = vmatprep.mubr.bf16.mxu0 0
  %3214 = vmatmul.mubr.bf16.gmra.mrb[0].mxu0 %v2684
  %v3215 = vpop.f32.mrb[0].mxu0
  %v3216 = vadd.f32 0.0, %v3215
  %v3217 = vpop.f32.mrb[0].mxu0
  %v3218 = vpop.f32.mrb[0].mxu0
  %v3219 = vadd.f32 0.0, %v3218
  %v3220 = vpop.f32.mrb[0].mxu0
  %3221 = vdwg.mxu0
  %v3222 = vadd.f32 %v3114, %v3216
  %v3223 = vadd.f32 %v3115, %v3219
  %s3224 = scalar_lea.vmem %s12, 320
  %v3225 = vld [vmem:[%s3224] sm:$0xf]
  %v3226 = vld [vmem:[%s3224 + $0x4] sm:$0xf]
  %v3227 = vld [vmem:[%s3224 + $0x8] sm:$0xf]
  %v3228 = vld [vmem:[%s3224 + $0xc] sm:$0xf]
  %v3229 = vld [vmem:[%s3224 + $0x10] sm:$0xf]
  %v3230 = vld [vmem:[%s3224 + $0x14] sm:$0xf]
  %v3231 = vld [vmem:[%s3224 + $0x18] sm:$0xf]
  %v3232 = vld [vmem:[%s3224 + $0x1c] sm:$0xf]
  %v3233 = vld [vmem:[%s3224 + $0x20] sm:$0xf]
  %v3234 = vld [vmem:[%s3224 + $0x24] sm:$0xf]
  %v3235 = vld [vmem:[%s3224 + $0x28] sm:$0xf]
  %v3236 = vld [vmem:[%s3224 + $0x2c] sm:$0xf]
  %v3237 = vld [vmem:[%s3224 + $0x30] sm:$0xf]
  %v3238 = vld [vmem:[%s3224 + $0x34] sm:$0xf]
  %v3239 = vld [vmem:[%s3224 + $0x38] sm:$0xf]
  %v3240 = vld [vmem:[%s3224 + $0x3c] sm:$0xf]
  %v3257 = vunpack.c.l.b16 %v3225
  %v3258 = vunpack.c.l.b16 %v3226
  %v3259 = vunpack.c.l.b16 %v3227
  %v3260 = vunpack.c.l.b16 %v3228
  %v3261 = vunpack.c.l.b16 %v3229
  %v3262 = vunpack.c.l.b16 %v3230
  %v3263 = vunpack.c.l.b16 %v3231
  %v3264 = vunpack.c.l.b16 %v3232
  %v3265 = vunpack.c.l.b16 %v3233
  %v3266 = vunpack.c.l.b16 %v3234
  %v3267 = vunpack.c.l.b16 %v3235
  %v3268 = vunpack.c.l.b16 %v3236
  %v3269 = vunpack.c.l.b16 %v3237
  %v3270 = vunpack.c.l.b16 %v3238
  %v3271 = vunpack.c.l.b16 %v3239
  %v3272 = vunpack.c.l.b16 %v3240
  %v3273 = vpack.c.b16 %v3258, %v3257
  %v3274 = vpack.c.b16 %v3260, %v3259
  %v3275 = vpack.c.b16 %v3262, %v3261
  %v3276 = vpack.c.b16 %v3264, %v3263
  %v3277 = vpack.c.b16 %v3266, %v3265
  %v3278 = vpack.c.b16 %v3268, %v3267
  %v3279 = vpack.c.b16 %v3270, %v3269
  %v3280 = vpack.c.b16 %v3272, %v3271
  %3289 = vmatprep.subr.bf16.mxu0 0
  %3290 = vmatpush1.bf16.msra.mxu0 %v3273
  %3291 = vmatprep.subr.bf16.mxu0 0
  %3292 = vmatpush1.bf16.msra.mxu0 %v3274
  %3293 = vmatprep.subr.bf16.mxu0 0
  %3294 = vmatpush1.bf16.msra.mxu0 %v3275
  %3295 = vmatprep.subr.bf16.mxu0 0
  %3296 = vmatpush1.bf16.msra.mxu0 %v3276
  %3297 = vmatprep.subr.bf16.mxu0 0
  %3298 = vmatpush1.bf16.msra.mxu0 %v3277
  %3299 = vmatprep.subr.bf16.mxu0 0
  %3300 = vmatpush1.bf16.msra.mxu0 %v3278
  %3301 = vmatprep.subr.bf16.mxu0 0
  %3302 = vmatpush1.bf16.msra.mxu0 %v3279
  %3303 = vmatprep.subr.bf16.mxu0 0
  %3304 = vmatpush1.bf16.msra.mxu0 %v3280
  %3305 = vmatprep.subr.bf16.mxu0 0
  %3306 = vmatpush1.bf16.msra.mxu0 0
  %3307 = vmatprep.subr.bf16.mxu0 0
  %3308 = vmatpush1.bf16.msra.mxu0 0
  %3309 = vmatprep.subr.bf16.mxu0 0
  %3310 = vmatpush1.bf16.msra.mxu0 0
  %3311 = vmatprep.subr.bf16.mxu0 0
  %3312 = vmatpush1.bf16.msra.mxu0 0
  %3313 = vmatprep.subr.bf16.mxu0 0
  %3314 = vmatpush1.bf16.msra.mxu0 0
  %3315 = vmatprep.subr.bf16.mxu0 0
  %3316 = vmatpush1.bf16.msra.mxu0 0
  %3317 = vmatprep.subr.bf16.mxu0 0
  %3318 = vmatpush1.bf16.msra.mxu0 0
  %3319 = vmatprep.subr.bf16.mxu0 0
  %3320 = vmatpush1.bf16.msra.mxu0 0
  %3321 = vmatprep.mubr.bf16.mxu0 0
  %3322 = vmatmul.mubr.bf16.gmra.mrb[0].mxu0 %v2685
  %v3323 = vpop.f32.mrb[0].mxu0
  %v3324 = vadd.f32 0.0, %v3323
  %v3325 = vpop.f32.mrb[0].mxu0
  %v3326 = vpop.f32.mrb[0].mxu0
  %v3327 = vadd.f32 0.0, %v3326
  %v3328 = vpop.f32.mrb[0].mxu0
  %3329 = vdwg.mxu0
  %v3330 = vadd.f32 %v3222, %v3324
  %v3331 = vadd.f32 %v3223, %v3327
  %s3332 = scalar_lea.vmem %s12, 384
  %v3333 = vld [vmem:[%s3332] sm:$0xf]
  %v3334 = vld [vmem:[%s3332 + $0x4] sm:$0xf]
  %v3335 = vld [vmem:[%s3332 + $0x8] sm:$0xf]
  %v3336 = vld [vmem:[%s3332 + $0xc] sm:$0xf]
  %v3337 = vld [vmem:[%s3332 + $0x10] sm:$0xf]
  %v3338 = vld [vmem:[%s3332 + $0x14] sm:$0xf]
  %v3339 = vld [vmem:[%s3332 + $0x18] sm:$0xf]
  %v3340 = vld [vmem:[%s3332 + $0x1c] sm:$0xf]
  %v3341 = vld [vmem:[%s3332 + $0x20] sm:$0xf]
  %v3342 = vld [vmem:[%s3332 + $0x24] sm:$0xf]
  %v3343 = vld [vmem:[%s3332 + $0x28] sm:$0xf]
  %v3344 = vld [vmem:[%s3332 + $0x2c] sm:$0xf]
  %v3345 = vld [vmem:[%s3332 + $0x30] sm:$0xf]
  %v3346 = vld [vmem:[%s3332 + $0x34] sm:$0xf]
  %v3347 = vld [vmem:[%s3332 + $0x38] sm:$0xf]
  %v3348 = vld [vmem:[%s3332 + $0x3c] sm:$0xf]
  %v3365 = vunpack.c.l.b16 %v3333
  %v3366 = vunpack.c.l.b16 %v3334
  %v3367 = vunpack.c.l.b16 %v3335
  %v3368 = vunpack.c.l.b16 %v3336
  %v3369 = vunpack.c.l.b16 %v3337
  %v3370 = vunpack.c.l.b16 %v3338
  %v3371 = vunpack.c.l.b16 %v3339
  %v3372 = vunpack.c.l.b16 %v3340
  %v3373 = vunpack.c.l.b16 %v3341
  %v3374 = vunpack.c.l.b16 %v3342
  %v3375 = vunpack.c.l.b16 %v3343
  %v3376 = vunpack.c.l.b16 %v3344
  %v3377 = vunpack.c.l.b16 %v3345
  %v3378 = vunpack.c.l.b16 %v3346
  %v3379 = vunpack.c.l.b16 %v3347
  %v3380 = vunpack.c.l.b16 %v3348
  %v3381 = vpack.c.b16 %v3366, %v3365
  %v3382 = vpack.c.b16 %v3368, %v3367
  %v3383 = vpack.c.b16 %v3370, %v3369
  %v3384 = vpack.c.b16 %v3372, %v3371
  %v3385 = vpack.c.b16 %v3374, %v3373
  %v3386 = vpack.c.b16 %v3376, %v3375
  %v3387 = vpack.c.b16 %v3378, %v3377
  %v3388 = vpack.c.b16 %v3380, %v3379
  %3397 = vmatprep.subr.bf16.mxu0 0
  %3398 = vmatpush1.bf16.msra.mxu0 %v3381
  %3399 = vmatprep.subr.bf16.mxu0 0
  %3400 = vmatpush1.bf16.msra.mxu0 %v3382
  %3401 = vmatprep.subr.bf16.mxu0 0
  %3402 = vmatpush1.bf16.msra.mxu0 %v3383
  %3403 = vmatprep.subr.bf16.mxu0 0
  %3404 = vmatpush1.bf16.msra.mxu0 %v3384
  %3405 = vmatprep.subr.bf16.mxu0 0
  %3406 = vmatpush1.bf16.msra.mxu0 %v3385
  %3407 = vmatprep.subr.bf16.mxu0 0
  %3408 = vmatpush1.bf16.msra.mxu0 %v3386
  %3409 = vmatprep.subr.bf16.mxu0 0
  %3410 = vmatpush1.bf16.msra.mxu0 %v3387
  %3411 = vmatprep.subr.bf16.mxu0 0
  %3412 = vmatpush1.bf16.msra.mxu0 %v3388
  %3413 = vmatprep.subr.bf16.mxu0 0
  %3414 = vmatpush1.bf16.msra.mxu0 0
  %3415 = vmatprep.subr.bf16.mxu0 0
  %3416 = vmatpush1.bf16.msra.mxu0 0
  %3417 = vmatprep.subr.bf16.mxu0 0
  %3418 = vmatpush1.bf16.msra.mxu0 0
  %3419 = vmatprep.subr.bf16.mxu0 0
  %3420 = vmatpush1.bf16.msra.mxu0 0
  %3421 = vmatprep.subr.bf16.mxu0 0
  %3422 = vmatpush1.bf16.msra.mxu0 0
  %3423 = vmatprep.subr.bf16.mxu0 0
  %3424 = vmatpush1.bf16.msra.mxu0 0
  %3425 = vmatprep.subr.bf16.mxu0 0
  %3426 = vmatpush1.bf16.msra.mxu0 0
  %3427 = vmatprep.subr.bf16.mxu0 0
  %3428 = vmatpush1.bf16.msra.mxu0 0
  %3429 = vmatprep.mubr.bf16.mxu0 0
  %3430 = vmatmul.mubr.bf16.gmra.mrb[0].mxu0 %v2686
  %v3431 = vpop.f32.mrb[0].mxu0
  %v3432 = vadd.f32 0.0, %v3431
  %v3433 = vpop.f32.mrb[0].mxu0
  %v3434 = vpop.f32.mrb[0].mxu0
  %v3435 = vadd.f32 0.0, %v3434
  %v3436 = vpop.f32.mrb[0].mxu0
  %3437 = vdwg.mxu0
  %v3438 = vadd.f32 %v3330, %v3432
  %v3439 = vadd.f32 %v3331, %v3435
  %s3440 = scalar_lea.vmem %s12, 448
  %v3441 = vld [vmem:[%s3440] sm:$0xf]
  %v3442 = vld [vmem:[%s3440 + $0x4] sm:$0xf]
  %v3443 = vld [vmem:[%s3440 + $0x8] sm:$0xf]
  %v3444 = vld [vmem:[%s3440 + $0xc] sm:$0xf]
  %v3445 = vld [vmem:[%s3440 + $0x10] sm:$0xf]
  %v3446 = vld [vmem:[%s3440 + $0x14] sm:$0xf]
  %v3447 = vld [vmem:[%s3440 + $0x18] sm:$0xf]
  %v3448 = vld [vmem:[%s3440 + $0x1c] sm:$0xf]
  %v3449 = vld [vmem:[%s3440 + $0x20] sm:$0xf]
  %v3450 = vld [vmem:[%s3440 + $0x24] sm:$0xf]
  %v3451 = vld [vmem:[%s3440 + $0x28] sm:$0xf]
  %v3452 = vld [vmem:[%s3440 + $0x2c] sm:$0xf]
  %v3453 = vld [vmem:[%s3440 + $0x30] sm:$0xf]
  %v3454 = vld [vmem:[%s3440 + $0x34] sm:$0xf]
  %v3455 = vld [vmem:[%s3440 + $0x38] sm:$0xf]
  %v3456 = vld [vmem:[%s3440 + $0x3c] sm:$0xf]
  %v3473 = vunpack.c.l.b16 %v3441
  %v3474 = vunpack.c.l.b16 %v3442
  %v3475 = vunpack.c.l.b16 %v3443
  %v3476 = vunpack.c.l.b16 %v3444
  %v3477 = vunpack.c.l.b16 %v3445
  %v3478 = vunpack.c.l.b16 %v3446
  %v3479 = vunpack.c.l.b16 %v3447
  %v3480 = vunpack.c.l.b16 %v3448
  %v3481 = vunpack.c.l.b16 %v3449
  %v3482 = vunpack.c.l.b16 %v3450
  %v3483 = vunpack.c.l.b16 %v3451
  %v3484 = vunpack.c.l.b16 %v3452
  %v3485 = vunpack.c.l.b16 %v3453
  %v3486 = vunpack.c.l.b16 %v3454
  %v3487 = vunpack.c.l.b16 %v3455
  %v3488 = vunpack.c.l.b16 %v3456
  %v3489 = vpack.c.b16 %v3474, %v3473
  %v3490 = vpack.c.b16 %v3476, %v3475
  %v3491 = vpack.c.b16 %v3478, %v3477
  %v3492 = vpack.c.b16 %v3480, %v3479
  %v3493 = vpack.c.b16 %v3482, %v3481
  %v3494 = vpack.c.b16 %v3484, %v3483
  %v3495 = vpack.c.b16 %v3486, %v3485
  %v3496 = vpack.c.b16 %v3488, %v3487
  %3505 = vmatprep.subr.bf16.mxu0 0
  %3506 = vmatpush1.bf16.msra.mxu0 %v3489
  %3507 = vmatprep.subr.bf16.mxu0 0
  %3508 = vmatpush1.bf16.msra.mxu0 %v3490
  %3509 = vmatprep.subr.bf16.mxu0 0
  %3510 = vmatpush1.bf16.msra.mxu0 %v3491
  %3511 = vmatprep.subr.bf16.mxu0 0
  %3512 = vmatpush1.bf16.msra.mxu0 %v3492
  %3513 = vmatprep.subr.bf16.mxu0 0
  %3514 = vmatpush1.bf16.msra.mxu0 %v3493
  %3515 = vmatprep.subr.bf16.mxu0 0
  %3516 = vmatpush1.bf16.msra.mxu0 %v3494
  %3517 = vmatprep.subr.bf16.mxu0 0
  %3518 = vmatpush1.bf16.msra.mxu0 %v3495
  %3519 = vmatprep.subr.bf16.mxu0 0
  %3520 = vmatpush1.bf16.msra.mxu0 %v3496
  %3521 = vmatprep.subr.bf16.mxu0 0
  %3522 = vmatpush1.bf16.msra.mxu0 0
  %3523 = vmatprep.subr.bf16.mxu0 0
  %3524 = vmatpush1.bf16.msra.mxu0 0
  %3525 = vmatprep.subr.bf16.mxu0 0
  %3526 = vmatpush1.bf16.msra.mxu0 0
  %3527 = vmatprep.subr.bf16.mxu0 0
  %3528 = vmatpush1.bf16.msra.mxu0 0
  %3529 = vmatprep.subr.bf16.mxu0 0
  %3530 = vmatpush1.bf16.msra.mxu0 0
  %3531 = vmatprep.subr.bf16.mxu0 0
  %3532 = vmatpush1.bf16.msra.mxu0 0
  %3533 = vmatprep.subr.bf16.mxu0 0
  %3534 = vmatpush1.bf16.msra.mxu0 0
  %3535 = vmatprep.subr.bf16.mxu0 0
  %3536 = vmatpush1.bf16.msra.mxu0 0
  %3537 = vmatprep.mubr.bf16.mxu0 0
  %3538 = vmatmul.mubr.bf16.gmra.mrb[0].mxu0 %v2687
  %v3539 = vpop.f32.mrb[0].mxu0
  %v3540 = vadd.f32 0.0, %v3539
  %v3541 = vpop.f32.mrb[0].mxu0
  %v3542 = vpop.f32.mrb[0].mxu0
  %v3543 = vadd.f32 0.0, %v3542
  %v3544 = vpop.f32.mrb[0].mxu0
  %3545 = vdwg.mxu0
  %v3546 = vadd.f32 %v3438, %v3540
  %v3547 = vadd.f32 %v3439, %v3543
  %s3548 = scalar_lea.vmem %s12, 512
  %v3549 = vld [vmem:[%s3548] sm:$0xf]
  %v3550 = vld [vmem:[%s3548 + $0x4] sm:$0xf]
  %v3551 = vld [vmem:[%s3548 + $0x8] sm:$0xf]
  %v3552 = vld [vmem:[%s3548 + $0xc] sm:$0xf]
  %v3553 = vld [vmem:[%s3548 + $0x10] sm:$0xf]
  %v3554 = vld [vmem:[%s3548 + $0x14] sm:$0xf]
  %v3555 = vld [vmem:[%s3548 + $0x18] sm:$0xf]
  %v3556 = vld [vmem:[%s3548 + $0x1c] sm:$0xf]
  %v3557 = vld [vmem:[%s3548 + $0x20] sm:$0xf]
  %v3558 = vld [vmem:[%s3548 + $0x24] sm:$0xf]
  %v3559 = vld [vmem:[%s3548 + $0x28] sm:$0xf]
  %v3560 = vld [vmem:[%s3548 + $0x2c] sm:$0xf]
  %v3561 = vld [vmem:[%s3548 + $0x30] sm:$0xf]
  %v3562 = vld [vmem:[%s3548 + $0x34] sm:$0xf]
  %v3563 = vld [vmem:[%s3548 + $0x38] sm:$0xf]
  %v3564 = vld [vmem:[%s3548 + $0x3c] sm:$0xf]
  %v3581 = vunpack.c.l.b16 %v3549
  %v3582 = vunpack.c.l.b16 %v3550
  %v3583 = vunpack.c.l.b16 %v3551
  %v3584 = vunpack.c.l.b16 %v3552
  %v3585 = vunpack.c.l.b16 %v3553
  %v3586 = vunpack.c.l.b16 %v3554
  %v3587 = vunpack.c.l.b16 %v3555
  %v3588 = vunpack.c.l.b16 %v3556
  %v3589 = vunpack.c.l.b16 %v3557
  %v3590 = vunpack.c.l.b16 %v3558
  %v3591 = vunpack.c.l.b16 %v3559
  %v3592 = vunpack.c.l.b16 %v3560
  %v3593 = vunpack.c.l.b16 %v3561
  %v3594 = vunpack.c.l.b16 %v3562
  %v3595 = vunpack.c.l.b16 %v3563
  %v3596 = vunpack.c.l.b16 %v3564
  %v3597 = vpack.c.b16 %v3582, %v3581
  %v3598 = vpack.c.b16 %v3584, %v3583
  %v3599 = vpack.c.b16 %v3586, %v3585
  %v3600 = vpack.c.b16 %v3588, %v3587
  %v3601 = vpack.c.b16 %v3590, %v3589
  %v3602 = vpack.c.b16 %v3592, %v3591
  %v3603 = vpack.c.b16 %v3594, %v3593
  %v3604 = vpack.c.b16 %v3596, %v3595
  %3613 = vmatprep.subr.bf16.mxu0 0
  %3614 = vmatpush1.bf16.msra.mxu0 %v3597
  %3615 = vmatprep.subr.bf16.mxu0 0
  %3616 = vmatpush1.bf16.msra.mxu0 %v3598
  %3617 = vmatprep.subr.bf16.mxu0 0
  %3618 = vmatpush1.bf16.msra.mxu0 %v3599
  %3619 = vmatprep.subr.bf16.mxu0 0
  %3620 = vmatpush1.bf16.msra.mxu0 %v3600
  %3621 = vmatprep.subr.bf16.mxu0 0
  %3622 = vmatpush1.bf16.msra.mxu0 %v3601
  %3623 = vmatprep.subr.bf16.mxu0 0
  %3624 = vmatpush1.bf16.msra.mxu0 %v3602
  %3625 = vmatprep.subr.bf16.mxu0 0
  %3626 = vmatpush1.bf16.msra.mxu0 %v3603
  %3627 = vmatprep.subr.bf16.mxu0 0
  %3628 = vmatpush1.bf16.msra.mxu0 %v3604
  %3629 = vmatprep.subr.bf16.mxu0 0
  %3630 = vmatpush1.bf16.msra.mxu0 0
  %3631 = vmatprep.subr.bf16.mxu0 0
  %3632 = vmatpush1.bf16.msra.mxu0 0
  %3633 = vmatprep.subr.bf16.mxu0 0
  %3634 = vmatpush1.bf16.msra.mxu0 0
  %3635 = vmatprep.subr.bf16.mxu0 0
  %3636 = vmatpush1.bf16.msra.mxu0 0
  %3637 = vmatprep.subr.bf16.mxu0 0
  %3638 = vmatpush1.bf16.msra.mxu0 0
  %3639 = vmatprep.subr.bf16.mxu0 0
  %3640 = vmatpush1.bf16.msra.mxu0 0
  %3641 = vmatprep.subr.bf16.mxu0 0
  %3642 = vmatpush1.bf16.msra.mxu0 0
  %3643 = vmatprep.subr.bf16.mxu0 0
  %3644 = vmatpush1.bf16.msra.mxu0 0
  %3645 = vmatprep.mubr.bf16.mxu0 0
  %3646 = vmatmul.mubr.bf16.gmra.mrb[0].mxu0 %v2688
  %v3647 = vpop.f32.mrb[0].mxu0
  %v3648 = vadd.f32 0.0, %v3647
  %v3649 = vpop.f32.mrb[0].mxu0
  %v3650 = vpop.f32.mrb[0].mxu0
  %v3651 = vadd.f32 0.0, %v3650
  %v3652 = vpop.f32.mrb[0].mxu0
  %3653 = vdwg.mxu0
  %v3654 = vadd.f32 %v3546, %v3648
  %v3655 = vadd.f32 %v3547, %v3651
  %v3656 = vld [vmem:[%s5 + $0x10] ss:$0 sm:$0xff]
  %v3657 = vadd.f32 %v3654, %v3656
  %v3658 = vadd.f32 %v3655, %v3656
  %v3659 = vmax.f32 %v3657, 0.0
  %v3660 = vmax.f32 %v3658, 0.0
  %v3661 = vpack.c.bf16 %v3660, %v3659
  %3662 = vmatprep.subr.bf16.mxu0 0
  %3663 = vmatpush1.bf16.msra.mxu0 %v3661
  %3664 = vmatprep.subr.bf16.mxu0 0
  %3665 = vmatpush1.bf16.msra.mxu0 0
  %3666 = vmatprep.subr.bf16.mxu0 0
  %3667 = vmatpush1.bf16.msra.mxu0 0
  %3668 = vmatprep.subr.bf16.mxu0 0
  %3669 = vmatpush1.bf16.msra.mxu0 0
  %3670 = vmatprep.subr.bf16.mxu0 0
  %3671 = vmatpush1.bf16.msra.mxu0 0
  %3672 = vmatprep.subr.bf16.mxu0 0
  %3673 = vmatpush1.bf16.msra.mxu0 0
  %3674 = vmatprep.subr.bf16.mxu0 0
  %3675 = vmatpush1.bf16.msra.mxu0 0
  %3676 = vmatprep.subr.bf16.mxu0 0
  %3677 = vmatpush1.bf16.msra.mxu0 0
  %3678 = vmatprep.subr.bf16.mxu0 0
  %3679 = vmatpush1.bf16.msra.mxu0 0
  %3680 = vmatprep.subr.bf16.mxu0 0
  %3681 = vmatpush1.bf16.msra.mxu0 0
  %3682 = vmatprep.subr.bf16.mxu0 0
  %3683 = vmatpush1.bf16.msra.mxu0 0
  %3684 = vmatprep.subr.bf16.mxu0 0
  %3685 = vmatpush1.bf16.msra.mxu0 0
  %3686 = vmatprep.subr.bf16.mxu0 0
  %3687 = vmatpush1.bf16.msra.mxu0 0
  %3688 = vmatprep.subr.bf16.mxu0 0
  %3689 = vmatpush1.bf16.msra.mxu0 0
  %3690 = vmatprep.subr.bf16.mxu0 0
  %3691 = vmatpush1.bf16.msra.mxu0 0
  %3692 = vmatprep.subr.bf16.mxu0 0
  %3693 = vmatpush1.bf16.msra.mxu0 0
  %3694 = vmatprep.mubr.bf16.mxu0 0
  %3695 = vmatmul.mubr.bf16.gmra.mrb[0].mxu0 %v2549
  %v3696 = vpop.f32.mrb[0].mxu0
  %v3697 = vadd.f32 0.0, %v3696
  %v3698 = vpop.f32.mrb[0].mxu0
  %v3699 = vpop.f32.mrb[0].mxu0
  %v3700 = vadd.f32 0.0, %v3699
  %v3701 = vpop.f32.mrb[0].mxu0
  %3702 = vmatprep.mubr.bf16.mxu0 0
  %3703 = vmatmul.mubr.bf16.gmra.mrb[0].mxu0 %v2552
  %v3704 = vpop.f32.mrb[0].mxu0
  %v3705 = vadd.f32 0.0, %v3704
  %v3706 = vpop.f32.mrb[0].mxu0
  %v3707 = vpop.f32.mrb[0].mxu0
  %v3708 = vadd.f32 0.0, %v3707
  %v3709 = vpop.f32.mrb[0].mxu0
  %3710 = vmatprep.mubr.bf16.mxu0 0
  %3711 = vmatmul.mubr.bf16.gmra.mrb[0].mxu0 %v2555
  %v3712 = vpop.f32.mrb[0].mxu0
  %v3713 = vadd.f32 0.0, %v3712
  %v3714 = vpop.f32.mrb[0].mxu0
  %v3715 = vpop.f32.mrb[0].mxu0
  %v3716 = vadd.f32 0.0, %v3715
  %v3717 = vpop.f32.mrb[0].mxu0
  %3718 = vmatprep.mubr.bf16.mxu0 0
  %3719 = vmatmul.mubr.bf16.gmra.mrb[0].mxu0 %v2558
  %v3720 = vpop.f32.mrb[0].mxu0
  %v3721 = vadd.f32 0.0, %v3720
  %v3722 = vpop.f32.mrb[0].mxu0
  %v3723 = vpop.f32.mrb[0].mxu0
  %v3724 = vadd.f32 0.0, %v3723
  %v3725 = vpop.f32.mrb[0].mxu0
  %3726 = vmatprep.mubr.bf16.mxu0 0
  %3727 = vmatmul.mubr.bf16.gmra.mrb[0].mxu0 %v2561
  %v3728 = vpop.f32.mrb[0].mxu0
  %v3729 = vadd.f32 0.0, %v3728
  %v3730 = vpop.f32.mrb[0].mxu0
  %v3731 = vpop.f32.mrb[0].mxu0
  %v3732 = vadd.f32 0.0, %v3731
  %v3733 = vpop.f32.mrb[0].mxu0
  %3734 = vmatprep.mubr.bf16.mxu0 0
  %3735 = vmatmul.mubr.bf16.gmra.mrb[0].mxu0 %v2564
  %v3736 = vpop.f32.mrb[0].mxu0
  %v3737 = vadd.f32 0.0, %v3736
  %v3738 = vpop.f32.mrb[0].mxu0
  %v3739 = vpop.f32.mrb[0].mxu0
  %v3740 = vadd.f32 0.0, %v3739
  %v3741 = vpop.f32.mrb[0].mxu0
  %3742 = vmatprep.mubr.bf16.mxu0 0
  %3743 = vmatmul.mubr.bf16.gmra.mrb[0].mxu0 %v2567
  %v3744 = vpop.f32.mrb[0].mxu0
  %v3745 = vadd.f32 0.0, %v3744
  %v3746 = vpop.f32.mrb[0].mxu0
  %v3747 = vpop.f32.mrb[0].mxu0
  %v3748 = vadd.f32 0.0, %v3747
  %v3749 = vpop.f32.mrb[0].mxu0
  %3750 = vmatprep.mubr.bf16.mxu0 0
  %3751 = vmatmul.mubr.bf16.gmra.mrb[0].mxu0 %v2570
  %v3752 = vpop.f32.mrb[0].mxu0
  %v3753 = vadd.f32 0.0, %v3752
  %v3754 = vpop.f32.mrb[0].mxu0
  %v3755 = vpop.f32.mrb[0].mxu0
  %v3756 = vadd.f32 0.0, %v3755
  %v3757 = vpop.f32.mrb[0].mxu0
  %3758 = vmatprep.mubr.bf16.mxu0 0
  %3759 = vmatmul.mubr.bf16.gmra.mrb[0].mxu0 %v2573
  %v3760 = vpop.f32.mrb[0].mxu0
  %v3761 = vadd.f32 0.0, %v3760
  %v3762 = vpop.f32.mrb[0].mxu0
  %v3763 = vpop.f32.mrb[0].mxu0
  %v3764 = vadd.f32 0.0, %v3763
  %v3765 = vpop.f32.mrb[0].mxu0
  %3766 = vdwg.mxu0
  %v3767 = vpack.c.bf16 %v3700, %v3697
  %v3768 = vpack.c.bf16 %v3708, %v3705
  %v3769 = vpack.c.bf16 %v3716, %v3713
  %v3770 = vpack.c.bf16 %v3724, %v3721
  %v3771 = vpack.c.bf16 %v3732, %v3729
  %v3772 = vpack.c.bf16 %v3740, %v3737
  %v3773 = vpack.c.bf16 %v3748, %v3745
  %v3774 = vpack.c.bf16 %v3756, %v3753
  %v3775 = vpack.c.bf16 %v3764, %v3761
  %s3776 = scalar_lea.vmem %s12, 576
  %v3777 = vld [vmem:[%s3776] sm:$0xf]
  %v3778 = vld [vmem:[%s3776 + $0x4] sm:$0xf]
  %v3779 = vld [vmem:[%s3776 + $0x8] sm:$0xf]
  %v3780 = vld [vmem:[%s3776 + $0xc] sm:$0xf]
  %v3781 = vld [vmem:[%s3776 + $0x10] sm:$0xf]
  %v3782 = vld [vmem:[%s3776 + $0x14] sm:$0xf]
  %v3783 = vld [vmem:[%s3776 + $0x18] sm:$0xf]
  %v3784 = vld [vmem:[%s3776 + $0x1c] sm:$0xf]
  %v3785 = vld [vmem:[%s3776 + $0x20] sm:$0xf]
  %v3786 = vld [vmem:[%s3776 + $0x24] sm:$0xf]
  %v3787 = vld [vmem:[%s3776 + $0x28] sm:$0xf]
  %v3788 = vld [vmem:[%s3776 + $0x2c] sm:$0xf]
  %v3789 = vld [vmem:[%s3776 + $0x30] sm:$0xf]
  %v3790 = vld [vmem:[%s3776 + $0x34] sm:$0xf]
  %v3791 = vld [vmem:[%s3776 + $0x38] sm:$0xf]
  %v3792 = vld [vmem:[%s3776 + $0x3c] sm:$0xf]
  %s3793 = scalar_lea.vmem %s12, 640
  %v3794 = vld [vmem:[%s3793] sm:$0xf]
  %v3795 = vld [vmem:[%s3793 + $0x4] sm:$0xf]
  %v3796 = vld [vmem:[%s3793 + $0x8] sm:$0xf]
  %v3797 = vld [vmem:[%s3793 + $0xc] sm:$0xf]
  %v3798 = vld [vmem:[%s3793 + $0x10] sm:$0xf]
  %v3799 = vld [vmem:[%s3793 + $0x14] sm:$0xf]
  %v3800 = vld [vmem:[%s3793 + $0x18] sm:$0xf]
  %v3801 = vld [vmem:[%s3793 + $0x1c] sm:$0xf]
  %v3802 = vld [vmem:[%s3793 + $0x20] sm:$0xf]
  %v3803 = vld [vmem:[%s3793 + $0x24] sm:$0xf]
  %v3804 = vld [vmem:[%s3793 + $0x28] sm:$0xf]
  %v3805 = vld [vmem:[%s3793 + $0x2c] sm:$0xf]
  %v3806 = vld [vmem:[%s3793 + $0x30] sm:$0xf]
  %v3807 = vld [vmem:[%s3793 + $0x34] sm:$0xf]
  %v3808 = vld [vmem:[%s3793 + $0x38] sm:$0xf]
  %v3809 = vld [vmem:[%s3793 + $0x3c] sm:$0xf]
  %v3826 = vunpack.c.l.b16 %v3794
  %v3827 = vunpack.c.l.b16 %v3795
  %v3828 = vunpack.c.l.b16 %v3796
  %v3829 = vunpack.c.l.b16 %v3797
  %v3830 = vunpack.c.l.b16 %v3798
  %v3831 = vunpack.c.l.b16 %v3799
  %v3832 = vunpack.c.l.b16 %v3800
  %v3833 = vunpack.c.l.b16 %v3801
  %v3834 = vunpack.c.l.b16 %v3802
  %v3835 = vunpack.c.l.b16 %v3803
  %v3836 = vunpack.c.l.b16 %v3804
  %v3837 = vunpack.c.l.b16 %v3805
  %v3838 = vunpack.c.l.b16 %v3806
  %v3839 = vunpack.c.l.b16 %v3807
  %v3840 = vunpack.c.l.b16 %v3808
  %v3841 = vunpack.c.l.b16 %v3809
  %v3842 = vpack.c.b16 %v3827, %v3826
  %v3843 = vpack.c.b16 %v3829, %v3828
  %v3844 = vpack.c.b16 %v3831, %v3830
  %v3845 = vpack.c.b16 %v3833, %v3832
  %v3846 = vpack.c.b16 %v3835, %v3834
  %v3847 = vpack.c.b16 %v3837, %v3836
  %v3848 = vpack.c.b16 %v3839, %v3838
  %v3849 = vpack.c.b16 %v3841, %v3840
  %3858 = vmatprep.subr.bf16.mxu0 0
  %3859 = vmatpush1.bf16.msra.mxu0 %v3842
  %3860 = vmatprep.subr.bf16.mxu0 0
  %3861 = vmatpush1.bf16.msra.mxu0 %v3843
  %3862 = vmatprep.subr.bf16.mxu0 0
  %3863 = vmatpush1.bf16.msra.mxu0 %v3844
  %3864 = vmatprep.subr.bf16.mxu0 0
  %3865 = vmatpush1.bf16.msra.mxu0 %v3845
  %3866 = vmatprep.subr.bf16.mxu0 0
  %3867 = vmatpush1.bf16.msra.mxu0 %v3846
  %3868 = vmatprep.subr.bf16.mxu0 0
  %3869 = vmatpush1.bf16.msra.mxu0 %v3847
  %3870 = vmatprep.subr.bf16.mxu0 0
  %3871 = vmatpush1.bf16.msra.mxu0 %v3848
  %3872 = vmatprep.subr.bf16.mxu0 0
  %3873 = vmatpush1.bf16.msra.mxu0 %v3849
  %3874 = vmatprep.subr.bf16.mxu0 0
  %3875 = vmatpush1.bf16.msra.mxu0 0
  %3876 = vmatprep.subr.bf16.mxu0 0
  %3877 = vmatpush1.bf16.msra.mxu0 0
  %3878 = vmatprep.subr.bf16.mxu0 0
  %3879 = vmatpush1.bf16.msra.mxu0 0
  %3880 = vmatprep.subr.bf16.mxu0 0
  %3881 = vmatpush1.bf16.msra.mxu0 0
  %3882 = vmatprep.subr.bf16.mxu0 0
  %3883 = vmatpush1.bf16.msra.mxu0 0
  %3884 = vmatprep.subr.bf16.mxu0 0
  %3885 = vmatpush1.bf16.msra.mxu0 0
  %3886 = vmatprep.subr.bf16.mxu0 0
  %3887 = vmatpush1.bf16.msra.mxu0 0
  %3888 = vmatprep.subr.bf16.mxu0 0
  %3889 = vmatpush1.bf16.msra.mxu0 0
  %3890 = vmatprep.mubr.bf16.mxu0 0
  %3891 = vmatmul.mubr.bf16.gmra.mrb[0].mxu0 %v3768
  %v3892 = vpop.f32.mrb[0].mxu0
  %v3893 = vadd.f32 0.0, %v3892
  %v3894 = vpop.f32.mrb[0].mxu0
  %v3895 = vpop.f32.mrb[0].mxu0
  %v3896 = vadd.f32 0.0, %v3895
  %v3897 = vpop.f32.mrb[0].mxu0
  %3898 = vdwg.mxu0
  %v3915 = vunpack.c.l.b16 %v3777
  %v3916 = vunpack.c.l.b16 %v3778
  %v3917 = vunpack.c.l.b16 %v3779
  %v3918 = vunpack.c.l.b16 %v3780
  %v3919 = vunpack.c.l.b16 %v3781
  %v3920 = vunpack.c.l.b16 %v3782
  %v3921 = vunpack.c.l.b16 %v3783
  %v3922 = vunpack.c.l.b16 %v3784
  %v3923 = vunpack.c.l.b16 %v3785
  %v3924 = vunpack.c.l.b16 %v3786
  %v3925 = vunpack.c.l.b16 %v3787
  %v3926 = vunpack.c.l.b16 %v3788
  %v3927 = vunpack.c.l.b16 %v3789
  %v3928 = vunpack.c.l.b16 %v3790
  %v3929 = vunpack.c.l.b16 %v3791
  %v3930 = vunpack.c.l.b16 %v3792
  %v3931 = vpack.c.b16 %v3916, %v3915
  %v3932 = vpack.c.b16 %v3918, %v3917
  %v3933 = vpack.c.b16 %v3920, %v3919
  %v3934 = vpack.c.b16 %v3922, %v3921
  %v3935 = vpack.c.b16 %v3924, %v3923
  %v3936 = vpack.c.b16 %v3926, %v3925
  %v3937 = vpack.c.b16 %v3928, %v3927
  %v3938 = vpack.c.b16 %v3930, %v3929
  %3947 = vmatprep.subr.bf16.mxu0 0
  %3948 = vmatpush1.bf16.msra.mxu0 %v3931
  %3949 = vmatprep.subr.bf16.mxu0 0
  %3950 = vmatpush1.bf16.msra.mxu0 %v3932
  %3951 = vmatprep.subr.bf16.mxu0 0
  %3952 = vmatpush1.bf16.msra.mxu0 %v3933
  %3953 = vmatprep.subr.bf16.mxu0 0
  %3954 = vmatpush1.bf16.msra.mxu0 %v3934
  %3955 = vmatprep.subr.bf16.mxu0 0
  %3956 = vmatpush1.bf16.msra.mxu0 %v3935
  %3957 = vmatprep.subr.bf16.mxu0 0
  %3958 = vmatpush1.bf16.msra.mxu0 %v3936
  %3959 = vmatprep.subr.bf16.mxu0 0
  %3960 = vmatpush1.bf16.msra.mxu0 %v3937
  %3961 = vmatprep.subr.bf16.mxu0 0
  %3962 = vmatpush1.bf16.msra.mxu0 %v3938
  %3963 = vmatprep.subr.bf16.mxu0 0
  %3964 = vmatpush1.bf16.msra.mxu0 0
  %3965 = vmatprep.subr.bf16.mxu0 0
  %3966 = vmatpush1.bf16.msra.mxu0 0
  %3967 = vmatprep.subr.bf16.mxu0 0
  %3968 = vmatpush1.bf16.msra.mxu0 0
  %3969 = vmatprep.subr.bf16.mxu0 0
  %3970 = vmatpush1.bf16.msra.mxu0 0
  %3971 = vmatprep.subr.bf16.mxu0 0
  %3972 = vmatpush1.bf16.msra.mxu0 0
  %3973 = vmatprep.subr.bf16.mxu0 0
  %3974 = vmatpush1.bf16.msra.mxu0 0
  %3975 = vmatprep.subr.bf16.mxu0 0
  %3976 = vmatpush1.bf16.msra.mxu0 0
  %3977 = vmatprep.subr.bf16.mxu0 0
  %3978 = vmatpush1.bf16.msra.mxu0 0
  %3979 = vmatprep.mubr.bf16.mxu0 0
  %3980 = vmatmul.mubr.bf16.gmra.mrb[0].mxu0 %v3767
  %v3981 = vpop.f32.mrb[0].mxu0
  %v3982 = vadd.f32 %v3893, %v3981
  %v3983 = vpop.f32.mrb[0].mxu0
  %v3984 = vpop.f32.mrb[0].mxu0
  %v3985 = vadd.f32 %v3896, %v3984
  %v3986 = vpop.f32.mrb[0].mxu0
  %3987 = vdwg.mxu0
  %s3988 = scalar_lea.vmem %s12, 704
  %v3989 = vld [vmem:[%s3988] sm:$0xf]
  %v3990 = vld [vmem:[%s3988 + $0x4] sm:$0xf]
  %v3991 = vld [vmem:[%s3988 + $0x8] sm:$0xf]
  %v3992 = vld [vmem:[%s3988 + $0xc] sm:$0xf]
  %v3993 = vld [vmem:[%s3988 + $0x10] sm:$0xf]
  %v3994 = vld [vmem:[%s3988 + $0x14] sm:$0xf]
  %v3995 = vld [vmem:[%s3988 + $0x18] sm:$0xf]
  %v3996 = vld [vmem:[%s3988 + $0x1c] sm:$0xf]
  %v3997 = vld [vmem:[%s3988 + $0x20] sm:$0xf]
  %v3998 = vld [vmem:[%s3988 + $0x24] sm:$0xf]
  %v3999 = vld [vmem:[%s3988 + $0x28] sm:$0xf]
  %v4000 = vld [vmem:[%s3988 + $0x2c] sm:$0xf]
  %v4001 = vld [vmem:[%s3988 + $0x30] sm:$0xf]
  %v4002 = vld [vmem:[%s3988 + $0x34] sm:$0xf]
  %v4003 = vld [vmem:[%s3988 + $0x38] sm:$0xf]
  %v4004 = vld [vmem:[%s3988 + $0x3c] sm:$0xf]
  %v4021 = vunpack.c.l.b16 %v3989
  %v4022 = vunpack.c.l.b16 %v3990
  %v4023 = vunpack.c.l.b16 %v3991
  %v4024 = vunpack.c.l.b16 %v3992
  %v4025 = vunpack.c.l.b16 %v3993
  %v4026 = vunpack.c.l.b16 %v3994
  %v4027 = vunpack.c.l.b16 %v3995
  %v4028 = vunpack.c.l.b16 %v3996
  %v4029 = vunpack.c.l.b16 %v3997
  %v4030 = vunpack.c.l.b16 %v3998
  %v4031 = vunpack.c.l.b16 %v3999
  %v4032 = vunpack.c.l.b16 %v4000
  %v4033 = vunpack.c.l.b16 %v4001
  %v4034 = vunpack.c.l.b16 %v4002
  %v4035 = vunpack.c.l.b16 %v4003
  %v4036 = vunpack.c.l.b16 %v4004
  %v4037 = vpack.c.b16 %v4022, %v4021
  %v4038 = vpack.c.b16 %v4024, %v4023
  %v4039 = vpack.c.b16 %v4026, %v4025
  %v4040 = vpack.c.b16 %v4028, %v4027
  %v4041 = vpack.c.b16 %v4030, %v4029
  %v4042 = vpack.c.b16 %v4032, %v4031
  %v4043 = vpack.c.b16 %v4034, %v4033
  %v4044 = vpack.c.b16 %v4036, %v4035
  %4053 = vmatprep.subr.bf16.mxu0 0
  %4054 = vmatpush1.bf16.msra.mxu0 %v4037
  %4055 = vmatprep.subr.bf16.mxu0 0
  %4056 = vmatpush1.bf16.msra.mxu0 %v4038
  %4057 = vmatprep.subr.bf16.mxu0 0
  %4058 = vmatpush1.bf16.msra.mxu0 %v4039
  %4059 = vmatprep.subr.bf16.mxu0 0
  %4060 = vmatpush1.bf16.msra.mxu0 %v4040
  %4061 = vmatprep.subr.bf16.mxu0 0
  %4062 = vmatpush1.bf16.msra.mxu0 %v4041
  %4063 = vmatprep.subr.bf16.mxu0 0
  %4064 = vmatpush1.bf16.msra.mxu0 %v4042
  %4065 = vmatprep.subr.bf16.mxu0 0
  %4066 = vmatpush1.bf16.msra.mxu0 %v4043
  %4067 = vmatprep.subr.bf16.mxu0 0
  %4068 = vmatpush1.bf16.msra.mxu0 %v4044
  %4069 = vmatprep.subr.bf16.mxu0 0
  %4070 = vmatpush1.bf16.msra.mxu0 0
  %4071 = vmatprep.subr.bf16.mxu0 0
  %4072 = vmatpush1.bf16.msra.mxu0 0
  %4073 = vmatprep.subr.bf16.mxu0 0
  %4074 = vmatpush1.bf16.msra.mxu0 0
  %4075 = vmatprep.subr.bf16.mxu0 0
  %4076 = vmatpush1.bf16.msra.mxu0 0
  %4077 = vmatprep.subr.bf16.mxu0 0
  %4078 = vmatpush1.bf16.msra.mxu0 0
  %4079 = vmatprep.subr.bf16.mxu0 0
  %4080 = vmatpush1.bf16.msra.mxu0 0
  %4081 = vmatprep.subr.bf16.mxu0 0
  %4082 = vmatpush1.bf16.msra.mxu0 0
  %4083 = vmatprep.subr.bf16.mxu0 0
  %4084 = vmatpush1.bf16.msra.mxu0 0
  %4085 = vmatprep.mubr.bf16.mxu0 0
  %4086 = vmatmul.mubr.bf16.gmra.mrb[0].mxu0 %v3769
  %v4087 = vpop.f32.mrb[0].mxu0
  %v4088 = vadd.f32 0.0, %v4087
  %v4089 = vpop.f32.mrb[0].mxu0
  %v4090 = vpop.f32.mrb[0].mxu0
  %v4091 = vadd.f32 0.0, %v4090
  %v4092 = vpop.f32.mrb[0].mxu0
  %4093 = vdwg.mxu0
  %v4094 = vadd.f32 %v3982, %v4088
  %v4095 = vadd.f32 %v3985, %v4091
  %s4096 = scalar_lea.vmem %s12, 768
  %v4097 = vld [vmem:[%s4096] sm:$0xf]
  %v4098 = vld [vmem:[%s4096 + $0x4] sm:$0xf]
  %v4099 = vld [vmem:[%s4096 + $0x8] sm:$0xf]
  %v4100 = vld [vmem:[%s4096 + $0xc] sm:$0xf]
  %v4101 = vld [vmem:[%s4096 + $0x10] sm:$0xf]
  %v4102 = vld [vmem:[%s4096 + $0x14] sm:$0xf]
  %v4103 = vld [vmem:[%s4096 + $0x18] sm:$0xf]
  %v4104 = vld [vmem:[%s4096 + $0x1c] sm:$0xf]
  %v4105 = vld [vmem:[%s4096 + $0x20] sm:$0xf]
  %v4106 = vld [vmem:[%s4096 + $0x24] sm:$0xf]
  %v4107 = vld [vmem:[%s4096 + $0x28] sm:$0xf]
  %v4108 = vld [vmem:[%s4096 + $0x2c] sm:$0xf]
  %v4109 = vld [vmem:[%s4096 + $0x30] sm:$0xf]
  %v4110 = vld [vmem:[%s4096 + $0x34] sm:$0xf]
  %v4111 = vld [vmem:[%s4096 + $0x38] sm:$0xf]
  %v4112 = vld [vmem:[%s4096 + $0x3c] sm:$0xf]
  %v4129 = vunpack.c.l.b16 %v4097
  %v4130 = vunpack.c.l.b16 %v4098
  %v4131 = vunpack.c.l.b16 %v4099
  %v4132 = vunpack.c.l.b16 %v4100
  %v4133 = vunpack.c.l.b16 %v4101
  %v4134 = vunpack.c.l.b16 %v4102
  %v4135 = vunpack.c.l.b16 %v4103
  %v4136 = vunpack.c.l.b16 %v4104
  %v4137 = vunpack.c.l.b16 %v4105
  %v4138 = vunpack.c.l.b16 %v4106
  %v4139 = vunpack.c.l.b16 %v4107
  %v4140 = vunpack.c.l.b16 %v4108
  %v4141 = vunpack.c.l.b16 %v4109
  %v4142 = vunpack.c.l.b16 %v4110
  %v4143 = vunpack.c.l.b16 %v4111
  %v4144 = vunpack.c.l.b16 %v4112
  %v4145 = vpack.c.b16 %v4130, %v4129
  %v4146 = vpack.c.b16 %v4132, %v4131
  %v4147 = vpack.c.b16 %v4134, %v4133
  %v4148 = vpack.c.b16 %v4136, %v4135
  %v4149 = vpack.c.b16 %v4138, %v4137
  %v4150 = vpack.c.b16 %v4140, %v4139
  %v4151 = vpack.c.b16 %v4142, %v4141
  %v4152 = vpack.c.b16 %v4144, %v4143
  %4161 = vmatprep.subr.bf16.mxu0 0
  %4162 = vmatpush1.bf16.msra.mxu0 %v4145
  %4163 = vmatprep.subr.bf16.mxu0 0
  %4164 = vmatpush1.bf16.msra.mxu0 %v4146
  %4165 = vmatprep.subr.bf16.mxu0 0
  %4166 = vmatpush1.bf16.msra.mxu0 %v4147
  %4167 = vmatprep.subr.bf16.mxu0 0
  %4168 = vmatpush1.bf16.msra.mxu0 %v4148
  %4169 = vmatprep.subr.bf16.mxu0 0
  %4170 = vmatpush1.bf16.msra.mxu0 %v4149
  %4171 = vmatprep.subr.bf16.mxu0 0
  %4172 = vmatpush1.bf16.msra.mxu0 %v4150
  %4173 = vmatprep.subr.bf16.mxu0 0
  %4174 = vmatpush1.bf16.msra.mxu0 %v4151
  %4175 = vmatprep.subr.bf16.mxu0 0
  %4176 = vmatpush1.bf16.msra.mxu0 %v4152
  %4177 = vmatprep.subr.bf16.mxu0 0
  %4178 = vmatpush1.bf16.msra.mxu0 0
  %4179 = vmatprep.subr.bf16.mxu0 0
  %4180 = vmatpush1.bf16.msra.mxu0 0
  %4181 = vmatprep.subr.bf16.mxu0 0
  %4182 = vmatpush1.bf16.msra.mxu0 0
  %4183 = vmatprep.subr.bf16.mxu0 0
  %4184 = vmatpush1.bf16.msra.mxu0 0
  %4185 = vmatprep.subr.bf16.mxu0 0
  %4186 = vmatpush1.bf16.msra.mxu0 0
  %4187 = vmatprep.subr.bf16.mxu0 0
  %4188 = vmatpush1.bf16.msra.mxu0 0
  %4189 = vmatprep.subr.bf16.mxu0 0
  %4190 = vmatpush1.bf16.msra.mxu0 0
  %4191 = vmatprep.subr.bf16.mxu0 0
  %4192 = vmatpush1.bf16.msra.mxu0 0
  %4193 = vmatprep.mubr.bf16.mxu0 0
  %4194 = vmatmul.mubr.bf16.gmra.mrb[0].mxu0 %v3770
  %v4195 = vpop.f32.mrb[0].mxu0
  %v4196 = vadd.f32 0.0, %v4195
  %v4197 = vpop.f32.mrb[0].mxu0
  %v4198 = vpop.f32.mrb[0].mxu0
  %v4199 = vadd.f32 0.0, %v4198
  %v4200 = vpop.f32.mrb[0].mxu0
  %4201 = vdwg.mxu0
  %v4202 = vadd.f32 %v4094, %v4196
  %v4203 = vadd.f32 %v4095, %v4199
  %s4204 = scalar_lea.vmem %s12, 832
  %v4205 = vld [vmem:[%s4204] sm:$0xf]
  %v4206 = vld [vmem:[%s4204 + $0x4] sm:$0xf]
  %v4207 = vld [vmem:[%s4204 + $0x8] sm:$0xf]
  %v4208 = vld [vmem:[%s4204 + $0xc] sm:$0xf]
  %v4209 = vld [vmem:[%s4204 + $0x10] sm:$0xf]
  %v4210 = vld [vmem:[%s4204 + $0x14] sm:$0xf]
  %v4211 = vld [vmem:[%s4204 + $0x18] sm:$0xf]
  %v4212 = vld [vmem:[%s4204 + $0x1c] sm:$0xf]
  %v4213 = vld [vmem:[%s4204 + $0x20] sm:$0xf]
  %v4214 = vld [vmem:[%s4204 + $0x24] sm:$0xf]
  %v4215 = vld [vmem:[%s4204 + $0x28] sm:$0xf]
  %v4216 = vld [vmem:[%s4204 + $0x2c] sm:$0xf]
  %v4217 = vld [vmem:[%s4204 + $0x30] sm:$0xf]
  %v4218 = vld [vmem:[%s4204 + $0x34] sm:$0xf]
  %v4219 = vld [vmem:[%s4204 + $0x38] sm:$0xf]
  %v4220 = vld [vmem:[%s4204 + $0x3c] sm:$0xf]
  %v4237 = vunpack.c.l.b16 %v4205
  %v4238 = vunpack.c.l.b16 %v4206
  %v4239 = vunpack.c.l.b16 %v4207
  %v4240 = vunpack.c.l.b16 %v4208
  %v4241 = vunpack.c.l.b16 %v4209
  %v4242 = vunpack.c.l.b16 %v4210
  %v4243 = vunpack.c.l.b16 %v4211
  %v4244 = vunpack.c.l.b16 %v4212
  %v4245 = vunpack.c.l.b16 %v4213
  %v4246 = vunpack.c.l.b16 %v4214
  %v4247 = vunpack.c.l.b16 %v4215
  %v4248 = vunpack.c.l.b16 %v4216
  %v4249 = vunpack.c.l.b16 %v4217
  %v4250 = vunpack.c.l.b16 %v4218
  %v4251 = vunpack.c.l.b16 %v4219
  %v4252 = vunpack.c.l.b16 %v4220
  %v4253 = vpack.c.b16 %v4238, %v4237
  %v4254 = vpack.c.b16 %v4240, %v4239
  %v4255 = vpack.c.b16 %v4242, %v4241
  %v4256 = vpack.c.b16 %v4244, %v4243
  %v4257 = vpack.c.b16 %v4246, %v4245
  %v4258 = vpack.c.b16 %v4248, %v4247
  %v4259 = vpack.c.b16 %v4250, %v4249
  %v4260 = vpack.c.b16 %v4252, %v4251
  %4269 = vmatprep.subr.bf16.mxu0 0
  %4270 = vmatpush1.bf16.msra.mxu0 %v4253
  %4271 = vmatprep.subr.bf16.mxu0 0
  %4272 = vmatpush1.bf16.msra.mxu0 %v4254
  %4273 = vmatprep.subr.bf16.mxu0 0
  %4274 = vmatpush1.bf16.msra.mxu0 %v4255
  %4275 = vmatprep.subr.bf16.mxu0 0
  %4276 = vmatpush1.bf16.msra.mxu0 %v4256
  %4277 = vmatprep.subr.bf16.mxu0 0
  %4278 = vmatpush1.bf16.msra.mxu0 %v4257
  %4279 = vmatprep.subr.bf16.mxu0 0
  %4280 = vmatpush1.bf16.msra.mxu0 %v4258
  %4281 = vmatprep.subr.bf16.mxu0 0
  %4282 = vmatpush1.bf16.msra.mxu0 %v4259
  %4283 = vmatprep.subr.bf16.mxu0 0
  %4284 = vmatpush1.bf16.msra.mxu0 %v4260
  %4285 = vmatprep.subr.bf16.mxu0 0
  %4286 = vmatpush1.bf16.msra.mxu0 0
  %4287 = vmatprep.subr.bf16.mxu0 0
  %4288 = vmatpush1.bf16.msra.mxu0 0
  %4289 = vmatprep.subr.bf16.mxu0 0
  %4290 = vmatpush1.bf16.msra.mxu0 0
  %4291 = vmatprep.subr.bf16.mxu0 0
  %4292 = vmatpush1.bf16.msra.mxu0 0
  %4293 = vmatprep.subr.bf16.mxu0 0
  %4294 = vmatpush1.bf16.msra.mxu0 0
  %4295 = vmatprep.subr.bf16.mxu0 0
  %4296 = vmatpush1.bf16.msra.mxu0 0
  %4297 = vmatprep.subr.bf16.mxu0 0
  %4298 = vmatpush1.bf16.msra.mxu0 0
  %4299 = vmatprep.subr.bf16.mxu0 0
  %4300 = vmatpush1.bf16.msra.mxu0 0
  %4301 = vmatprep.mubr.bf16.mxu0 0
  %4302 = vmatmul.mubr.bf16.gmra.mrb[0].mxu0 %v3771
  %v4303 = vpop.f32.mrb[0].mxu0
  %v4304 = vadd.f32 0.0, %v4303
  %v4305 = vpop.f32.mrb[0].mxu0
  %v4306 = vpop.f32.mrb[0].mxu0
  %v4307 = vadd.f32 0.0, %v4306
  %v4308 = vpop.f32.mrb[0].mxu0
  %4309 = vdwg.mxu0
  %v4310 = vadd.f32 %v4202, %v4304
  %v4311 = vadd.f32 %v4203, %v4307
  %s4312 = scalar_lea.vmem %s12, 896
  %v4313 = vld [vmem:[%s4312] sm:$0xf]
  %v4314 = vld [vmem:[%s4312 + $0x4] sm:$0xf]
  %v4315 = vld [vmem:[%s4312 + $0x8] sm:$0xf]
  %v4316 = vld [vmem:[%s4312 + $0xc] sm:$0xf]
  %v4317 = vld [vmem:[%s4312 + $0x10] sm:$0xf]
  %v4318 = vld [vmem:[%s4312 + $0x14] sm:$0xf]
  %v4319 = vld [vmem:[%s4312 + $0x18] sm:$0xf]
  %v4320 = vld [vmem:[%s4312 + $0x1c] sm:$0xf]
  %v4321 = vld [vmem:[%s4312 + $0x20] sm:$0xf]
  %v4322 = vld [vmem:[%s4312 + $0x24] sm:$0xf]
  %v4323 = vld [vmem:[%s4312 + $0x28] sm:$0xf]
  %v4324 = vld [vmem:[%s4312 + $0x2c] sm:$0xf]
  %v4325 = vld [vmem:[%s4312 + $0x30] sm:$0xf]
  %v4326 = vld [vmem:[%s4312 + $0x34] sm:$0xf]
  %v4327 = vld [vmem:[%s4312 + $0x38] sm:$0xf]
  %v4328 = vld [vmem:[%s4312 + $0x3c] sm:$0xf]
  %v4345 = vunpack.c.l.b16 %v4313
  %v4346 = vunpack.c.l.b16 %v4314
  %v4347 = vunpack.c.l.b16 %v4315
  %v4348 = vunpack.c.l.b16 %v4316
  %v4349 = vunpack.c.l.b16 %v4317
  %v4350 = vunpack.c.l.b16 %v4318
  %v4351 = vunpack.c.l.b16 %v4319
  %v4352 = vunpack.c.l.b16 %v4320
  %v4353 = vunpack.c.l.b16 %v4321
  %v4354 = vunpack.c.l.b16 %v4322
  %v4355 = vunpack.c.l.b16 %v4323
  %v4356 = vunpack.c.l.b16 %v4324
  %v4357 = vunpack.c.l.b16 %v4325
  %v4358 = vunpack.c.l.b16 %v4326
  %v4359 = vunpack.c.l.b16 %v4327
  %v4360 = vunpack.c.l.b16 %v4328
  %v4361 = vpack.c.b16 %v4346, %v4345
  %v4362 = vpack.c.b16 %v4348, %v4347
  %v4363 = vpack.c.b16 %v4350, %v4349
  %v4364 = vpack.c.b16 %v4352, %v4351
  %v4365 = vpack.c.b16 %v4354, %v4353
  %v4366 = vpack.c.b16 %v4356, %v4355
  %v4367 = vpack.c.b16 %v4358, %v4357
  %v4368 = vpack.c.b16 %v4360, %v4359
  %4377 = vmatprep.subr.bf16.mxu0 0
  %4378 = vmatpush1.bf16.msra.mxu0 %v4361
  %4379 = vmatprep.subr.bf16.mxu0 0
  %4380 = vmatpush1.bf16.msra.mxu0 %v4362
  %4381 = vmatprep.subr.bf16.mxu0 0
  %4382 = vmatpush1.bf16.msra.mxu0 %v4363
  %4383 = vmatprep.subr.bf16.mxu0 0
  %4384 = vmatpush1.bf16.msra.mxu0 %v4364
  %4385 = vmatprep.subr.bf16.mxu0 0
  %4386 = vmatpush1.bf16.msra.mxu0 %v4365
  %4387 = vmatprep.subr.bf16.mxu0 0
  %4388 = vmatpush1.bf16.msra.mxu0 %v4366
  %4389 = vmatprep.subr.bf16.mxu0 0
  %4390 = vmatpush1.bf16.msra.mxu0 %v4367
  %4391 = vmatprep.subr.bf16.mxu0 0
  %4392 = vmatpush1.bf16.msra.mxu0 %v4368
  %4393 = vmatprep.subr.bf16.mxu0 0
  %4394 = vmatpush1.bf16.msra.mxu0 0
  %4395 = vmatprep.subr.bf16.mxu0 0
  %4396 = vmatpush1.bf16.msra.mxu0 0
  %4397 = vmatprep.subr.bf16.mxu0 0
  %4398 = vmatpush1.bf16.msra.mxu0 0
  %4399 = vmatprep.subr.bf16.mxu0 0
  %4400 = vmatpush1.bf16.msra.mxu0 0
  %4401 = vmatprep.subr.bf16.mxu0 0
  %4402 = vmatpush1.bf16.msra.mxu0 0
  %4403 = vmatprep.subr.bf16.mxu0 0
  %4404 = vmatpush1.bf16.msra.mxu0 0
  %4405 = vmatprep.subr.bf16.mxu0 0
  %4406 = vmatpush1.bf16.msra.mxu0 0
  %4407 = vmatprep.subr.bf16.mxu0 0
  %4408 = vmatpush1.bf16.msra.mxu0 0
  %4409 = vmatprep.mubr.bf16.mxu0 0
  %4410 = vmatmul.mubr.bf16.gmra.mrb[0].mxu0 %v3772
  %v4411 = vpop.f32.mrb[0].mxu0
  %v4412 = vadd.f32 0.0, %v4411
  %v4413 = vpop.f32.mrb[0].mxu0
  %v4414 = vpop.f32.mrb[0].mxu0
  %v4415 = vadd.f32 0.0, %v4414
  %v4416 = vpop.f32.mrb[0].mxu0
  %4417 = vdwg.mxu0
  %v4418 = vadd.f32 %v4310, %v4412
  %v4419 = vadd.f32 %v4311, %v4415
  %s4420 = scalar_lea.vmem %s12, 960
  %v4421 = vld [vmem:[%s4420] sm:$0xf]
  %v4422 = vld [vmem:[%s4420 + $0x4] sm:$0xf]
  %v4423 = vld [vmem:[%s4420 + $0x8] sm:$0xf]
  %v4424 = vld [vmem:[%s4420 + $0xc] sm:$0xf]
  %v4425 = vld [vmem:[%s4420 + $0x10] sm:$0xf]
  %v4426 = vld [vmem:[%s4420 + $0x14] sm:$0xf]
  %v4427 = vld [vmem:[%s4420 + $0x18] sm:$0xf]
  %v4428 = vld [vmem:[%s4420 + $0x1c] sm:$0xf]
  %v4429 = vld [vmem:[%s4420 + $0x20] sm:$0xf]
  %v4430 = vld [vmem:[%s4420 + $0x24] sm:$0xf]
  %v4431 = vld [vmem:[%s4420 + $0x28] sm:$0xf]
  %v4432 = vld [vmem:[%s4420 + $0x2c] sm:$0xf]
  %v4433 = vld [vmem:[%s4420 + $0x30] sm:$0xf]
  %v4434 = vld [vmem:[%s4420 + $0x34] sm:$0xf]
  %v4435 = vld [vmem:[%s4420 + $0x38] sm:$0xf]
  %v4436 = vld [vmem:[%s4420 + $0x3c] sm:$0xf]
  %v4453 = vunpack.c.l.b16 %v4421
  %v4454 = vunpack.c.l.b16 %v4422
  %v4455 = vunpack.c.l.b16 %v4423
  %v4456 = vunpack.c.l.b16 %v4424
  %v4457 = vunpack.c.l.b16 %v4425
  %v4458 = vunpack.c.l.b16 %v4426
  %v4459 = vunpack.c.l.b16 %v4427
  %v4460 = vunpack.c.l.b16 %v4428
  %v4461 = vunpack.c.l.b16 %v4429
  %v4462 = vunpack.c.l.b16 %v4430
  %v4463 = vunpack.c.l.b16 %v4431
  %v4464 = vunpack.c.l.b16 %v4432
  %v4465 = vunpack.c.l.b16 %v4433
  %v4466 = vunpack.c.l.b16 %v4434
  %v4467 = vunpack.c.l.b16 %v4435
  %v4468 = vunpack.c.l.b16 %v4436
  %v4469 = vpack.c.b16 %v4454, %v4453
  %v4470 = vpack.c.b16 %v4456, %v4455
  %v4471 = vpack.c.b16 %v4458, %v4457
  %v4472 = vpack.c.b16 %v4460, %v4459
  %v4473 = vpack.c.b16 %v4462, %v4461
  %v4474 = vpack.c.b16 %v4464, %v4463
  %v4475 = vpack.c.b16 %v4466, %v4465
  %v4476 = vpack.c.b16 %v4468, %v4467
  %4485 = vmatprep.subr.bf16.mxu0 0
  %4486 = vmatpush1.bf16.msra.mxu0 %v4469
  %4487 = vmatprep.subr.bf16.mxu0 0
  %4488 = vmatpush1.bf16.msra.mxu0 %v4470
  %4489 = vmatprep.subr.bf16.mxu0 0
  %4490 = vmatpush1.bf16.msra.mxu0 %v4471
  %4491 = vmatprep.subr.bf16.mxu0 0
  %4492 = vmatpush1.bf16.msra.mxu0 %v4472
  %4493 = vmatprep.subr.bf16.mxu0 0
  %4494 = vmatpush1.bf16.msra.mxu0 %v4473
  %4495 = vmatprep.subr.bf16.mxu0 0
  %4496 = vmatpush1.bf16.msra.mxu0 %v4474
  %4497 = vmatprep.subr.bf16.mxu0 0
  %4498 = vmatpush1.bf16.msra.mxu0 %v4475
  %4499 = vmatprep.subr.bf16.mxu0 0
  %4500 = vmatpush1.bf16.msra.mxu0 %v4476
  %4501 = vmatprep.subr.bf16.mxu0 0
  %4502 = vmatpush1.bf16.msra.mxu0 0
  %4503 = vmatprep.subr.bf16.mxu0 0
  %4504 = vmatpush1.bf16.msra.mxu0 0
  %4505 = vmatprep.subr.bf16.mxu0 0
  %4506 = vmatpush1.bf16.msra.mxu0 0
  %4507 = vmatprep.subr.bf16.mxu0 0
  %4508 = vmatpush1.bf16.msra.mxu0 0
  %4509 = vmatprep.subr.bf16.mxu0 0
  %4510 = vmatpush1.bf16.msra.mxu0 0
  %4511 = vmatprep.subr.bf16.mxu0 0
  %4512 = vmatpush1.bf16.msra.mxu0 0
  %4513 = vmatprep.subr.bf16.mxu0 0
  %4514 = vmatpush1.bf16.msra.mxu0 0
  %4515 = vmatprep.subr.bf16.mxu0 0
  %4516 = vmatpush1.bf16.msra.mxu0 0
  %4517 = vmatprep.mubr.bf16.mxu0 0
  %4518 = vmatmul.mubr.bf16.gmra.mrb[0].mxu0 %v3773
  %v4519 = vpop.f32.mrb[0].mxu0
  %v4520 = vadd.f32 0.0, %v4519
  %v4521 = vpop.f32.mrb[0].mxu0
  %v4522 = vpop.f32.mrb[0].mxu0
  %v4523 = vadd.f32 0.0, %v4522
  %v4524 = vpop.f32.mrb[0].mxu0
  %4525 = vdwg.mxu0
  %v4526 = vadd.f32 %v4418, %v4520
  %v4527 = vadd.f32 %v4419, %v4523
  %s4528 = scalar_lea.vmem %s12, 1024
  %v4529 = vld [vmem:[%s4528] sm:$0xf]
  %v4530 = vld [vmem:[%s4528 + $0x4] sm:$0xf]
  %v4531 = vld [vmem:[%s4528 + $0x8] sm:$0xf]
  %v4532 = vld [vmem:[%s4528 + $0xc] sm:$0xf]
  %v4533 = vld [vmem:[%s4528 + $0x10] sm:$0xf]
  %v4534 = vld [vmem:[%s4528 + $0x14] sm:$0xf]
  %v4535 = vld [vmem:[%s4528 + $0x18] sm:$0xf]
  %v4536 = vld [vmem:[%s4528 + $0x1c] sm:$0xf]
  %v4537 = vld [vmem:[%s4528 + $0x20] sm:$0xf]
  %v4538 = vld [vmem:[%s4528 + $0x24] sm:$0xf]
  %v4539 = vld [vmem:[%s4528 + $0x28] sm:$0xf]
  %v4540 = vld [vmem:[%s4528 + $0x2c] sm:$0xf]
  %v4541 = vld [vmem:[%s4528 + $0x30] sm:$0xf]
  %v4542 = vld [vmem:[%s4528 + $0x34] sm:$0xf]
  %v4543 = vld [vmem:[%s4528 + $0x38] sm:$0xf]
  %v4544 = vld [vmem:[%s4528 + $0x3c] sm:$0xf]
  %v4561 = vunpack.c.l.b16 %v4529
  %v4562 = vunpack.c.l.b16 %v4530
  %v4563 = vunpack.c.l.b16 %v4531
  %v4564 = vunpack.c.l.b16 %v4532
  %v4565 = vunpack.c.l.b16 %v4533
  %v4566 = vunpack.c.l.b16 %v4534
  %v4567 = vunpack.c.l.b16 %v4535
  %v4568 = vunpack.c.l.b16 %v4536
  %v4569 = vunpack.c.l.b16 %v4537
  %v4570 = vunpack.c.l.b16 %v4538
  %v4571 = vunpack.c.l.b16 %v4539
  %v4572 = vunpack.c.l.b16 %v4540
  %v4573 = vunpack.c.l.b16 %v4541
  %v4574 = vunpack.c.l.b16 %v4542
  %v4575 = vunpack.c.l.b16 %v4543
  %v4576 = vunpack.c.l.b16 %v4544
  %v4577 = vpack.c.b16 %v4562, %v4561
  %v4578 = vpack.c.b16 %v4564, %v4563
  %v4579 = vpack.c.b16 %v4566, %v4565
  %v4580 = vpack.c.b16 %v4568, %v4567
  %v4581 = vpack.c.b16 %v4570, %v4569
  %v4582 = vpack.c.b16 %v4572, %v4571
  %v4583 = vpack.c.b16 %v4574, %v4573
  %v4584 = vpack.c.b16 %v4576, %v4575
  %4593 = vmatprep.subr.bf16.mxu0 0
  %4594 = vmatpush1.bf16.msra.mxu0 %v4577
  %4595 = vmatprep.subr.bf16.mxu0 0
  %4596 = vmatpush1.bf16.msra.mxu0 %v4578
  %4597 = vmatprep.subr.bf16.mxu0 0
  %4598 = vmatpush1.bf16.msra.mxu0 %v4579
  %4599 = vmatprep.subr.bf16.mxu0 0
  %4600 = vmatpush1.bf16.msra.mxu0 %v4580
  %4601 = vmatprep.subr.bf16.mxu0 0
  %4602 = vmatpush1.bf16.msra.mxu0 %v4581
  %4603 = vmatprep.subr.bf16.mxu0 0
  %4604 = vmatpush1.bf16.msra.mxu0 %v4582
  %4605 = vmatprep.subr.bf16.mxu0 0
  %4606 = vmatpush1.bf16.msra.mxu0 %v4583
  %4607 = vmatprep.subr.bf16.mxu0 0
  %4608 = vmatpush1.bf16.msra.mxu0 %v4584
  %4609 = vmatprep.subr.bf16.mxu0 0
  %4610 = vmatpush1.bf16.msra.mxu0 0
  %4611 = vmatprep.subr.bf16.mxu0 0
  %4612 = vmatpush1.bf16.msra.mxu0 0
  %4613 = vmatprep.subr.bf16.mxu0 0
  %4614 = vmatpush1.bf16.msra.mxu0 0
  %4615 = vmatprep.subr.bf16.mxu0 0
  %4616 = vmatpush1.bf16.msra.mxu0 0
  %4617 = vmatprep.subr.bf16.mxu0 0
  %4618 = vmatpush1.bf16.msra.mxu0 0
  %4619 = vmatprep.subr.bf16.mxu0 0
  %4620 = vmatpush1.bf16.msra.mxu0 0
  %4621 = vmatprep.subr.bf16.mxu0 0
  %4622 = vmatpush1.bf16.msra.mxu0 0
  %4623 = vmatprep.subr.bf16.mxu0 0
  %4624 = vmatpush1.bf16.msra.mxu0 0
  %4625 = vmatprep.mubr.bf16.mxu0 0
  %4626 = vmatmul.mubr.bf16.gmra.mrb[0].mxu0 %v3774
  %v4627 = vpop.f32.mrb[0].mxu0
  %v4628 = vadd.f32 0.0, %v4627
  %v4629 = vpop.f32.mrb[0].mxu0
  %v4630 = vpop.f32.mrb[0].mxu0
  %v4631 = vadd.f32 0.0, %v4630
  %v4632 = vpop.f32.mrb[0].mxu0
  %4633 = vdwg.mxu0
  %v4634 = vadd.f32 %v4526, %v4628
  %v4635 = vadd.f32 %v4527, %v4631
  %s4636 = scalar_lea.vmem %s12, 1088
  %v4637 = vld [vmem:[%s4636] sm:$0xf]
  %v4638 = vld [vmem:[%s4636 + $0x4] sm:$0xf]
  %v4639 = vld [vmem:[%s4636 + $0x8] sm:$0xf]
  %v4640 = vld [vmem:[%s4636 + $0xc] sm:$0xf]
  %v4641 = vld [vmem:[%s4636 + $0x10] sm:$0xf]
  %v4642 = vld [vmem:[%s4636 + $0x14] sm:$0xf]
  %v4643 = vld [vmem:[%s4636 + $0x18] sm:$0xf]
  %v4644 = vld [vmem:[%s4636 + $0x1c] sm:$0xf]
  %v4645 = vld [vmem:[%s4636 + $0x20] sm:$0xf]
  %v4646 = vld [vmem:[%s4636 + $0x24] sm:$0xf]
  %v4647 = vld [vmem:[%s4636 + $0x28] sm:$0xf]
  %v4648 = vld [vmem:[%s4636 + $0x2c] sm:$0xf]
  %v4649 = vld [vmem:[%s4636 + $0x30] sm:$0xf]
  %v4650 = vld [vmem:[%s4636 + $0x34] sm:$0xf]
  %v4651 = vld [vmem:[%s4636 + $0x38] sm:$0xf]
  %v4652 = vld [vmem:[%s4636 + $0x3c] sm:$0xf]
  %v4669 = vunpack.c.l.b16 %v4637
  %v4670 = vunpack.c.l.b16 %v4638
  %v4671 = vunpack.c.l.b16 %v4639
  %v4672 = vunpack.c.l.b16 %v4640
  %v4673 = vunpack.c.l.b16 %v4641
  %v4674 = vunpack.c.l.b16 %v4642
  %v4675 = vunpack.c.l.b16 %v4643
  %v4676 = vunpack.c.l.b16 %v4644
  %v4677 = vunpack.c.l.b16 %v4645
  %v4678 = vunpack.c.l.b16 %v4646
  %v4679 = vunpack.c.l.b16 %v4647
  %v4680 = vunpack.c.l.b16 %v4648
  %v4681 = vunpack.c.l.b16 %v4649
  %v4682 = vunpack.c.l.b16 %v4650
  %v4683 = vunpack.c.l.b16 %v4651
  %v4684 = vunpack.c.l.b16 %v4652
  %v4685 = vpack.c.b16 %v4670, %v4669
  %v4686 = vpack.c.b16 %v4672, %v4671
  %v4687 = vpack.c.b16 %v4674, %v4673
  %v4688 = vpack.c.b16 %v4676, %v4675
  %v4689 = vpack.c.b16 %v4678, %v4677
  %v4690 = vpack.c.b16 %v4680, %v4679
  %v4691 = vpack.c.b16 %v4682, %v4681
  %v4692 = vpack.c.b16 %v4684, %v4683
  %4701 = vmatprep.subr.bf16.mxu0 0
  %4702 = vmatpush1.bf16.msra.mxu0 %v4685
  %4703 = vmatprep.subr.bf16.mxu0 0
  %4704 = vmatpush1.bf16.msra.mxu0 %v4686
  %4705 = vmatprep.subr.bf16.mxu0 0
  %4706 = vmatpush1.bf16.msra.mxu0 %v4687
  %4707 = vmatprep.subr.bf16.mxu0 0
  %4708 = vmatpush1.bf16.msra.mxu0 %v4688
  %4709 = vmatprep.subr.bf16.mxu0 0
  %4710 = vmatpush1.bf16.msra.mxu0 %v4689
  %4711 = vmatprep.subr.bf16.mxu0 0
  %4712 = vmatpush1.bf16.msra.mxu0 %v4690
  %4713 = vmatprep.subr.bf16.mxu0 0
  %4714 = vmatpush1.bf16.msra.mxu0 %v4691
  %4715 = vmatprep.subr.bf16.mxu0 0
  %4716 = vmatpush1.bf16.msra.mxu0 %v4692
  %4717 = vmatprep.subr.bf16.mxu0 0
  %4718 = vmatpush1.bf16.msra.mxu0 0
  %4719 = vmatprep.subr.bf16.mxu0 0
  %4720 = vmatpush1.bf16.msra.mxu0 0
  %4721 = vmatprep.subr.bf16.mxu0 0
  %4722 = vmatpush1.bf16.msra.mxu0 0
  %4723 = vmatprep.subr.bf16.mxu0 0
  %4724 = vmatpush1.bf16.msra.mxu0 0
  %4725 = vmatprep.subr.bf16.mxu0 0
  %4726 = vmatpush1.bf16.msra.mxu0 0
  %4727 = vmatprep.subr.bf16.mxu0 0
  %4728 = vmatpush1.bf16.msra.mxu0 0
  %4729 = vmatprep.subr.bf16.mxu0 0
  %4730 = vmatpush1.bf16.msra.mxu0 0
  %4731 = vmatprep.subr.bf16.mxu0 0
  %4732 = vmatpush1.bf16.msra.mxu0 0
  %4733 = vmatprep.mubr.bf16.mxu0 0
  %4734 = vmatmul.mubr.bf16.gmra.mrb[0].mxu0 %v3775
  %v4735 = vpop.f32.mrb[0].mxu0
  %v4736 = vadd.f32 0.0, %v4735
  %v4737 = vpop.f32.mrb[0].mxu0
  %v4738 = vpop.f32.mrb[0].mxu0
  %v4739 = vadd.f32 0.0, %v4738
  %v4740 = vpop.f32.mrb[0].mxu0
  %4741 = vdwg.mxu0
  %v4742 = vadd.f32 %v4634, %v4736
  %v4743 = vadd.f32 %v4635, %v4739
  %v4744 = vld [vmem:[%s5 + $0x11] ss:$0 sm:$0xff]
  %v4745 = vadd.f32 %v4742, %v4744
  %v4746 = vadd.f32 %v4743, %v4744
  %v4747 = vmax.f32 %v4745, 0.0
  %v4748 = vmax.f32 %v4746, 0.0
  %v4749 = vpack.c.bf16 %v4748, %v4747
  %4750 = vmatprep.subr.bf16.mxu0 0
  %4751 = vmatpush1.bf16.msra.mxu0 %v4749
  %4752 = vmatprep.subr.bf16.mxu0 0
  %4753 = vmatpush1.bf16.msra.mxu0 0
  %4754 = vmatprep.subr.bf16.mxu0 0
  %4755 = vmatpush1.bf16.msra.mxu0 0
  %4756 = vmatprep.subr.bf16.mxu0 0
  %4757 = vmatpush1.bf16.msra.mxu0 0
  %4758 = vmatprep.subr.bf16.mxu0 0
  %4759 = vmatpush1.bf16.msra.mxu0 0
  %4760 = vmatprep.subr.bf16.mxu0 0
  %4761 = vmatpush1.bf16.msra.mxu0 0
  %4762 = vmatprep.subr.bf16.mxu0 0
  %4763 = vmatpush1.bf16.msra.mxu0 0
  %4764 = vmatprep.subr.bf16.mxu0 0
  %4765 = vmatpush1.bf16.msra.mxu0 0
  %4766 = vmatprep.subr.bf16.mxu0 0
  %4767 = vmatpush1.bf16.msra.mxu0 0
  %4768 = vmatprep.subr.bf16.mxu0 0
  %4769 = vmatpush1.bf16.msra.mxu0 0
  %4770 = vmatprep.subr.bf16.mxu0 0
  %4771 = vmatpush1.bf16.msra.mxu0 0
  %4772 = vmatprep.subr.bf16.mxu0 0
  %4773 = vmatpush1.bf16.msra.mxu0 0
  %4774 = vmatprep.subr.bf16.mxu0 0
  %4775 = vmatpush1.bf16.msra.mxu0 0
  %4776 = vmatprep.subr.bf16.mxu0 0
  %4777 = vmatpush1.bf16.msra.mxu0 0
  %4778 = vmatprep.subr.bf16.mxu0 0
  %4779 = vmatpush1.bf16.msra.mxu0 0
  %4780 = vmatprep.subr.bf16.mxu0 0
  %4781 = vmatpush1.bf16.msra.mxu0 0
  %4782 = vmatprep.mubr.bf16.mxu0 0
  %4783 = vmatmul.mubr.bf16.gmra.mrb[0].mxu0 %v2549
  %v4784 = vpop.f32.mrb[0].mxu0
  %v4785 = vadd.f32 0.0, %v4784
  %v4786 = vpop.f32.mrb[0].mxu0
  %v4787 = vpop.f32.mrb[0].mxu0
  %v4788 = vadd.f32 0.0, %v4787
  %v4789 = vpop.f32.mrb[0].mxu0
  %4790 = vmatprep.mubr.bf16.mxu0 0
  %4791 = vmatmul.mubr.bf16.gmra.mrb[0].mxu0 %v2552
  %v4792 = vpop.f32.mrb[0].mxu0
  %v4793 = vadd.f32 0.0, %v4792
  %v4794 = vpop.f32.mrb[0].mxu0
  %v4795 = vpop.f32.mrb[0].mxu0
  %v4796 = vadd.f32 0.0, %v4795
  %v4797 = vpop.f32.mrb[0].mxu0
  %4798 = vmatprep.mubr.bf16.mxu0 0
  %4799 = vmatmul.mubr.bf16.gmra.mrb[0].mxu0 %v2555
  %v4800 = vpop.f32.mrb[0].mxu0
  %v4801 = vadd.f32 0.0, %v4800
  %v4802 = vpop.f32.mrb[0].mxu0
  %v4803 = vpop.f32.mrb[0].mxu0
  %v4804 = vadd.f32 0.0, %v4803
  %v4805 = vpop.f32.mrb[0].mxu0
  %4806 = vmatprep.mubr.bf16.mxu0 0
  %4807 = vmatmul.mubr.bf16.gmra.mrb[0].mxu0 %v2558
  %v4808 = vpop.f32.mrb[0].mxu0
  %v4809 = vadd.f32 0.0, %v4808
  %v4810 = vpop.f32.mrb[0].mxu0
  %v4811 = vpop.f32.mrb[0].mxu0
  %v4812 = vadd.f32 0.0, %v4811
  %v4813 = vpop.f32.mrb[0].mxu0
  %4814 = vmatprep.mubr.bf16.mxu0 0
  %4815 = vmatmul.mubr.bf16.gmra.mrb[0].mxu0 %v2561
  %v4816 = vpop.f32.mrb[0].mxu0
  %v4817 = vadd.f32 0.0, %v4816
  %v4818 = vpop.f32.mrb[0].mxu0
  %v4819 = vpop.f32.mrb[0].mxu0
  %v4820 = vadd.f32 0.0, %v4819
  %v4821 = vpop.f32.mrb[0].mxu0
  %4822 = vmatprep.mubr.bf16.mxu0 0
  %4823 = vmatmul.mubr.bf16.gmra.mrb[0].mxu0 %v2564
  %v4824 = vpop.f32.mrb[0].mxu0
  %v4825 = vadd.f32 0.0, %v4824
  %v4826 = vpop.f32.mrb[0].mxu0
  %v4827 = vpop.f32.mrb[0].mxu0
  %v4828 = vadd.f32 0.0, %v4827
  %v4829 = vpop.f32.mrb[0].mxu0
  %4830 = vmatprep.mubr.bf16.mxu0 0
  %4831 = vmatmul.mubr.bf16.gmra.mrb[0].mxu0 %v2567
  %v4832 = vpop.f32.mrb[0].mxu0
  %v4833 = vadd.f32 0.0, %v4832
  %v4834 = vpop.f32.mrb[0].mxu0
  %v4835 = vpop.f32.mrb[0].mxu0
  %v4836 = vadd.f32 0.0, %v4835
  %v4837 = vpop.f32.mrb[0].mxu0
  %4838 = vmatprep.mubr.bf16.mxu0 0
  %4839 = vmatmul.mubr.bf16.gmra.mrb[0].mxu0 %v2570
  %v4840 = vpop.f32.mrb[0].mxu0
  %v4841 = vadd.f32 0.0, %v4840
  %v4842 = vpop.f32.mrb[0].mxu0
  %v4843 = vpop.f32.mrb[0].mxu0
  %v4844 = vadd.f32 0.0, %v4843
  %v4845 = vpop.f32.mrb[0].mxu0
  %4846 = vmatprep.mubr.bf16.mxu0 0
  %4847 = vmatmul.mubr.bf16.gmra.mrb[0].mxu0 %v2573
  %v4848 = vpop.f32.mrb[0].mxu0
  %v4849 = vadd.f32 0.0, %v4848
  %v4850 = vpop.f32.mrb[0].mxu0
  %v4851 = vpop.f32.mrb[0].mxu0
  %v4852 = vadd.f32 0.0, %v4851
  %v4853 = vpop.f32.mrb[0].mxu0
  %4854 = vdwg.mxu0
  %v4855 = vpack.c.bf16 %v4788, %v4785
  %v4856 = vpack.c.bf16 %v4796, %v4793
  %v4857 = vpack.c.bf16 %v4804, %v4801
  %v4858 = vpack.c.bf16 %v4812, %v4809
  %v4859 = vpack.c.bf16 %v4820, %v4817
  %v4860 = vpack.c.bf16 %v4828, %v4825
  %v4861 = vpack.c.bf16 %v4836, %v4833
  %v4862 = vpack.c.bf16 %v4844, %v4841
  %v4863 = vpack.c.bf16 %v4852, %v4849
  %s4864 = scalar_lea.vmem %s12, 1152
  %v4865 = vld [vmem:[%s4864] sm:$0xf]
  %v4866 = vld [vmem:[%s4864 + $0x4] sm:$0xf]
  %v4867 = vld [vmem:[%s4864 + $0x8] sm:$0xf]
  %v4868 = vld [vmem:[%s4864 + $0xc] sm:$0xf]
  %v4869 = vld [vmem:[%s4864 + $0x10] sm:$0xf]
  %v4870 = vld [vmem:[%s4864 + $0x14] sm:$0xf]
  %v4871 = vld [vmem:[%s4864 + $0x18] sm:$0xf]
  %v4872 = vld [vmem:[%s4864 + $0x1c] sm:$0xf]
  %v4873 = vld [vmem:[%s4864 + $0x20] sm:$0xf]
  %v4874 = vld [vmem:[%s4864 + $0x24] sm:$0xf]
  %v4875 = vld [vmem:[%s4864 + $0x28] sm:$0xf]
  %v4876 = vld [vmem:[%s4864 + $0x2c] sm:$0xf]
  %v4877 = vld [vmem:[%s4864 + $0x30] sm:$0xf]
  %v4878 = vld [vmem:[%s4864 + $0x34] sm:$0xf]
  %v4879 = vld [vmem:[%s4864 + $0x38] sm:$0xf]
  %v4880 = vld [vmem:[%s4864 + $0x3c] sm:$0xf]
  %s4881 = scalar_lea.vmem %s12, 1216
  %v4882 = vld [vmem:[%s4881] sm:$0xf]
  %v4883 = vld [vmem:[%s4881 + $0x4] sm:$0xf]
  %v4884 = vld [vmem:[%s4881 + $0x8] sm:$0xf]
  %v4885 = vld [vmem:[%s4881 + $0xc] sm:$0xf]
  %v4886 = vld [vmem:[%s4881 + $0x10] sm:$0xf]
  %v4887 = vld [vmem:[%s4881 + $0x14] sm:$0xf]
  %v4888 = vld [vmem:[%s4881 + $0x18] sm:$0xf]
  %v4889 = vld [vmem:[%s4881 + $0x1c] sm:$0xf]
  %v4890 = vld [vmem:[%s4881 + $0x20] sm:$0xf]
  %v4891 = vld [vmem:[%s4881 + $0x24] sm:$0xf]
  %v4892 = vld [vmem:[%s4881 + $0x28] sm:$0xf]
  %v4893 = vld [vmem:[%s4881 + $0x2c] sm:$0xf]
  %v4894 = vld [vmem:[%s4881 + $0x30] sm:$0xf]
  %v4895 = vld [vmem:[%s4881 + $0x34] sm:$0xf]
  %v4896 = vld [vmem:[%s4881 + $0x38] sm:$0xf]
  %v4897 = vld [vmem:[%s4881 + $0x3c] sm:$0xf]
  %v4914 = vunpack.c.l.b16 %v4882
  %v4915 = vunpack.c.l.b16 %v4883
  %v4916 = vunpack.c.l.b16 %v4884
  %v4917 = vunpack.c.l.b16 %v4885
  %v4918 = vunpack.c.l.b16 %v4886
  %v4919 = vunpack.c.l.b16 %v4887
  %v4920 = vunpack.c.l.b16 %v4888
  %v4921 = vunpack.c.l.b16 %v4889
  %v4922 = vunpack.c.l.b16 %v4890
  %v4923 = vunpack.c.l.b16 %v4891
  %v4924 = vunpack.c.l.b16 %v4892
  %v4925 = vunpack.c.l.b16 %v4893
  %v4926 = vunpack.c.l.b16 %v4894
  %v4927 = vunpack.c.l.b16 %v4895
  %v4928 = vunpack.c.l.b16 %v4896
  %v4929 = vunpack.c.l.b16 %v4897
  %v4930 = vpack.c.b16 %v4915, %v4914
  %v4931 = vpack.c.b16 %v4917, %v4916
  %v4932 = vpack.c.b16 %v4919, %v4918
  %v4933 = vpack.c.b16 %v4921, %v4920
  %v4934 = vpack.c.b16 %v4923, %v4922
  %v4935 = vpack.c.b16 %v4925, %v4924
  %v4936 = vpack.c.b16 %v4927, %v4926
  %v4937 = vpack.c.b16 %v4929, %v4928
  %4946 = vmatprep.subr.bf16.mxu0 0
  %4947 = vmatpush1.bf16.msra.mxu0 %v4930
  %4948 = vmatprep.subr.bf16.mxu0 0
  %4949 = vmatpush1.bf16.msra.mxu0 %v4931
  %4950 = vmatprep.subr.bf16.mxu0 0
  %4951 = vmatpush1.bf16.msra.mxu0 %v4932
  %4952 = vmatprep.subr.bf16.mxu0 0
  %4953 = vmatpush1.bf16.msra.mxu0 %v4933
  %4954 = vmatprep.subr.bf16.mxu0 0
  %4955 = vmatpush1.bf16.msra.mxu0 %v4934
  %4956 = vmatprep.subr.bf16.mxu0 0
  %4957 = vmatpush1.bf16.msra.mxu0 %v4935
  %4958 = vmatprep.subr.bf16.mxu0 0
  %4959 = vmatpush1.bf16.msra.mxu0 %v4936
  %4960 = vmatprep.subr.bf16.mxu0 0
  %4961 = vmatpush1.bf16.msra.mxu0 %v4937
  %4962 = vmatprep.subr.bf16.mxu0 0
  %4963 = vmatpush1.bf16.msra.mxu0 0
  %4964 = vmatprep.subr.bf16.mxu0 0
  %4965 = vmatpush1.bf16.msra.mxu0 0
  %4966 = vmatprep.subr.bf16.mxu0 0
  %4967 = vmatpush1.bf16.msra.mxu0 0
  %4968 = vmatprep.subr.bf16.mxu0 0
  %4969 = vmatpush1.bf16.msra.mxu0 0
  %4970 = vmatprep.subr.bf16.mxu0 0
  %4971 = vmatpush1.bf16.msra.mxu0 0
  %4972 = vmatprep.subr.bf16.mxu0 0
  %4973 = vmatpush1.bf16.msra.mxu0 0
  %4974 = vmatprep.subr.bf16.mxu0 0
  %4975 = vmatpush1.bf16.msra.mxu0 0
  %4976 = vmatprep.subr.bf16.mxu0 0
  %4977 = vmatpush1.bf16.msra.mxu0 0
  %4978 = vmatprep.mubr.bf16.mxu0 0
  %4979 = vmatmul.mubr.bf16.gmra.mrb[0].mxu0 %v4856
  %v4980 = vpop.f32.mrb[0].mxu0
  %v4981 = vadd.f32 0.0, %v4980
  %v4982 = vpop.f32.mrb[0].mxu0
  %v4983 = vpop.f32.mrb[0].mxu0
  %v4984 = vadd.f32 0.0, %v4983
  %v4985 = vpop.f32.mrb[0].mxu0
  %4986 = vdwg.mxu0
  %v5003 = vunpack.c.l.b16 %v4865
  %v5004 = vunpack.c.l.b16 %v4866
  %v5005 = vunpack.c.l.b16 %v4867
  %v5006 = vunpack.c.l.b16 %v4868
  %v5007 = vunpack.c.l.b16 %v4869
  %v5008 = vunpack.c.l.b16 %v4870
  %v5009 = vunpack.c.l.b16 %v4871
  %v5010 = vunpack.c.l.b16 %v4872
  %v5011 = vunpack.c.l.b16 %v4873
  %v5012 = vunpack.c.l.b16 %v4874
  %v5013 = vunpack.c.l.b16 %v4875
  %v5014 = vunpack.c.l.b16 %v4876
  %v5015 = vunpack.c.l.b16 %v4877
  %v5016 = vunpack.c.l.b16 %v4878
  %v5017 = vunpack.c.l.b16 %v4879
  %v5018 = vunpack.c.l.b16 %v4880
  %v5019 = vpack.c.b16 %v5004, %v5003
  %v5020 = vpack.c.b16 %v5006, %v5005
  %v5021 = vpack.c.b16 %v5008, %v5007
  %v5022 = vpack.c.b16 %v5010, %v5009
  %v5023 = vpack.c.b16 %v5012, %v5011
  %v5024 = vpack.c.b16 %v5014, %v5013
  %v5025 = vpack.c.b16 %v5016, %v5015
  %v5026 = vpack.c.b16 %v5018, %v5017
  %5035 = vmatprep.subr.bf16.mxu0 0
  %5036 = vmatpush1.bf16.msra.mxu0 %v5019
  %5037 = vmatprep.subr.bf16.mxu0 0
  %5038 = vmatpush1.bf16.msra.mxu0 %v5020
  %5039 = vmatprep.subr.bf16.mxu0 0
  %5040 = vmatpush1.bf16.msra.mxu0 %v5021
  %5041 = vmatprep.subr.bf16.mxu0 0
  %5042 = vmatpush1.bf16.msra.mxu0 %v5022
  %5043 = vmatprep.subr.bf16.mxu0 0
  %5044 = vmatpush1.bf16.msra.mxu0 %v5023
  %5045 = vmatprep.subr.bf16.mxu0 0
  %5046 = vmatpush1.bf16.msra.mxu0 %v5024
  %5047 = vmatprep.subr.bf16.mxu0 0
  %5048 = vmatpush1.bf16.msra.mxu0 %v5025
  %5049 = vmatprep.subr.bf16.mxu0 0
  %5050 = vmatpush1.bf16.msra.mxu0 %v5026
  %5051 = vmatprep.subr.bf16.mxu0 0
  %5052 = vmatpush1.bf16.msra.mxu0 0
  %5053 = vmatprep.subr.bf16.mxu0 0
  %5054 = vmatpush1.bf16.msra.mxu0 0
  %5055 = vmatprep.subr.bf16.mxu0 0
  %5056 = vmatpush1.bf16.msra.mxu0 0
  %5057 = vmatprep.subr.bf16.mxu0 0
  %5058 = vmatpush1.bf16.msra.mxu0 0
  %5059 = vmatprep.subr.bf16.mxu0 0
  %5060 = vmatpush1.bf16.msra.mxu0 0
  %5061 = vmatprep.subr.bf16.mxu0 0
  %5062 = vmatpush1.bf16.msra.mxu0 0
  %5063 = vmatprep.subr.bf16.mxu0 0
  %5064 = vmatpush1.bf16.msra.mxu0 0
  %5065 = vmatprep.subr.bf16.mxu0 0
  %5066 = vmatpush1.bf16.msra.mxu0 0
  %5067 = vmatprep.mubr.bf16.mxu0 0
  %5068 = vmatmul.mubr.bf16.gmra.mrb[0].mxu0 %v4855
  %v5069 = vpop.f32.mrb[0].mxu0
  %v5070 = vadd.f32 %v4981, %v5069
  %v5071 = vpop.f32.mrb[0].mxu0
  %v5072 = vpop.f32.mrb[0].mxu0
  %v5073 = vadd.f32 %v4984, %v5072
  %v5074 = vpop.f32.mrb[0].mxu0
  %5075 = vdwg.mxu0
  %s5076 = scalar_lea.vmem %s12, 1280
  %v5077 = vld [vmem:[%s5076] sm:$0xf]
  %v5078 = vld [vmem:[%s5076 + $0x4] sm:$0xf]
  %v5079 = vld [vmem:[%s5076 + $0x8] sm:$0xf]
  %v5080 = vld [vmem:[%s5076 + $0xc] sm:$0xf]
  %v5081 = vld [vmem:[%s5076 + $0x10] sm:$0xf]
  %v5082 = vld [vmem:[%s5076 + $0x14] sm:$0xf]
  %v5083 = vld [vmem:[%s5076 + $0x18] sm:$0xf]
  %v5084 = vld [vmem:[%s5076 + $0x1c] sm:$0xf]
  %v5085 = vld [vmem:[%s5076 + $0x20] sm:$0xf]
  %v5086 = vld [vmem:[%s5076 + $0x24] sm:$0xf]
  %v5087 = vld [vmem:[%s5076 + $0x28] sm:$0xf]
  %v5088 = vld [vmem:[%s5076 + $0x2c] sm:$0xf]
  %v5089 = vld [vmem:[%s5076 + $0x30] sm:$0xf]
  %v5090 = vld [vmem:[%s5076 + $0x34] sm:$0xf]
  %v5091 = vld [vmem:[%s5076 + $0x38] sm:$0xf]
  %v5092 = vld [vmem:[%s5076 + $0x3c] sm:$0xf]
  %v5109 = vunpack.c.l.b16 %v5077
  %v5110 = vunpack.c.l.b16 %v5078
  %v5111 = vunpack.c.l.b16 %v5079
  %v5112 = vunpack.c.l.b16 %v5080
  %v5113 = vunpack.c.l.b16 %v5081
  %v5114 = vunpack.c.l.b16 %v5082
  %v5115 = vunpack.c.l.b16 %v5083
  %v5116 = vunpack.c.l.b16 %v5084
  %v5117 = vunpack.c.l.b16 %v5085
  %v5118 = vunpack.c.l.b16 %v5086
  %v5119 = vunpack.c.l.b16 %v5087
  %v5120 = vunpack.c.l.b16 %v5088
  %v5121 = vunpack.c.l.b16 %v5089
  %v5122 = vunpack.c.l.b16 %v5090
  %v5123 = vunpack.c.l.b16 %v5091
  %v5124 = vunpack.c.l.b16 %v5092
  %v5125 = vpack.c.b16 %v5110, %v5109
  %v5126 = vpack.c.b16 %v5112, %v5111
  %v5127 = vpack.c.b16 %v5114, %v5113
  %v5128 = vpack.c.b16 %v5116, %v5115
  %v5129 = vpack.c.b16 %v5118, %v5117
  %v5130 = vpack.c.b16 %v5120, %v5119
  %v5131 = vpack.c.b16 %v5122, %v5121
  %v5132 = vpack.c.b16 %v5124, %v5123
  %5141 = vmatprep.subr.bf16.mxu0 0
  %5142 = vmatpush1.bf16.msra.mxu0 %v5125
  %5143 = vmatprep.subr.bf16.mxu0 0
  %5144 = vmatpush1.bf16.msra.mxu0 %v5126
  %5145 = vmatprep.subr.bf16.mxu0 0
  %5146 = vmatpush1.bf16.msra.mxu0 %v5127
  %5147 = vmatprep.subr.bf16.mxu0 0
  %5148 = vmatpush1.bf16.msra.mxu0 %v5128
  %5149 = vmatprep.subr.bf16.mxu0 0
  %5150 = vmatpush1.bf16.msra.mxu0 %v5129
  %5151 = vmatprep.subr.bf16.mxu0 0
  %5152 = vmatpush1.bf16.msra.mxu0 %v5130
  %5153 = vmatprep.subr.bf16.mxu0 0
  %5154 = vmatpush1.bf16.msra.mxu0 %v5131
  %5155 = vmatprep.subr.bf16.mxu0 0
  %5156 = vmatpush1.bf16.msra.mxu0 %v5132
  %5157 = vmatprep.subr.bf16.mxu0 0
  %5158 = vmatpush1.bf16.msra.mxu0 0
  %5159 = vmatprep.subr.bf16.mxu0 0
  %5160 = vmatpush1.bf16.msra.mxu0 0
  %5161 = vmatprep.subr.bf16.mxu0 0
  %5162 = vmatpush1.bf16.msra.mxu0 0
  %5163 = vmatprep.subr.bf16.mxu0 0
  %5164 = vmatpush1.bf16.msra.mxu0 0
  %5165 = vmatprep.subr.bf16.mxu0 0
  %5166 = vmatpush1.bf16.msra.mxu0 0
  %5167 = vmatprep.subr.bf16.mxu0 0
  %5168 = vmatpush1.bf16.msra.mxu0 0
  %5169 = vmatprep.subr.bf16.mxu0 0
  %5170 = vmatpush1.bf16.msra.mxu0 0
  %5171 = vmatprep.subr.bf16.mxu0 0
  %5172 = vmatpush1.bf16.msra.mxu0 0
  %5173 = vmatprep.mubr.bf16.mxu0 0
  %5174 = vmatmul.mubr.bf16.gmra.mrb[0].mxu0 %v4857
  %v5175 = vpop.f32.mrb[0].mxu0
  %v5176 = vadd.f32 0.0, %v5175
  %v5177 = vpop.f32.mrb[0].mxu0
  %v5178 = vpop.f32.mrb[0].mxu0
  %v5179 = vadd.f32 0.0, %v5178
  %v5180 = vpop.f32.mrb[0].mxu0
  %5181 = vdwg.mxu0
  %v5182 = vadd.f32 %v5070, %v5176
  %v5183 = vadd.f32 %v5073, %v5179
  %s5184 = scalar_lea.vmem %s12, 1344
  %v5185 = vld [vmem:[%s5184] sm:$0xf]
  %v5186 = vld [vmem:[%s5184 + $0x4] sm:$0xf]
  %v5187 = vld [vmem:[%s5184 + $0x8] sm:$0xf]
  %v5188 = vld [vmem:[%s5184 + $0xc] sm:$0xf]
  %v5189 = vld [vmem:[%s5184 + $0x10] sm:$0xf]
  %v5190 = vld [vmem:[%s5184 + $0x14] sm:$0xf]
  %v5191 = vld [vmem:[%s5184 + $0x18] sm:$0xf]
  %v5192 = vld [vmem:[%s5184 + $0x1c] sm:$0xf]
  %v5193 = vld [vmem:[%s5184 + $0x20] sm:$0xf]
  %v5194 = vld [vmem:[%s5184 + $0x24] sm:$0xf]
  %v5195 = vld [vmem:[%s5184 + $0x28] sm:$0xf]
  %v5196 = vld [vmem:[%s5184 + $0x2c] sm:$0xf]
  %v5197 = vld [vmem:[%s5184 + $0x30] sm:$0xf]
  %v5198 = vld [vmem:[%s5184 + $0x34] sm:$0xf]
  %v5199 = vld [vmem:[%s5184 + $0x38] sm:$0xf]
  %v5200 = vld [vmem:[%s5184 + $0x3c] sm:$0xf]
  %v5217 = vunpack.c.l.b16 %v5185
  %v5218 = vunpack.c.l.b16 %v5186
  %v5219 = vunpack.c.l.b16 %v5187
  %v5220 = vunpack.c.l.b16 %v5188
  %v5221 = vunpack.c.l.b16 %v5189
  %v5222 = vunpack.c.l.b16 %v5190
  %v5223 = vunpack.c.l.b16 %v5191
  %v5224 = vunpack.c.l.b16 %v5192
  %v5225 = vunpack.c.l.b16 %v5193
  %v5226 = vunpack.c.l.b16 %v5194
  %v5227 = vunpack.c.l.b16 %v5195
  %v5228 = vunpack.c.l.b16 %v5196
  %v5229 = vunpack.c.l.b16 %v5197
  %v5230 = vunpack.c.l.b16 %v5198
  %v5231 = vunpack.c.l.b16 %v5199
  %v5232 = vunpack.c.l.b16 %v5200
  %v5233 = vpack.c.b16 %v5218, %v5217
  %v5234 = vpack.c.b16 %v5220, %v5219
  %v5235 = vpack.c.b16 %v5222, %v5221
  %v5236 = vpack.c.b16 %v5224, %v5223
  %v5237 = vpack.c.b16 %v5226, %v5225
  %v5238 = vpack.c.b16 %v5228, %v5227
  %v5239 = vpack.c.b16 %v5230, %v5229
  %v5240 = vpack.c.b16 %v5232, %v5231
  %5249 = vmatprep.subr.bf16.mxu0 0
  %5250 = vmatpush1.bf16.msra.mxu0 %v5233
  %5251 = vmatprep.subr.bf16.mxu0 0
  %5252 = vmatpush1.bf16.msra.mxu0 %v5234
  %5253 = vmatprep.subr.bf16.mxu0 0
  %5254 = vmatpush1.bf16.msra.mxu0 %v5235
  %5255 = vmatprep.subr.bf16.mxu0 0
  %5256 = vmatpush1.bf16.msra.mxu0 %v5236
  %5257 = vmatprep.subr.bf16.mxu0 0
  %5258 = vmatpush1.bf16.msra.mxu0 %v5237
  %5259 = vmatprep.subr.bf16.mxu0 0
  %5260 = vmatpush1.bf16.msra.mxu0 %v5238
  %5261 = vmatprep.subr.bf16.mxu0 0
  %5262 = vmatpush1.bf16.msra.mxu0 %v5239
  %5263 = vmatprep.subr.bf16.mxu0 0
  %5264 = vmatpush1.bf16.msra.mxu0 %v5240
  %5265 = vmatprep.subr.bf16.mxu0 0
  %5266 = vmatpush1.bf16.msra.mxu0 0
  %5267 = vmatprep.subr.bf16.mxu0 0
  %5268 = vmatpush1.bf16.msra.mxu0 0
  %5269 = vmatprep.subr.bf16.mxu0 0
  %5270 = vmatpush1.bf16.msra.mxu0 0
  %5271 = vmatprep.subr.bf16.mxu0 0
  %5272 = vmatpush1.bf16.msra.mxu0 0
  %5273 = vmatprep.subr.bf16.mxu0 0
  %5274 = vmatpush1.bf16.msra.mxu0 0
  %5275 = vmatprep.subr.bf16.mxu0 0
  %5276 = vmatpush1.bf16.msra.mxu0 0
  %5277 = vmatprep.subr.bf16.mxu0 0
  %5278 = vmatpush1.bf16.msra.mxu0 0
  %5279 = vmatprep.subr.bf16.mxu0 0
  %5280 = vmatpush1.bf16.msra.mxu0 0
  %5281 = vmatprep.mubr.bf16.mxu0 0
  %5282 = vmatmul.mubr.bf16.gmra.mrb[0].mxu0 %v4858
  %v5283 = vpop.f32.mrb[0].mxu0
  %v5284 = vadd.f32 0.0, %v5283
  %v5285 = vpop.f32.mrb[0].mxu0
  %v5286 = vpop.f32.mrb[0].mxu0
  %v5287 = vadd.f32 0.0, %v5286
  %v5288 = vpop.f32.mrb[0].mxu0
  %5289 = vdwg.mxu0
  %v5290 = vadd.f32 %v5182, %v5284
  %v5291 = vadd.f32 %v5183, %v5287
  %s5292 = scalar_lea.vmem %s12, 1408
  %v5293 = vld [vmem:[%s5292] sm:$0xf]
  %v5294 = vld [vmem:[%s5292 + $0x4] sm:$0xf]
  %v5295 = vld [vmem:[%s5292 + $0x8] sm:$0xf]
  %v5296 = vld [vmem:[%s5292 + $0xc] sm:$0xf]
  %v5297 = vld [vmem:[%s5292 + $0x10] sm:$0xf]
  %v5298 = vld [vmem:[%s5292 + $0x14] sm:$0xf]
  %v5299 = vld [vmem:[%s5292 + $0x18] sm:$0xf]
  %v5300 = vld [vmem:[%s5292 + $0x1c] sm:$0xf]
  %v5301 = vld [vmem:[%s5292 + $0x20] sm:$0xf]
  %v5302 = vld [vmem:[%s5292 + $0x24] sm:$0xf]
  %v5303 = vld [vmem:[%s5292 + $0x28] sm:$0xf]
  %v5304 = vld [vmem:[%s5292 + $0x2c] sm:$0xf]
  %v5305 = vld [vmem:[%s5292 + $0x30] sm:$0xf]
  %v5306 = vld [vmem:[%s5292 + $0x34] sm:$0xf]
  %v5307 = vld [vmem:[%s5292 + $0x38] sm:$0xf]
  %v5308 = vld [vmem:[%s5292 + $0x3c] sm:$0xf]
  %v5325 = vunpack.c.l.b16 %v5293
  %v5326 = vunpack.c.l.b16 %v5294
  %v5327 = vunpack.c.l.b16 %v5295
  %v5328 = vunpack.c.l.b16 %v5296
  %v5329 = vunpack.c.l.b16 %v5297
  %v5330 = vunpack.c.l.b16 %v5298
  %v5331 = vunpack.c.l.b16 %v5299
  %v5332 = vunpack.c.l.b16 %v5300
  %v5333 = vunpack.c.l.b16 %v5301
  %v5334 = vunpack.c.l.b16 %v5302
  %v5335 = vunpack.c.l.b16 %v5303
  %v5336 = vunpack.c.l.b16 %v5304
  %v5337 = vunpack.c.l.b16 %v5305
  %v5338 = vunpack.c.l.b16 %v5306
  %v5339 = vunpack.c.l.b16 %v5307
  %v5340 = vunpack.c.l.b16 %v5308
  %v5341 = vpack.c.b16 %v5326, %v5325
  %v5342 = vpack.c.b16 %v5328, %v5327
  %v5343 = vpack.c.b16 %v5330, %v5329
  %v5344 = vpack.c.b16 %v5332, %v5331
  %v5345 = vpack.c.b16 %v5334, %v5333
  %v5346 = vpack.c.b16 %v5336, %v5335
  %v5347 = vpack.c.b16 %v5338, %v5337
  %v5348 = vpack.c.b16 %v5340, %v5339
  %5357 = vmatprep.subr.bf16.mxu0 0
  %5358 = vmatpush1.bf16.msra.mxu0 %v5341
  %5359 = vmatprep.subr.bf16.mxu0 0
  %5360 = vmatpush1.bf16.msra.mxu0 %v5342
  %5361 = vmatprep.subr.bf16.mxu0 0
  %5362 = vmatpush1.bf16.msra.mxu0 %v5343
  %5363 = vmatprep.subr.bf16.mxu0 0
  %5364 = vmatpush1.bf16.msra.mxu0 %v5344
  %5365 = vmatprep.subr.bf16.mxu0 0
  %5366 = vmatpush1.bf16.msra.mxu0 %v5345
  %5367 = vmatprep.subr.bf16.mxu0 0
  %5368 = vmatpush1.bf16.msra.mxu0 %v5346
  %5369 = vmatprep.subr.bf16.mxu0 0
  %5370 = vmatpush1.bf16.msra.mxu0 %v5347
  %5371 = vmatprep.subr.bf16.mxu0 0
  %5372 = vmatpush1.bf16.msra.mxu0 %v5348
  %5373 = vmatprep.subr.bf16.mxu0 0
  %5374 = vmatpush1.bf16.msra.mxu0 0
  %5375 = vmatprep.subr.bf16.mxu0 0
  %5376 = vmatpush1.bf16.msra.mxu0 0
  %5377 = vmatprep.subr.bf16.mxu0 0
  %5378 = vmatpush1.bf16.msra.mxu0 0
  %5379 = vmatprep.subr.bf16.mxu0 0
  %5380 = vmatpush1.bf16.msra.mxu0 0
  %5381 = vmatprep.subr.bf16.mxu0 0
  %5382 = vmatpush1.bf16.msra.mxu0 0
  %5383 = vmatprep.subr.bf16.mxu0 0
  %5384 = vmatpush1.bf16.msra.mxu0 0
  %5385 = vmatprep.subr.bf16.mxu0 0
  %5386 = vmatpush1.bf16.msra.mxu0 0
  %5387 = vmatprep.subr.bf16.mxu0 0
  %5388 = vmatpush1.bf16.msra.mxu0 0
  %5389 = vmatprep.mubr.bf16.mxu0 0
  %5390 = vmatmul.mubr.bf16.gmra.mrb[0].mxu0 %v4859
  %v5391 = vpop.f32.mrb[0].mxu0
  %v5392 = vadd.f32 0.0, %v5391
  %v5393 = vpop.f32.mrb[0].mxu0
  %v5394 = vpop.f32.mrb[0].mxu0
  %v5395 = vadd.f32 0.0, %v5394
  %v5396 = vpop.f32.mrb[0].mxu0
  %5397 = vdwg.mxu0
  %v5398 = vadd.f32 %v5290, %v5392
  %v5399 = vadd.f32 %v5291, %v5395
  %s5400 = scalar_lea.vmem %s12, 1472
  %v5401 = vld [vmem:[%s5400] sm:$0xf]
  %v5402 = vld [vmem:[%s5400 + $0x4] sm:$0xf]
  %v5403 = vld [vmem:[%s5400 + $0x8] sm:$0xf]
  %v5404 = vld [vmem:[%s5400 + $0xc] sm:$0xf]
  %v5405 = vld [vmem:[%s5400 + $0x10] sm:$0xf]
  %v5406 = vld [vmem:[%s5400 + $0x14] sm:$0xf]
  %v5407 = vld [vmem:[%s5400 + $0x18] sm:$0xf]
  %v5408 = vld [vmem:[%s5400 + $0x1c] sm:$0xf]
  %v5409 = vld [vmem:[%s5400 + $0x20] sm:$0xf]
  %v5410 = vld [vmem:[%s5400 + $0x24] sm:$0xf]
  %v5411 = vld [vmem:[%s5400 + $0x28] sm:$0xf]
  %v5412 = vld [vmem:[%s5400 + $0x2c] sm:$0xf]
  %v5413 = vld [vmem:[%s5400 + $0x30] sm:$0xf]
  %v5414 = vld [vmem:[%s5400 + $0x34] sm:$0xf]
  %v5415 = vld [vmem:[%s5400 + $0x38] sm:$0xf]
  %v5416 = vld [vmem:[%s5400 + $0x3c] sm:$0xf]
  %v5433 = vunpack.c.l.b16 %v5401
  %v5434 = vunpack.c.l.b16 %v5402
  %v5435 = vunpack.c.l.b16 %v5403
  %v5436 = vunpack.c.l.b16 %v5404
  %v5437 = vunpack.c.l.b16 %v5405
  %v5438 = vunpack.c.l.b16 %v5406
  %v5439 = vunpack.c.l.b16 %v5407
  %v5440 = vunpack.c.l.b16 %v5408
  %v5441 = vunpack.c.l.b16 %v5409
  %v5442 = vunpack.c.l.b16 %v5410
  %v5443 = vunpack.c.l.b16 %v5411
  %v5444 = vunpack.c.l.b16 %v5412
  %v5445 = vunpack.c.l.b16 %v5413
  %v5446 = vunpack.c.l.b16 %v5414
  %v5447 = vunpack.c.l.b16 %v5415
  %v5448 = vunpack.c.l.b16 %v5416
  %v5449 = vpack.c.b16 %v5434, %v5433
  %v5450 = vpack.c.b16 %v5436, %v5435
  %v5451 = vpack.c.b16 %v5438, %v5437
  %v5452 = vpack.c.b16 %v5440, %v5439
  %v5453 = vpack.c.b16 %v5442, %v5441
  %v5454 = vpack.c.b16 %v5444, %v5443
  %v5455 = vpack.c.b16 %v5446, %v5445
  %v5456 = vpack.c.b16 %v5448, %v5447
  %5465 = vmatprep.subr.bf16.mxu0 0
  %5466 = vmatpush1.bf16.msra.mxu0 %v5449
  %5467 = vmatprep.subr.bf16.mxu0 0
  %5468 = vmatpush1.bf16.msra.mxu0 %v5450
  %5469 = vmatprep.subr.bf16.mxu0 0
  %5470 = vmatpush1.bf16.msra.mxu0 %v5451
  %5471 = vmatprep.subr.bf16.mxu0 0
  %5472 = vmatpush1.bf16.msra.mxu0 %v5452
  %5473 = vmatprep.subr.bf16.mxu0 0
  %5474 = vmatpush1.bf16.msra.mxu0 %v5453
  %5475 = vmatprep.subr.bf16.mxu0 0
  %5476 = vmatpush1.bf16.msra.mxu0 %v5454
  %5477 = vmatprep.subr.bf16.mxu0 0
  %5478 = vmatpush1.bf16.msra.mxu0 %v5455
  %5479 = vmatprep.subr.bf16.mxu0 0
  %5480 = vmatpush1.bf16.msra.mxu0 %v5456
  %5481 = vmatprep.subr.bf16.mxu0 0
  %5482 = vmatpush1.bf16.msra.mxu0 0
  %5483 = vmatprep.subr.bf16.mxu0 0
  %5484 = vmatpush1.bf16.msra.mxu0 0
  %5485 = vmatprep.subr.bf16.mxu0 0
  %5486 = vmatpush1.bf16.msra.mxu0 0
  %5487 = vmatprep.subr.bf16.mxu0 0
  %5488 = vmatpush1.bf16.msra.mxu0 0
  %5489 = vmatprep.subr.bf16.mxu0 0
  %5490 = vmatpush1.bf16.msra.mxu0 0
  %5491 = vmatprep.subr.bf16.mxu0 0
  %5492 = vmatpush1.bf16.msra.mxu0 0
  %5493 = vmatprep.subr.bf16.mxu0 0
  %5494 = vmatpush1.bf16.msra.mxu0 0
  %5495 = vmatprep.subr.bf16.mxu0 0
  %5496 = vmatpush1.bf16.msra.mxu0 0
  %5497 = vmatprep.mubr.bf16.mxu0 0
  %5498 = vmatmul.mubr.bf16.gmra.mrb[0].mxu0 %v4860
  %v5499 = vpop.f32.mrb[0].mxu0
  %v5500 = vadd.f32 0.0, %v5499
  %v5501 = vpop.f32.mrb[0].mxu0
  %v5502 = vpop.f32.mrb[0].mxu0
  %v5503 = vadd.f32 0.0, %v5502
  %v5504 = vpop.f32.mrb[0].mxu0
  %5505 = vdwg.mxu0
  %v5506 = vadd.f32 %v5398, %v5500
  %v5507 = vadd.f32 %v5399, %v5503
  %s5508 = scalar_lea.vmem %s12, 1536
  %v5509 = vld [vmem:[%s5508] sm:$0xf]
  %v5510 = vld [vmem:[%s5508 + $0x4] sm:$0xf]
  %v5511 = vld [vmem:[%s5508 + $0x8] sm:$0xf]
  %v5512 = vld [vmem:[%s5508 + $0xc] sm:$0xf]
  %v5513 = vld [vmem:[%s5508 + $0x10] sm:$0xf]
  %v5514 = vld [vmem:[%s5508 + $0x14] sm:$0xf]
  %v5515 = vld [vmem:[%s5508 + $0x18] sm:$0xf]
  %v5516 = vld [vmem:[%s5508 + $0x1c] sm:$0xf]
  %v5517 = vld [vmem:[%s5508 + $0x20] sm:$0xf]
  %v5518 = vld [vmem:[%s5508 + $0x24] sm:$0xf]
  %v5519 = vld [vmem:[%s5508 + $0x28] sm:$0xf]
  %v5520 = vld [vmem:[%s5508 + $0x2c] sm:$0xf]
  %v5521 = vld [vmem:[%s5508 + $0x30] sm:$0xf]
  %v5522 = vld [vmem:[%s5508 + $0x34] sm:$0xf]
  %v5523 = vld [vmem:[%s5508 + $0x38] sm:$0xf]
  %v5524 = vld [vmem:[%s5508 + $0x3c] sm:$0xf]
  %v5541 = vunpack.c.l.b16 %v5509
  %v5542 = vunpack.c.l.b16 %v5510
  %v5543 = vunpack.c.l.b16 %v5511
  %v5544 = vunpack.c.l.b16 %v5512
  %v5545 = vunpack.c.l.b16 %v5513
  %v5546 = vunpack.c.l.b16 %v5514
  %v5547 = vunpack.c.l.b16 %v5515
  %v5548 = vunpack.c.l.b16 %v5516
  %v5549 = vunpack.c.l.b16 %v5517
  %v5550 = vunpack.c.l.b16 %v5518
  %v5551 = vunpack.c.l.b16 %v5519
  %v5552 = vunpack.c.l.b16 %v5520
  %v5553 = vunpack.c.l.b16 %v5521
  %v5554 = vunpack.c.l.b16 %v5522
  %v5555 = vunpack.c.l.b16 %v5523
  %v5556 = vunpack.c.l.b16 %v5524
  %v5557 = vpack.c.b16 %v5542, %v5541
  %v5558 = vpack.c.b16 %v5544, %v5543
  %v5559 = vpack.c.b16 %v5546, %v5545
  %v5560 = vpack.c.b16 %v5548, %v5547
  %v5561 = vpack.c.b16 %v5550, %v5549
  %v5562 = vpack.c.b16 %v5552, %v5551
  %v5563 = vpack.c.b16 %v5554, %v5553
  %v5564 = vpack.c.b16 %v5556, %v5555
  %5573 = vmatprep.subr.bf16.mxu0 0
  %5574 = vmatpush1.bf16.msra.mxu0 %v5557
  %5575 = vmatprep.subr.bf16.mxu0 0
  %5576 = vmatpush1.bf16.msra.mxu0 %v5558
  %5577 = vmatprep.subr.bf16.mxu0 0
  %5578 = vmatpush1.bf16.msra.mxu0 %v5559
  %5579 = vmatprep.subr.bf16.mxu0 0
  %5580 = vmatpush1.bf16.msra.mxu0 %v5560
  %5581 = vmatprep.subr.bf16.mxu0 0
  %5582 = vmatpush1.bf16.msra.mxu0 %v5561
  %5583 = vmatprep.subr.bf16.mxu0 0
  %5584 = vmatpush1.bf16.msra.mxu0 %v5562
  %5585 = vmatprep.subr.bf16.mxu0 0
  %5586 = vmatpush1.bf16.msra.mxu0 %v5563
  %5587 = vmatprep.subr.bf16.mxu0 0
  %5588 = vmatpush1.bf16.msra.mxu0 %v5564
  %5589 = vmatprep.subr.bf16.mxu0 0
  %5590 = vmatpush1.bf16.msra.mxu0 0
  %5591 = vmatprep.subr.bf16.mxu0 0
  %5592 = vmatpush1.bf16.msra.mxu0 0
  %5593 = vmatprep.subr.bf16.mxu0 0
  %5594 = vmatpush1.bf16.msra.mxu0 0
  %5595 = vmatprep.subr.bf16.mxu0 0
  %5596 = vmatpush1.bf16.msra.mxu0 0
  %5597 = vmatprep.subr.bf16.mxu0 0
  %5598 = vmatpush1.bf16.msra.mxu0 0
  %5599 = vmatprep.subr.bf16.mxu0 0
  %5600 = vmatpush1.bf16.msra.mxu0 0
  %5601 = vmatprep.subr.bf16.mxu0 0
  %5602 = vmatpush1.bf16.msra.mxu0 0
  %5603 = vmatprep.subr.bf16.mxu0 0
  %5604 = vmatpush1.bf16.msra.mxu0 0
  %5605 = vmatprep.mubr.bf16.mxu0 0
  %5606 = vmatmul.mubr.bf16.gmra.mrb[0].mxu0 %v4861
  %v5607 = vpop.f32.mrb[0].mxu0
  %v5608 = vadd.f32 0.0, %v5607
  %v5609 = vpop.f32.mrb[0].mxu0
  %v5610 = vpop.f32.mrb[0].mxu0
  %v5611 = vadd.f32 0.0, %v5610
  %v5612 = vpop.f32.mrb[0].mxu0
  %5613 = vdwg.mxu0
  %v5614 = vadd.f32 %v5506, %v5608
  %v5615 = vadd.f32 %v5507, %v5611
  %s5616 = scalar_lea.vmem %s12, 1600
  %v5617 = vld [vmem:[%s5616] sm:$0xf]
  %v5618 = vld [vmem:[%s5616 + $0x4] sm:$0xf]
  %v5619 = vld [vmem:[%s5616 + $0x8] sm:$0xf]
  %v5620 = vld [vmem:[%s5616 + $0xc] sm:$0xf]
  %v5621 = vld [vmem:[%s5616 + $0x10] sm:$0xf]
  %v5622 = vld [vmem:[%s5616 + $0x14] sm:$0xf]
  %v5623 = vld [vmem:[%s5616 + $0x18] sm:$0xf]
  %v5624 = vld [vmem:[%s5616 + $0x1c] sm:$0xf]
  %v5625 = vld [vmem:[%s5616 + $0x20] sm:$0xf]
  %v5626 = vld [vmem:[%s5616 + $0x24] sm:$0xf]
  %v5627 = vld [vmem:[%s5616 + $0x28] sm:$0xf]
  %v5628 = vld [vmem:[%s5616 + $0x2c] sm:$0xf]
  %v5629 = vld [vmem:[%s5616 + $0x30] sm:$0xf]
  %v5630 = vld [vmem:[%s5616 + $0x34] sm:$0xf]
  %v5631 = vld [vmem:[%s5616 + $0x38] sm:$0xf]
  %v5632 = vld [vmem:[%s5616 + $0x3c] sm:$0xf]
  %v5649 = vunpack.c.l.b16 %v5617
  %v5650 = vunpack.c.l.b16 %v5618
  %v5651 = vunpack.c.l.b16 %v5619
  %v5652 = vunpack.c.l.b16 %v5620
  %v5653 = vunpack.c.l.b16 %v5621
  %v5654 = vunpack.c.l.b16 %v5622
  %v5655 = vunpack.c.l.b16 %v5623
  %v5656 = vunpack.c.l.b16 %v5624
  %v5657 = vunpack.c.l.b16 %v5625
  %v5658 = vunpack.c.l.b16 %v5626
  %v5659 = vunpack.c.l.b16 %v5627
  %v5660 = vunpack.c.l.b16 %v5628
  %v5661 = vunpack.c.l.b16 %v5629
  %v5662 = vunpack.c.l.b16 %v5630
  %v5663 = vunpack.c.l.b16 %v5631
  %v5664 = vunpack.c.l.b16 %v5632
  %v5665 = vpack.c.b16 %v5650, %v5649
  %v5666 = vpack.c.b16 %v5652, %v5651
  %v5667 = vpack.c.b16 %v5654, %v5653
  %v5668 = vpack.c.b16 %v5656, %v5655
  %v5669 = vpack.c.b16 %v5658, %v5657
  %v5670 = vpack.c.b16 %v5660, %v5659
  %v5671 = vpack.c.b16 %v5662, %v5661
  %v5672 = vpack.c.b16 %v5664, %v5663
  %5681 = vmatprep.subr.bf16.mxu0 0
  %5682 = vmatpush1.bf16.msra.mxu0 %v5665
  %5683 = vmatprep.subr.bf16.mxu0 0
  %5684 = vmatpush1.bf16.msra.mxu0 %v5666
  %5685 = vmatprep.subr.bf16.mxu0 0
  %5686 = vmatpush1.bf16.msra.mxu0 %v5667
  %5687 = vmatprep.subr.bf16.mxu0 0
  %5688 = vmatpush1.bf16.msra.mxu0 %v5668
  %5689 = vmatprep.subr.bf16.mxu0 0
  %5690 = vmatpush1.bf16.msra.mxu0 %v5669
  %5691 = vmatprep.subr.bf16.mxu0 0
  %5692 = vmatpush1.bf16.msra.mxu0 %v5670
  %5693 = vmatprep.subr.bf16.mxu0 0
  %5694 = vmatpush1.bf16.msra.mxu0 %v5671
  %5695 = vmatprep.subr.bf16.mxu0 0
  %5696 = vmatpush1.bf16.msra.mxu0 %v5672
  %5697 = vmatprep.subr.bf16.mxu0 0
  %5698 = vmatpush1.bf16.msra.mxu0 0
  %5699 = vmatprep.subr.bf16.mxu0 0
  %5700 = vmatpush1.bf16.msra.mxu0 0
  %5701 = vmatprep.subr.bf16.mxu0 0
  %5702 = vmatpush1.bf16.msra.mxu0 0
  %5703 = vmatprep.subr.bf16.mxu0 0
  %5704 = vmatpush1.bf16.msra.mxu0 0
  %5705 = vmatprep.subr.bf16.mxu0 0
  %5706 = vmatpush1.bf16.msra.mxu0 0
  %5707 = vmatprep.subr.bf16.mxu0 0
  %5708 = vmatpush1.bf16.msra.mxu0 0
  %5709 = vmatprep.subr.bf16.mxu0 0
  %5710 = vmatpush1.bf16.msra.mxu0 0
  %5711 = vmatprep.subr.bf16.mxu0 0
  %5712 = vmatpush1.bf16.msra.mxu0 0
  %5713 = vmatprep.mubr.bf16.mxu0 0
  %5714 = vmatmul.mubr.bf16.gmra.mrb[0].mxu0 %v4862
  %v5715 = vpop.f32.mrb[0].mxu0
  %v5716 = vadd.f32 0.0, %v5715
  %v5717 = vpop.f32.mrb[0].mxu0
  %v5718 = vpop.f32.mrb[0].mxu0
  %v5719 = vadd.f32 0.0, %v5718
  %v5720 = vpop.f32.mrb[0].mxu0
  %5721 = vdwg.mxu0
  %v5722 = vadd.f32 %v5614, %v5716
  %v5723 = vadd.f32 %v5615, %v5719
  %s5724 = scalar_lea.vmem %s12, 1664
  %v5725 = vld [vmem:[%s5724] sm:$0xf]
  %v5726 = vld [vmem:[%s5724 + $0x4] sm:$0xf]
  %v5727 = vld [vmem:[%s5724 + $0x8] sm:$0xf]
  %v5728 = vld [vmem:[%s5724 + $0xc] sm:$0xf]
  %v5729 = vld [vmem:[%s5724 + $0x10] sm:$0xf]
  %v5730 = vld [vmem:[%s5724 + $0x14] sm:$0xf]
  %v5731 = vld [vmem:[%s5724 + $0x18] sm:$0xf]
  %v5732 = vld [vmem:[%s5724 + $0x1c] sm:$0xf]
  %v5733 = vld [vmem:[%s5724 + $0x20] sm:$0xf]
  %v5734 = vld [vmem:[%s5724 + $0x24] sm:$0xf]
  %v5735 = vld [vmem:[%s5724 + $0x28] sm:$0xf]
  %v5736 = vld [vmem:[%s5724 + $0x2c] sm:$0xf]
  %v5737 = vld [vmem:[%s5724 + $0x30] sm:$0xf]
  %v5738 = vld [vmem:[%s5724 + $0x34] sm:$0xf]
  %v5739 = vld [vmem:[%s5724 + $0x38] sm:$0xf]
  %v5740 = vld [vmem:[%s5724 + $0x3c] sm:$0xf]
  %v5757 = vunpack.c.l.b16 %v5725
  %v5758 = vunpack.c.l.b16 %v5726
  %v5759 = vunpack.c.l.b16 %v5727
  %v5760 = vunpack.c.l.b16 %v5728
  %v5761 = vunpack.c.l.b16 %v5729
  %v5762 = vunpack.c.l.b16 %v5730
  %v5763 = vunpack.c.l.b16 %v5731
  %v5764 = vunpack.c.l.b16 %v5732
  %v5765 = vunpack.c.l.b16 %v5733
  %v5766 = vunpack.c.l.b16 %v5734
  %v5767 = vunpack.c.l.b16 %v5735
  %v5768 = vunpack.c.l.b16 %v5736
  %v5769 = vunpack.c.l.b16 %v5737
  %v5770 = vunpack.c.l.b16 %v5738
  %v5771 = vunpack.c.l.b16 %v5739
  %v5772 = vunpack.c.l.b16 %v5740
  %v5773 = vpack.c.b16 %v5758, %v5757
  %v5774 = vpack.c.b16 %v5760, %v5759
  %v5775 = vpack.c.b16 %v5762, %v5761
  %v5776 = vpack.c.b16 %v5764, %v5763
  %v5777 = vpack.c.b16 %v5766, %v5765
  %v5778 = vpack.c.b16 %v5768, %v5767
  %v5779 = vpack.c.b16 %v5770, %v5769
  %v5780 = vpack.c.b16 %v5772, %v5771
  %5789 = vmatprep.subr.bf16.mxu0 0
  %5790 = vmatpush1.bf16.msra.mxu0 %v5773
  %5791 = vmatprep.subr.bf16.mxu0 0
  %5792 = vmatpush1.bf16.msra.mxu0 %v5774
  %5793 = vmatprep.subr.bf16.mxu0 0
  %5794 = vmatpush1.bf16.msra.mxu0 %v5775
  %5795 = vmatprep.subr.bf16.mxu0 0
  %5796 = vmatpush1.bf16.msra.mxu0 %v5776
  %5797 = vmatprep.subr.bf16.mxu0 0
  %5798 = vmatpush1.bf16.msra.mxu0 %v5777
  %5799 = vmatprep.subr.bf16.mxu0 0
  %5800 = vmatpush1.bf16.msra.mxu0 %v5778
  %5801 = vmatprep.subr.bf16.mxu0 0
  %5802 = vmatpush1.bf16.msra.mxu0 %v5779
  %5803 = vmatprep.subr.bf16.mxu0 0
  %5804 = vmatpush1.bf16.msra.mxu0 %v5780
  %5805 = vmatprep.subr.bf16.mxu0 0
  %5806 = vmatpush1.bf16.msra.mxu0 0
  %5807 = vmatprep.subr.bf16.mxu0 0
  %5808 = vmatpush1.bf16.msra.mxu0 0
  %5809 = vmatprep.subr.bf16.mxu0 0
  %5810 = vmatpush1.bf16.msra.mxu0 0
  %5811 = vmatprep.subr.bf16.mxu0 0
  %5812 = vmatpush1.bf16.msra.mxu0 0
  %5813 = vmatprep.subr.bf16.mxu0 0
  %5814 = vmatpush1.bf16.msra.mxu0 0
  %5815 = vmatprep.subr.bf16.mxu0 0
  %5816 = vmatpush1.bf16.msra.mxu0 0
  %5817 = vmatprep.subr.bf16.mxu0 0
  %5818 = vmatpush1.bf16.msra.mxu0 0
  %5819 = vmatprep.subr.bf16.mxu0 0
  %5820 = vmatpush1.bf16.msra.mxu0 0
  %5821 = vmatprep.mubr.bf16.mxu0 0
  %5822 = vmatmul.mubr.bf16.gmra.mrb[0].mxu0 %v4863
  %v5823 = vpop.f32.mrb[0].mxu0
  %v5824 = vadd.f32 0.0, %v5823
  %v5825 = vpop.f32.mrb[0].mxu0
  %v5826 = vpop.f32.mrb[0].mxu0
  %v5827 = vadd.f32 0.0, %v5826
  %v5828 = vpop.f32.mrb[0].mxu0
  %5829 = vdwg.mxu0
  %v5830 = vadd.f32 %v5722, %v5824
  %v5831 = vadd.f32 %v5723, %v5827
  %v5832 = vld [vmem:[%s5 + $0x12] ss:$0 sm:$0xff]
  %v5833 = vadd.f32 %v5830, %v5832
  %v5834 = vadd.f32 %v5831, %v5832
  %v5835 = vmax.f32 %v5833, 0.0
  %v5836 = vmax.f32 %v5834, 0.0
  %v5837 = vpack.c.bf16 %v5836, %v5835
  %5838 = vmatprep.subr.bf16.mxu0 0
  %5839 = vmatpush1.bf16.msra.mxu0 %v5837
  %5840 = vmatprep.subr.bf16.mxu0 0
  %5841 = vmatpush1.bf16.msra.mxu0 0
  %5842 = vmatprep.subr.bf16.mxu0 0
  %5843 = vmatpush1.bf16.msra.mxu0 0
  %5844 = vmatprep.subr.bf16.mxu0 0
  %5845 = vmatpush1.bf16.msra.mxu0 0
  %5846 = vmatprep.subr.bf16.mxu0 0
  %5847 = vmatpush1.bf16.msra.mxu0 0
  %5848 = vmatprep.subr.bf16.mxu0 0
  %5849 = vmatpush1.bf16.msra.mxu0 0
  %5850 = vmatprep.subr.bf16.mxu0 0
  %5851 = vmatpush1.bf16.msra.mxu0 0
  %5852 = vmatprep.subr.bf16.mxu0 0
  %5853 = vmatpush1.bf16.msra.mxu0 0
  %5854 = vmatprep.subr.bf16.mxu0 0
  %5855 = vmatpush1.bf16.msra.mxu0 0
  %5856 = vmatprep.subr.bf16.mxu0 0
  %5857 = vmatpush1.bf16.msra.mxu0 0
  %5858 = vmatprep.subr.bf16.mxu0 0
  %5859 = vmatpush1.bf16.msra.mxu0 0
  %5860 = vmatprep.subr.bf16.mxu0 0
  %5861 = vmatpush1.bf16.msra.mxu0 0
  %5862 = vmatprep.subr.bf16.mxu0 0
  %5863 = vmatpush1.bf16.msra.mxu0 0
  %5864 = vmatprep.subr.bf16.mxu0 0
  %5865 = vmatpush1.bf16.msra.mxu0 0
  %5866 = vmatprep.subr.bf16.mxu0 0
  %5867 = vmatpush1.bf16.msra.mxu0 0
  %5868 = vmatprep.subr.bf16.mxu0 0
  %5869 = vmatpush1.bf16.msra.mxu0 0
  %5870 = vmatprep.mubr.bf16.mxu0 0
  %5871 = vmatmul.mubr.bf16.gmra.mrb[0].mxu0 %v2549
  %v5872 = vpop.f32.mrb[0].mxu0
  %v5873 = vadd.f32 0.0, %v5872
  %v5874 = vpop.f32.mrb[0].mxu0
  %v5875 = vpop.f32.mrb[0].mxu0
  %v5876 = vadd.f32 0.0, %v5875
  %v5877 = vpop.f32.mrb[0].mxu0
  %5878 = vmatprep.mubr.bf16.mxu0 0
  %5879 = vmatmul.mubr.bf16.gmra.mrb[0].mxu0 %v2552
  %v5880 = vpop.f32.mrb[0].mxu0
  %v5881 = vadd.f32 0.0, %v5880
  %v5882 = vpop.f32.mrb[0].mxu0
  %v5883 = vpop.f32.mrb[0].mxu0
  %v5884 = vadd.f32 0.0, %v5883
  %v5885 = vpop.f32.mrb[0].mxu0
  %5886 = vmatprep.mubr.bf16.mxu0 0
  %5887 = vmatmul.mubr.bf16.gmra.mrb[0].mxu0 %v2555
  %v5888 = vpop.f32.mrb[0].mxu0
  %v5889 = vadd.f32 0.0, %v5888
  %v5890 = vpop.f32.mrb[0].mxu0
  %v5891 = vpop.f32.mrb[0].mxu0
  %v5892 = vadd.f32 0.0, %v5891
  %v5893 = vpop.f32.mrb[0].mxu0
  %5894 = vmatprep.mubr.bf16.mxu0 0
  %5895 = vmatmul.mubr.bf16.gmra.mrb[0].mxu0 %v2558
  %v5896 = vpop.f32.mrb[0].mxu0
  %v5897 = vadd.f32 0.0, %v5896
  %v5898 = vpop.f32.mrb[0].mxu0
  %v5899 = vpop.f32.mrb[0].mxu0
  %v5900 = vadd.f32 0.0, %v5899
  %v5901 = vpop.f32.mrb[0].mxu0
  %5902 = vmatprep.mubr.bf16.mxu0 0
  %5903 = vmatmul.mubr.bf16.gmra.mrb[0].mxu0 %v2561
  %v5904 = vpop.f32.mrb[0].mxu0
  %v5905 = vadd.f32 0.0, %v5904
  %v5906 = vpop.f32.mrb[0].mxu0
  %v5907 = vpop.f32.mrb[0].mxu0
  %v5908 = vadd.f32 0.0, %v5907
  %v5909 = vpop.f32.mrb[0].mxu0
  %5910 = vmatprep.mubr.bf16.mxu0 0
  %5911 = vmatmul.mubr.bf16.gmra.mrb[0].mxu0 %v2564
  %v5912 = vpop.f32.mrb[0].mxu0
  %v5913 = vadd.f32 0.0, %v5912
  %v5914 = vpop.f32.mrb[0].mxu0
  %v5915 = vpop.f32.mrb[0].mxu0
  %v5916 = vadd.f32 0.0, %v5915
  %v5917 = vpop.f32.mrb[0].mxu0
  %5918 = vmatprep.mubr.bf16.mxu0 0
  %5919 = vmatmul.mubr.bf16.gmra.mrb[0].mxu0 %v2567
  %v5920 = vpop.f32.mrb[0].mxu0
  %v5921 = vadd.f32 0.0, %v5920
  %v5922 = vpop.f32.mrb[0].mxu0
  %v5923 = vpop.f32.mrb[0].mxu0
  %v5924 = vadd.f32 0.0, %v5923
  %v5925 = vpop.f32.mrb[0].mxu0
  %5926 = vmatprep.mubr.bf16.mxu0 0
  %5927 = vmatmul.mubr.bf16.gmra.mrb[0].mxu0 %v2570
  %v5928 = vpop.f32.mrb[0].mxu0
  %v5929 = vadd.f32 0.0, %v5928
  %v5930 = vpop.f32.mrb[0].mxu0
  %v5931 = vpop.f32.mrb[0].mxu0
  %v5932 = vadd.f32 0.0, %v5931
  %v5933 = vpop.f32.mrb[0].mxu0
  %5934 = vmatprep.mubr.bf16.mxu0 0
  %5935 = vmatmul.mubr.bf16.gmra.mrb[0].mxu0 %v2573
  %v5936 = vpop.f32.mrb[0].mxu0
  %v5937 = vadd.f32 0.0, %v5936
  %v5938 = vpop.f32.mrb[0].mxu0
  %v5939 = vpop.f32.mrb[0].mxu0
  %v5940 = vadd.f32 0.0, %v5939
  %v5941 = vpop.f32.mrb[0].mxu0
  %5942 = vdwg.mxu0
  %v5943 = vpack.c.bf16 %v5876, %v5873
  %v5944 = vpack.c.bf16 %v5884, %v5881
  %v5945 = vpack.c.bf16 %v5892, %v5889
  %v5946 = vpack.c.bf16 %v5900, %v5897
  %v5947 = vpack.c.bf16 %v5908, %v5905
  %v5948 = vpack.c.bf16 %v5916, %v5913
  %v5949 = vpack.c.bf16 %v5924, %v5921
  %v5950 = vpack.c.bf16 %v5932, %v5929
  %v5951 = vpack.c.bf16 %v5940, %v5937
  %s5952 = scalar_lea.vmem %s12, 1728
  %v5953 = vld [vmem:[%s5952] sm:$0xf]
  %v5954 = vld [vmem:[%s5952 + $0x4] sm:$0xf]
  %v5955 = vld [vmem:[%s5952 + $0x8] sm:$0xf]
  %v5956 = vld [vmem:[%s5952 + $0xc] sm:$0xf]
  %v5957 = vld [vmem:[%s5952 + $0x10] sm:$0xf]
  %v5958 = vld [vmem:[%s5952 + $0x14] sm:$0xf]
  %v5959 = vld [vmem:[%s5952 + $0x18] sm:$0xf]
  %v5960 = vld [vmem:[%s5952 + $0x1c] sm:$0xf]
  %v5961 = vld [vmem:[%s5952 + $0x20] sm:$0xf]
  %v5962 = vld [vmem:[%s5952 + $0x24] sm:$0xf]
  %v5963 = vld [vmem:[%s5952 + $0x28] sm:$0xf]
  %v5964 = vld [vmem:[%s5952 + $0x2c] sm:$0xf]
  %v5965 = vld [vmem:[%s5952 + $0x30] sm:$0xf]
  %v5966 = vld [vmem:[%s5952 + $0x34] sm:$0xf]
  %v5967 = vld [vmem:[%s5952 + $0x38] sm:$0xf]
  %v5968 = vld [vmem:[%s5952 + $0x3c] sm:$0xf]
  %s5969 = scalar_lea.vmem %s12, 1792
  %v5970 = vld [vmem:[%s5969] sm:$0xf]
  %v5971 = vld [vmem:[%s5969 + $0x4] sm:$0xf]
  %v5972 = vld [vmem:[%s5969 + $0x8] sm:$0xf]
  %v5973 = vld [vmem:[%s5969 + $0xc] sm:$0xf]
  %v5974 = vld [vmem:[%s5969 + $0x10] sm:$0xf]
  %v5975 = vld [vmem:[%s5969 + $0x14] sm:$0xf]
  %v5976 = vld [vmem:[%s5969 + $0x18] sm:$0xf]
  %v5977 = vld [vmem:[%s5969 + $0x1c] sm:$0xf]
  %v5978 = vld [vmem:[%s5969 + $0x20] sm:$0xf]
  %v5979 = vld [vmem:[%s5969 + $0x24] sm:$0xf]
  %v5980 = vld [vmem:[%s5969 + $0x28] sm:$0xf]
  %v5981 = vld [vmem:[%s5969 + $0x2c] sm:$0xf]
  %v5982 = vld [vmem:[%s5969 + $0x30] sm:$0xf]
  %v5983 = vld [vmem:[%s5969 + $0x34] sm:$0xf]
  %v5984 = vld [vmem:[%s5969 + $0x38] sm:$0xf]
  %v5985 = vld [vmem:[%s5969 + $0x3c] sm:$0xf]
  %v6002 = vunpack.c.l.b16 %v5970
  %v6003 = vunpack.c.l.b16 %v5971
  %v6004 = vunpack.c.l.b16 %v5972
  %v6005 = vunpack.c.l.b16 %v5973
  %v6006 = vunpack.c.l.b16 %v5974
  %v6007 = vunpack.c.l.b16 %v5975
  %v6008 = vunpack.c.l.b16 %v5976
  %v6009 = vunpack.c.l.b16 %v5977
  %v6010 = vunpack.c.l.b16 %v5978
  %v6011 = vunpack.c.l.b16 %v5979
  %v6012 = vunpack.c.l.b16 %v5980
  %v6013 = vunpack.c.l.b16 %v5981
  %v6014 = vunpack.c.l.b16 %v5982
  %v6015 = vunpack.c.l.b16 %v5983
  %v6016 = vunpack.c.l.b16 %v5984
  %v6017 = vunpack.c.l.b16 %v5985
  %v6018 = vpack.c.b16 %v6003, %v6002
  %v6019 = vpack.c.b16 %v6005, %v6004
  %v6020 = vpack.c.b16 %v6007, %v6006
  %v6021 = vpack.c.b16 %v6009, %v6008
  %v6022 = vpack.c.b16 %v6011, %v6010
  %v6023 = vpack.c.b16 %v6013, %v6012
  %v6024 = vpack.c.b16 %v6015, %v6014
  %v6025 = vpack.c.b16 %v6017, %v6016
  %6034 = vmatprep.subr.bf16.mxu0 0
  %6035 = vmatpush1.bf16.msra.mxu0 %v6018
  %6036 = vmatprep.subr.bf16.mxu0 0
  %6037 = vmatpush1.bf16.msra.mxu0 %v6019
  %6038 = vmatprep.subr.bf16.mxu0 0
  %6039 = vmatpush1.bf16.msra.mxu0 %v6020
  %6040 = vmatprep.subr.bf16.mxu0 0
  %6041 = vmatpush1.bf16.msra.mxu0 %v6021
  %6042 = vmatprep.subr.bf16.mxu0 0
  %6043 = vmatpush1.bf16.msra.mxu0 %v6022
  %6044 = vmatprep.subr.bf16.mxu0 0
  %6045 = vmatpush1.bf16.msra.mxu0 %v6023
  %6046 = vmatprep.subr.bf16.mxu0 0
  %6047 = vmatpush1.bf16.msra.mxu0 %v6024
  %6048 = vmatprep.subr.bf16.mxu0 0
  %6049 = vmatpush1.bf16.msra.mxu0 %v6025
  %6050 = vmatprep.subr.bf16.mxu0 0
  %6051 = vmatpush1.bf16.msra.mxu0 0
  %6052 = vmatprep.subr.bf16.mxu0 0
  %6053 = vmatpush1.bf16.msra.mxu0 0
  %6054 = vmatprep.subr.bf16.mxu0 0
  %6055 = vmatpush1.bf16.msra.mxu0 0
  %6056 = vmatprep.subr.bf16.mxu0 0
  %6057 = vmatpush1.bf16.msra.mxu0 0
  %6058 = vmatprep.subr.bf16.mxu0 0
  %6059 = vmatpush1.bf16.msra.mxu0 0
  %6060 = vmatprep.subr.bf16.mxu0 0
  %6061 = vmatpush1.bf16.msra.mxu0 0
  %6062 = vmatprep.subr.bf16.mxu0 0
  %6063 = vmatpush1.bf16.msra.mxu0 0
  %6064 = vmatprep.subr.bf16.mxu0 0
  %6065 = vmatpush1.bf16.msra.mxu0 0
  %6066 = vmatprep.mubr.bf16.mxu0 0
  %6067 = vmatmul.mubr.bf16.gmra.mrb[0].mxu0 %v5944
  %v6068 = vpop.f32.mrb[0].mxu0
  %v6069 = vadd.f32 0.0, %v6068
  %v6070 = vpop.f32.mrb[0].mxu0
  %v6071 = vpop.f32.mrb[0].mxu0
  %v6072 = vadd.f32 0.0, %v6071
  %v6073 = vpop.f32.mrb[0].mxu0
  %6074 = vdwg.mxu0
  %v6091 = vunpack.c.l.b16 %v5953
  %v6092 = vunpack.c.l.b16 %v5954
  %v6093 = vunpack.c.l.b16 %v5955
  %v6094 = vunpack.c.l.b16 %v5956
  %v6095 = vunpack.c.l.b16 %v5957
  %v6096 = vunpack.c.l.b16 %v5958
  %v6097 = vunpack.c.l.b16 %v5959
  %v6098 = vunpack.c.l.b16 %v5960
  %v6099 = vunpack.c.l.b16 %v5961
  %v6100 = vunpack.c.l.b16 %v5962
  %v6101 = vunpack.c.l.b16 %v5963
  %v6102 = vunpack.c.l.b16 %v5964
  %v6103 = vunpack.c.l.b16 %v5965
  %v6104 = vunpack.c.l.b16 %v5966
  %v6105 = vunpack.c.l.b16 %v5967
  %v6106 = vunpack.c.l.b16 %v5968
  %v6107 = vpack.c.b16 %v6092, %v6091
  %v6108 = vpack.c.b16 %v6094, %v6093
  %v6109 = vpack.c.b16 %v6096, %v6095
  %v6110 = vpack.c.b16 %v6098, %v6097
  %v6111 = vpack.c.b16 %v6100, %v6099
  %v6112 = vpack.c.b16 %v6102, %v6101
  %v6113 = vpack.c.b16 %v6104, %v6103
  %v6114 = vpack.c.b16 %v6106, %v6105
  %6123 = vmatprep.subr.bf16.mxu0 0
  %6124 = vmatpush1.bf16.msra.mxu0 %v6107
  %6125 = vmatprep.subr.bf16.mxu0 0
  %6126 = vmatpush1.bf16.msra.mxu0 %v6108
  %6127 = vmatprep.subr.bf16.mxu0 0
  %6128 = vmatpush1.bf16.msra.mxu0 %v6109
  %6129 = vmatprep.subr.bf16.mxu0 0
  %6130 = vmatpush1.bf16.msra.mxu0 %v6110
  %6131 = vmatprep.subr.bf16.mxu0 0
  %6132 = vmatpush1.bf16.msra.mxu0 %v6111
  %6133 = vmatprep.subr.bf16.mxu0 0
  %6134 = vmatpush1.bf16.msra.mxu0 %v6112
  %6135 = vmatprep.subr.bf16.mxu0 0
  %6136 = vmatpush1.bf16.msra.mxu0 %v6113
  %6137 = vmatprep.subr.bf16.mxu0 0
  %6138 = vmatpush1.bf16.msra.mxu0 %v6114
  %6139 = vmatprep.subr.bf16.mxu0 0
  %6140 = vmatpush1.bf16.msra.mxu0 0
  %6141 = vmatprep.subr.bf16.mxu0 0
  %6142 = vmatpush1.bf16.msra.mxu0 0
  %6143 = vmatprep.subr.bf16.mxu0 0
  %6144 = vmatpush1.bf16.msra.mxu0 0
  %6145 = vmatprep.subr.bf16.mxu0 0
  %6146 = vmatpush1.bf16.msra.mxu0 0
  %6147 = vmatprep.subr.bf16.mxu0 0
  %6148 = vmatpush1.bf16.msra.mxu0 0
  %6149 = vmatprep.subr.bf16.mxu0 0
  %6150 = vmatpush1.bf16.msra.mxu0 0
  %6151 = vmatprep.subr.bf16.mxu0 0
  %6152 = vmatpush1.bf16.msra.mxu0 0
  %6153 = vmatprep.subr.bf16.mxu0 0
  %6154 = vmatpush1.bf16.msra.mxu0 0
  %6155 = vmatprep.mubr.bf16.mxu0 0
  %6156 = vmatmul.mubr.bf16.gmra.mrb[0].mxu0 %v5943
  %v6157 = vpop.f32.mrb[0].mxu0
  %v6158 = vadd.f32 %v6069, %v6157
  %v6159 = vpop.f32.mrb[0].mxu0
  %v6160 = vpop.f32.mrb[0].mxu0
  %v6161 = vadd.f32 %v6072, %v6160
  %v6162 = vpop.f32.mrb[0].mxu0
  %6163 = vdwg.mxu0
  %s6164 = scalar_lea.vmem %s12, 1856
  %v6165 = vld [vmem:[%s6164] sm:$0xf]
  %v6166 = vld [vmem:[%s6164 + $0x4] sm:$0xf]
  %v6167 = vld [vmem:[%s6164 + $0x8] sm:$0xf]
  %v6168 = vld [vmem:[%s6164 + $0xc] sm:$0xf]
  %v6169 = vld [vmem:[%s6164 + $0x10] sm:$0xf]
  %v6170 = vld [vmem:[%s6164 + $0x14] sm:$0xf]
  %v6171 = vld [vmem:[%s6164 + $0x18] sm:$0xf]
  %v6172 = vld [vmem:[%s6164 + $0x1c] sm:$0xf]
  %v6173 = vld [vmem:[%s6164 + $0x20] sm:$0xf]
  %v6174 = vld [vmem:[%s6164 + $0x24] sm:$0xf]
  %v6175 = vld [vmem:[%s6164 + $0x28] sm:$0xf]
  %v6176 = vld [vmem:[%s6164 + $0x2c] sm:$0xf]
  %v6177 = vld [vmem:[%s6164 + $0x30] sm:$0xf]
  %v6178 = vld [vmem:[%s6164 + $0x34] sm:$0xf]
  %v6179 = vld [vmem:[%s6164 + $0x38] sm:$0xf]
  %v6180 = vld [vmem:[%s6164 + $0x3c] sm:$0xf]
  %v6197 = vunpack.c.l.b16 %v6165
  %v6198 = vunpack.c.l.b16 %v6166
  %v6199 = vunpack.c.l.b16 %v6167
  %v6200 = vunpack.c.l.b16 %v6168
  %v6201 = vunpack.c.l.b16 %v6169
  %v6202 = vunpack.c.l.b16 %v6170
  %v6203 = vunpack.c.l.b16 %v6171
  %v6204 = vunpack.c.l.b16 %v6172
  %v6205 = vunpack.c.l.b16 %v6173
  %v6206 = vunpack.c.l.b16 %v6174
  %v6207 = vunpack.c.l.b16 %v6175
  %v6208 = vunpack.c.l.b16 %v6176
  %v6209 = vunpack.c.l.b16 %v6177
  %v6210 = vunpack.c.l.b16 %v6178
  %v6211 = vunpack.c.l.b16 %v6179
  %v6212 = vunpack.c.l.b16 %v6180
  %v6213 = vpack.c.b16 %v6198, %v6197
  %v6214 = vpack.c.b16 %v6200, %v6199
  %v6215 = vpack.c.b16 %v6202, %v6201
  %v6216 = vpack.c.b16 %v6204, %v6203
  %v6217 = vpack.c.b16 %v6206, %v6205
  %v6218 = vpack.c.b16 %v6208, %v6207
  %v6219 = vpack.c.b16 %v6210, %v6209
  %v6220 = vpack.c.b16 %v6212, %v6211
  %6229 = vmatprep.subr.bf16.mxu0 0
  %6230 = vmatpush1.bf16.msra.mxu0 %v6213
  %6231 = vmatprep.subr.bf16.mxu0 0
  %6232 = vmatpush1.bf16.msra.mxu0 %v6214
  %6233 = vmatprep.subr.bf16.mxu0 0
  %6234 = vmatpush1.bf16.msra.mxu0 %v6215
  %6235 = vmatprep.subr.bf16.mxu0 0
  %6236 = vmatpush1.bf16.msra.mxu0 %v6216
  %6237 = vmatprep.subr.bf16.mxu0 0
  %6238 = vmatpush1.bf16.msra.mxu0 %v6217
  %6239 = vmatprep.subr.bf16.mxu0 0
  %6240 = vmatpush1.bf16.msra.mxu0 %v6218
  %6241 = vmatprep.subr.bf16.mxu0 0
  %6242 = vmatpush1.bf16.msra.mxu0 %v6219
  %6243 = vmatprep.subr.bf16.mxu0 0
  %6244 = vmatpush1.bf16.msra.mxu0 %v6220
  %6245 = vmatprep.subr.bf16.mxu0 0
  %6246 = vmatpush1.bf16.msra.mxu0 0
  %6247 = vmatprep.subr.bf16.mxu0 0
  %6248 = vmatpush1.bf16.msra.mxu0 0
  %6249 = vmatprep.subr.bf16.mxu0 0
  %6250 = vmatpush1.bf16.msra.mxu0 0
  %6251 = vmatprep.subr.bf16.mxu0 0
  %6252 = vmatpush1.bf16.msra.mxu0 0
  %6253 = vmatprep.subr.bf16.mxu0 0
  %6254 = vmatpush1.bf16.msra.mxu0 0
  %6255 = vmatprep.subr.bf16.mxu0 0
  %6256 = vmatpush1.bf16.msra.mxu0 0
  %6257 = vmatprep.subr.bf16.mxu0 0
  %6258 = vmatpush1.bf16.msra.mxu0 0
  %6259 = vmatprep.subr.bf16.mxu0 0
  %6260 = vmatpush1.bf16.msra.mxu0 0
  %6261 = vmatprep.mubr.bf16.mxu0 0
  %6262 = vmatmul.mubr.bf16.gmra.mrb[0].mxu0 %v5945
  %v6263 = vpop.f32.mrb[0].mxu0
  %v6264 = vadd.f32 0.0, %v6263
  %v6265 = vpop.f32.mrb[0].mxu0
  %v6266 = vpop.f32.mrb[0].mxu0
  %v6267 = vadd.f32 0.0, %v6266
  %v6268 = vpop.f32.mrb[0].mxu0
  %6269 = vdwg.mxu0
  %v6270 = vadd.f32 %v6158, %v6264
  %v6271 = vadd.f32 %v6161, %v6267
  %s6272 = scalar_lea.vmem %s12, 1920
  %v6273 = vld [vmem:[%s6272] sm:$0xf]
  %v6274 = vld [vmem:[%s6272 + $0x4] sm:$0xf]
  %v6275 = vld [vmem:[%s6272 + $0x8] sm:$0xf]
  %v6276 = vld [vmem:[%s6272 + $0xc] sm:$0xf]
  %v6277 = vld [vmem:[%s6272 + $0x10] sm:$0xf]
  %v6278 = vld [vmem:[%s6272 + $0x14] sm:$0xf]
  %v6279 = vld [vmem:[%s6272 + $0x18] sm:$0xf]
  %v6280 = vld [vmem:[%s6272 + $0x1c] sm:$0xf]
  %v6281 = vld [vmem:[%s6272 + $0x20] sm:$0xf]
  %v6282 = vld [vmem:[%s6272 + $0x24] sm:$0xf]
  %v6283 = vld [vmem:[%s6272 + $0x28] sm:$0xf]
  %v6284 = vld [vmem:[%s6272 + $0x2c] sm:$0xf]
  %v6285 = vld [vmem:[%s6272 + $0x30] sm:$0xf]
  %v6286 = vld [vmem:[%s6272 + $0x34] sm:$0xf]
  %v6287 = vld [vmem:[%s6272 + $0x38] sm:$0xf]
  %v6288 = vld [vmem:[%s6272 + $0x3c] sm:$0xf]
  %v6305 = vunpack.c.l.b16 %v6273
  %v6306 = vunpack.c.l.b16 %v6274
  %v6307 = vunpack.c.l.b16 %v6275
  %v6308 = vunpack.c.l.b16 %v6276
  %v6309 = vunpack.c.l.b16 %v6277
  %v6310 = vunpack.c.l.b16 %v6278
  %v6311 = vunpack.c.l.b16 %v6279
  %v6312 = vunpack.c.l.b16 %v6280
  %v6313 = vunpack.c.l.b16 %v6281
  %v6314 = vunpack.c.l.b16 %v6282
  %v6315 = vunpack.c.l.b16 %v6283
  %v6316 = vunpack.c.l.b16 %v6284
  %v6317 = vunpack.c.l.b16 %v6285
  %v6318 = vunpack.c.l.b16 %v6286
  %v6319 = vunpack.c.l.b16 %v6287
  %v6320 = vunpack.c.l.b16 %v6288
  %v6321 = vpack.c.b16 %v6306, %v6305
  %v6322 = vpack.c.b16 %v6308, %v6307
  %v6323 = vpack.c.b16 %v6310, %v6309
  %v6324 = vpack.c.b16 %v6312, %v6311
  %v6325 = vpack.c.b16 %v6314, %v6313
  %v6326 = vpack.c.b16 %v6316, %v6315
  %v6327 = vpack.c.b16 %v6318, %v6317
  %v6328 = vpack.c.b16 %v6320, %v6319
  %6337 = vmatprep.subr.bf16.mxu0 0
  %6338 = vmatpush1.bf16.msra.mxu0 %v6321
  %6339 = vmatprep.subr.bf16.mxu0 0
  %6340 = vmatpush1.bf16.msra.mxu0 %v6322
  %6341 = vmatprep.subr.bf16.mxu0 0
  %6342 = vmatpush1.bf16.msra.mxu0 %v6323
  %6343 = vmatprep.subr.bf16.mxu0 0
  %6344 = vmatpush1.bf16.msra.mxu0 %v6324
  %6345 = vmatprep.subr.bf16.mxu0 0
  %6346 = vmatpush1.bf16.msra.mxu0 %v6325
  %6347 = vmatprep.subr.bf16.mxu0 0
  %6348 = vmatpush1.bf16.msra.mxu0 %v6326
  %6349 = vmatprep.subr.bf16.mxu0 0
  %6350 = vmatpush1.bf16.msra.mxu0 %v6327
  %6351 = vmatprep.subr.bf16.mxu0 0
  %6352 = vmatpush1.bf16.msra.mxu0 %v6328
  %6353 = vmatprep.subr.bf16.mxu0 0
  %6354 = vmatpush1.bf16.msra.mxu0 0
  %6355 = vmatprep.subr.bf16.mxu0 0
  %6356 = vmatpush1.bf16.msra.mxu0 0
  %6357 = vmatprep.subr.bf16.mxu0 0
  %6358 = vmatpush1.bf16.msra.mxu0 0
  %6359 = vmatprep.subr.bf16.mxu0 0
  %6360 = vmatpush1.bf16.msra.mxu0 0
  %6361 = vmatprep.subr.bf16.mxu0 0
  %6362 = vmatpush1.bf16.msra.mxu0 0
  %6363 = vmatprep.subr.bf16.mxu0 0
  %6364 = vmatpush1.bf16.msra.mxu0 0
  %6365 = vmatprep.subr.bf16.mxu0 0
  %6366 = vmatpush1.bf16.msra.mxu0 0
  %6367 = vmatprep.subr.bf16.mxu0 0
  %6368 = vmatpush1.bf16.msra.mxu0 0
  %6369 = vmatprep.mubr.bf16.mxu0 0
  %6370 = vmatmul.mubr.bf16.gmra.mrb[0].mxu0 %v5946
  %v6371 = vpop.f32.mrb[0].mxu0
  %v6372 = vadd.f32 0.0, %v6371
  %v6373 = vpop.f32.mrb[0].mxu0
  %v6374 = vpop.f32.mrb[0].mxu0
  %v6375 = vadd.f32 0.0, %v6374
  %v6376 = vpop.f32.mrb[0].mxu0
  %6377 = vdwg.mxu0
  %v6378 = vadd.f32 %v6270, %v6372
  %v6379 = vadd.f32 %v6271, %v6375
  %s6380 = scalar_lea.vmem %s12, 1984
  %v6381 = vld [vmem:[%s6380] sm:$0xf]
  %v6382 = vld [vmem:[%s6380 + $0x4] sm:$0xf]
  %v6383 = vld [vmem:[%s6380 + $0x8] sm:$0xf]
  %v6384 = vld [vmem:[%s6380 + $0xc] sm:$0xf]
  %v6385 = vld [vmem:[%s6380 + $0x10] sm:$0xf]
  %v6386 = vld [vmem:[%s6380 + $0x14] sm:$0xf]
  %v6387 = vld [vmem:[%s6380 + $0x18] sm:$0xf]
  %v6388 = vld [vmem:[%s6380 + $0x1c] sm:$0xf]
  %v6389 = vld [vmem:[%s6380 + $0x20] sm:$0xf]
  %v6390 = vld [vmem:[%s6380 + $0x24] sm:$0xf]
  %v6391 = vld [vmem:[%s6380 + $0x28] sm:$0xf]
  %v6392 = vld [vmem:[%s6380 + $0x2c] sm:$0xf]
  %v6393 = vld [vmem:[%s6380 + $0x30] sm:$0xf]
  %v6394 = vld [vmem:[%s6380 + $0x34] sm:$0xf]
  %v6395 = vld [vmem:[%s6380 + $0x38] sm:$0xf]
  %v6396 = vld [vmem:[%s6380 + $0x3c] sm:$0xf]
  %v6413 = vunpack.c.l.b16 %v6381
  %v6414 = vunpack.c.l.b16 %v6382
  %v6415 = vunpack.c.l.b16 %v6383
  %v6416 = vunpack.c.l.b16 %v6384
  %v6417 = vunpack.c.l.b16 %v6385
  %v6418 = vunpack.c.l.b16 %v6386
  %v6419 = vunpack.c.l.b16 %v6387
  %v6420 = vunpack.c.l.b16 %v6388
  %v6421 = vunpack.c.l.b16 %v6389
  %v6422 = vunpack.c.l.b16 %v6390
  %v6423 = vunpack.c.l.b16 %v6391
  %v6424 = vunpack.c.l.b16 %v6392
  %v6425 = vunpack.c.l.b16 %v6393
  %v6426 = vunpack.c.l.b16 %v6394
  %v6427 = vunpack.c.l.b16 %v6395
  %v6428 = vunpack.c.l.b16 %v6396
  %v6429 = vpack.c.b16 %v6414, %v6413
  %v6430 = vpack.c.b16 %v6416, %v6415
  %v6431 = vpack.c.b16 %v6418, %v6417
  %v6432 = vpack.c.b16 %v6420, %v6419
  %v6433 = vpack.c.b16 %v6422, %v6421
  %v6434 = vpack.c.b16 %v6424, %v6423
  %v6435 = vpack.c.b16 %v6426, %v6425
  %v6436 = vpack.c.b16 %v6428, %v6427
  %6445 = vmatprep.subr.bf16.mxu0 0
  %6446 = vmatpush1.bf16.msra.mxu0 %v6429
  %6447 = vmatprep.subr.bf16.mxu0 0
  %6448 = vmatpush1.bf16.msra.mxu0 %v6430
  %6449 = vmatprep.subr.bf16.mxu0 0
  %6450 = vmatpush1.bf16.msra.mxu0 %v6431
  %6451 = vmatprep.subr.bf16.mxu0 0
  %6452 = vmatpush1.bf16.msra.mxu0 %v6432
  %6453 = vmatprep.subr.bf16.mxu0 0
  %6454 = vmatpush1.bf16.msra.mxu0 %v6433
  %6455 = vmatprep.subr.bf16.mxu0 0
  %6456 = vmatpush1.bf16.msra.mxu0 %v6434
  %6457 = vmatprep.subr.bf16.mxu0 0
  %6458 = vmatpush1.bf16.msra.mxu0 %v6435
  %6459 = vmatprep.subr.bf16.mxu0 0
  %6460 = vmatpush1.bf16.msra.mxu0 %v6436
  %6461 = vmatprep.subr.bf16.mxu0 0
  %6462 = vmatpush1.bf16.msra.mxu0 0
  %6463 = vmatprep.subr.bf16.mxu0 0
  %6464 = vmatpush1.bf16.msra.mxu0 0
  %6465 = vmatprep.subr.bf16.mxu0 0
  %6466 = vmatpush1.bf16.msra.mxu0 0
  %6467 = vmatprep.subr.bf16.mxu0 0
  %6468 = vmatpush1.bf16.msra.mxu0 0
  %6469 = vmatprep.subr.bf16.mxu0 0
  %6470 = vmatpush1.bf16.msra.mxu0 0
  %6471 = vmatprep.subr.bf16.mxu0 0
  %6472 = vmatpush1.bf16.msra.mxu0 0
  %6473 = vmatprep.subr.bf16.mxu0 0
  %6474 = vmatpush1.bf16.msra.mxu0 0
  %6475 = vmatprep.subr.bf16.mxu0 0
  %6476 = vmatpush1.bf16.msra.mxu0 0
  %6477 = vmatprep.mubr.bf16.mxu0 0
  %6478 = vmatmul.mubr.bf16.gmra.mrb[0].mxu0 %v5947
  %v6479 = vpop.f32.mrb[0].mxu0
  %v6480 = vadd.f32 0.0, %v6479
  %v6481 = vpop.f32.mrb[0].mxu0
  %v6482 = vpop.f32.mrb[0].mxu0
  %v6483 = vadd.f32 0.0, %v6482
  %v6484 = vpop.f32.mrb[0].mxu0
  %6485 = vdwg.mxu0
  %v6486 = vadd.f32 %v6378, %v6480
  %v6487 = vadd.f32 %v6379, %v6483
  %s6488 = scalar_lea.vmem %s12, 2048
  %v6489 = vld [vmem:[%s6488] sm:$0xf]
  %v6490 = vld [vmem:[%s6488 + $0x4] sm:$0xf]
  %v6491 = vld [vmem:[%s6488 + $0x8] sm:$0xf]
  %v6492 = vld [vmem:[%s6488 + $0xc] sm:$0xf]
  %v6493 = vld [vmem:[%s6488 + $0x10] sm:$0xf]
  %v6494 = vld [vmem:[%s6488 + $0x14] sm:$0xf]
  %v6495 = vld [vmem:[%s6488 + $0x18] sm:$0xf]
  %v6496 = vld [vmem:[%s6488 + $0x1c] sm:$0xf]
  %v6497 = vld [vmem:[%s6488 + $0x20] sm:$0xf]
  %v6498 = vld [vmem:[%s6488 + $0x24] sm:$0xf]
  %v6499 = vld [vmem:[%s6488 + $0x28] sm:$0xf]
  %v6500 = vld [vmem:[%s6488 + $0x2c] sm:$0xf]
  %v6501 = vld [vmem:[%s6488 + $0x30] sm:$0xf]
  %v6502 = vld [vmem:[%s6488 + $0x34] sm:$0xf]
  %v6503 = vld [vmem:[%s6488 + $0x38] sm:$0xf]
  %v6504 = vld [vmem:[%s6488 + $0x3c] sm:$0xf]
  %v6521 = vunpack.c.l.b16 %v6489
  %v6522 = vunpack.c.l.b16 %v6490
  %v6523 = vunpack.c.l.b16 %v6491
  %v6524 = vunpack.c.l.b16 %v6492
  %v6525 = vunpack.c.l.b16 %v6493
  %v6526 = vunpack.c.l.b16 %v6494
  %v6527 = vunpack.c.l.b16 %v6495
  %v6528 = vunpack.c.l.b16 %v6496
  %v6529 = vunpack.c.l.b16 %v6497
  %v6530 = vunpack.c.l.b16 %v6498
  %v6531 = vunpack.c.l.b16 %v6499
  %v6532 = vunpack.c.l.b16 %v6500
  %v6533 = vunpack.c.l.b16 %v6501
  %v6534 = vunpack.c.l.b16 %v6502
  %v6535 = vunpack.c.l.b16 %v6503
  %v6536 = vunpack.c.l.b16 %v6504
  %v6537 = vpack.c.b16 %v6522, %v6521
  %v6538 = vpack.c.b16 %v6524, %v6523
  %v6539 = vpack.c.b16 %v6526, %v6525
  %v6540 = vpack.c.b16 %v6528, %v6527
  %v6541 = vpack.c.b16 %v6530, %v6529
  %v6542 = vpack.c.b16 %v6532, %v6531
  %v6543 = vpack.c.b16 %v6534, %v6533
  %v6544 = vpack.c.b16 %v6536, %v6535
  %6553 = vmatprep.subr.bf16.mxu0 0
  %6554 = vmatpush1.bf16.msra.mxu0 %v6537
  %6555 = vmatprep.subr.bf16.mxu0 0
  %6556 = vmatpush1.bf16.msra.mxu0 %v6538
  %6557 = vmatprep.subr.bf16.mxu0 0
  %6558 = vmatpush1.bf16.msra.mxu0 %v6539
  %6559 = vmatprep.subr.bf16.mxu0 0
  %6560 = vmatpush1.bf16.msra.mxu0 %v6540
  %6561 = vmatprep.subr.bf16.mxu0 0
  %6562 = vmatpush1.bf16.msra.mxu0 %v6541
  %6563 = vmatprep.subr.bf16.mxu0 0
  %6564 = vmatpush1.bf16.msra.mxu0 %v6542
  %6565 = vmatprep.subr.bf16.mxu0 0
  %6566 = vmatpush1.bf16.msra.mxu0 %v6543
  %6567 = vmatprep.subr.bf16.mxu0 0
  %6568 = vmatpush1.bf16.msra.mxu0 %v6544
  %6569 = vmatprep.subr.bf16.mxu0 0
  %6570 = vmatpush1.bf16.msra.mxu0 0
  %6571 = vmatprep.subr.bf16.mxu0 0
  %6572 = vmatpush1.bf16.msra.mxu0 0
  %6573 = vmatprep.subr.bf16.mxu0 0
  %6574 = vmatpush1.bf16.msra.mxu0 0
  %6575 = vmatprep.subr.bf16.mxu0 0
  %6576 = vmatpush1.bf16.msra.mxu0 0
  %6577 = vmatprep.subr.bf16.mxu0 0
  %6578 = vmatpush1.bf16.msra.mxu0 0
  %6579 = vmatprep.subr.bf16.mxu0 0
  %6580 = vmatpush1.bf16.msra.mxu0 0
  %6581 = vmatprep.subr.bf16.mxu0 0
  %6582 = vmatpush1.bf16.msra.mxu0 0
  %6583 = vmatprep.subr.bf16.mxu0 0
  %6584 = vmatpush1.bf16.msra.mxu0 0
  %6585 = vmatprep.mubr.bf16.mxu0 0
  %6586 = vmatmul.mubr.bf16.gmra.mrb[0].mxu0 %v5948
  %v6587 = vpop.f32.mrb[0].mxu0
  %v6588 = vadd.f32 0.0, %v6587
  %v6589 = vpop.f32.mrb[0].mxu0
  %v6590 = vpop.f32.mrb[0].mxu0
  %v6591 = vadd.f32 0.0, %v6590
  %v6592 = vpop.f32.mrb[0].mxu0
  %6593 = vdwg.mxu0
  %v6594 = vadd.f32 %v6486, %v6588
  %v6595 = vadd.f32 %v6487, %v6591
  %s6596 = scalar_lea.vmem %s12, 2112
  %v6597 = vld [vmem:[%s6596] sm:$0xf]
  %v6598 = vld [vmem:[%s6596 + $0x4] sm:$0xf]
  %v6599 = vld [vmem:[%s6596 + $0x8] sm:$0xf]
  %v6600 = vld [vmem:[%s6596 + $0xc] sm:$0xf]
  %v6601 = vld [vmem:[%s6596 + $0x10] sm:$0xf]
  %v6602 = vld [vmem:[%s6596 + $0x14] sm:$0xf]
  %v6603 = vld [vmem:[%s6596 + $0x18] sm:$0xf]
  %v6604 = vld [vmem:[%s6596 + $0x1c] sm:$0xf]
  %v6605 = vld [vmem:[%s6596 + $0x20] sm:$0xf]
  %v6606 = vld [vmem:[%s6596 + $0x24] sm:$0xf]
  %v6607 = vld [vmem:[%s6596 + $0x28] sm:$0xf]
  %v6608 = vld [vmem:[%s6596 + $0x2c] sm:$0xf]
  %v6609 = vld [vmem:[%s6596 + $0x30] sm:$0xf]
  %v6610 = vld [vmem:[%s6596 + $0x34] sm:$0xf]
  %v6611 = vld [vmem:[%s6596 + $0x38] sm:$0xf]
  %v6612 = vld [vmem:[%s6596 + $0x3c] sm:$0xf]
  %v6629 = vunpack.c.l.b16 %v6597
  %v6630 = vunpack.c.l.b16 %v6598
  %v6631 = vunpack.c.l.b16 %v6599
  %v6632 = vunpack.c.l.b16 %v6600
  %v6633 = vunpack.c.l.b16 %v6601
  %v6634 = vunpack.c.l.b16 %v6602
  %v6635 = vunpack.c.l.b16 %v6603
  %v6636 = vunpack.c.l.b16 %v6604
  %v6637 = vunpack.c.l.b16 %v6605
  %v6638 = vunpack.c.l.b16 %v6606
  %v6639 = vunpack.c.l.b16 %v6607
  %v6640 = vunpack.c.l.b16 %v6608
  %v6641 = vunpack.c.l.b16 %v6609
  %v6642 = vunpack.c.l.b16 %v6610
  %v6643 = vunpack.c.l.b16 %v6611
  %v6644 = vunpack.c.l.b16 %v6612
  %v6645 = vpack.c.b16 %v6630, %v6629
  %v6646 = vpack.c.b16 %v6632, %v6631
  %v6647 = vpack.c.b16 %v6634, %v6633
  %v6648 = vpack.c.b16 %v6636, %v6635
  %v6649 = vpack.c.b16 %v6638, %v6637
  %v6650 = vpack.c.b16 %v6640, %v6639
  %v6651 = vpack.c.b16 %v6642, %v6641
  %v6652 = vpack.c.b16 %v6644, %v6643
  %6661 = vmatprep.subr.bf16.mxu0 0
  %6662 = vmatpush1.bf16.msra.mxu0 %v6645
  %6663 = vmatprep.subr.bf16.mxu0 0
  %6664 = vmatpush1.bf16.msra.mxu0 %v6646
  %6665 = vmatprep.subr.bf16.mxu0 0
  %6666 = vmatpush1.bf16.msra.mxu0 %v6647
  %6667 = vmatprep.subr.bf16.mxu0 0
  %6668 = vmatpush1.bf16.msra.mxu0 %v6648
  %6669 = vmatprep.subr.bf16.mxu0 0
  %6670 = vmatpush1.bf16.msra.mxu0 %v6649
  %6671 = vmatprep.subr.bf16.mxu0 0
  %6672 = vmatpush1.bf16.msra.mxu0 %v6650
  %6673 = vmatprep.subr.bf16.mxu0 0
  %6674 = vmatpush1.bf16.msra.mxu0 %v6651
  %6675 = vmatprep.subr.bf16.mxu0 0
  %6676 = vmatpush1.bf16.msra.mxu0 %v6652
  %6677 = vmatprep.subr.bf16.mxu0 0
  %6678 = vmatpush1.bf16.msra.mxu0 0
  %6679 = vmatprep.subr.bf16.mxu0 0
  %6680 = vmatpush1.bf16.msra.mxu0 0
  %6681 = vmatprep.subr.bf16.mxu0 0
  %6682 = vmatpush1.bf16.msra.mxu0 0
  %6683 = vmatprep.subr.bf16.mxu0 0
  %6684 = vmatpush1.bf16.msra.mxu0 0
  %6685 = vmatprep.subr.bf16.mxu0 0
  %6686 = vmatpush1.bf16.msra.mxu0 0
  %6687 = vmatprep.subr.bf16.mxu0 0
  %6688 = vmatpush1.bf16.msra.mxu0 0
  %6689 = vmatprep.subr.bf16.mxu0 0
  %6690 = vmatpush1.bf16.msra.mxu0 0
  %6691 = vmatprep.subr.bf16.mxu0 0
  %6692 = vmatpush1.bf16.msra.mxu0 0
  %6693 = vmatprep.mubr.bf16.mxu0 0
  %6694 = vmatmul.mubr.bf16.gmra.mrb[0].mxu0 %v5949
  %v6695 = vpop.f32.mrb[0].mxu0
  %v6696 = vadd.f32 0.0, %v6695
  %v6697 = vpop.f32.mrb[0].mxu0
  %v6698 = vpop.f32.mrb[0].mxu0
  %v6699 = vadd.f32 0.0, %v6698
  %v6700 = vpop.f32.mrb[0].mxu0
  %6701 = vdwg.mxu0
  %v6702 = vadd.f32 %v6594, %v6696
  %v6703 = vadd.f32 %v6595, %v6699
  %s6704 = scalar_lea.vmem %s12, 2176
  %v6705 = vld [vmem:[%s6704] sm:$0xf]
  %v6706 = vld [vmem:[%s6704 + $0x4] sm:$0xf]
  %v6707 = vld [vmem:[%s6704 + $0x8] sm:$0xf]
  %v6708 = vld [vmem:[%s6704 + $0xc] sm:$0xf]
  %v6709 = vld [vmem:[%s6704 + $0x10] sm:$0xf]
  %v6710 = vld [vmem:[%s6704 + $0x14] sm:$0xf]
  %v6711 = vld [vmem:[%s6704 + $0x18] sm:$0xf]
  %v6712 = vld [vmem:[%s6704 + $0x1c] sm:$0xf]
  %v6713 = vld [vmem:[%s6704 + $0x20] sm:$0xf]
  %v6714 = vld [vmem:[%s6704 + $0x24] sm:$0xf]
  %v6715 = vld [vmem:[%s6704 + $0x28] sm:$0xf]
  %v6716 = vld [vmem:[%s6704 + $0x2c] sm:$0xf]
  %v6717 = vld [vmem:[%s6704 + $0x30] sm:$0xf]
  %v6718 = vld [vmem:[%s6704 + $0x34] sm:$0xf]
  %v6719 = vld [vmem:[%s6704 + $0x38] sm:$0xf]
  %v6720 = vld [vmem:[%s6704 + $0x3c] sm:$0xf]
  %v6737 = vunpack.c.l.b16 %v6705
  %v6738 = vunpack.c.l.b16 %v6706
  %v6739 = vunpack.c.l.b16 %v6707
  %v6740 = vunpack.c.l.b16 %v6708
  %v6741 = vunpack.c.l.b16 %v6709
  %v6742 = vunpack.c.l.b16 %v6710
  %v6743 = vunpack.c.l.b16 %v6711
  %v6744 = vunpack.c.l.b16 %v6712
  %v6745 = vunpack.c.l.b16 %v6713
  %v6746 = vunpack.c.l.b16 %v6714
  %v6747 = vunpack.c.l.b16 %v6715
  %v6748 = vunpack.c.l.b16 %v6716
  %v6749 = vunpack.c.l.b16 %v6717
  %v6750 = vunpack.c.l.b16 %v6718
  %v6751 = vunpack.c.l.b16 %v6719
  %v6752 = vunpack.c.l.b16 %v6720
  %v6753 = vpack.c.b16 %v6738, %v6737
  %v6754 = vpack.c.b16 %v6740, %v6739
  %v6755 = vpack.c.b16 %v6742, %v6741
  %v6756 = vpack.c.b16 %v6744, %v6743
  %v6757 = vpack.c.b16 %v6746, %v6745
  %v6758 = vpack.c.b16 %v6748, %v6747
  %v6759 = vpack.c.b16 %v6750, %v6749
  %v6760 = vpack.c.b16 %v6752, %v6751
  %6769 = vmatprep.subr.bf16.mxu0 0
  %6770 = vmatpush1.bf16.msra.mxu0 %v6753
  %6771 = vmatprep.subr.bf16.mxu0 0
  %6772 = vmatpush1.bf16.msra.mxu0 %v6754
  %6773 = vmatprep.subr.bf16.mxu0 0
  %6774 = vmatpush1.bf16.msra.mxu0 %v6755
  %6775 = vmatprep.subr.bf16.mxu0 0
  %6776 = vmatpush1.bf16.msra.mxu0 %v6756
  %6777 = vmatprep.subr.bf16.mxu0 0
  %6778 = vmatpush1.bf16.msra.mxu0 %v6757
  %6779 = vmatprep.subr.bf16.mxu0 0
  %6780 = vmatpush1.bf16.msra.mxu0 %v6758
  %6781 = vmatprep.subr.bf16.mxu0 0
  %6782 = vmatpush1.bf16.msra.mxu0 %v6759
  %6783 = vmatprep.subr.bf16.mxu0 0
  %6784 = vmatpush1.bf16.msra.mxu0 %v6760
  %6785 = vmatprep.subr.bf16.mxu0 0
  %6786 = vmatpush1.bf16.msra.mxu0 0
  %6787 = vmatprep.subr.bf16.mxu0 0
  %6788 = vmatpush1.bf16.msra.mxu0 0
  %6789 = vmatprep.subr.bf16.mxu0 0
  %6790 = vmatpush1.bf16.msra.mxu0 0
  %6791 = vmatprep.subr.bf16.mxu0 0
  %6792 = vmatpush1.bf16.msra.mxu0 0
  %6793 = vmatprep.subr.bf16.mxu0 0
  %6794 = vmatpush1.bf16.msra.mxu0 0
  %6795 = vmatprep.subr.bf16.mxu0 0
  %6796 = vmatpush1.bf16.msra.mxu0 0
  %6797 = vmatprep.subr.bf16.mxu0 0
  %6798 = vmatpush1.bf16.msra.mxu0 0
  %6799 = vmatprep.subr.bf16.mxu0 0
  %6800 = vmatpush1.bf16.msra.mxu0 0
  %6801 = vmatprep.mubr.bf16.mxu0 0
  %6802 = vmatmul.mubr.bf16.gmra.mrb[0].mxu0 %v5950
  %v6803 = vpop.f32.mrb[0].mxu0
  %v6804 = vadd.f32 0.0, %v6803
  %v6805 = vpop.f32.mrb[0].mxu0
  %v6806 = vpop.f32.mrb[0].mxu0
  %v6807 = vadd.f32 0.0, %v6806
  %v6808 = vpop.f32.mrb[0].mxu0
  %6809 = vdwg.mxu0
  %v6810 = vadd.f32 %v6702, %v6804
  %v6811 = vadd.f32 %v6703, %v6807
  %s6812 = scalar_lea.vmem %s12, 2240
  %v6813 = vld [vmem:[%s6812] sm:$0xf]
  %v6814 = vld [vmem:[%s6812 + $0x4] sm:$0xf]
  %v6815 = vld [vmem:[%s6812 + $0x8] sm:$0xf]
  %v6816 = vld [vmem:[%s6812 + $0xc] sm:$0xf]
  %v6817 = vld [vmem:[%s6812 + $0x10] sm:$0xf]
  %v6818 = vld [vmem:[%s6812 + $0x14] sm:$0xf]
  %v6819 = vld [vmem:[%s6812 + $0x18] sm:$0xf]
  %v6820 = vld [vmem:[%s6812 + $0x1c] sm:$0xf]
  %v6821 = vld [vmem:[%s6812 + $0x20] sm:$0xf]
  %v6822 = vld [vmem:[%s6812 + $0x24] sm:$0xf]
  %v6823 = vld [vmem:[%s6812 + $0x28] sm:$0xf]
  %v6824 = vld [vmem:[%s6812 + $0x2c] sm:$0xf]
  %v6825 = vld [vmem:[%s6812 + $0x30] sm:$0xf]
  %v6826 = vld [vmem:[%s6812 + $0x34] sm:$0xf]
  %v6827 = vld [vmem:[%s6812 + $0x38] sm:$0xf]
  %v6828 = vld [vmem:[%s6812 + $0x3c] sm:$0xf]
  %v6845 = vunpack.c.l.b16 %v6813
  %v6846 = vunpack.c.l.b16 %v6814
  %v6847 = vunpack.c.l.b16 %v6815
  %v6848 = vunpack.c.l.b16 %v6816
  %v6849 = vunpack.c.l.b16 %v6817
  %v6850 = vunpack.c.l.b16 %v6818
  %v6851 = vunpack.c.l.b16 %v6819
  %v6852 = vunpack.c.l.b16 %v6820
  %v6853 = vunpack.c.l.b16 %v6821
  %v6854 = vunpack.c.l.b16 %v6822
  %v6855 = vunpack.c.l.b16 %v6823
  %v6856 = vunpack.c.l.b16 %v6824
  %v6857 = vunpack.c.l.b16 %v6825
  %v6858 = vunpack.c.l.b16 %v6826
  %v6859 = vunpack.c.l.b16 %v6827
  %v6860 = vunpack.c.l.b16 %v6828
  %v6861 = vpack.c.b16 %v6846, %v6845
  %v6862 = vpack.c.b16 %v6848, %v6847
  %v6863 = vpack.c.b16 %v6850, %v6849
  %v6864 = vpack.c.b16 %v6852, %v6851
  %v6865 = vpack.c.b16 %v6854, %v6853
  %v6866 = vpack.c.b16 %v6856, %v6855
  %v6867 = vpack.c.b16 %v6858, %v6857
  %v6868 = vpack.c.b16 %v6860, %v6859
  %6877 = vmatprep.subr.bf16.mxu0 0
  %6878 = vmatpush1.bf16.msra.mxu0 %v6861
  %6879 = vmatprep.subr.bf16.mxu0 0
  %6880 = vmatpush1.bf16.msra.mxu0 %v6862
  %6881 = vmatprep.subr.bf16.mxu0 0
  %6882 = vmatpush1.bf16.msra.mxu0 %v6863
  %6883 = vmatprep.subr.bf16.mxu0 0
  %6884 = vmatpush1.bf16.msra.mxu0 %v6864
  %6885 = vmatprep.subr.bf16.mxu0 0
  %6886 = vmatpush1.bf16.msra.mxu0 %v6865
  %6887 = vmatprep.subr.bf16.mxu0 0
  %6888 = vmatpush1.bf16.msra.mxu0 %v6866
  %6889 = vmatprep.subr.bf16.mxu0 0
  %6890 = vmatpush1.bf16.msra.mxu0 %v6867
  %6891 = vmatprep.subr.bf16.mxu0 0
  %6892 = vmatpush1.bf16.msra.mxu0 %v6868
  %6893 = vmatprep.subr.bf16.mxu0 0
  %6894 = vmatpush1.bf16.msra.mxu0 0
  %6895 = vmatprep.subr.bf16.mxu0 0
  %6896 = vmatpush1.bf16.msra.mxu0 0
  %6897 = vmatprep.subr.bf16.mxu0 0
  %6898 = vmatpush1.bf16.msra.mxu0 0
  %6899 = vmatprep.subr.bf16.mxu0 0
  %6900 = vmatpush1.bf16.msra.mxu0 0
  %6901 = vmatprep.subr.bf16.mxu0 0
  %6902 = vmatpush1.bf16.msra.mxu0 0
  %6903 = vmatprep.subr.bf16.mxu0 0
  %6904 = vmatpush1.bf16.msra.mxu0 0
  %6905 = vmatprep.subr.bf16.mxu0 0
  %6906 = vmatpush1.bf16.msra.mxu0 0
  %6907 = vmatprep.subr.bf16.mxu0 0
  %6908 = vmatpush1.bf16.msra.mxu0 0
  %6909 = vmatprep.mubr.bf16.mxu0 0
  %6910 = vmatmul.mubr.bf16.gmra.mrb[0].mxu0 %v5951
  %v6911 = vpop.f32.mrb[0].mxu0
  %v6912 = vadd.f32 0.0, %v6911
  %v6913 = vpop.f32.mrb[0].mxu0
  %v6914 = vpop.f32.mrb[0].mxu0
  %v6915 = vadd.f32 0.0, %v6914
  %v6916 = vpop.f32.mrb[0].mxu0
  %6917 = vdwg.mxu0
  %v6918 = vadd.f32 %v6810, %v6912
  %v6919 = vadd.f32 %v6811, %v6915
  %v6920 = vld [vmem:[%s5 + $0x13] ss:$0 sm:$0xff]
  %v6921 = vadd.f32 %v6918, %v6920
  %v6922 = vadd.f32 %v6919, %v6920
  %v6923 = vmax.f32 %v6921, 0.0
  %v6924 = vmax.f32 %v6922, 0.0
  %v6925 = vld [vmem:[%s4 + $0x8] sm:$0x7]
  %v6926 = vld [vmem:[%s4 + $0x4] sm:$0x7]
  %6927 = vmatprep.subr.mxu0 0.0
  %6928 = vmatpush1.xpose.msra.mxu0 %v6923
  %6929 = vmatprep.subr.mxu0 0.0
  %6930 = vmatpush1.xpose.msra.mxu0 %v6924
  %6931 = vmatprep.subr.mxu0 0.0
  %6932 = vmatpush1.xpose.msra.mxu0 0.0
  %6933 = vmatprep.subr.mxu0 0.0
  %6934 = vmatpush1.xpose.msra.mxu0 0.0
  %6935 = vmatprep.subr.mxu0 0.0
  %6936 = vmatpush1.xpose.msra.mxu0 0.0
  %6937 = vmatprep.subr.mxu0 0.0
  %6938 = vmatpush1.xpose.msra.mxu0 0.0
  %6939 = vmatprep.subr.mxu0 0.0
  %6940 = vmatpush1.xpose.msra.mxu0 0.0
  %6941 = vmatprep.subr.mxu0 0.0
  %6942 = vmatpush1.xpose.msra.mxu0 0.0
  %6943 = vmatprep.subr.mxu0 0.0
  %6944 = vmatpush1.xpose.msra.mxu0 0.0
  %6945 = vmatprep.subr.mxu0 0.0
  %6946 = vmatpush1.xpose.msra.mxu0 0.0
  %6947 = vmatprep.subr.mxu0 0.0
  %6948 = vmatpush1.xpose.msra.mxu0 0.0
  %6949 = vmatprep.subr.mxu0 0.0
  %6950 = vmatpush1.xpose.msra.mxu0 0.0
  %6951 = vmatprep.subr.mxu0 0.0
  %6952 = vmatpush1.xpose.msra.mxu0 0.0
  %6953 = vmatprep.subr.mxu0 0.0
  %6954 = vmatpush1.xpose.msra.mxu0 0.0
  %6955 = vmatprep.subr.mxu0 0.0
  %6956 = vmatpush1.xpose.msra.mxu0 0.0
  %6957 = vmatprep.subr.mxu0 0.0
  %6958 = vmatpush1.xpose.msra.mxu0 0.0
  %6959 = vmatprep.subr.mxu0 0.0
  %6960 = vmatpush1.xpose.msra.mxu0 0.0
  %6961 = vmatprep.subr.mxu0 0.0
  %6962 = vmatpush1.xpose.msra.mxu0 0.0
  %6963 = vmatprep.subr.mxu0 0.0
  %6964 = vmatpush1.xpose.msra.mxu0 0.0
  %6965 = vmatprep.subr.mxu0 0.0
  %6966 = vmatpush1.xpose.msra.mxu0 0.0
  %6967 = vmatprep.subr.mxu0 0.0
  %6968 = vmatpush1.xpose.msra.mxu0 0.0
  %6969 = vmatprep.subr.mxu0 0.0
  %6970 = vmatpush1.xpose.msra.mxu0 0.0
  %6971 = vmatprep.subr.mxu0 0.0
  %6972 = vmatpush1.xpose.msra.mxu0 0.0
  %6973 = vmatprep.subr.mxu0 0.0
  %6974 = vmatpush1.xpose.msra.mxu0 0.0
  %6975 = vmatprep.subr.mxu0 0.0
  %6976 = vmatpush1.xpose.msra.mxu0 0.0
  %6977 = vmatprep.subr.mxu0 0.0
  %6978 = vmatpush1.xpose.msra.mxu0 0.0
  %6979 = vmatprep.subr.mxu0 0.0
  %6980 = vmatpush1.xpose.msra.mxu0 0.0
  %6981 = vmatprep.subr.mxu0 0.0
  %6982 = vmatpush1.xpose.msra.mxu0 0.0
  %6983 = vmatprep.subr.mxu0 0.0
  %6984 = vmatpush1.xpose.msra.mxu0 0.0
  %6985 = vmatprep.subr.mxu0 0.0
  %6986 = vmatpush1.xpose.msra.mxu0 0.0
  %6987 = vmatprep.subr.mxu0 0.0
  %6988 = vmatpush1.xpose.msra.mxu0 0.0
  %6989 = vmatprep.subr.mxu0 0.0
  %6990 = vmatpush1.xpose.msra.mxu0 0.0
  %6991 = vmatprep.mubr.f32.mxu0 0.0
  %6992 = vmatmul.mubr.f32.gmra.mrb[0].mxu0 %v6925
  %v6993 = vpop.f32.mrb[0].mxu0
  %v6994 = vadd.f32 %v6926, %v6993
  %v6995 = vpop.f32.mrb[0].mxu0
  %6996 = vdwg.mxu0
  %vm6997 = vcmask 124929
  %v6998 = vsel %vm6997, %v6994, -inf
  %6999 = vmax.xlane.f32.xlu0 %v6998
  %v7000 = vpop.xlane.xlu0 %6999
  %v7001 = vsub.f32 %v6994, %v7000
  %v7002 = vmul.f32 %v7001, 1.442695
  %v7003 = vpow.pop %v7002
  %v7004 = vsel %vm6997, %v7003, 0.0
  %7005 = vadd.xlane.f32.xlu0 %v7004
  %v7006 = vpop.xlane.xlu0 %7005
  %v7007 = vrcp.pop %v7006
  %v7008 = vmul.f32 %v7003, %v7007
  %v7009 = vld [vmem:[%s4 + $0x1] sm:$0x1]
  %v7010 = vlaneseq
  %v7011 = vshrl.u32 %v7010, 7
  %v7012 = vsub.s32 0, %v7011
  %v7013 = vrot.slane %v7009, %v7012
  %v7014 = vmul.f32 %v7008, %v7013
  %v7015 = vsel %vm6997, %v7014, 0.0
  %7016 = vadd.xlane.f32.xlu0 %v7015
  %v7017 = vpop.xlane.xlu0 %7016
  %v7018 = vld [vmem:[%s4 + $0x2] sm:$0x1]
  %v7019 = vlaneseq
  %v7020 = vshrl.u32 %v7019, 7
  %v7021 = vsub.s32 0, %v7020
  %v7022 = vrot.slane %v7018, %v7021
  %v7023 = vmul.f32 %v7008, %v7022
  %v7024 = vsel %vm6997, %v7023, 0.0
  %7025 = vadd.xlane.f32.xlu0 %v7024
  %v7026 = vpop.xlane.xlu0 %7025
  %7027 = vst [vmem:[%s13] sm:$0xff] 0.0
  %vm7028 = vcmask 122880
  %7029 = vst.msk [vmem:[%s13] sm:$0x1] %vm7028, %v6994
  %vm7030 = vcmask 7168
  %v7031 = vsel %vm7030, %v7017, %v7026
  %vm7032 = vcmask 10241
  %7033 = vst.msk [vmem:[%s13] sm:$0x6] %vm7032, %v7031
  // Predicated region
  $region54: #{promptvt_forward.1} parent=0 // pred_check
    _
  $region55: #{promptvt_forward.1} parent=0 // pred_check_branch
    %7035 = sbr.rel (0) target = $region57
  $region56: #{promptvt_forward.1} parent=0 // pred_region
    _
  $region57: #{promptvt_forward.1} parent=0 // pred_fallthru
    _
  // Predicated region
  $region58: #{promptvt_forward.1} parent=0 // pred_check
    _
  $region59: #{promptvt_forward.1} parent=0 // pred_check_branch
    %7037 = sbr.rel (0) target = $region61
  $region60: #{promptvt_forward.1} parent=0 // pred_region
    _
  $region61: #{promptvt_forward.1} parent=0 // pred_fallthru
    _

</llo_original>
